<compile_context>
chip_gen: v5e
topology: v5e:2x2
jax: 0.10.0
libtpu: 0.0.40
codegen_flags: <defaults>
</compile_context>

<pallas_src>
import math
import functools

import jax
import jax.numpy as jnp
from jax.experimental import pallas as pl
from jax.experimental.pallas import tpu as pltpu

_EPS = 1e-5
_LANE = 128  # lane width: pad channel dims to a multiple of this


def _round_up(x, m):
    return ((x + m - 1) // m) * m


def _cdiv(a, b):
    return -(-a // b)


def _pad_to(a, shape):
    pads = [(0, s - d) for d, s in zip(a.shape, shape)]
    return jnp.pad(a, pads)


def _vmem_limit_bytes():
    try:
        kind = jax.devices()[0].device_kind.lower()
    except Exception:
        kind = ""
    if "v7" in kind:
        return 48 * 1024 * 1024          # v7x: 64 MiB physical, leave headroom
    if ("v5" in kind) or ("v6" in kind):
        return 100 * 1024 * 1024         # v5e/v6e: 128 MiB physical
    return 32 * 1024 * 1024


# ----------------------------- flat geometry ---------------------------------
#
# Layout of one batch tile of B images with output spatial (Ho, Wo):
#   Wpad  = Wo + 2                      (left + right zero column)
#   pitch = Ho + 1                      (one shared zero row before each image)
#   data element (b, oh, ow) lives at flat index
#       f = (b*pitch + 1 + oh) * Wpad + 1 + ow
#   conv output index m = f - (Wpad + 1); tap (i, j) reads flat index
#       m + i*Wpad + j.

def _pick_batch_tile(n, ho, wo):
    bt = max(1, _cdiv(256, ho * wo))     # target >= 256 M-rows per MXU dot
    bt = min(bt, n)
    if bt == n and n >= 2:
        bt = _cdiv(n, 2)                 # keep >= 2 grid steps (v7x megacore)
    return bt


def _make_geom(n, ho, wo):
    b = _pick_batch_tile(n, ho, wo)
    nb = _cdiv(n, b)
    wpad = wo + 2
    pitch = ho + 1
    mtot = b * pitch * wpad
    n_tiles = max(1, _cdiv(mtot, 256))
    tm = _round_up(_cdiv(mtot, n_tiles), 8)
    mt = n_tiles * tm                              # rows of conv output computed
    io_flat = _round_up(mt + wpad + 1, 8)          # HBM activation slab length
    s_flat = _round_up(mt + 2 * wpad + 2, 8)       # VMEM pad-scratch length

    f = jnp.arange(io_flat)
    row = f // wpad
    col = f % wpad
    valid = ((row < b * pitch) & (row % pitch != 0)
             & (col >= 1) & (col <= wo))
    mask = valid.astype(jnp.float32).reshape(io_flat, 1)

    return dict(N=n, B=b, NB=nb, Ho=ho, Wo=wo, Wpad=wpad, pitch=pitch,
                Mtot=mtot, TM=tm, n_tiles=n_tiles, MT=mt,
                IO_FLAT=io_flat, S_FLAT=s_flat, mask=mask)


def _to_flat(x, g):
    """(N, Ho, Wo, C) -> (NB*IO_FLAT, C) padded-flat layout."""
    n, ho, wo, c = x.shape
    b, nb, wpad, io_flat = g["B"], g["NB"], g["Wpad"], g["IO_FLAT"]
    if n < nb * b:
        x = jnp.pad(x, ((0, nb * b - n), (0, 0), (0, 0), (0, 0)))
    x = x.reshape(nb, b, ho, wo, c)
    x = jnp.pad(x, ((0, 0), (0, 0), (1, 0), (1, wpad - 1 - wo), (0, 0)))
    mtot = b * (ho + 1) * wpad
    x = x.reshape(nb, mtot, c)
    x = jnp.pad(x, ((0, 0), (0, io_flat - mtot), (0, 0)))
    return x.reshape(nb * io_flat, c)


def _from_flat(y, g, n, c_out):
    """(NB*IO_FLAT, C) padded-flat -> (N, Ho, Wo, c_out)."""
    b, nb = g["B"], g["NB"]
    ho, wo, wpad, io_flat = g["Ho"], g["Wo"], g["Wpad"], g["IO_FLAT"]
    c = y.shape[-1]
    mtot = b * (ho + 1) * wpad
    y = y.reshape(nb, io_flat, c)[:, :mtot, :]
    y = y.reshape(nb, b, ho + 1, wpad, c)[:, :, 1:, 1:1 + wo, :]
    y = y.reshape(nb * b, ho, wo, c)[:n, :, :, :c_out]
    return y


# ------------------------- fused BasicBlock kernel ---------------------------

def _make_block_kernel(cfg):
    TM, n_tiles = cfg["TM"], cfg["n_tiles"]
    Wpad = cfg["Wpad"]
    kh1, kw1 = cfg["kh1"], cfg["kw1"]
    cpi, cpo = cfg["cpin"], cfg["cpout"]
    MT, S_FLAT = cfg["MT"], cfg["S_FLAT"]
    has_sc = cfg["has_sc"]
    ORG = Wpad + 1   # flat offset of the data origin relative to output index m

    def kernel(*refs):
        if has_sc:
            (x_ref, w1_ref, w2_ref, wsc_ref,
             s1_ref, b1_ref, b2_ref, mask_ref, o_ref, h1pad, h2pad) = refs
        else:
            (x_ref, w1_ref, w2_ref,
             s1_ref, b1_ref, b2_ref, mask_ref, o_ref, h1pad, h2pad) = refs
            wsc_ref = None

        # Re-zero only the small scratch regions that the compute below never
        # writes (top/tail pad rows).  The interior is fully rewritten every
        # step, so this is correct under any megacore grid split.
        h1pad[pl.ds(MT, S_FLAT - MT), :] = jnp.zeros(
            (S_FLAT - MT, cpi), jnp.bfloat16)
        h2pad[pl.ds(0, ORG), :] = jnp.zeros((ORG, cpo), jnp.bfloat16)
        h2pad[pl.ds(MT + ORG, S_FLAT - MT - ORG), :] = jnp.zeros(
            (S_FLAT - MT - ORG, cpo), jnp.bfloat16)

        s1 = s1_ref[...]
        b1 = b1_ref[...]
        b2 = b2_ref[...]

        # ---- prologue: BN1 + ReLU (+ padding mask), one bf16 pass -----------
        for it in range(n_tiles):
            t0 = it * TM
            xv = x_ref[pl.ds(t0, TM), :].astype(jnp.float32)
            mk = mask_ref[pl.ds(t0, TM), :]
            h = jnp.maximum(xv * s1 + b1, 0.0)
            h1pad[pl.ds(t0, TM), :] = jnp.where(mk > 0.5, h, 0.0).astype(
                jnp.bfloat16)

        # ---- conv1 (BN2 scale pre-folded into w1) + bias + ReLU -> h2pad ----
        for it in range(n_tiles):
            m0 = it * TM
            acc = jnp.zeros((TM, cpo), jnp.float32)
            for t in range(kh1 * kw1):
                i, j = divmod(t, kw1)
                tap = h1pad[pl.ds(m0 + i * Wpad + j, TM), :]
                acc = acc + jnp.dot(tap, w1_ref[t],
                                    preferred_element_type=jnp.float32)
            h2 = jnp.maximum(acc + b2, 0.0)
            # TODO(synk): training-mode dropout (dropRate > 0) would go here;
            # the module default dropRate=0.0 makes it a no-op.
            mk = mask_ref[pl.ds(m0 + ORG, TM), :]
            h2pad[pl.ds(m0 + ORG, TM), :] = jnp.where(mk > 0.5, h2, 0.0).astype(
                jnp.bfloat16)

        # ---- conv2 + residual -> lane-dense bf16 output ----------------------
        for it in range(n_tiles):
            m0 = it * TM
            acc = jnp.zeros((TM, cpo), jnp.float32)
            for t in range(9):
                i, j = divmod(t, 3)
                tap = h2pad[pl.ds(m0 + i * Wpad + j, TM), :]
                acc = acc + jnp.dot(tap, w2_ref[t],
                                    preferred_element_type=jnp.float32)
            if has_sc:
                hs = h1pad[pl.ds(m0 + ORG, TM), :]
                acc = acc + jnp.dot(hs, wsc_ref[...],
                                    preferred_element_type=jnp.float32)
            else:
                acc = acc + x_ref[pl.ds(m0 + ORG, TM), :].astype(jnp.float32)
            o_ref[pl.ds(m0 + ORG, TM), :] = acc.astype(o_ref.dtype)

    return kernel


def _basic_block_apply(p, g, x_flat):
    cpi, cpo = p["cpin"], p["cpout"]
    IO_FLAT, NB = g["IO_FLAT"], g["NB"]
    cfg = dict(TM=g["TM"], n_tiles=g["n_tiles"], Wpad=g["Wpad"],
               kh1=p["kh1"], kw1=p["kw1"], cpin=cpi, cpout=cpo,
               MT=g["MT"], S_FLAT=g["S_FLAT"], has_sc=not p["equal"])
    kernel = _make_block_kernel(cfg)

    in_specs = [
        pl.BlockSpec((IO_FLAT, cpi), lambda t: (t, 0)),               # x (flat)
        pl.BlockSpec((p["kh1"] * p["kw1"], cpi, cpo),
                     lambda t: (0, 0, 0)),                            # conv1 taps
        pl.BlockSpec((9, cpo, cpo), lambda t: (0, 0, 0)),             # conv2 taps
    ]
    args = [x_flat, p["w1"], p["w2"]]
    if cfg["has_sc"]:
        in_specs.append(pl.BlockSpec((cpi, cpo), lambda t: (0, 0)))   # shortcut
        args.append(p["wsc"])
    in_specs += [
        pl.BlockSpec((1, cpi), lambda t: (0, 0)),                     # bn1 scale
        pl.BlockSpec((1, cpi), lambda t: (0, 0)),                     # bn1 bias
        pl.BlockSpec((1, cpo), lambda t: (0, 0)),                     # bn2 bias
        pl.BlockSpec((IO_FLAT, 1), lambda t: (0, 0)),                 # data mask
    ]
    args += [p["bn1_scale"], p["bn1_bias"], p["bn2_bias"], g["mask"]]

    return pl.pallas_call(
        kernel,
        out_shape=jax.ShapeDtypeStruct((NB * IO_FLAT, cpo), jnp.bfloat16),
        grid=(NB,),
        in_specs=in_specs,
        out_specs=pl.BlockSpec((IO_FLAT, cpo), lambda t: (t, 0)),
        scratch_shapes=[
            pltpu.VMEM((g["S_FLAT"], cpi), jnp.bfloat16),   # padded BN1(x) slab
            pltpu.VMEM((g["S_FLAT"], cpo), jnp.bfloat16),   # padded conv1 slab
        ],
        compiler_params=pltpu.CompilerParams(
            dimension_semantics=("parallel",),
            vmem_limit_bytes=_vmem_limit_bytes(),
        ),
    )(*args)


# -------------------------- parameter construction ---------------------------

def _he_conv(key, kh, kw, cin, cout):
    std = math.sqrt(2.0 / (kh * kw * cout))   # WRN init scheme
    return std * jax.random.normal(key, (kh, kw, cin, cout), dtype=jnp.float32)


def _bn_affine(c):
    # gamma=1, beta=0, running_mean=0, running_var=1 (eval-mode BatchNorm)
    gamma = jnp.ones((c,), jnp.float32)
    beta = jnp.zeros((c,), jnp.float32)
    mean = jnp.zeros((c,), jnp.float32)
    var = jnp.ones((c,), jnp.float32)
    scale = gamma / jnp.sqrt(var + _EPS)
    bias = beta - mean * scale
    return scale, bias


def init_basic_block(key, in_planes, out_planes, stride, drop_rate):
    assert stride in (1, 2)
    equal = in_planes == out_planes
    assert not (equal and stride != 1), "in_planes==out_planes requires stride==1"

    k1, k2, k3 = jax.random.split(key, 3)
    conv1 = _he_conv(k1, 3, 3, in_planes, out_planes)
    conv2 = _he_conv(k2, 3, 3, out_planes, out_planes)
    s1, b1 = _bn_affine(in_planes)
    s2, b2 = _bn_affine(out_planes)

    raw = {"conv1": conv1, "conv2": conv2, "bn1": (s1, b1), "bn2": (s2, b2)}

    # Fold BN2's per-channel scale into conv1's output columns (done once here,
    # so the kernel only does bias + ReLU after conv1).
    conv1_s = conv1 * s2[None, None, None, :]

    if stride == 1:
        kh1 = kw1 = 3
        cin_eff = in_planes
        w1_eff = conv1_s
        s1_eff, b1_eff = s1, b1
    else:
        # stride-2 conv3x3(pad=1)  ==  stride-1 conv2x2 over space-to-depth(x);
        # 3x3 weights re-scattered onto the 2x2 taps / parity channel blocks.
        kh1 = kw1 = 2
        cin_eff = 4 * in_planes
        w1_eff = jnp.zeros((2, 2, cin_eff, out_planes), jnp.float32)
        imap = {0: (0, 1), 1: (1, 0), 2: (1, 1)}   # 3x3 tap -> (2x2 tap, parity)
        for i in range(3):
            di, pr = imap[i]
            for j in range(3):
                dj, qc = imap[j]
                ch0 = (pr * 2 + qc) * in_planes
                w1_eff = w1_eff.at[di, dj, ch0:ch0 + in_planes, :].set(conv1_s[i, j])
        s1_eff = jnp.tile(s1, 4)
        b1_eff = jnp.tile(b1, 4)

    cpin = _round_up(cin_eff, _LANE)
    cpout = _round_up(out_planes, _LANE)

    p = {
        "stride": stride,
        "equal": equal,
        "in_planes": in_planes,
        "out_planes": out_planes,
        "kh1": kh1, "kw1": kw1,
        "cpin": cpin, "cpout": cpout,
        "drop_rate": drop_rate,
        "raw": raw,
        "w1": _pad_to(w1_eff, (kh1, kw1, cpin, cpout))
              .reshape(kh1 * kw1, cpin, cpout).astype(jnp.bfloat16),
        "w2": _pad_to(conv2, (3, 3, cpout, cpout))
              .reshape(9, cpout, cpout).astype(jnp.bfloat16),
        "bn1_scale": _pad_to(s1_eff, (cpin,)).reshape(1, cpin),
        "bn1_bias": _pad_to(b1_eff, (cpin,)).reshape(1, cpin),
        "bn2_bias": _pad_to(b2, (cpout,)).reshape(1, cpout),
    }
    if not equal:
        conv_sc = _he_conv(k3, 1, 1, in_planes, out_planes)
        raw["conv_sc"] = conv_sc
        # In the s2d form the 1x1/stride-2 shortcut reads only the (even,even)
        # parity block == effective input channels [0:in_planes); zero-pad rest.
        p["wsc"] = _pad_to(conv_sc[0, 0], (cpin, cpout)).astype(jnp.bfloat16)
    return p


def init_network_block(key, nb_layers, in_planes, out_planes, stride, drop_rate=0.0):
    layers = []
    for i in range(int(nb_layers)):
        key, sub = jax.random.split(key)
        layers.append(init_basic_block(
            sub,
            in_planes if i == 0 else out_planes,
            out_planes,
            stride if i == 0 else 1,
            drop_rate))
    return layers


# ---------------------------------- forward ----------------------------------

def _space_to_depth(x):
    """(N,H,W,C) -> (N,H/2,W/2,4C), channel index (p*2+q)*C + c."""
    n, h, w, c = x.shape
    x = x.reshape(n, h // 2, 2, w // 2, 2, c)
    x = jnp.transpose(x, (0, 1, 3, 2, 4, 5))
    return x.reshape(n, h // 2, w // 2, 4 * c)


def network_block_forward(params, x_nchw):
    """Public entry point: NCHW in, NCHW out (matches the PyTorch module)."""
    x = jnp.transpose(x_nchw, (0, 2, 3, 1)).astype(jnp.float32)   # NCHW -> NHWC
    p0 = params[0]
    if p0["stride"] == 2:
        assert x.shape[1] % 2 == 0 and x.shape[2] % 2 == 0
        x = _space_to_depth(x)
    n, ho, wo, c = x.shape
    g = _make_geom(n, ho, wo)

    cpin0 = p0["cpin"]
    if c < cpin0:
        x = jnp.pad(x, ((0, 0), (0, 0), (0, 0), (0, cpin0 - c)))
    x = x.astype(jnp.bfloat16)
    xf = _to_flat(x, g)                         # padded-flat activation slab
    for p in params:
        xf = _basic_block_apply(p, g, xf)       # stays in the flat layout
    y = _from_flat(xf, g, n, params[-1]["out_planes"])
    return jnp.transpose(y.astype(jnp.float32), (0, 3, 1, 2))     # NHWC -> NCHW


# ---------------------- pure-JAX reference (validation) ----------------------

def _ref_network_block(params, x_nchw):
    dn = ("NHWC", "HWIO", "NHWC")
    x = jnp.transpose(x_nchw, (0, 2, 3, 1)).astype(jnp.float32)
    for p in params:
        raw = p["raw"]
        s1, b1 = raw["bn1"]
        s2, b2 = raw["bn2"]
        st = (p["stride"], p["stride"])
        h = jnp.maximum(x * s1 + b1, 0.0)
        out = jax.lax.conv_general_dilated(h, raw["conv1"], st, ((1, 1), (1, 1)),
                                           dimension_numbers=dn)
        out = jnp.maximum(out * s2 + b2, 0.0)
        out = jax.lax.conv_general_dilated(out, raw["conv2"], (1, 1), ((1, 1), (1, 1)),
                                           dimension_numbers=dn)
        if p["equal"]:
            sc = x
        else:
            sc = jax.lax.conv_general_dilated(h, raw["conv_sc"], st, ((0, 0), (0, 0)),
                                              dimension_numbers=dn)
        x = out + sc
    return jnp.transpose(x, (0, 3, 1, 2))


# ------------------------------------ main ------------------------------------

if __name__ == "__main__":
    key = jax.random.PRNGKey(0)
    k_in, k_par = jax.random.split(key)

    # Small WRN-like configuration: 2 layers, 4 -> 8 channels, stride 2.
    nb_layers, in_planes, out_planes, stride = 2, 4, 8, 2
    N, H, W = 2, 16, 16

    x = jax.random.normal(k_in, (N, in_planes, H, W), dtype=jnp.float32)  # NCHW
    params = init_network_block(k_par, nb_layers, in_planes, out_planes, stride)

    fwd = jax.jit(functools.partial(network_block_forward, params))
    y = fwd(x)
    jax.block_until_ready(y)

    expected = (N, out_planes, H // stride, W // stride)
    assert y.shape == expected, (y.shape, expected)
    assert bool(jnp.all(jnp.isfinite(y)))

    # Validate against a plain-XLA reference (loose tolerance: bf16 storage/MXU).
    y_ref = _ref_network_block(params, x)
    err = float(jnp.max(jnp.abs(y - y_ref)))
    ref_mag = float(jnp.max(jnp.abs(y_ref))) + 1e-6
    assert err / ref_mag < 0.06, (err, ref_mag)

    print("KERNEL_OK")
</pallas_src>

<mosaic_0001>
module attributes {stable_mosaic.version = 11 : i64} {
  func.func @kernel(%arg0: i32, %arg1: memref<112x128xbf16, #tpu.memory_space<vmem>>, %arg2: memref<4x128x128xbf16, #tpu.memory_space<vmem>>, %arg3: memref<9x128x128xbf16, #tpu.memory_space<vmem>>, %arg4: memref<128x128xbf16, #tpu.memory_space<vmem>>, %arg5: memref<1x128xf32, #tpu.memory_space<vmem>>, %arg6: memref<1x128xf32, #tpu.memory_space<vmem>>, %arg7: memref<1x128xf32, #tpu.memory_space<vmem>>, %arg8: memref<112x1xf32, #tpu.memory_space<vmem>>, %arg9: memref<112x128xbf16, #tpu.memory_space<vmem>>, %arg10: memref<120x128xbf16, #tpu.memory_space<vmem>>, %arg11: memref<120x128xbf16, #tpu.memory_space<vmem>>) attributes {dimension_semantics = [#tpu.dimension_semantics<parallel>], iteration_bounds = array<i64: 2>, scalar_prefetch = 0 : i64, scratch_operands = 2 : i64, tpu.core_type = #tpu.core_type<tc>, window_params = [{transform_indices = @transform_0, window_bounds = array<i64: 112, 128>}, {pipeline_mode = #tpu.pipeline_mode<synchronous>, transform_indices = @transform_1, window_bounds = array<i64: 4, 128, 128>}, {pipeline_mode = #tpu.pipeline_mode<synchronous>, transform_indices = @transform_2, window_bounds = array<i64: 9, 128, 128>}, {pipeline_mode = #tpu.pipeline_mode<synchronous>, transform_indices = @transform_3, window_bounds = array<i64: 128, 128>}, {pipeline_mode = #tpu.pipeline_mode<synchronous>, transform_indices = @transform_4, window_bounds = array<i64: 1, 128>}, {pipeline_mode = #tpu.pipeline_mode<synchronous>, transform_indices = @transform_5, window_bounds = array<i64: 1, 128>}, {pipeline_mode = #tpu.pipeline_mode<synchronous>, transform_indices = @transform_6, window_bounds = array<i64: 1, 128>}, {pipeline_mode = #tpu.pipeline_mode<synchronous>, transform_indices = @transform_7, window_bounds = array<i64: 112, 1>}, {transform_indices = @transform_8, window_bounds = array<i64: 112, 128>}]} {
    %cst = arith.constant 0.000000e+00 : bf16
    %0 = vector.broadcast %cst : bf16 to vector<24x128xbf16>
    %c96 = arith.constant 96 : index
    %c0 = arith.constant 0 : index
    %1 = vector.load %arg10[%c96, %c0] : memref<120x128xbf16, #tpu.memory_space<vmem>>, vector<24x128xbf16>
    tpu.vector_store %arg10[%c96, %c0], %0 {strides = array<i32>} : memref<120x128xbf16, #tpu.memory_space<vmem>>, vector<24x128xbf16>,
    %cst_0 = arith.constant 0.000000e+00 : bf16
    %2 = vector.broadcast %cst_0 : bf16 to vector<11x128xbf16>
    %c0_1 = arith.constant 0 : index
    %c0_2 = arith.constant 0 : index
    %3 = vector.load %arg11[%c0_1, %c0_2] : memref<120x128xbf16, #tpu.memory_space<vmem>>, vector<11x128xbf16>
    tpu.vector_store %arg11[%c0_1, %c0_2], %2 {strides = array<i32>} : memref<120x128xbf16, #tpu.memory_space<vmem>>, vector<11x128xbf16>,
    %cst_3 = arith.constant 0.000000e+00 : bf16
    %4 = vector.broadcast %cst_3 : bf16 to vector<13x128xbf16>
    %c107 = arith.constant 107 : index
    %c0_4 = arith.constant 0 : index
    %5 = vector.load %arg11[%c107, %c0_4] : memref<120x128xbf16, #tpu.memory_space<vmem>>, vector<13x128xbf16>
    tpu.vector_store %arg11[%c107, %c0_4], %4 {strides = array<i32>} : memref<120x128xbf16, #tpu.memory_space<vmem>>, vector<13x128xbf16>,
    %c0_5 = arith.constant 0 : index
    %c0_6 = arith.constant 0 : index
    %6 = vector.load %arg5[%c0_5, %c0_6] : memref<1x128xf32, #tpu.memory_space<vmem>>, vector<1x128xf32>
    %c0_7 = arith.constant 0 : index
    %c0_8 = arith.constant 0 : index
    %7 = vector.load %arg6[%c0_7, %c0_8] : memref<1x128xf32, #tpu.memory_space<vmem>>, vector<1x128xf32>
    %c0_9 = arith.constant 0 : index
    %c0_10 = arith.constant 0 : index
    %8 = vector.load %arg7[%c0_9, %c0_10] : memref<1x128xf32, #tpu.memory_space<vmem>>, vector<1x128xf32>
    %c0_11 = arith.constant 0 : index
    %c0_12 = arith.constant 0 : index
    %9 = vector.load %arg1[%c0_11, %c0_12] : memref<112x128xbf16, #tpu.memory_space<vmem>>, vector<96x128xbf16>
    %10 = arith.extf %9 : vector<96x128xbf16> to vector<96x128xf32>
    %c0_13 = arith.constant 0 : index
    %c0_14 = arith.constant 0 : index
    %11 = vector.load %arg8[%c0_13, %c0_14] : memref<112x1xf32, #tpu.memory_space<vmem>>, vector<96x1xf32>
    %12 = vector.broadcast %6 : vector<1x128xf32> to vector<96x128xf32>
    %13 = arith.mulf %10, %12 : vector<96x128xf32>
    %14 = vector.broadcast %7 : vector<1x128xf32> to vector<96x128xf32>
    %15 = arith.addf %13, %14 : vector<96x128xf32>
    %cst_15 = arith.constant 0.000000e+00 : f32
    %16 = vector.broadcast %cst_15 : f32 to vector<96x128xf32>
    %17 = arith.maximumf %15, %16 : vector<96x128xf32>
    %cst_16 = arith.constant 5.000000e-01 : f32
    %18 = vector.broadcast %cst_16 : f32 to vector<96x1xf32>
    %19 = arith.cmpf ogt, %11, %18 : vector<96x1xf32>
    %cst_17 = arith.constant 0.000000e+00 : f32
    %20 = vector.shape_cast %19 : vector<96x1xi1> to vector<96x1xi1>
    %21 = vector.broadcast %20 : vector<96x1xi1> to vector<96x128xi1>
    %22 = vector.broadcast %cst_17 : f32 to vector<96x128xf32>
    %23 = arith.select %21, %17, %22 : vector<96x128xi1>, vector<96x128xf32>
    %24 = arith.truncf %23 : vector<96x128xf32> to vector<96x128xbf16>
    %c0_18 = arith.constant 0 : index
    %c0_19 = arith.constant 0 : index
    %25 = vector.load %arg10[%c0_18, %c0_19] : memref<120x128xbf16, #tpu.memory_space<vmem>>, vector<96x128xbf16>
    tpu.vector_store %arg10[%c0_18, %c0_19], %24 {strides = array<i32>} : memref<120x128xbf16, #tpu.memory_space<vmem>>, vector<96x128xbf16>,
    %cst_20 = arith.constant 0.000000e+00 : f32
    %26 = vector.broadcast %cst_20 : f32 to vector<96x128xf32>
    %c0_21 = arith.constant 0 : index
    %c0_22 = arith.constant 0 : index
    %27 = vector.load %arg10[%c0_21, %c0_22] : memref<120x128xbf16, #tpu.memory_space<vmem>>, vector<96x128xbf16>
    %c0_23 = arith.constant 0 : index
    %c0_24 = arith.constant 0 : index
    %c0_25 = arith.constant 0 : index
    %28 = vector.load %arg2[%c0_23, %c0_24, %c0_25] : memref<4x128x128xbf16, #tpu.memory_space<vmem>>, vector<1x128x128xbf16>
    %29 = vector.shape_cast %28 : vector<1x128x128xbf16> to vector<128x128xbf16>
    %cst_26 = arith.constant dense<0.000000e+00> : vector<96x128xf32>
    %30 = tpu.matmul %27, %29, %cst_26 {dimension_numbers = #tpu.dot_dimension_numbers<[1], [0], [0], [1], [0, 0, 1, 1], [], []>} : vector<96x128xbf16>, vector<128x128xbf16>, vector<96x128xf32> -> vector<96x128xf32>
    %31 = arith.addf %26, %30 : vector<96x128xf32>
    %c1 = arith.constant 1 : index
    %c0_27 = arith.constant 0 : index
    %32 = vector.load %arg10[%c1, %c0_27] : memref<120x128xbf16, #tpu.memory_space<vmem>>, vector<96x128xbf16>
    %c1_28 = arith.constant 1 : index
    %c0_29 = arith.constant 0 : index
    %c0_30 = arith.constant 0 : index
    %33 = vector.load %arg2[%c1_28, %c0_29, %c0_30] : memref<4x128x128xbf16, #tpu.memory_space<vmem>>, vector<1x128x128xbf16>
    %34 = vector.shape_cast %33 : vector<1x128x128xbf16> to vector<128x128xbf16>
    %cst_31 = arith.constant dense<0.000000e+00> : vector<96x128xf32>
    %35 = tpu.matmul %32, %34, %cst_31 {dimension_numbers = #tpu.dot_dimension_numbers<[1], [0], [0], [1], [0, 0, 1, 1], [], []>} : vector<96x128xbf16>, vector<128x128xbf16>, vector<96x128xf32> -> vector<96x128xf32>
    %36 = arith.addf %31, %35 : vector<96x128xf32>
    %c10 = arith.constant 10 : index
    %c0_32 = arith.constant 0 : index
    %37 = vector.load %arg10[%c10, %c0_32] : memref<120x128xbf16, #tpu.memory_space<vmem>>, vector<96x128xbf16>
    %c2 = arith.constant 2 : index
    %c0_33 = arith.constant 0 : index
    %c0_34 = arith.constant 0 : index
    %38 = vector.load %arg2[%c2, %c0_33, %c0_34] : memref<4x128x128xbf16, #tpu.memory_space<vmem>>, vector<1x128x128xbf16>
    %39 = vector.shape_cast %38 : vector<1x128x128xbf16> to vector<128x128xbf16>
    %cst_35 = arith.constant dense<0.000000e+00> : vector<96x128xf32>
    %40 = tpu.matmul %37, %39, %cst_35 {dimension_numbers = #tpu.dot_dimension_numbers<[1], [0], [0], [1], [0, 0, 1, 1], [], []>} : vector<96x128xbf16>, vector<128x128xbf16>, vector<96x128xf32> -> vector<96x128xf32>
    %41 = arith.addf %36, %40 : vector<96x128xf32>
    %c11 = arith.constant 11 : index
    %c0_36 = arith.constant 0 : index
    %42 = vector.load %arg10[%c11, %c0_36] : memref<120x128xbf16, #tpu.memory_space<vmem>>, vector<96x128xbf16>
    %c3 = arith.constant 3 : index
    %c0_37 = arith.constant 0 : index
    %c0_38 = arith.constant 0 : index
    %43 = vector.load %arg2[%c3, %c0_37, %c0_38] : memref<4x128x128xbf16, #tpu.memory_space<vmem>>, vector<1x128x128xbf16>
    %44 = vector.shape_cast %43 : vector<1x128x128xbf16> to vector<128x128xbf16>
    %cst_39 = arith.constant dense<0.000000e+00> : vector<96x128xf32>
    %45 = tpu.matmul %42, %44, %cst_39 {dimension_numbers = #tpu.dot_dimension_numbers<[1], [0], [0], [1], [0, 0, 1, 1], [], []>} : vector<96x128xbf16>, vector<128x128xbf16>, vector<96x128xf32> -> vector<96x128xf32>
    %46 = arith.addf %41, %45 : vector<96x128xf32>
    %47 = vector.broadcast %8 : vector<1x128xf32> to vector<96x128xf32>
    %48 = arith.addf %46, %47 : vector<96x128xf32>
    %cst_40 = arith.constant 0.000000e+00 : f32
    %49 = vector.broadcast %cst_40 : f32 to vector<96x128xf32>
    %50 = arith.maximumf %48, %49 : vector<96x128xf32>
    %c11_41 = arith.constant 11 : index
    %c0_42 = arith.constant 0 : index
    %51 = vector.load %arg8[%c11_41, %c0_42] : memref<112x1xf32, #tpu.memory_space<vmem>>, vector<96x1xf32>
    %cst_43 = arith.constant 5.000000e-01 : f32
    %52 = vector.broadcast %cst_43 : f32 to vector<96x1xf32>
    %53 = arith.cmpf ogt, %51, %52 : vector<96x1xf32>
    %cst_44 = arith.constant 0.000000e+00 : f32
    %54 = vector.shape_cast %53 : vector<96x1xi1> to vector<96x1xi1>
    %55 = vector.broadcast %54 : vector<96x1xi1> to vector<96x128xi1>
    %56 = vector.broadcast %cst_44 : f32 to vector<96x128xf32>
    %57 = arith.select %55, %50, %56 : vector<96x128xi1>, vector<96x128xf32>
    %58 = arith.truncf %57 : vector<96x128xf32> to vector<96x128xbf16>
    %c11_45 = arith.constant 11 : index
    %c0_46 = arith.constant 0 : index
    %59 = vector.load %arg11[%c11_45, %c0_46] : memref<120x128xbf16, #tpu.memory_space<vmem>>, vector<96x128xbf16>
    tpu.vector_store %arg11[%c11_45, %c0_46], %58 {strides = array<i32>} : memref<120x128xbf16, #tpu.memory_space<vmem>>, vector<96x128xbf16>,
    %cst_47 = arith.constant 0.000000e+00 : f32
    %60 = vector.broadcast %cst_47 : f32 to vector<96x128xf32>
    %c0_48 = arith.constant 0 : index
    %c0_49 = arith.constant 0 : index
    %61 = vector.load %arg11[%c0_48, %c0_49] : memref<120x128xbf16, #tpu.memory_space<vmem>>, vector<96x128xbf16>
    %c0_50 = arith.constant 0 : index
    %c0_51 = arith.constant 0 : index
    %c0_52 = arith.constant 0 : index
    %62 = vector.load %arg3[%c0_50, %c0_51, %c0_52] : memref<9x128x128xbf16, #tpu.memory_space<vmem>>, vector<1x128x128xbf16>
    %63 = vector.shape_cast %62 : vector<1x128x128xbf16> to vector<128x128xbf16>
    %cst_53 = arith.constant dense<0.000000e+00> : vector<96x128xf32>
    %64 = tpu.matmul %61, %63, %cst_53 {dimension_numbers = #tpu.dot_dimension_numbers<[1], [0], [0], [1], [0, 0, 1, 1], [], []>} : vector<96x128xbf16>, vector<128x128xbf16>, vector<96x128xf32> -> vector<96x128xf32>
    %65 = arith.addf %60, %64 : vector<96x128xf32>
    %c1_54 = arith.constant 1 : index
    %c0_55 = arith.constant 0 : index
    %66 = vector.load %arg11[%c1_54, %c0_55] : memref<120x128xbf16, #tpu.memory_space<vmem>>, vector<96x128xbf16>
    %c1_56 = arith.constant 1 : index
    %c0_57 = arith.constant 0 : index
    %c0_58 = arith.constant 0 : index
    %67 = vector.load %arg3[%c1_56, %c0_57, %c0_58] : memref<9x128x128xbf16, #tpu.memory_space<vmem>>, vector<1x128x128xbf16>
    %68 = vector.shape_cast %67 : vector<1x128x128xbf16> to vector<128x128xbf16>
    %cst_59 = arith.constant dense<0.000000e+00> : vector<96x128xf32>
    %69 = tpu.matmul %66, %68, %cst_59 {dimension_numbers = #tpu.dot_dimension_numbers<[1], [0], [0], [1], [0, 0, 1, 1], [], []>} : vector<96x128xbf16>, vector<128x128xbf16>, vector<96x128xf32> -> vector<96x128xf32>
    %70 = arith.addf %65, %69 : vector<96x128xf32>
    %c2_60 = arith.constant 2 : index
    %c0_61 = arith.constant 0 : index
    %71 = vector.load %arg11[%c2_60, %c0_61] : memref<120x128xbf16, #tpu.memory_space<vmem>>, vector<96x128xbf16>
    %c2_62 = arith.constant 2 : index
    %c0_63 = arith.constant 0 : index
    %c0_64 = arith.constant 0 : index
    %72 = vector.load %arg3[%c2_62, %c0_63, %c0_64] : memref<9x128x128xbf16, #tpu.memory_space<vmem>>, vector<1x128x128xbf16>
    %73 = vector.shape_cast %72 : vector<1x128x128xbf16> to vector<128x128xbf16>
    %cst_65 = arith.constant dense<0.000000e+00> : vector<96x128xf32>
    %74 = tpu.matmul %71, %73, %cst_65 {dimension_numbers = #tpu.dot_dimension_numbers<[1], [0], [0], [1], [0, 0, 1, 1], [], []>} : vector<96x128xbf16>, vector<128x128xbf16>, vector<96x128xf32> -> vector<96x128xf32>
    %75 = arith.addf %70, %74 : vector<96x128xf32>
    %c10_66 = arith.constant 10 : index
    %c0_67 = arith.constant 0 : index
    %76 = vector.load %arg11[%c10_66, %c0_67] : memref<120x128xbf16, #tpu.memory_space<vmem>>, vector<96x128xbf16>
    %c3_68 = arith.constant 3 : index
    %c0_69 = arith.constant 0 : index
    %c0_70 = arith.constant 0 : index
    %77 = vector.load %arg3[%c3_68, %c0_69, %c0_70] : memref<9x128x128xbf16, #tpu.memory_space<vmem>>, vector<1x128x128xbf16>
    %78 = vector.shape_cast %77 : vector<1x128x128xbf16> to vector<128x128xbf16>
    %cst_71 = arith.constant dense<0.000000e+00> : vector<96x128xf32>
    %79 = tpu.matmul %76, %78, %cst_71 {dimension_numbers = #tpu.dot_dimension_numbers<[1], [0], [0], [1], [0, 0, 1, 1], [], []>} : vector<96x128xbf16>, vector<128x128xbf16>, vector<96x128xf32> -> vector<96x128xf32>
    %80 = arith.addf %75, %79 : vector<96x128xf32>
    %c11_72 = arith.constant 11 : index
    %c0_73 = arith.constant 0 : index
    %81 = vector.load %arg11[%c11_72, %c0_73] : memref<120x128xbf16, #tpu.memory_space<vmem>>, vector<96x128xbf16>
    %c4 = arith.constant 4 : index
    %c0_74 = arith.constant 0 : index
    %c0_75 = arith.constant 0 : index
    %82 = vector.load %arg3[%c4, %c0_74, %c0_75] : memref<9x128x128xbf16, #tpu.memory_space<vmem>>, vector<1x128x128xbf16>
    %83 = vector.shape_cast %82 : vector<1x128x128xbf16> to vector<128x128xbf16>
    %cst_76 = arith.constant dense<0.000000e+00> : vector<96x128xf32>
    %84 = tpu.matmul %81, %83, %cst_76 {dimension_numbers = #tpu.dot_dimension_numbers<[1], [0], [0], [1], [0, 0, 1, 1], [], []>} : vector<96x128xbf16>, vector<128x128xbf16>, vector<96x128xf32> -> vector<96x128xf32>
    %85 = arith.addf %80, %84 : vector<96x128xf32>
    %c12 = arith.constant 12 : index
    %c0_77 = arith.constant 0 : index
    %86 = vector.load %arg11[%c12, %c0_77] : memref<120x128xbf16, #tpu.memory_space<vmem>>, vector<96x128xbf16>
    %c5 = arith.constant 5 : index
    %c0_78 = arith.constant 0 : index
    %c0_79 = arith.constant 0 : index
    %87 = vector.load %arg3[%c5, %c0_78, %c0_79] : memref<9x128x128xbf16, #tpu.memory_space<vmem>>, vector<1x128x128xbf16>
    %88 = vector.shape_cast %87 : vector<1x128x128xbf16> to vector<128x128xbf16>
    %cst_80 = arith.constant dense<0.000000e+00> : vector<96x128xf32>
    %89 = tpu.matmul %86, %88, %cst_80 {dimension_numbers = #tpu.dot_dimension_numbers<[1], [0], [0], [1], [0, 0, 1, 1], [], []>} : vector<96x128xbf16>, vector<128x128xbf16>, vector<96x128xf32> -> vector<96x128xf32>
    %90 = arith.addf %85, %89 : vector<96x128xf32>
    %c20 = arith.constant 20 : index
    %c0_81 = arith.constant 0 : index
    %91 = vector.load %arg11[%c20, %c0_81] : memref<120x128xbf16, #tpu.memory_space<vmem>>, vector<96x128xbf16>
    %c6 = arith.constant 6 : index
    %c0_82 = arith.constant 0 : index
    %c0_83 = arith.constant 0 : index
    %92 = vector.load %arg3[%c6, %c0_82, %c0_83] : memref<9x128x128xbf16, #tpu.memory_space<vmem>>, vector<1x128x128xbf16>
    %93 = vector.shape_cast %92 : vector<1x128x128xbf16> to vector<128x128xbf16>
    %cst_84 = arith.constant dense<0.000000e+00> : vector<96x128xf32>
    %94 = tpu.matmul %91, %93, %cst_84 {dimension_numbers = #tpu.dot_dimension_numbers<[1], [0], [0], [1], [0, 0, 1, 1], [], []>} : vector<96x128xbf16>, vector<128x128xbf16>, vector<96x128xf32> -> vector<96x128xf32>
    %95 = arith.addf %90, %94 : vector<96x128xf32>
    %c21 = arith.constant 21 : index
    %c0_85 = arith.constant 0 : index
    %96 = vector.load %arg11[%c21, %c0_85] : memref<120x128xbf16, #tpu.memory_space<vmem>>, vector<96x128xbf16>
    %c7 = arith.constant 7 : index
    %c0_86 = arith.constant 0 : index
    %c0_87 = arith.constant 0 : index
    %97 = vector.load %arg3[%c7, %c0_86, %c0_87] : memref<9x128x128xbf16, #tpu.memory_space<vmem>>, vector<1x128x128xbf16>
    %98 = vector.shape_cast %97 : vector<1x128x128xbf16> to vector<128x128xbf16>
    %cst_88 = arith.constant dense<0.000000e+00> : vector<96x128xf32>
    %99 = tpu.matmul %96, %98, %cst_88 {dimension_numbers = #tpu.dot_dimension_numbers<[1], [0], [0], [1], [0, 0, 1, 1], [], []>} : vector<96x128xbf16>, vector<128x128xbf16>, vector<96x128xf32> -> vector<96x128xf32>
    %100 = arith.addf %95, %99 : vector<96x128xf32>
    %c22 = arith.constant 22 : index
    %c0_89 = arith.constant 0 : index
    %101 = vector.load %arg11[%c22, %c0_89] : memref<120x128xbf16, #tpu.memory_space<vmem>>, vector<96x128xbf16>
    %c8 = arith.constant 8 : index
    %c0_90 = arith.constant 0 : index
    %c0_91 = arith.constant 0 : index
    %102 = vector.load %arg3[%c8, %c0_90, %c0_91] : memref<9x128x128xbf16, #tpu.memory_space<vmem>>, vector<1x128x128xbf16>
    %103 = vector.shape_cast %102 : vector<1x128x128xbf16> to vector<128x128xbf16>
    %cst_92 = arith.constant dense<0.000000e+00> : vector<96x128xf32>
    %104 = tpu.matmul %101, %103, %cst_92 {dimension_numbers = #tpu.dot_dimension_numbers<[1], [0], [0], [1], [0, 0, 1, 1], [], []>} : vector<96x128xbf16>, vector<128x128xbf16>, vector<96x128xf32> -> vector<96x128xf32>
    %105 = arith.addf %100, %104 : vector<96x128xf32>
    %c11_93 = arith.constant 11 : index
    %c0_94 = arith.constant 0 : index
    %106 = vector.load %arg10[%c11_93, %c0_94] : memref<120x128xbf16, #tpu.memory_space<vmem>>, vector<96x128xbf16>
    %c0_95 = arith.constant 0 : index
    %c0_96 = arith.constant 0 : index
    %107 = vector.load %arg4[%c0_95, %c0_96] : memref<128x128xbf16, #tpu.memory_space<vmem>>, vector<128x128xbf16>
    %cst_97 = arith.constant dense<0.000000e+00> : vector<96x128xf32>
    %108 = tpu.matmul %106, %107, %cst_97 {dimension_numbers = #tpu.dot_dimension_numbers<[1], [0], [0], [1], [0, 0, 1, 1], [], []>} : vector<96x128xbf16>, vector<128x128xbf16>, vector<96x128xf32> -> vector<96x128xf32>
    %109 = arith.addf %105, %108 : vector<96x128xf32>
    %110 = arith.truncf %109 : vector<96x128xf32> to vector<96x128xbf16>
    %c11_98 = arith.constant 11 : index
    %c0_99 = arith.constant 0 : index
    %111 = vector.load %arg9[%c11_98, %c0_99] : memref<112x128xbf16, #tpu.memory_space<vmem>>, vector<96x128xbf16>
    tpu.vector_store %arg9[%c11_98, %c0_99], %110 {strides = array<i32>} : memref<112x128xbf16, #tpu.memory_space<vmem>>, vector<96x128xbf16>,
    return
  }
  func.func @transform_0(%arg0: i32) -> (i32, i32) {
    %c0_i32 = arith.constant 0 : i32
    %c0_i32_0 = arith.constant 0 : i32
    return %arg0, %c0_i32 : i32, i32
  }
  func.func @transform_1(%arg0: i32) -> (i32, i32, i32) {
    %c0_i32 = arith.constant 0 : i32
    %c0_i32_0 = arith.constant 0 : i32
    %c0_i32_1 = arith.constant 0 : i32
    %c0_i32_2 = arith.constant 0 : i32
    return %c0_i32, %c0_i32_0, %c0_i32_1 : i32, i32, i32
  }
  func.func @transform_2(%arg0: i32) -> (i32, i32, i32) {
    %c0_i32 = arith.constant 0 : i32
    %c0_i32_0 = arith.constant 0 : i32
    %c0_i32_1 = arith.constant 0 : i32
    %c0_i32_2 = arith.constant 0 : i32
    return %c0_i32, %c0_i32_0, %c0_i32_1 : i32, i32, i32
  }
  func.func @transform_3(%arg0: i32) -> (i32, i32) {
    %c0_i32 = arith.constant 0 : i32
    %c0_i32_0 = arith.constant 0 : i32
    %c0_i32_1 = arith.constant 0 : i32
    return %c0_i32, %c0_i32_0 : i32, i32
  }
  func.func @transform_4(%arg0: i32) -> (i32, i32) {
    %c0_i32 = arith.constant 0 : i32
    %c0_i32_0 = arith.constant 0 : i32
    %c0_i32_1 = arith.constant 0 : i32
    return %c0_i32, %c0_i32_0 : i32, i32
  }
  func.func @transform_5(%arg0: i32) -> (i32, i32) {
    %c0_i32 = arith.constant 0 : i32
    %c0_i32_0 = arith.constant 0 : i32
    %c0_i32_1 = arith.constant 0 : i32
    return %c0_i32, %c0_i32_0 : i32, i32
  }
  func.func @transform_6(%arg0: i32) -> (i32, i32) {
    %c0_i32 = arith.constant 0 : i32
    %c0_i32_0 = arith.constant 0 : i32
    %c0_i32_1 = arith.constant 0 : i32
    return %c0_i32, %c0_i32_0 : i32, i32
  }
  func.func @transform_7(%arg0: i32) -> (i32, i32) {
    %c0_i32 = arith.constant 0 : i32
    %c0_i32_0 = arith.constant 0 : i32
    %c0_i32_1 = arith.constant 0 : i32
    return %c0_i32, %c0_i32_0 : i32, i32
  }
  func.func @transform_8(%arg0: i32) -> (i32, i32) {
    %c0_i32 = arith.constant 0 : i32
    %c0_i32_0 = arith.constant 0 : i32
    return %arg0, %c0_i32 : i32, i32
  }
}

module attributes {stable_mosaic.version = 11 : i64} {
  func.func @kernel(%arg0: i32, %arg1: memref<112x128xbf16, #tpu.memory_space<vmem>>, %arg2: memref<9x128x128xbf16, #tpu.memory_space<vmem>>, %arg3: memref<9x128x128xbf16, #tpu.memory_space<vmem>>, %arg4: memref<1x128xf32, #tpu.memory_space<vmem>>, %arg5: memref<1x128xf32, #tpu.memory_space<vmem>>, %arg6: memref<1x128xf32, #tpu.memory_space<vmem>>, %arg7: memref<112x1xf32, #tpu.memory_space<vmem>>, %arg8: memref<112x128xbf16, #tpu.memory_space<vmem>>, %arg9: memref<120x128xbf16, #tpu.memory_space<vmem>>, %arg10: memref<120x128xbf16, #tpu.memory_space<vmem>>) attributes {dimension_semantics = [#tpu.dimension_semantics<parallel>], iteration_bounds = array<i64: 2>, scalar_prefetch = 0 : i64, scratch_operands = 2 : i64, tpu.core_type = #tpu.core_type<tc>, window_params = [{transform_indices = @transform_0, window_bounds = array<i64: 112, 128>}, {pipeline_mode = #tpu.pipeline_mode<synchronous>, transform_indices = @transform_1, window_bounds = array<i64: 9, 128, 128>}, {pipeline_mode = #tpu.pipeline_mode<synchronous>, transform_indices = @transform_2, window_bounds = array<i64: 9, 128, 128>}, {pipeline_mode = #tpu.pipeline_mode<synchronous>, transform_indices = @transform_3, window_bounds = array<i64: 1, 128>}, {pipeline_mode = #tpu.pipeline_mode<synchronous>, transform_indices = @transform_4, window_bounds = array<i64: 1, 128>}, {pipeline_mode = #tpu.pipeline_mode<synchronous>, transform_indices = @transform_5, window_bounds = array<i64: 1, 128>}, {pipeline_mode = #tpu.pipeline_mode<synchronous>, transform_indices = @transform_6, window_bounds = array<i64: 112, 1>}, {transform_indices = @transform_7, window_bounds = array<i64: 112, 128>}]} {
    %cst = arith.constant 0.000000e+00 : bf16
    %0 = vector.broadcast %cst : bf16 to vector<24x128xbf16>
    %c96 = arith.constant 96 : index
    %c0 = arith.constant 0 : index
    %1 = vector.load %arg9[%c96, %c0] : memref<120x128xbf16, #tpu.memory_space<vmem>>, vector<24x128xbf16>
    tpu.vector_store %arg9[%c96, %c0], %0 {strides = array<i32>} : memref<120x128xbf16, #tpu.memory_space<vmem>>, vector<24x128xbf16>,
    %cst_0 = arith.constant 0.000000e+00 : bf16
    %2 = vector.broadcast %cst_0 : bf16 to vector<11x128xbf16>
    %c0_1 = arith.constant 0 : index
    %c0_2 = arith.constant 0 : index
    %3 = vector.load %arg10[%c0_1, %c0_2] : memref<120x128xbf16, #tpu.memory_space<vmem>>, vector<11x128xbf16>
    tpu.vector_store %arg10[%c0_1, %c0_2], %2 {strides = array<i32>} : memref<120x128xbf16, #tpu.memory_space<vmem>>, vector<11x128xbf16>,
    %cst_3 = arith.constant 0.000000e+00 : bf16
    %4 = vector.broadcast %cst_3 : bf16 to vector<13x128xbf16>
    %c107 = arith.constant 107 : index
    %c0_4 = arith.constant 0 : index
    %5 = vector.load %arg10[%c107, %c0_4] : memref<120x128xbf16, #tpu.memory_space<vmem>>, vector<13x128xbf16>
    tpu.vector_store %arg10[%c107, %c0_4], %4 {strides = array<i32>} : memref<120x128xbf16, #tpu.memory_space<vmem>>, vector<13x128xbf16>,
    %c0_5 = arith.constant 0 : index
    %c0_6 = arith.constant 0 : index
    %6 = vector.load %arg4[%c0_5, %c0_6] : memref<1x128xf32, #tpu.memory_space<vmem>>, vector<1x128xf32>
    %c0_7 = arith.constant 0 : index
    %c0_8 = arith.constant 0 : index
    %7 = vector.load %arg5[%c0_7, %c0_8] : memref<1x128xf32, #tpu.memory_space<vmem>>, vector<1x128xf32>
    %c0_9 = arith.constant 0 : index
    %c0_10 = arith.constant 0 : index
    %8 = vector.load %arg6[%c0_9, %c0_10] : memref<1x128xf32, #tpu.memory_space<vmem>>, vector<1x128xf32>
    %c0_11 = arith.constant 0 : index
    %c0_12 = arith.constant 0 : index
    %9 = vector.load %arg1[%c0_11, %c0_12] : memref<112x128xbf16, #tpu.memory_space<vmem>>, vector<96x128xbf16>
    %10 = arith.extf %9 : vector<96x128xbf16> to vector<96x128xf32>
    %c0_13 = arith.constant 0 : index
    %c0_14 = arith.constant 0 : index
    %11 = vector.load %arg7[%c0_13, %c0_14] : memref<112x1xf32, #tpu.memory_space<vmem>>, vector<96x1xf32>
    %12 = vector.broadcast %6 : vector<1x128xf32> to vector<96x128xf32>
    %13 = arith.mulf %10, %12 : vector<96x128xf32>
    %14 = vector.broadcast %7 : vector<1x128xf32> to vector<96x128xf32>
    %15 = arith.addf %13, %14 : vector<96x128xf32>
    %cst_15 = arith.constant 0.000000e+00 : f32
    %16 = vector.broadcast %cst_15 : f32 to vector<96x128xf32>
    %17 = arith.maximumf %15, %16 : vector<96x128xf32>
    %cst_16 = arith.constant 5.000000e-01 : f32
    %18 = vector.broadcast %cst_16 : f32 to vector<96x1xf32>
    %19 = arith.cmpf ogt, %11, %18 : vector<96x1xf32>
    %cst_17 = arith.constant 0.000000e+00 : f32
    %20 = vector.shape_cast %19 : vector<96x1xi1> to vector<96x1xi1>
    %21 = vector.broadcast %20 : vector<96x1xi1> to vector<96x128xi1>
    %22 = vector.broadcast %cst_17 : f32 to vector<96x128xf32>
    %23 = arith.select %21, %17, %22 : vector<96x128xi1>, vector<96x128xf32>
    %24 = arith.truncf %23 : vector<96x128xf32> to vector<96x128xbf16>
    %c0_18 = arith.constant 0 : index
    %c0_19 = arith.constant 0 : index
    %25 = vector.load %arg9[%c0_18, %c0_19] : memref<120x128xbf16, #tpu.memory_space<vmem>>, vector<96x128xbf16>
    tpu.vector_store %arg9[%c0_18, %c0_19], %24 {strides = array<i32>} : memref<120x128xbf16, #tpu.memory_space<vmem>>, vector<96x128xbf16>,
    %cst_20 = arith.constant 0.000000e+00 : f32
    %26 = vector.broadcast %cst_20 : f32 to vector<96x128xf32>
    %c0_21 = arith.constant 0 : index
    %c0_22 = arith.constant 0 : index
    %27 = vector.load %arg9[%c0_21, %c0_22] : memref<120x128xbf16, #tpu.memory_space<vmem>>, vector<96x128xbf16>
    %c0_23 = arith.constant 0 : index
    %c0_24 = arith.constant 0 : index
    %c0_25 = arith.constant 0 : index
    %28 = vector.load %arg2[%c0_23, %c0_24, %c0_25] : memref<9x128x128xbf16, #tpu.memory_space<vmem>>, vector<1x128x128xbf16>
    %29 = vector.shape_cast %28 : vector<1x128x128xbf16> to vector<128x128xbf16>
    %cst_26 = arith.constant dense<0.000000e+00> : vector<96x128xf32>
    %30 = tpu.matmul %27, %29, %cst_26 {dimension_numbers = #tpu.dot_dimension_numbers<[1], [0], [0], [1], [0, 0, 1, 1], [], []>} : vector<96x128xbf16>, vector<128x128xbf16>, vector<96x128xf32> -> vector<96x128xf32>
    %31 = arith.addf %26, %30 : vector<96x128xf32>
    %c1 = arith.constant 1 : index
    %c0_27 = arith.constant 0 : index
    %32 = vector.load %arg9[%c1, %c0_27] : memref<120x128xbf16, #tpu.memory_space<vmem>>, vector<96x128xbf16>
    %c1_28 = arith.constant 1 : index
    %c0_29 = arith.constant 0 : index
    %c0_30 = arith.constant 0 : index
    %33 = vector.load %arg2[%c1_28, %c0_29, %c0_30] : memref<9x128x128xbf16, #tpu.memory_space<vmem>>, vector<1x128x128xbf16>
    %34 = vector.shape_cast %33 : vector<1x128x128xbf16> to vector<128x128xbf16>
    %cst_31 = arith.constant dense<0.000000e+00> : vector<96x128xf32>
    %35 = tpu.matmul %32, %34, %cst_31 {dimension_numbers = #tpu.dot_dimension_numbers<[1], [0], [0], [1], [0, 0, 1, 1], [], []>} : vector<96x128xbf16>, vector<128x128xbf16>, vector<96x128xf32> -> vector<96x128xf32>
    %36 = arith.addf %31, %35 : vector<96x128xf32>
    %c2 = arith.constant 2 : index
    %c0_32 = arith.constant 0 : index
    %37 = vector.load %arg9[%c2, %c0_32] : memref<120x128xbf16, #tpu.memory_space<vmem>>, vector<96x128xbf16>
    %c2_33 = arith.constant 2 : index
    %c0_34 = arith.constant 0 : index
    %c0_35 = arith.constant 0 : index
    %38 = vector.load %arg2[%c2_33, %c0_34, %c0_35] : memref<9x128x128xbf16, #tpu.memory_space<vmem>>, vector<1x128x128xbf16>
    %39 = vector.shape_cast %38 : vector<1x128x128xbf16> to vector<128x128xbf16>
    %cst_36 = arith.constant dense<0.000000e+00> : vector<96x128xf32>
    %40 = tpu.matmul %37, %39, %cst_36 {dimension_numbers = #tpu.dot_dimension_numbers<[1], [0], [0], [1], [0, 0, 1, 1], [], []>} : vector<96x128xbf16>, vector<128x128xbf16>, vector<96x128xf32> -> vector<96x128xf32>
    %41 = arith.addf %36, %40 : vector<96x128xf32>
    %c10 = arith.constant 10 : index
    %c0_37 = arith.constant 0 : index
    %42 = vector.load %arg9[%c10, %c0_37] : memref<120x128xbf16, #tpu.memory_space<vmem>>, vector<96x128xbf16>
    %c3 = arith.constant 3 : index
    %c0_38 = arith.constant 0 : index
    %c0_39 = arith.constant 0 : index
    %43 = vector.load %arg2[%c3, %c0_38, %c0_39] : memref<9x128x128xbf16, #tpu.memory_space<vmem>>, vector<1x128x128xbf16>
    %44 = vector.shape_cast %43 : vector<1x128x128xbf16> to vector<128x128xbf16>
    %cst_40 = arith.constant dense<0.000000e+00> : vector<96x128xf32>
    %45 = tpu.matmul %42, %44, %cst_40 {dimension_numbers = #tpu.dot_dimension_numbers<[1], [0], [0], [1], [0, 0, 1, 1], [], []>} : vector<96x128xbf16>, vector<128x128xbf16>, vector<96x128xf32> -> vector<96x128xf32>
    %46 = arith.addf %41, %45 : vector<96x128xf32>
    %c11 = arith.constant 11 : index
    %c0_41 = arith.constant 0 : index
    %47 = vector.load %arg9[%c11, %c0_41] : memref<120x128xbf16, #tpu.memory_space<vmem>>, vector<96x128xbf16>
    %c4 = arith.constant 4 : index
    %c0_42 = arith.constant 0 : index
    %c0_43 = arith.constant 0 : index
    %48 = vector.load %arg2[%c4, %c0_42, %c0_43] : memref<9x128x128xbf16, #tpu.memory_space<vmem>>, vector<1x128x128xbf16>
    %49 = vector.shape_cast %48 : vector<1x128x128xbf16> to vector<128x128xbf16>
    %cst_44 = arith.constant dense<0.000000e+00> : vector<96x128xf32>
    %50 = tpu.matmul %47, %49, %cst_44 {dimension_numbers = #tpu.dot_dimension_numbers<[1], [0], [0], [1], [0, 0, 1, 1], [], []>} : vector<96x128xbf16>, vector<128x128xbf16>, vector<96x128xf32> -> vector<96x128xf32>
    %51 = arith.addf %46, %50 : vector<96x128xf32>
    %c12 = arith.constant 12 : index
    %c0_45 = arith.constant 0 : index
    %52 = vector.load %arg9[%c12, %c0_45] : memref<120x128xbf16, #tpu.memory_space<vmem>>, vector<96x128xbf16>
    %c5 = arith.constant 5 : index
    %c0_46 = arith.constant 0 : index
    %c0_47 = arith.constant 0 : index
    %53 = vector.load %arg2[%c5, %c0_46, %c0_47] : memref<9x128x128xbf16, #tpu.memory_space<vmem>>, vector<1x128x128xbf16>
    %54 = vector.shape_cast %53 : vector<1x128x128xbf16> to vector<128x128xbf16>
    %cst_48 = arith.constant dense<0.000000e+00> : vector<96x128xf32>
    %55 = tpu.matmul %52, %54, %cst_48 {dimension_numbers = #tpu.dot_dimension_numbers<[1], [0], [0], [1], [0, 0, 1, 1], [], []>} : vector<96x128xbf16>, vector<128x128xbf16>, vector<96x128xf32> -> vector<96x128xf32>
    %56 = arith.addf %51, %55 : vector<96x128xf32>
    %c20 = arith.constant 20 : index
    %c0_49 = arith.constant 0 : index
    %57 = vector.load %arg9[%c20, %c0_49] : memref<120x128xbf16, #tpu.memory_space<vmem>>, vector<96x128xbf16>
    %c6 = arith.constant 6 : index
    %c0_50 = arith.constant 0 : index
    %c0_51 = arith.constant 0 : index
    %58 = vector.load %arg2[%c6, %c0_50, %c0_51] : memref<9x128x128xbf16, #tpu.memory_space<vmem>>, vector<1x128x128xbf16>
    %59 = vector.shape_cast %58 : vector<1x128x128xbf16> to vector<128x128xbf16>
    %cst_52 = arith.constant dense<0.000000e+00> : vector<96x128xf32>
    %60 = tpu.matmul %57, %59, %cst_52 {dimension_numbers = #tpu.dot_dimension_numbers<[1], [0], [0], [1], [0, 0, 1, 1], [], []>} : vector<96x128xbf16>, vector<128x128xbf16>, vector<96x128xf32> -> vector<96x128xf32>
    %61 = arith.addf %56, %60 : vector<96x128xf32>
    %c21 = arith.constant 21 : index
    %c0_53 = arith.constant 0 : index
    %62 = vector.load %arg9[%c21, %c0_53] : memref<120x128xbf16, #tpu.memory_space<vmem>>, vector<96x128xbf16>
    %c7 = arith.constant 7 : index
    %c0_54 = arith.constant 0 : index
    %c0_55 = arith.constant 0 : index
    %63 = vector.load %arg2[%c7, %c0_54, %c0_55] : memref<9x128x128xbf16, #tpu.memory_space<vmem>>, vector<1x128x128xbf16>
    %64 = vector.shape_cast %63 : vector<1x128x128xbf16> to vector<128x128xbf16>
    %cst_56 = arith.constant dense<0.000000e+00> : vector<96x128xf32>
    %65 = tpu.matmul %62, %64, %cst_56 {dimension_numbers = #tpu.dot_dimension_numbers<[1], [0], [0], [1], [0, 0, 1, 1], [], []>} : vector<96x128xbf16>, vector<128x128xbf16>, vector<96x128xf32> -> vector<96x128xf32>
    %66 = arith.addf %61, %65 : vector<96x128xf32>
    %c22 = arith.constant 22 : index
    %c0_57 = arith.constant 0 : index
    %67 = vector.load %arg9[%c22, %c0_57] : memref<120x128xbf16, #tpu.memory_space<vmem>>, vector<96x128xbf16>
    %c8 = arith.constant 8 : index
    %c0_58 = arith.constant 0 : index
    %c0_59 = arith.constant 0 : index
    %68 = vector.load %arg2[%c8, %c0_58, %c0_59] : memref<9x128x128xbf16, #tpu.memory_space<vmem>>, vector<1x128x128xbf16>
    %69 = vector.shape_cast %68 : vector<1x128x128xbf16> to vector<128x128xbf16>
    %cst_60 = arith.constant dense<0.000000e+00> : vector<96x128xf32>
    %70 = tpu.matmul %67, %69, %cst_60 {dimension_numbers = #tpu.dot_dimension_numbers<[1], [0], [0], [1], [0, 0, 1, 1], [], []>} : vector<96x128xbf16>, vector<128x128xbf16>, vector<96x128xf32> -> vector<96x128xf32>
    %71 = arith.addf %66, %70 : vector<96x128xf32>
    %72 = vector.broadcast %8 : vector<1x128xf32> to vector<96x128xf32>
    %73 = arith.addf %71, %72 : vector<96x128xf32>
    %cst_61 = arith.constant 0.000000e+00 : f32
    %74 = vector.broadcast %cst_61 : f32 to vector<96x128xf32>
    %75 = arith.maximumf %73, %74 : vector<96x128xf32>
    %c11_62 = arith.constant 11 : index
    %c0_63 = arith.constant 0 : index
    %76 = vector.load %arg7[%c11_62, %c0_63] : memref<112x1xf32, #tpu.memory_space<vmem>>, vector<96x1xf32>
    %cst_64 = arith.constant 5.000000e-01 : f32
    %77 = vector.broadcast %cst_64 : f32 to vector<96x1xf32>
    %78 = arith.cmpf ogt, %76, %77 : vector<96x1xf32>
    %cst_65 = arith.constant 0.000000e+00 : f32
    %79 = vector.shape_cast %78 : vector<96x1xi1> to vector<96x1xi1>
    %80 = vector.broadcast %79 : vector<96x1xi1> to vector<96x128xi1>
    %81 = vector.broadcast %cst_65 : f32 to vector<96x128xf32>
    %82 = arith.select %80, %75, %81 : vector<96x128xi1>, vector<96x128xf32>
    %83 = arith.truncf %82 : vector<96x128xf32> to vector<96x128xbf16>
    %c11_66 = arith.constant 11 : index
    %c0_67 = arith.constant 0 : index
    %84 = vector.load %arg10[%c11_66, %c0_67] : memref<120x128xbf16, #tpu.memory_space<vmem>>, vector<96x128xbf16>
    tpu.vector_store %arg10[%c11_66, %c0_67], %83 {strides = array<i32>} : memref<120x128xbf16, #tpu.memory_space<vmem>>, vector<96x128xbf16>,
    %cst_68 = arith.constant 0.000000e+00 : f32
    %85 = vector.broadcast %cst_68 : f32 to vector<96x128xf32>
    %c0_69 = arith.constant 0 : index
    %c0_70 = arith.constant 0 : index
    %86 = vector.load %arg10[%c0_69, %c0_70] : memref<120x128xbf16, #tpu.memory_space<vmem>>, vector<96x128xbf16>
    %c0_71 = arith.constant 0 : index
    %c0_72 = arith.constant 0 : index
    %c0_73 = arith.constant 0 : index
    %87 = vector.load %arg3[%c0_71, %c0_72, %c0_73] : memref<9x128x128xbf16, #tpu.memory_space<vmem>>, vector<1x128x128xbf16>
    %88 = vector.shape_cast %87 : vector<1x128x128xbf16> to vector<128x128xbf16>
    %cst_74 = arith.constant dense<0.000000e+00> : vector<96x128xf32>
    %89 = tpu.matmul %86, %88, %cst_74 {dimension_numbers = #tpu.dot_dimension_numbers<[1], [0], [0], [1], [0, 0, 1, 1], [], []>} : vector<96x128xbf16>, vector<128x128xbf16>, vector<96x128xf32> -> vector<96x128xf32>
    %90 = arith.addf %85, %89 : vector<96x128xf32>
    %c1_75 = arith.constant 1 : index
    %c0_76 = arith.constant 0 : index
    %91 = vector.load %arg10[%c1_75, %c0_76] : memref<120x128xbf16, #tpu.memory_space<vmem>>, vector<96x128xbf16>
    %c1_77 = arith.constant 1 : index
    %c0_78 = arith.constant 0 : index
    %c0_79 = arith.constant 0 : index
    %92 = vector.load %arg3[%c1_77, %c0_78, %c0_79] : memref<9x128x128xbf16, #tpu.memory_space<vmem>>, vector<1x128x128xbf16>
    %93 = vector.shape_cast %92 : vector<1x128x128xbf16> to vector<128x128xbf16>
    %cst_80 = arith.constant dense<0.000000e+00> : vector<96x128xf32>
    %94 = tpu.matmul %91, %93, %cst_80 {dimension_numbers = #tpu.dot_dimension_numbers<[1], [0], [0], [1], [0, 0, 1, 1], [], []>} : vector<96x128xbf16>, vector<128x128xbf16>, vector<96x128xf32> -> vector<96x128xf32>
    %95 = arith.addf %90, %94 : vector<96x128xf32>
    %c2_81 = arith.constant 2 : index
    %c0_82 = arith.constant 0 : index
    %96 = vector.load %arg10[%c2_81, %c0_82] : memref<120x128xbf16, #tpu.memory_space<vmem>>, vector<96x128xbf16>
    %c2_83 = arith.constant 2 : index
    %c0_84 = arith.constant 0 : index
    %c0_85 = arith.constant 0 : index
    %97 = vector.load %arg3[%c2_83, %c0_84, %c0_85] : memref<9x128x128xbf16, #tpu.memory_space<vmem>>, vector<1x128x128xbf16>
    %98 = vector.shape_cast %97 : vector<1x128x128xbf16> to vector<128x128xbf16>
    %cst_86 = arith.constant dense<0.000000e+00> : vector<96x128xf32>
    %99 = tpu.matmul %96, %98, %cst_86 {dimension_numbers = #tpu.dot_dimension_numbers<[1], [0], [0], [1], [0, 0, 1, 1], [], []>} : vector<96x128xbf16>, vector<128x128xbf16>, vector<96x128xf32> -> vector<96x128xf32>
    %100 = arith.addf %95, %99 : vector<96x128xf32>
    %c10_87 = arith.constant 10 : index
    %c0_88 = arith.constant 0 : index
    %101 = vector.load %arg10[%c10_87, %c0_88] : memref<120x128xbf16, #tpu.memory_space<vmem>>, vector<96x128xbf16>
    %c3_89 = arith.constant 3 : index
    %c0_90 = arith.constant 0 : index
    %c0_91 = arith.constant 0 : index
    %102 = vector.load %arg3[%c3_89, %c0_90, %c0_91] : memref<9x128x128xbf16, #tpu.memory_space<vmem>>, vector<1x128x128xbf16>
    %103 = vector.shape_cast %102 : vector<1x128x128xbf16> to vector<128x128xbf16>
    %cst_92 = arith.constant dense<0.000000e+00> : vector<96x128xf32>
    %104 = tpu.matmul %101, %103, %cst_92 {dimension_numbers = #tpu.dot_dimension_numbers<[1], [0], [0], [1], [0, 0, 1, 1], [], []>} : vector<96x128xbf16>, vector<128x128xbf16>, vector<96x128xf32> -> vector<96x128xf32>
    %105 = arith.addf %100, %104 : vector<96x128xf32>
    %c11_93 = arith.constant 11 : index
    %c0_94 = arith.constant 0 : index
    %106 = vector.load %arg10[%c11_93, %c0_94] : memref<120x128xbf16, #tpu.memory_space<vmem>>, vector<96x128xbf16>
    %c4_95 = arith.constant 4 : index
    %c0_96 = arith.constant 0 : index
    %c0_97 = arith.constant 0 : index
    %107 = vector.load %arg3[%c4_95, %c0_96, %c0_97] : memref<9x128x128xbf16, #tpu.memory_space<vmem>>, vector<1x128x128xbf16>
    %108 = vector.shape_cast %107 : vector<1x128x128xbf16> to vector<128x128xbf16>
    %cst_98 = arith.constant dense<0.000000e+00> : vector<96x128xf32>
    %109 = tpu.matmul %106, %108, %cst_98 {dimension_numbers = #tpu.dot_dimension_numbers<[1], [0], [0], [1], [0, 0, 1, 1], [], []>} : vector<96x128xbf16>, vector<128x128xbf16>, vector<96x128xf32> -> vector<96x128xf32>
    %110 = arith.addf %105, %109 : vector<96x128xf32>
    %c12_99 = arith.constant 12 : index
    %c0_100 = arith.constant 0 : index
    %111 = vector.load %arg10[%c12_99, %c0_100] : memref<120x128xbf16, #tpu.memory_space<vmem>>, vector<96x128xbf16>
    %c5_101 = arith.constant 5 : index
    %c0_102 = arith.constant 0 : index
    %c0_103 = arith.constant 0 : index
    %112 = vector.load %arg3[%c5_101, %c0_102, %c0_103] : memref<9x128x128xbf16, #tpu.memory_space<vmem>>, vector<1x128x128xbf16>
    %113 = vector.shape_cast %112 : vector<1x128x128xbf16> to vector<128x128xbf16>
    %cst_104 = arith.constant dense<0.000000e+00> : vector<96x128xf32>
    %114 = tpu.matmul %111, %113, %cst_104 {dimension_numbers = #tpu.dot_dimension_numbers<[1], [0], [0], [1], [0, 0, 1, 1], [], []>} : vector<96x128xbf16>, vector<128x128xbf16>, vector<96x128xf32> -> vector<96x128xf32>
    %115 = arith.addf %110, %114 : vector<96x128xf32>
    %c20_105 = arith.constant 20 : index
    %c0_106 = arith.constant 0 : index
    %116 = vector.load %arg10[%c20_105, %c0_106] : memref<120x128xbf16, #tpu.memory_space<vmem>>, vector<96x128xbf16>
    %c6_107 = arith.constant 6 : index
    %c0_108 = arith.constant 0 : index
    %c0_109 = arith.constant 0 : index
    %117 = vector.load %arg3[%c6_107, %c0_108, %c0_109] : memref<9x128x128xbf16, #tpu.memory_space<vmem>>, vector<1x128x128xbf16>
    %118 = vector.shape_cast %117 : vector<1x128x128xbf16> to vector<128x128xbf16>
    %cst_110 = arith.constant dense<0.000000e+00> : vector<96x128xf32>
    %119 = tpu.matmul %116, %118, %cst_110 {dimension_numbers = #tpu.dot_dimension_numbers<[1], [0], [0], [1], [0, 0, 1, 1], [], []>} : vector<96x128xbf16>, vector<128x128xbf16>, vector<96x128xf32> -> vector<96x128xf32>
    %120 = arith.addf %115, %119 : vector<96x128xf32>
    %c21_111 = arith.constant 21 : index
    %c0_112 = arith.constant 0 : index
    %121 = vector.load %arg10[%c21_111, %c0_112] : memref<120x128xbf16, #tpu.memory_space<vmem>>, vector<96x128xbf16>
    %c7_113 = arith.constant 7 : index
    %c0_114 = arith.constant 0 : index
    %c0_115 = arith.constant 0 : index
    %122 = vector.load %arg3[%c7_113, %c0_114, %c0_115] : memref<9x128x128xbf16, #tpu.memory_space<vmem>>, vector<1x128x128xbf16>
    %123 = vector.shape_cast %122 : vector<1x128x128xbf16> to vector<128x128xbf16>
    %cst_116 = arith.constant dense<0.000000e+00> : vector<96x128xf32>
    %124 = tpu.matmul %121, %123, %cst_116 {dimension_numbers = #tpu.dot_dimension_numbers<[1], [0], [0], [1], [0, 0, 1, 1], [], []>} : vector<96x128xbf16>, vector<128x128xbf16>, vector<96x128xf32> -> vector<96x128xf32>
    %125 = arith.addf %120, %124 : vector<96x128xf32>
    %c22_117 = arith.constant 22 : index
    %c0_118 = arith.constant 0 : index
    %126 = vector.load %arg10[%c22_117, %c0_118] : memref<120x128xbf16, #tpu.memory_space<vmem>>, vector<96x128xbf16>
    %c8_119 = arith.constant 8 : index
    %c0_120 = arith.constant 0 : index
    %c0_121 = arith.constant 0 : index
    %127 = vector.load %arg3[%c8_119, %c0_120, %c0_121] : memref<9x128x128xbf16, #tpu.memory_space<vmem>>, vector<1x128x128xbf16>
    %128 = vector.shape_cast %127 : vector<1x128x128xbf16> to vector<128x128xbf16>
    %cst_122 = arith.constant dense<0.000000e+00> : vector<96x128xf32>
    %129 = tpu.matmul %126, %128, %cst_122 {dimension_numbers = #tpu.dot_dimension_numbers<[1], [0], [0], [1], [0, 0, 1, 1], [], []>} : vector<96x128xbf16>, vector<128x128xbf16>, vector<96x128xf32> -> vector<96x128xf32>
    %130 = arith.addf %125, %129 : vector<96x128xf32>
    %c11_123 = arith.constant 11 : index
    %c0_124 = arith.constant 0 : index
    %131 = vector.load %arg1[%c11_123, %c0_124] : memref<112x128xbf16, #tpu.memory_space<vmem>>, vector<96x128xbf16>
    %132 = arith.extf %131 : vector<96x128xbf16> to vector<96x128xf32>
    %133 = arith.addf %130, %132 : vector<96x128xf32>
    %134 = arith.truncf %133 : vector<96x128xf32> to vector<96x128xbf16>
    %c11_125 = arith.constant 11 : index
    %c0_126 = arith.constant 0 : index
    %135 = vector.load %arg8[%c11_125, %c0_126] : memref<112x128xbf16, #tpu.memory_space<vmem>>, vector<96x128xbf16>
    tpu.vector_store %arg8[%c11_125, %c0_126], %134 {strides = array<i32>} : memref<112x128xbf16, #tpu.memory_space<vmem>>, vector<96x128xbf16>,
    return
  }
  func.func @transform_0(%arg0: i32) -> (i32, i32) {
    %c0_i32 = arith.constant 0 : i32
    %c0_i32_0 = arith.constant 0 : i32
    return %arg0, %c0_i32 : i32, i32
  }
  func.func @transform_1(%arg0: i32) -> (i32, i32, i32) {
    %c0_i32 = arith.constant 0 : i32
    %c0_i32_0 = arith.constant 0 : i32
    %c0_i32_1 = arith.constant 0 : i32
    %c0_i32_2 = arith.constant 0 : i32
    return %c0_i32, %c0_i32_0, %c0_i32_1 : i32, i32, i32
  }
  func.func @transform_2(%arg0: i32) -> (i32, i32, i32) {
    %c0_i32 = arith.constant 0 : i32
    %c0_i32_0 = arith.constant 0 : i32
    %c0_i32_1 = arith.constant 0 : i32
    %c0_i32_2 = arith.constant 0 : i32
    return %c0_i32, %c0_i32_0, %c0_i32_1 : i32, i32, i32
  }
  func.func @transform_3(%arg0: i32) -> (i32, i32) {
    %c0_i32 = arith.constant 0 : i32
    %c0_i32_0 = arith.constant 0 : i32
    %c0_i32_1 = arith.constant 0 : i32
    return %c0_i32, %c0_i32_0 : i32, i32
  }
  func.func @transform_4(%arg0: i32) -> (i32, i32) {
    %c0_i32 = arith.constant 0 : i32
    %c0_i32_0 = arith.constant 0 : i32
    %c0_i32_1 = arith.constant 0 : i32
    return %c0_i32, %c0_i32_0 : i32, i32
  }
  func.func @transform_5(%arg0: i32) -> (i32, i32) {
    %c0_i32 = arith.constant 0 : i32
    %c0_i32_0 = arith.constant 0 : i32
    %c0_i32_1 = arith.constant 0 : i32
    return %c0_i32, %c0_i32_0 : i32, i32
  }
  func.func @transform_6(%arg0: i32) -> (i32, i32) {
    %c0_i32 = arith.constant 0 : i32
    %c0_i32_0 = arith.constant 0 : i32
    %c0_i32_1 = arith.constant 0 : i32
    return %c0_i32, %c0_i32_0 : i32, i32
  }
  func.func @transform_7(%arg0: i32) -> (i32, i32) {
    %c0_i32 = arith.constant 0 : i32
    %c0_i32_0 = arith.constant 0 : i32
    return %arg0, %c0_i32 : i32, i32
  }
}

</mosaic_0001>

<llo_original>
// kernel: network_block_forward.2
$region0: #{network_block_forward.2}
  #allocation0 [shape = 'u32[]', space=smem, size = 0x4, offset = 0x4, fixed_abs, tag = 'smem constant byte address 0x4 - core index']
  #allocation1 [shape = 'u32[72,128]{1,0:T(1,128)}', space=vmem, size = 0x9000, scoped, tag = 'internal scratch']
  #allocation2 [shape = 'bf16[120,128]{1,0:T(8,128)(2,1)}', space=vmem, size = 0x7800, scoped, tag = 'scratch operand']
  #allocation3 [shape = 'bf16[120,128]{1,0:T(8,128)(2,1)}', space=vmem, size = 0x7800, scoped, tag = 'scratch operand']
  %s0 = inlined_call_operand.vmem [shape: bf16[224,128], index: 0, kind: input, shape index: {}]
  %s1 = inlined_call_operand.vmem [shape: bf16[4,128,128], index: 1, kind: input, shape index: {}]
  %s2 = inlined_call_operand.vmem [shape: bf16[9,128,128], index: 2, kind: input, shape index: {}]
  %s3 = inlined_call_operand.vmem [shape: bf16[128,128], index: 3, kind: input, shape index: {}]
  %s4 = inlined_call_operand.vmem [shape: f32[1,128], index: 4, kind: input, shape index: {}]
  %s5 = inlined_call_operand.vmem [shape: f32[1,128], index: 5, kind: input, shape index: {}, may-alias: {5,6}]
  %s6 = inlined_call_operand.vmem [shape: f32[1,128], index: 6, kind: input, shape index: {}, may-alias: {5,6}]
  %s7 = inlined_call_operand.vmem [shape: f32[112,1], index: 7, kind: input, shape index: {}]
  %s8 = inlined_call_operand.vmem [shape: bf16[224,128], index: 8, kind: output, shape index: {}]
  %s9 = sld [smem:[#allocation0]]
  $region65: #{network_block_forward.2} parent=0
    _
  %s11 = ssub.s32 1, %s9
  %s12 = scalar_select 0, %s11, %s9
  loop: start=0, step=1, limit=4
  $region2: #{network_block_forward.2} parent=0 // loop_pre_header
    _
  $region3: #{network_block_forward.2} parent=0 // loop_header
    %s14 = sphi 0, %s18
    %p15 = scmp.ge.s32.totalorder %s14, 4
    %s24 = sphi 0, %s26
    %s27 = sphi 0, %s24
    %s28 = sphi 0, %s27
    %s44 = sphi 0, %s28
    %s48 = sphi 0, %s48
    %s50 = sphi 0, %s48
    %s51 = sphi 0, %s50
    %s65 = sphi 0, %s51
    %s69 = sphi 0, %s69
    %s71 = sphi 0, %s69
    %s72 = sphi 0, %s71
    %s86 = sphi 0, %s72
    %s90 = sphi 0, %s90
    %s92 = sphi 0, %s90
    %s93 = sphi 0, %s92
    %s107 = sphi 0, %s93
    %s111 = sphi 0, %s111
    %s113 = sphi 0, %s111
    %s114 = sphi 0, %s113
    %s128 = sphi 0, %s114
    %s132 = sphi 0, %s132
    %s134 = sphi 0, %s132
    %s135 = sphi 0, %s134
    %s149 = sphi 0, %s135
    %s153 = sphi 0, %s153
    %s155 = sphi 0, %s153
    %s156 = sphi 0, %s155
    %s170 = sphi 0, %s156
    %s174 = sphi 0, %s174
    %s176 = sphi 0, %s174
    %s177 = sphi 0, %s176
    %s191 = sphi 0, %s177
    %s197 = sphi 0, %s199
    %s200 = sphi 0, %s197
    %s201 = sphi 0, %s200
    %s217 = sphi 0, %s201
  $region4: #{network_block_forward.2} parent=0 // loop_header_branch
    %17 = sbr.rel (%p15) target = $region8
  $region5: #{network_block_forward.2} parent=0 // loop_body
    %s19 = ssub.s32 %s14, 1
    %s20 = ssub.s32 %s14, 2
    %s21 = sadd.s32 %s14, 1
    %s22 = ssub.s32 %s14, %s21
    %p23 = scmp.eq.s32.totalorder %s22, 0
    %s25 = sadd.s32 %s24, 1
    %s26 = scalar_select %p23, %s24, %s25
    %p29 = pneg %p23
    %p30 = scmp.eq.s32.totalorder %s14, 1
    %p31 = por %p29, %p30
    %p32 = scmp.ne.s32.totalorder %s24, %s27
    %p33 = scmp.eq.s32.totalorder %s14, 0
    %p34 = por %p32, %p33
    %p35 = scmp.ne.s32.totalorder %s24, %s27
    %p36 = scmp.eq.s32.totalorder %s19, 1
    %p37 = por %p35, %p36
    %p38 = scmp.ne.s32.totalorder %s27, %s28
    %p39 = scmp.eq.s32.totalorder %s19, 0
    %p40 = por %p38, %p39
    %p41 = scmp.ne.s32.totalorder %s27, %s28
    %p42 = scmp.eq.s32.totalorder %s20, 1
    %p43 = por %p41, %p42
    %p45 = scmp.ne.s32.totalorder %s28, %s44
    %p46 = scmp.eq.s32.totalorder %s20, 0
    %p47 = por %p45, %p46
    %s49 = sadd.s32 %s48, 1
    %p52 = scmp.eq.s32.totalorder %s14, 1
    %p53 = scmp.ne.s32.totalorder %s48, %s50
    %p54 = scmp.eq.s32.totalorder %s14, 0
    %p55 = por %p53, %p54
    %p56 = scmp.ne.s32.totalorder %s48, %s50
    %p57 = scmp.eq.s32.totalorder %s19, 1
    %p58 = por %p56, %p57
    %p59 = scmp.ne.s32.totalorder %s50, %s51
    %p60 = scmp.eq.s32.totalorder %s19, 0
    %p61 = por %p59, %p60
    %p62 = scmp.ne.s32.totalorder %s50, %s51
    %p63 = scmp.eq.s32.totalorder %s20, 1
    %p64 = por %p62, %p63
    %p66 = scmp.ne.s32.totalorder %s51, %s65
    %p67 = scmp.eq.s32.totalorder %s20, 0
    %p68 = por %p66, %p67
    %s70 = sadd.s32 %s69, 1
    %p73 = scmp.eq.s32.totalorder %s14, 1
    %p74 = scmp.ne.s32.totalorder %s69, %s71
    %p75 = scmp.eq.s32.totalorder %s14, 0
    %p76 = por %p74, %p75
    %p77 = scmp.ne.s32.totalorder %s69, %s71
    %p78 = scmp.eq.s32.totalorder %s19, 1
    %p79 = por %p77, %p78
    %p80 = scmp.ne.s32.totalorder %s71, %s72
    %p81 = scmp.eq.s32.totalorder %s19, 0
    %p82 = por %p80, %p81
    %p83 = scmp.ne.s32.totalorder %s71, %s72
    %p84 = scmp.eq.s32.totalorder %s20, 1
    %p85 = por %p83, %p84
    %p87 = scmp.ne.s32.totalorder %s72, %s86
    %p88 = scmp.eq.s32.totalorder %s20, 0
    %p89 = por %p87, %p88
    %s91 = sadd.s32 %s90, 1
    %p94 = scmp.eq.s32.totalorder %s14, 1
    %p95 = scmp.ne.s32.totalorder %s90, %s92
    %p96 = scmp.eq.s32.totalorder %s14, 0
    %p97 = por %p95, %p96
    %p98 = scmp.ne.s32.totalorder %s90, %s92
    %p99 = scmp.eq.s32.totalorder %s19, 1
    %p100 = por %p98, %p99
    %p101 = scmp.ne.s32.totalorder %s92, %s93
    %p102 = scmp.eq.s32.totalorder %s19, 0
    %p103 = por %p101, %p102
    %p104 = scmp.ne.s32.totalorder %s92, %s93
    %p105 = scmp.eq.s32.totalorder %s20, 1
    %p106 = por %p104, %p105
    %p108 = scmp.ne.s32.totalorder %s93, %s107
    %p109 = scmp.eq.s32.totalorder %s20, 0
    %p110 = por %p108, %p109
    %s112 = sadd.s32 %s111, 1
    %p115 = scmp.eq.s32.totalorder %s14, 1
    %p116 = scmp.ne.s32.totalorder %s111, %s113
    %p117 = scmp.eq.s32.totalorder %s14, 0
    %p118 = por %p116, %p117
    %p119 = scmp.ne.s32.totalorder %s111, %s113
    %p120 = scmp.eq.s32.totalorder %s19, 1
    %p121 = por %p119, %p120
    %p122 = scmp.ne.s32.totalorder %s113, %s114
    %p123 = scmp.eq.s32.totalorder %s19, 0
    %p124 = por %p122, %p123
    %p125 = scmp.ne.s32.totalorder %s113, %s114
    %p126 = scmp.eq.s32.totalorder %s20, 1
    %p127 = por %p125, %p126
    %p129 = scmp.ne.s32.totalorder %s114, %s128
    %p130 = scmp.eq.s32.totalorder %s20, 0
    %p131 = por %p129, %p130
    %s133 = sadd.s32 %s132, 1
    %p136 = scmp.eq.s32.totalorder %s14, 1
    %p137 = scmp.ne.s32.totalorder %s132, %s134
    %p138 = scmp.eq.s32.totalorder %s14, 0
    %p139 = por %p137, %p138
    %p140 = scmp.ne.s32.totalorder %s132, %s134
    %p141 = scmp.eq.s32.totalorder %s19, 1
    %p142 = por %p140, %p141
    %p143 = scmp.ne.s32.totalorder %s134, %s135
    %p144 = scmp.eq.s32.totalorder %s19, 0
    %p145 = por %p143, %p144
    %p146 = scmp.ne.s32.totalorder %s134, %s135
    %p147 = scmp.eq.s32.totalorder %s20, 1
    %p148 = por %p146, %p147
    %p150 = scmp.ne.s32.totalorder %s135, %s149
    %p151 = scmp.eq.s32.totalorder %s20, 0
    %p152 = por %p150, %p151
    %s154 = sadd.s32 %s153, 1
    %p157 = scmp.eq.s32.totalorder %s14, 1
    %p158 = scmp.ne.s32.totalorder %s153, %s155
    %p159 = scmp.eq.s32.totalorder %s14, 0
    %p160 = por %p158, %p159
    %p161 = scmp.ne.s32.totalorder %s153, %s155
    %p162 = scmp.eq.s32.totalorder %s19, 1
    %p163 = por %p161, %p162
    %p164 = scmp.ne.s32.totalorder %s155, %s156
    %p165 = scmp.eq.s32.totalorder %s19, 0
    %p166 = por %p164, %p165
    %p167 = scmp.ne.s32.totalorder %s155, %s156
    %p168 = scmp.eq.s32.totalorder %s20, 1
    %p169 = por %p167, %p168
    %p171 = scmp.ne.s32.totalorder %s156, %s170
    %p172 = scmp.eq.s32.totalorder %s20, 0
    %p173 = por %p171, %p172
    %s175 = sadd.s32 %s174, 1
    %p178 = scmp.eq.s32.totalorder %s14, 1
    %p179 = scmp.ne.s32.totalorder %s174, %s176
    %p180 = scmp.eq.s32.totalorder %s14, 0
    %p181 = por %p179, %p180
    %p182 = scmp.ne.s32.totalorder %s174, %s176
    %p183 = scmp.eq.s32.totalorder %s19, 1
    %p184 = por %p182, %p183
    %p185 = scmp.ne.s32.totalorder %s176, %s177
    %p186 = scmp.eq.s32.totalorder %s19, 0
    %p187 = por %p185, %p186
    %p188 = scmp.ne.s32.totalorder %s176, %s177
    %p189 = scmp.eq.s32.totalorder %s20, 1
    %p190 = por %p188, %p189
    %p192 = scmp.ne.s32.totalorder %s177, %s191
    %p193 = scmp.eq.s32.totalorder %s20, 0
    %p194 = por %p192, %p193
    %s195 = ssub.s32 %s14, %s21
    %p196 = scmp.eq.s32.totalorder %s195, 0
    %s198 = sadd.s32 %s197, 1
    %s199 = scalar_select %p196, %s197, %s198
    %p202 = pneg %p196
    %p203 = scmp.eq.s32.totalorder %s14, 1
    %p204 = por %p202, %p203
    %p205 = scmp.ne.s32.totalorder %s197, %s200
    %p206 = scmp.eq.s32.totalorder %s14, 0
    %p207 = por %p205, %p206
    %p208 = scmp.ne.s32.totalorder %s197, %s200
    %p209 = scmp.eq.s32.totalorder %s19, 1
    %p210 = por %p208, %p209
    %p211 = scmp.ne.s32.totalorder %s200, %s201
    %p212 = scmp.eq.s32.totalorder %s19, 0
    %p213 = por %p211, %p212
    %p214 = scmp.ne.s32.totalorder %s200, %s201
    %p215 = scmp.eq.s32.totalorder %s20, 1
    %p216 = por %p214, %p215
    %p218 = scmp.ne.s32.totalorder %s201, %s217
    %p219 = scmp.eq.s32.totalorder %s20, 0
    %p220 = por %p218, %p219
    %p221 = scmp.le.s32.totalorder 1, %s14
    %p222 = scmp.lt.s32.totalorder %s14, 3
    %p223 = pnand %p221, %p222
    %p224 = pneg %p223
    // Predicated region
    $region9: #{network_block_forward.2} parent=5 // pred_check
      _
    $region10: #{network_block_forward.2} parent=5 // pred_check_branch
      %226 = sbr.rel (%p223) target = $region12
    $region11: #{network_block_forward.2} parent=5 // pred_region
      %s227 = ssub.s32 %s14, 1
      // Predicated region
      $region13: #{network_block_forward.2} parent=11 // pred_check
        %p228 = pneg %p61
      $region14: #{network_block_forward.2} parent=11 // pred_check_branch
        %230 = sbr.rel (%p228) target = $region16
      $region15: #{network_block_forward.2} parent=11 // pred_region
        _
      $region16: #{network_block_forward.2} parent=11 // pred_fallthru
        _
      // Predicated region
      $region17: #{network_block_forward.2} parent=11 // pred_check
        %p231 = pneg %p82
      $region18: #{network_block_forward.2} parent=11 // pred_check_branch
        %233 = sbr.rel (%p231) target = $region20
      $region19: #{network_block_forward.2} parent=11 // pred_region
        _
      $region20: #{network_block_forward.2} parent=11 // pred_fallthru
        _
      // Predicated region
      $region21: #{network_block_forward.2} parent=11 // pred_check
        %p234 = pneg %p103
      $region22: #{network_block_forward.2} parent=11 // pred_check_branch
        %236 = sbr.rel (%p234) target = $region24
      $region23: #{network_block_forward.2} parent=11 // pred_region
        _
      $region24: #{network_block_forward.2} parent=11 // pred_fallthru
        _
      // Predicated region
      $region25: #{network_block_forward.2} parent=11 // pred_check
        %p237 = pneg %p124
      $region26: #{network_block_forward.2} parent=11 // pred_check_branch
        %239 = sbr.rel (%p237) target = $region28
      $region27: #{network_block_forward.2} parent=11 // pred_region
        _
      $region28: #{network_block_forward.2} parent=11 // pred_fallthru
        _
      // Predicated region
      $region29: #{network_block_forward.2} parent=11 // pred_check
        %p240 = pneg %p145
      $region30: #{network_block_forward.2} parent=11 // pred_check_branch
        %242 = sbr.rel (%p240) target = $region32
      $region31: #{network_block_forward.2} parent=11 // pred_region
        _
      $region32: #{network_block_forward.2} parent=11 // pred_fallthru
        _
      // Predicated region
      $region33: #{network_block_forward.2} parent=11 // pred_check
        %p243 = pneg %p166
      $region34: #{network_block_forward.2} parent=11 // pred_check_branch
        %245 = sbr.rel (%p243) target = $region36
      $region35: #{network_block_forward.2} parent=11 // pred_region
        _
      $region36: #{network_block_forward.2} parent=11 // pred_fallthru
        _
      // Predicated region
      $region37: #{network_block_forward.2} parent=11 // pred_check
        %p246 = pneg %p187
      $region38: #{network_block_forward.2} parent=11 // pred_check_branch
        %248 = sbr.rel (%p246) target = $region40
      $region39: #{network_block_forward.2} parent=11 // pred_region
        _
      $region40: #{network_block_forward.2} parent=11 // pred_fallthru
        _
    $region12: #{network_block_forward.2} parent=5 // pred_fallthru
      _
    %p249 = scmp.lt.s32.totalorder %s14, 2
    // Predicated region
    $region41: #{network_block_forward.2} parent=5 // pred_check
      %p250 = pneg %p249
    $region42: #{network_block_forward.2} parent=5 // pred_check_branch
      %252 = sbr.rel (%p250) target = $region44
    $region43: #{network_block_forward.2} parent=5 // pred_region
      // Predicated region
      $region45: #{network_block_forward.2} parent=43 // pred_check
        %p253 = pneg %p34
      $region46: #{network_block_forward.2} parent=43 // pred_check_branch
        %255 = sbr.rel (%p253) target = $region48
      $region47: #{network_block_forward.2} parent=43 // pred_region
        %s256 = smul.u32 14, %s14
        %p257 = scmp.lt.s32.totalorder %s256, 27
        %s258 = scalar_select %p257, %s256, 27
        %s259 = smul.addr %s258, 4
        %s260 = scalar_lea.vmem %s0, %s259
        %s261 = smul.u32 14, %s14
      $region48: #{network_block_forward.2} parent=43 // pred_fallthru
        _
    $region44: #{network_block_forward.2} parent=5 // pred_fallthru
      _
    %p262 = scmp.le.s32.totalorder 1, %s14
    %p263 = scmp.lt.s32.totalorder %s14, 3
    %p264 = pnand %p262, %p263
    %p265 = pneg %p264
    // Predicated region
    $region49: #{network_block_forward.2} parent=5 // pred_check
      _
    $region50: #{network_block_forward.2} parent=5 // pred_check_branch
      %267 = sbr.rel (%p264) target = $region52
    $region51: #{network_block_forward.2} parent=5 // pred_region
      %s268 = ssub.s32 %s14, 1
      %s269 = smul.u32 14, %s19
      %p270 = scmp.lt.s32.totalorder %s269, 27
      %s271 = scalar_select %p270, %s269, 27
      %s272 = smul.addr %s271, 4
      %s273 = scalar_lea.vmem %s0, %s272
      %p274 = pneg %p40
      %p275 = pneg %p37
      %p276 = pneg %p61
      %p277 = pneg %p58
      %p278 = pneg %p82
      %p279 = pneg %p79
      %p280 = pneg %p103
      %p281 = pneg %p100
      %p282 = pneg %p124
      %p283 = pneg %p121
      %p284 = pneg %p145
      %p285 = pneg %p142
      %p286 = pneg %p166
      %p287 = pneg %p163
      %p288 = pneg %p187
      %p289 = pneg %p184
      %p290 = pneg %p213
      %p291 = pneg %p210
      %s292 = smul.u32 14, %s19
      %p293 = scmp.lt.s32.totalorder %s292, 27
      %s294 = scalar_select %p293, %s292, 27
      %s295 = smul.addr %s294, 4
      %s296 = scalar_lea.vmem %s8, %s295
      %s297 = smul.u32 14, %s19
      %p298 = scmp.lt.s32.totalorder %s297, 27
      %s299 = scalar_select %p298, %s297, 27
      %s300 = smul.addr %s299, 4
      %s301 = scalar_lea.vmem %s0, %s300
      %s302 = smul.u32 14, %s19
      %s303 = smul.u32 14, %s19
      %p304 = scmp.lt.s32.totalorder %s303, 27
      %s305 = scalar_select %p304, %s303, 27
      %s306 = smul.addr %s305, 4
      %s307 = scalar_lea.vmem %s8, %s306
      %s308 = smul.u32 14, %s19
      %310 = vst [vmem:[#allocation2 + $0x30] sm:$0xf] 0
      %311 = vst [vmem:[#allocation2 + $0x34] sm:$0xf] 0
      %312 = vst [vmem:[#allocation2 + $0x38] sm:$0xf] 0
      %313 = vst [vmem:[#allocation3] sm:$0xf] 0
      %vm314 = vcmask 1041408
      %vm315 = vsmask.f32 1280
      %vm316 = vmand %vm314, %vm315
      %v317 = vld [vmem:[#allocation3 + $0x4] sm:$0x3]
      %v318 = vsel %vm316, 0, %v317
      %319 = vst [vmem:[#allocation3 + $0x4] sm:$0x3] %v318
      %vm320 = vcmask 1043457
      %vm321 = vsmask.f32 7942
      %vm322 = vmand %vm320, %vm321
      %v323 = vld [vmem:[#allocation3 + $0x34] sm:$0xe]
      %v324 = vsel %vm322, 0, %v323
      %325 = vst [vmem:[#allocation3 + $0x34] sm:$0xe] %v324
      %326 = vst [vmem:[#allocation3 + $0x38] sm:$0xf] 0
      %v327 = vld [vmem:[%s4] sm:$0x1]
      %v328 = vld [vmem:[%s5] sm:$0x1]
      %v329 = vld [vmem:[%s6] sm:$0x1]
      %v330 = vld [vmem:[%s301] sm:$0xf]
      %v331 = vld [vmem:[%s301 + $0x4] sm:$0xf]
      %v332 = vld [vmem:[%s301 + $0x8] sm:$0xf]
      %v333 = vld [vmem:[%s301 + $0xc] sm:$0xf]
      %v334 = vld [vmem:[%s301 + $0x10] sm:$0xf]
      %v335 = vld [vmem:[%s301 + $0x14] sm:$0xf]
      %v336 = vld [vmem:[%s301 + $0x18] sm:$0xf]
      %v337 = vld [vmem:[%s301 + $0x1c] sm:$0xf]
      %v338 = vld [vmem:[%s301 + $0x20] sm:$0xf]
      %v339 = vld [vmem:[%s301 + $0x24] sm:$0xf]
      %v340 = vld [vmem:[%s301 + $0x28] sm:$0xf]
      %v341 = vld [vmem:[%s301 + $0x2c] sm:$0xf]
      %v342 = vunpack.c.l.bf16 %v330
      %v343 = vunpack.c.l.bf16 %v331
      %v344 = vunpack.c.l.bf16 %v332
      %v345 = vunpack.c.l.bf16 %v333
      %v346 = vunpack.c.l.bf16 %v334
      %v347 = vunpack.c.l.bf16 %v335
      %v348 = vunpack.c.l.bf16 %v336
      %v349 = vunpack.c.l.bf16 %v337
      %v350 = vunpack.c.l.bf16 %v338
      %v351 = vunpack.c.l.bf16 %v339
      %v352 = vunpack.c.l.bf16 %v340
      %v353 = vunpack.c.l.bf16 %v341
      %v354 = vld [vmem:[%s7] sm:$0xff]
      %v355 = vld [vmem:[%s7 + $0x8] sm:$0xff]
      %v356 = vld [vmem:[%s7 + $0x10] sm:$0xff]
      %v357 = vld [vmem:[%s7 + $0x18] sm:$0xff]
      %v358 = vld [vmem:[%s7 + $0x20] sm:$0xff]
      %v359 = vld [vmem:[%s7 + $0x28] sm:$0xff]
      %v360 = vld [vmem:[%s7 + $0x30] sm:$0xff]
      %v361 = vld [vmem:[%s7 + $0x38] sm:$0xff]
      %v362 = vld [vmem:[%s7 + $0x40] sm:$0xff]
      %v363 = vld [vmem:[%s7 + $0x48] sm:$0xff]
      %v364 = vld [vmem:[%s7 + $0x50] sm:$0xff]
      %v365 = vld [vmem:[%s7 + $0x58] sm:$0xff]
      %v367 = vperm.slane %v327, 0
      %v369 = vmul.f32 %v342, %v367
      %v370 = vmul.f32 %v343, %v367
      %v371 = vmul.f32 %v344, %v367
      %v372 = vmul.f32 %v345, %v367
      %v373 = vmul.f32 %v346, %v367
      %v374 = vmul.f32 %v347, %v367
      %v375 = vmul.f32 %v348, %v367
      %v376 = vmul.f32 %v349, %v367
      %v377 = vmul.f32 %v350, %v367
      %v378 = vmul.f32 %v351, %v367
      %v379 = vmul.f32 %v352, %v367
      %v380 = vmul.f32 %v353, %v367
      %v382 = vperm.slane %v328, 0
      %v384 = vadd.f32 %v369, %v382
      %v385 = vadd.f32 %v370, %v382
      %v386 = vadd.f32 %v371, %v382
      %v387 = vadd.f32 %v372, %v382
      %v388 = vadd.f32 %v373, %v382
      %v389 = vadd.f32 %v374, %v382
      %v390 = vadd.f32 %v375, %v382
      %v391 = vadd.f32 %v376, %v382
      %v392 = vadd.f32 %v377, %v382
      %v393 = vadd.f32 %v378, %v382
      %v394 = vadd.f32 %v379, %v382
      %v395 = vadd.f32 %v380, %v382
      %v396 = vmax.f32 %v384, 0.0
      %v397 = vmax.f32 %v385, 0.0
      %v398 = vmax.f32 %v386, 0.0
      %v399 = vmax.f32 %v387, 0.0
      %v400 = vmax.f32 %v388, 0.0
      %v401 = vmax.f32 %v389, 0.0
      %v402 = vmax.f32 %v390, 0.0
      %v403 = vmax.f32 %v391, 0.0
      %v404 = vmax.f32 %v392, 0.0
      %v405 = vmax.f32 %v393, 0.0
      %v406 = vmax.f32 %v394, 0.0
      %v407 = vmax.f32 %v395, 0.0
      %vm408 = vcmp.gt.f32.partialorder %v354, 0.5
      %vm409 = vcmp.gt.f32.partialorder %v355, 0.5
      %vm410 = vcmp.gt.f32.partialorder %v356, 0.5
      %vm411 = vcmp.gt.f32.partialorder %v357, 0.5
      %vm412 = vcmp.gt.f32.partialorder %v358, 0.5
      %vm413 = vcmp.gt.f32.partialorder %v359, 0.5
      %vm414 = vcmp.gt.f32.partialorder %v360, 0.5
      %vm415 = vcmp.gt.f32.partialorder %v361, 0.5
      %vm416 = vcmp.gt.f32.partialorder %v362, 0.5
      %vm417 = vcmp.gt.f32.partialorder %v363, 0.5
      %vm418 = vcmp.gt.f32.partialorder %v364, 0.5
      %vm419 = vcmp.gt.f32.partialorder %v365, 0.5
      %v420 = vsel %vm408, 1, 0
      %v421 = vsel %vm409, 1, 0
      %v422 = vsel %vm410, 1, 0
      %v423 = vsel %vm411, 1, 0
      %v424 = vsel %vm412, 1, 0
      %v425 = vsel %vm413, 1, 0
      %v426 = vsel %vm414, 1, 0
      %v427 = vsel %vm415, 1, 0
      %v428 = vsel %vm416, 1, 0
      %v429 = vsel %vm417, 1, 0
      %v430 = vsel %vm418, 1, 0
      %v431 = vsel %vm419, 1, 0
      %432 = vset.pattern.permute.xlu0 0
      %433 = vperm.xlu0 %432, %v420
      %v434 = vpop.permute.xlu0 %433
      %435 = vset.pattern.permute.xlu0 0
      %436 = vperm.xlu0 %435, %v421
      %v437 = vpop.permute.xlu0 %436
      %438 = vset.pattern.permute.xlu0 0
      %439 = vperm.xlu0 %438, %v422
      %v440 = vpop.permute.xlu0 %439
      %441 = vset.pattern.permute.xlu0 0
      %442 = vperm.xlu0 %441, %v423
      %v443 = vpop.permute.xlu0 %442
      %444 = vset.pattern.permute.xlu0 0
      %445 = vperm.xlu0 %444, %v424
      %v446 = vpop.permute.xlu0 %445
      %447 = vset.pattern.permute.xlu0 0
      %448 = vperm.xlu0 %447, %v425
      %v449 = vpop.permute.xlu0 %448
      %450 = vset.pattern.permute.xlu0 0
      %451 = vperm.xlu0 %450, %v426
      %v452 = vpop.permute.xlu0 %451
      %453 = vset.pattern.permute.xlu0 0
      %454 = vperm.xlu0 %453, %v427
      %v455 = vpop.permute.xlu0 %454
      %456 = vset.pattern.permute.xlu0 0
      %457 = vperm.xlu0 %456, %v428
      %v458 = vpop.permute.xlu0 %457
      %459 = vset.pattern.permute.xlu0 0
      %460 = vperm.xlu0 %459, %v429
      %v461 = vpop.permute.xlu0 %460
      %462 = vset.pattern.permute.xlu0 0
      %463 = vperm.xlu0 %462, %v430
      %v464 = vpop.permute.xlu0 %463
      %465 = vset.pattern.permute.xlu0 0
      %466 = vperm.xlu0 %465, %v431
      %v467 = vpop.permute.xlu0 %466
      %vm468 = vcmp.eq.s32.totalorder %v434, 1
      %vm469 = vcmp.eq.s32.totalorder %v437, 1
      %vm470 = vcmp.eq.s32.totalorder %v440, 1
      %vm471 = vcmp.eq.s32.totalorder %v443, 1
      %vm472 = vcmp.eq.s32.totalorder %v446, 1
      %vm473 = vcmp.eq.s32.totalorder %v449, 1
      %vm474 = vcmp.eq.s32.totalorder %v452, 1
      %vm475 = vcmp.eq.s32.totalorder %v455, 1
      %vm476 = vcmp.eq.s32.totalorder %v458, 1
      %vm477 = vcmp.eq.s32.totalorder %v461, 1
      %vm478 = vcmp.eq.s32.totalorder %v464, 1
      %vm479 = vcmp.eq.s32.totalorder %v467, 1
      %v480 = vsel %vm468, %v396, 0.0
      %v481 = vsel %vm469, %v397, 0.0
      %v482 = vsel %vm470, %v398, 0.0
      %v483 = vsel %vm471, %v399, 0.0
      %v484 = vsel %vm472, %v400, 0.0
      %v485 = vsel %vm473, %v401, 0.0
      %v486 = vsel %vm474, %v402, 0.0
      %v487 = vsel %vm475, %v403, 0.0
      %v488 = vsel %vm476, %v404, 0.0
      %v489 = vsel %vm477, %v405, 0.0
      %v490 = vsel %vm478, %v406, 0.0
      %v491 = vsel %vm479, %v407, 0.0
      %v492 = vpack.c.bf16 %v480, %v480
      %v493 = vpack.c.bf16 %v481, %v481
      %v494 = vpack.c.bf16 %v482, %v482
      %v495 = vpack.c.bf16 %v483, %v483
      %v496 = vpack.c.bf16 %v484, %v484
      %v497 = vpack.c.bf16 %v485, %v485
      %v498 = vpack.c.bf16 %v486, %v486
      %v499 = vpack.c.bf16 %v487, %v487
      %v500 = vpack.c.bf16 %v488, %v488
      %v501 = vpack.c.bf16 %v489, %v489
      %v502 = vpack.c.bf16 %v490, %v490
      %v503 = vpack.c.bf16 %v491, %v491
      %504 = vst [vmem:[#allocation2] sm:$0xf] %v492
      %505 = vst [vmem:[#allocation2 + $0x4] sm:$0xf] %v493
      %506 = vst [vmem:[#allocation2 + $0x8] sm:$0xf] %v494
      %507 = vst [vmem:[#allocation2 + $0xc] sm:$0xf] %v495
      %508 = vst [vmem:[#allocation2 + $0x10] sm:$0xf] %v496
      %509 = vst [vmem:[#allocation2 + $0x14] sm:$0xf] %v497
      %510 = vst [vmem:[#allocation2 + $0x18] sm:$0xf] %v498
      %511 = vst [vmem:[#allocation2 + $0x1c] sm:$0xf] %v499
      %512 = vst [vmem:[#allocation2 + $0x20] sm:$0xf] %v500
      %513 = vst [vmem:[#allocation2 + $0x24] sm:$0xf] %v501
      %514 = vst [vmem:[#allocation2 + $0x28] sm:$0xf] %v502
      %515 = vst [vmem:[#allocation2 + $0x2c] sm:$0xf] %v503
      %v516 = vld [vmem:[#allocation2] sm:$0xf]
      %v517 = vld [vmem:[#allocation2 + $0x4] sm:$0xf]
      %v518 = vld [vmem:[#allocation2 + $0x8] sm:$0xf]
      %v519 = vld [vmem:[#allocation2 + $0xc] sm:$0xf]
      %v520 = vld [vmem:[#allocation2 + $0x10] sm:$0xf]
      %v521 = vld [vmem:[#allocation2 + $0x14] sm:$0xf]
      %v522 = vld [vmem:[#allocation2 + $0x18] sm:$0xf]
      %v523 = vld [vmem:[#allocation2 + $0x1c] sm:$0xf]
      %v524 = vld [vmem:[#allocation2 + $0x20] sm:$0xf]
      %v525 = vld [vmem:[#allocation2 + $0x24] sm:$0xf]
      %v526 = vld [vmem:[#allocation2 + $0x28] sm:$0xf]
      %v527 = vld [vmem:[#allocation2 + $0x2c] sm:$0xf]
      %v528 = vld [vmem:[%s1] sm:$0xf]
      %v529 = vld [vmem:[%s1 + $0x4] sm:$0xf]
      %v530 = vld [vmem:[%s1 + $0x8] sm:$0xf]
      %v531 = vld [vmem:[%s1 + $0xc] sm:$0xf]
      %v532 = vld [vmem:[%s1 + $0x10] sm:$0xf]
      %v533 = vld [vmem:[%s1 + $0x14] sm:$0xf]
      %v534 = vld [vmem:[%s1 + $0x18] sm:$0xf]
      %v535 = vld [vmem:[%s1 + $0x1c] sm:$0xf]
      %v536 = vld [vmem:[%s1 + $0x20] sm:$0xf]
      %v537 = vld [vmem:[%s1 + $0x24] sm:$0xf]
      %v538 = vld [vmem:[%s1 + $0x28] sm:$0xf]
      %v539 = vld [vmem:[%s1 + $0x2c] sm:$0xf]
      %v540 = vld [vmem:[%s1 + $0x30] sm:$0xf]
      %v541 = vld [vmem:[%s1 + $0x34] sm:$0xf]
      %v542 = vld [vmem:[%s1 + $0x38] sm:$0xf]
      %v543 = vld [vmem:[%s1 + $0x3c] sm:$0xf]
      %v544 = vld [vmem:[#allocation2 + $0x30] sm:$0x1]
      %s545 = scalar_lea.vmem %s1, 64
      %v546 = vld [vmem:[%s545] sm:$0xf]
      %v547 = vld [vmem:[%s545 + $0x4] sm:$0xf]
      %v548 = vld [vmem:[%s545 + $0x8] sm:$0xf]
      %v549 = vld [vmem:[%s545 + $0xc] sm:$0xf]
      %v550 = vld [vmem:[%s545 + $0x10] sm:$0xf]
      %v551 = vld [vmem:[%s545 + $0x14] sm:$0xf]
      %v552 = vld [vmem:[%s545 + $0x18] sm:$0xf]
      %v553 = vld [vmem:[%s545 + $0x1c] sm:$0xf]
      %v554 = vld [vmem:[%s545 + $0x20] sm:$0xf]
      %v555 = vld [vmem:[%s545 + $0x24] sm:$0xf]
      %v556 = vld [vmem:[%s545 + $0x28] sm:$0xf]
      %v557 = vld [vmem:[%s545 + $0x2c] sm:$0xf]
      %v558 = vld [vmem:[%s545 + $0x30] sm:$0xf]
      %v559 = vld [vmem:[%s545 + $0x34] sm:$0xf]
      %v560 = vld [vmem:[%s545 + $0x38] sm:$0xf]
      %v561 = vld [vmem:[%s545 + $0x3c] sm:$0xf]
      %v575 = vunpack.c.l.b16 %v516
      %v576 = vunpack.c.l.b16 %v517
      %v577 = vunpack.c.l.b16 %v518
      %v578 = vunpack.c.l.b16 %v519
      %v579 = vunpack.c.l.b16 %v520
      %v580 = vunpack.c.l.b16 %v521
      %v581 = vunpack.c.l.b16 %v522
      %v582 = vunpack.c.l.b16 %v523
      %v583 = vunpack.c.l.b16 %v524
      %v584 = vunpack.c.l.b16 %v525
      %v585 = vunpack.c.l.b16 %v526
      %v586 = vunpack.c.l.b16 %v527
      %v587 = vunpack.c.l.b16 %v544
      %v588 = vpack.c.b16 %v576, %v575
      %v589 = vpack.c.b16 %v578, %v577
      %v590 = vpack.c.b16 %v580, %v579
      %v591 = vpack.c.b16 %v582, %v581
      %v592 = vpack.c.b16 %v584, %v583
      %v593 = vpack.c.b16 %v586, %v585
      %v594 = vpack.c.b16 %v587, %v587
      %vm595 = vsmask.f32 7424
      %v597 = vshrl.u32 %v588, 16
      %v599 = vshll.u32 %v588, 16
      %v601 = vrot.slane %v599, 1
      %v602 = vor.u32 %v597, %v601
      %v604 = vshll.u32 %v589, 16
      %v606 = vrot.slane %v604, 1
      %v607 = vsel %vm595, %v602, %v606
      %v608 = vshrl.u32 %v589, 16
      %v610 = vor.u32 %v608, %v606
      %v612 = vshll.u32 %v590, 16
      %v614 = vrot.slane %v612, 1
      %v615 = vsel %vm595, %v610, %v614
      %v616 = vshrl.u32 %v590, 16
      %v618 = vor.u32 %v616, %v614
      %v620 = vshll.u32 %v591, 16
      %v622 = vrot.slane %v620, 1
      %v623 = vsel %vm595, %v618, %v622
      %v624 = vshrl.u32 %v591, 16
      %v626 = vor.u32 %v624, %v622
      %v628 = vshll.u32 %v592, 16
      %v630 = vrot.slane %v628, 1
      %v631 = vsel %vm595, %v626, %v630
      %v632 = vshrl.u32 %v592, 16
      %v634 = vor.u32 %v632, %v630
      %v636 = vshll.u32 %v593, 16
      %v638 = vrot.slane %v636, 1
      %v639 = vsel %vm595, %v634, %v638
      %v640 = vshrl.u32 %v593, 16
      %v642 = vor.u32 %v640, %v638
      %v644 = vshll.u32 %v594, 16
      %v646 = vrot.slane %v644, 1
      %v647 = vsel %vm595, %v642, %v646
      %v670 = vunpack.c.l.b16 %v546
      %v671 = vunpack.c.l.b16 %v547
      %v672 = vunpack.c.l.b16 %v548
      %v673 = vunpack.c.l.b16 %v549
      %v674 = vunpack.c.l.b16 %v550
      %v675 = vunpack.c.l.b16 %v551
      %v676 = vunpack.c.l.b16 %v552
      %v677 = vunpack.c.l.b16 %v553
      %v678 = vunpack.c.l.b16 %v554
      %v679 = vunpack.c.l.b16 %v555
      %v680 = vunpack.c.l.b16 %v556
      %v681 = vunpack.c.l.b16 %v557
      %v682 = vunpack.c.l.b16 %v558
      %v683 = vunpack.c.l.b16 %v559
      %v684 = vunpack.c.l.b16 %v560
      %v685 = vunpack.c.l.b16 %v561
      %v686 = vpack.c.b16 %v671, %v670
      %v687 = vpack.c.b16 %v673, %v672
      %v688 = vpack.c.b16 %v675, %v674
      %v689 = vpack.c.b16 %v677, %v676
      %v690 = vpack.c.b16 %v679, %v678
      %v691 = vpack.c.b16 %v681, %v680
      %v692 = vpack.c.b16 %v683, %v682
      %v693 = vpack.c.b16 %v685, %v684
      %702 = vmatpush.bf16.msra.mxu0 %v693
      %703 = vmatpush.bf16.msra.mxu0 %v692
      %704 = vmatpush.bf16.msra.mxu0 %v691
      %705 = vmatpush.bf16.msra.mxu0 %v690
      %706 = vmatpush.bf16.msra.mxu0 %v689
      %707 = vmatpush.bf16.msra.mxu0 %v688
      %708 = vmatpush.bf16.msra.mxu0 %v687
      %709 = vmatpush.bf16.msra.mxu0 %v686
      %710 = vmatmul.bf16.gmra.mxu0 %v607
      %v711 = vpop.f32.mrf.mxu0
      %v712 = vadd.f32 0.0, %v711
      %v713 = vpop.f32.mrf.mxu0
      %v714 = vadd.f32 0.0, %v713
      %715 = vmatmul.bf16.gmra.mxu0 %v615
      %v716 = vpop.f32.mrf.mxu0
      %v717 = vadd.f32 0.0, %v716
      %v718 = vpop.f32.mrf.mxu0
      %v719 = vadd.f32 0.0, %v718
      %720 = vmatmul.bf16.gmra.mxu0 %v623
      %v721 = vpop.f32.mrf.mxu0
      %v722 = vadd.f32 0.0, %v721
      %v723 = vpop.f32.mrf.mxu0
      %v724 = vadd.f32 0.0, %v723
      %725 = vmatmul.bf16.gmra.mxu0 %v631
      %v726 = vpop.f32.mrf.mxu0
      %v727 = vadd.f32 0.0, %v726
      %v728 = vpop.f32.mrf.mxu0
      %v729 = vadd.f32 0.0, %v728
      %730 = vmatmul.bf16.gmra.mxu0 %v639
      %v731 = vpop.f32.mrf.mxu0
      %v732 = vadd.f32 0.0, %v731
      %v733 = vpop.f32.mrf.mxu0
      %v734 = vadd.f32 0.0, %v733
      %735 = vmatmul.bf16.gmra.mxu0 %v647
      %v736 = vpop.f32.mrf.mxu0
      %v737 = vadd.f32 0.0, %v736
      %v738 = vpop.f32.mrf.mxu0
      %v739 = vadd.f32 0.0, %v738
      %740 = vdwg.mxu0
      %v763 = vunpack.c.l.b16 %v528
      %v764 = vunpack.c.l.b16 %v529
      %v765 = vunpack.c.l.b16 %v530
      %v766 = vunpack.c.l.b16 %v531
      %v767 = vunpack.c.l.b16 %v532
      %v768 = vunpack.c.l.b16 %v533
      %v769 = vunpack.c.l.b16 %v534
      %v770 = vunpack.c.l.b16 %v535
      %v771 = vunpack.c.l.b16 %v536
      %v772 = vunpack.c.l.b16 %v537
      %v773 = vunpack.c.l.b16 %v538
      %v774 = vunpack.c.l.b16 %v539
      %v775 = vunpack.c.l.b16 %v540
      %v776 = vunpack.c.l.b16 %v541
      %v777 = vunpack.c.l.b16 %v542
      %v778 = vunpack.c.l.b16 %v543
      %v779 = vpack.c.b16 %v764, %v763
      %v780 = vpack.c.b16 %v766, %v765
      %v781 = vpack.c.b16 %v768, %v767
      %v782 = vpack.c.b16 %v770, %v769
      %v783 = vpack.c.b16 %v772, %v771
      %v784 = vpack.c.b16 %v774, %v773
      %v785 = vpack.c.b16 %v776, %v775
      %v786 = vpack.c.b16 %v778, %v777
      %795 = vmatpush.bf16.msra.mxu0 %v786
      %796 = vmatpush.bf16.msra.mxu0 %v785
      %797 = vmatpush.bf16.msra.mxu0 %v784
      %798 = vmatpush.bf16.msra.mxu0 %v783
      %799 = vmatpush.bf16.msra.mxu0 %v782
      %800 = vmatpush.bf16.msra.mxu0 %v781
      %801 = vmatpush.bf16.msra.mxu0 %v780
      %802 = vmatpush.bf16.msra.mxu0 %v779
      %803 = vmatmul.bf16.gmra.mxu0 %v588
      %v804 = vpop.f32.mrf.mxu0
      %v805 = vadd.f32 %v712, %v804
      %v806 = vpop.f32.mrf.mxu0
      %v807 = vadd.f32 %v714, %v806
      %808 = vmatmul.bf16.gmra.mxu0 %v589
      %v809 = vpop.f32.mrf.mxu0
      %v810 = vadd.f32 %v717, %v809
      %v811 = vpop.f32.mrf.mxu0
      %v812 = vadd.f32 %v719, %v811
      %813 = vmatmul.bf16.gmra.mxu0 %v590
      %v814 = vpop.f32.mrf.mxu0
      %v815 = vadd.f32 %v722, %v814
      %v816 = vpop.f32.mrf.mxu0
      %v817 = vadd.f32 %v724, %v816
      %818 = vmatmul.bf16.gmra.mxu0 %v591
      %v819 = vpop.f32.mrf.mxu0
      %v820 = vadd.f32 %v727, %v819
      %v821 = vpop.f32.mrf.mxu0
      %v822 = vadd.f32 %v729, %v821
      %823 = vmatmul.bf16.gmra.mxu0 %v592
      %v824 = vpop.f32.mrf.mxu0
      %v825 = vadd.f32 %v732, %v824
      %v826 = vpop.f32.mrf.mxu0
      %v827 = vadd.f32 %v734, %v826
      %828 = vmatmul.bf16.gmra.mxu0 %v593
      %v829 = vpop.f32.mrf.mxu0
      %v830 = vadd.f32 %v737, %v829
      %v831 = vpop.f32.mrf.mxu0
      %v832 = vadd.f32 %v739, %v831
      %833 = vdwg.mxu0
      %v834 = vld [vmem:[#allocation2 + $0x4] sm:$0xe]
      %v835 = vld [vmem:[#allocation2 + $0x8] sm:$0xf]
      %v836 = vld [vmem:[#allocation2 + $0xc] sm:$0xf]
      %v837 = vld [vmem:[#allocation2 + $0x10] sm:$0xf]
      %v838 = vld [vmem:[#allocation2 + $0x14] sm:$0xf]
      %v839 = vld [vmem:[#allocation2 + $0x18] sm:$0xf]
      %v840 = vld [vmem:[#allocation2 + $0x1c] sm:$0xf]
      %v841 = vld [vmem:[#allocation2 + $0x20] sm:$0xf]
      %v842 = vld [vmem:[#allocation2 + $0x24] sm:$0xf]
      %v843 = vld [vmem:[#allocation2 + $0x28] sm:$0xf]
      %v844 = vld [vmem:[#allocation2 + $0x2c] sm:$0xf]
      %v845 = vld [vmem:[#allocation2 + $0x30] sm:$0xf]
      %v846 = vld [vmem:[#allocation2 + $0x34] sm:$0x1]
      %s847 = scalar_lea.vmem %s1, 128
      %v848 = vld [vmem:[%s847] sm:$0xf]
      %v849 = vld [vmem:[%s847 + $0x4] sm:$0xf]
      %v850 = vld [vmem:[%s847 + $0x8] sm:$0xf]
      %v851 = vld [vmem:[%s847 + $0xc] sm:$0xf]
      %v852 = vld [vmem:[%s847 + $0x10] sm:$0xf]
      %v853 = vld [vmem:[%s847 + $0x14] sm:$0xf]
      %v854 = vld [vmem:[%s847 + $0x18] sm:$0xf]
      %v855 = vld [vmem:[%s847 + $0x1c] sm:$0xf]
      %v856 = vld [vmem:[%s847 + $0x20] sm:$0xf]
      %v857 = vld [vmem:[%s847 + $0x24] sm:$0xf]
      %v858 = vld [vmem:[%s847 + $0x28] sm:$0xf]
      %v859 = vld [vmem:[%s847 + $0x2c] sm:$0xf]
      %v860 = vld [vmem:[%s847 + $0x30] sm:$0xf]
      %v861 = vld [vmem:[%s847 + $0x34] sm:$0xf]
      %v862 = vld [vmem:[%s847 + $0x38] sm:$0xf]
      %v863 = vld [vmem:[%s847 + $0x3c] sm:$0xf]
      %v877 = vunpack.c.l.b16 %v834
      %v878 = vunpack.c.l.b16 %v835
      %v879 = vunpack.c.l.b16 %v836
      %v880 = vunpack.c.l.b16 %v837
      %v881 = vunpack.c.l.b16 %v838
      %v882 = vunpack.c.l.b16 %v839
      %v883 = vunpack.c.l.b16 %v840
      %v884 = vunpack.c.l.b16 %v841
      %v885 = vunpack.c.l.b16 %v842
      %v886 = vunpack.c.l.b16 %v843
      %v887 = vunpack.c.l.b16 %v844
      %v888 = vunpack.c.l.b16 %v845
      %v889 = vunpack.c.l.b16 %v846
      %v890 = vpack.c.b16 %v878, %v877
      %v891 = vpack.c.b16 %v880, %v879
      %v892 = vpack.c.b16 %v882, %v881
      %v893 = vpack.c.b16 %v884, %v883
      %v894 = vpack.c.b16 %v886, %v885
      %v895 = vpack.c.b16 %v888, %v887
      %v896 = vpack.c.b16 %v889, %v889
      %vm897 = vcmask 1046528
      %v898 = vrot.slane %v890, 1
      %v899 = vrot.slane %v891, 1
      %v900 = vsel %vm897, %v898, %v899
      %v901 = vrot.slane %v892, 1
      %v902 = vsel %vm897, %v899, %v901
      %v903 = vrot.slane %v893, 1
      %v904 = vsel %vm897, %v901, %v903
      %v905 = vrot.slane %v894, 1
      %v906 = vsel %vm897, %v903, %v905
      %v907 = vrot.slane %v895, 1
      %v908 = vsel %vm897, %v905, %v907
      %v909 = vrot.slane %v896, 1
      %v910 = vsel %vm897, %v907, %v909
      %v933 = vunpack.c.l.b16 %v848
      %v934 = vunpack.c.l.b16 %v849
      %v935 = vunpack.c.l.b16 %v850
      %v936 = vunpack.c.l.b16 %v851
      %v937 = vunpack.c.l.b16 %v852
      %v938 = vunpack.c.l.b16 %v853
      %v939 = vunpack.c.l.b16 %v854
      %v940 = vunpack.c.l.b16 %v855
      %v941 = vunpack.c.l.b16 %v856
      %v942 = vunpack.c.l.b16 %v857
      %v943 = vunpack.c.l.b16 %v858
      %v944 = vunpack.c.l.b16 %v859
      %v945 = vunpack.c.l.b16 %v860
      %v946 = vunpack.c.l.b16 %v861
      %v947 = vunpack.c.l.b16 %v862
      %v948 = vunpack.c.l.b16 %v863
      %v949 = vpack.c.b16 %v934, %v933
      %v950 = vpack.c.b16 %v936, %v935
      %v951 = vpack.c.b16 %v938, %v937
      %v952 = vpack.c.b16 %v940, %v939
      %v953 = vpack.c.b16 %v942, %v941
      %v954 = vpack.c.b16 %v944, %v943
      %v955 = vpack.c.b16 %v946, %v945
      %v956 = vpack.c.b16 %v948, %v947
      %965 = vmatpush.bf16.msra.mxu0 %v956
      %966 = vmatpush.bf16.msra.mxu0 %v955
      %967 = vmatpush.bf16.msra.mxu0 %v954
      %968 = vmatpush.bf16.msra.mxu0 %v953
      %969 = vmatpush.bf16.msra.mxu0 %v952
      %970 = vmatpush.bf16.msra.mxu0 %v951
      %971 = vmatpush.bf16.msra.mxu0 %v950
      %972 = vmatpush.bf16.msra.mxu0 %v949
      %973 = vmatmul.bf16.gmra.mxu0 %v900
      %v974 = vpop.f32.mrf.mxu0
      %v975 = vadd.f32 0.0, %v974
      %v976 = vpop.f32.mrf.mxu0
      %v977 = vadd.f32 0.0, %v976
      %978 = vmatmul.bf16.gmra.mxu0 %v902
      %v979 = vpop.f32.mrf.mxu0
      %v980 = vadd.f32 0.0, %v979
      %v981 = vpop.f32.mrf.mxu0
      %v982 = vadd.f32 0.0, %v981
      %983 = vmatmul.bf16.gmra.mxu0 %v904
      %v984 = vpop.f32.mrf.mxu0
      %v985 = vadd.f32 0.0, %v984
      %v986 = vpop.f32.mrf.mxu0
      %v987 = vadd.f32 0.0, %v986
      %988 = vmatmul.bf16.gmra.mxu0 %v906
      %v989 = vpop.f32.mrf.mxu0
      %v990 = vadd.f32 0.0, %v989
      %v991 = vpop.f32.mrf.mxu0
      %v992 = vadd.f32 0.0, %v991
      %993 = vmatmul.bf16.gmra.mxu0 %v908
      %v994 = vpop.f32.mrf.mxu0
      %v995 = vadd.f32 0.0, %v994
      %v996 = vpop.f32.mrf.mxu0
      %v997 = vadd.f32 0.0, %v996
      %998 = vmatmul.bf16.gmra.mxu0 %v910
      %v999 = vpop.f32.mrf.mxu0
      %v1000 = vadd.f32 0.0, %v999
      %v1001 = vpop.f32.mrf.mxu0
      %v1002 = vadd.f32 0.0, %v1001
      %1003 = vdwg.mxu0
      %v1004 = vadd.f32 %v805, %v975
      %v1005 = vadd.f32 %v807, %v977
      %v1006 = vadd.f32 %v810, %v980
      %v1007 = vadd.f32 %v812, %v982
      %v1008 = vadd.f32 %v815, %v985
      %v1009 = vadd.f32 %v817, %v987
      %v1010 = vadd.f32 %v820, %v990
      %v1011 = vadd.f32 %v822, %v992
      %v1012 = vadd.f32 %v825, %v995
      %v1013 = vadd.f32 %v827, %v997
      %v1014 = vadd.f32 %v830, %v1000
      %v1015 = vadd.f32 %v832, %v1002
      %v1016 = vld [vmem:[#allocation2 + $0x34] sm:$0x3]
      %s1017 = scalar_lea.vmem %s1, 192
      %v1018 = vld [vmem:[%s1017] sm:$0xf]
      %v1019 = vld [vmem:[%s1017 + $0x4] sm:$0xf]
      %v1020 = vld [vmem:[%s1017 + $0x8] sm:$0xf]
      %v1021 = vld [vmem:[%s1017 + $0xc] sm:$0xf]
      %v1022 = vld [vmem:[%s1017 + $0x10] sm:$0xf]
      %v1023 = vld [vmem:[%s1017 + $0x14] sm:$0xf]
      %v1024 = vld [vmem:[%s1017 + $0x18] sm:$0xf]
      %v1025 = vld [vmem:[%s1017 + $0x1c] sm:$0xf]
      %v1026 = vld [vmem:[%s1017 + $0x20] sm:$0xf]
      %v1027 = vld [vmem:[%s1017 + $0x24] sm:$0xf]
      %v1028 = vld [vmem:[%s1017 + $0x28] sm:$0xf]
      %v1029 = vld [vmem:[%s1017 + $0x2c] sm:$0xf]
      %v1030 = vld [vmem:[%s1017 + $0x30] sm:$0xf]
      %v1031 = vld [vmem:[%s1017 + $0x34] sm:$0xf]
      %v1032 = vld [vmem:[%s1017 + $0x38] sm:$0xf]
      %v1033 = vld [vmem:[%s1017 + $0x3c] sm:$0xf]
      %v1035 = vunpack.c.l.b16 %v1016
      %v1036 = vpack.c.b16 %v1035, %v1035
      %vm1037 = vsmask.f32 6400
      %v1039 = vshrl.u32 %v890, 16
      %v1041 = vrot.slane %v1039, 1
      %v1042 = vshll.u32 %v890, 16
      %v1044 = vrot.slane %v1042, 2
      %v1045 = vor.u32 %v1041, %v1044
      %v1047 = vshrl.u32 %v891, 16
      %v1049 = vrot.slane %v1047, 1
      %v1050 = vshll.u32 %v891, 16
      %v1052 = vrot.slane %v1050, 2
      %v1053 = vor.u32 %v1049, %v1052
      %v1054 = vsel %vm1037, %v1045, %v1053
      %v1056 = vshrl.u32 %v892, 16
      %v1058 = vrot.slane %v1056, 1
      %v1059 = vshll.u32 %v892, 16
      %v1061 = vrot.slane %v1059, 2
      %v1062 = vor.u32 %v1058, %v1061
      %v1063 = vsel %vm1037, %v1053, %v1062
      %v1065 = vshrl.u32 %v893, 16
      %v1067 = vrot.slane %v1065, 1
      %v1068 = vshll.u32 %v893, 16
      %v1070 = vrot.slane %v1068, 2
      %v1071 = vor.u32 %v1067, %v1070
      %v1072 = vsel %vm1037, %v1062, %v1071
      %v1074 = vshrl.u32 %v894, 16
      %v1076 = vrot.slane %v1074, 1
      %v1077 = vshll.u32 %v894, 16
      %v1079 = vrot.slane %v1077, 2
      %v1080 = vor.u32 %v1076, %v1079
      %v1081 = vsel %vm1037, %v1071, %v1080
      %v1083 = vshrl.u32 %v895, 16
      %v1085 = vrot.slane %v1083, 1
      %v1086 = vshll.u32 %v895, 16
      %v1088 = vrot.slane %v1086, 2
      %v1089 = vor.u32 %v1085, %v1088
      %v1090 = vsel %vm1037, %v1080, %v1089
      %v1092 = vshrl.u32 %v1036, 16
      %v1094 = vrot.slane %v1092, 1
      %v1095 = vshll.u32 %v1036, 16
      %v1097 = vrot.slane %v1095, 2
      %v1098 = vor.u32 %v1094, %v1097
      %v1099 = vsel %vm1037, %v1089, %v1098
      %v1122 = vunpack.c.l.b16 %v1018
      %v1123 = vunpack.c.l.b16 %v1019
      %v1124 = vunpack.c.l.b16 %v1020
      %v1125 = vunpack.c.l.b16 %v1021
      %v1126 = vunpack.c.l.b16 %v1022
      %v1127 = vunpack.c.l.b16 %v1023
      %v1128 = vunpack.c.l.b16 %v1024
      %v1129 = vunpack.c.l.b16 %v1025
      %v1130 = vunpack.c.l.b16 %v1026
      %v1131 = vunpack.c.l.b16 %v1027
      %v1132 = vunpack.c.l.b16 %v1028
      %v1133 = vunpack.c.l.b16 %v1029
      %v1134 = vunpack.c.l.b16 %v1030
      %v1135 = vunpack.c.l.b16 %v1031
      %v1136 = vunpack.c.l.b16 %v1032
      %v1137 = vunpack.c.l.b16 %v1033
      %v1138 = vpack.c.b16 %v1123, %v1122
      %v1139 = vpack.c.b16 %v1125, %v1124
      %v1140 = vpack.c.b16 %v1127, %v1126
      %v1141 = vpack.c.b16 %v1129, %v1128
      %v1142 = vpack.c.b16 %v1131, %v1130
      %v1143 = vpack.c.b16 %v1133, %v1132
      %v1144 = vpack.c.b16 %v1135, %v1134
      %v1145 = vpack.c.b16 %v1137, %v1136
      %1154 = vmatpush.bf16.msra.mxu0 %v1145
      %1155 = vmatpush.bf16.msra.mxu0 %v1144
      %1156 = vmatpush.bf16.msra.mxu0 %v1143
      %1157 = vmatpush.bf16.msra.mxu0 %v1142
      %1158 = vmatpush.bf16.msra.mxu0 %v1141
      %1159 = vmatpush.bf16.msra.mxu0 %v1140
      %1160 = vmatpush.bf16.msra.mxu0 %v1139
      %1161 = vmatpush.bf16.msra.mxu0 %v1138
      %1162 = vmatmul.bf16.gmra.mxu0 %v1054
      %v1163 = vpop.f32.mrf.mxu0
      %v1164 = vadd.f32 0.0, %v1163
      %v1165 = vpop.f32.mrf.mxu0
      %v1166 = vadd.f32 0.0, %v1165
      %1167 = vmatmul.bf16.gmra.mxu0 %v1063
      %v1168 = vpop.f32.mrf.mxu0
      %v1169 = vadd.f32 0.0, %v1168
      %v1170 = vpop.f32.mrf.mxu0
      %v1171 = vadd.f32 0.0, %v1170
      %1172 = vmatmul.bf16.gmra.mxu0 %v1072
      %v1173 = vpop.f32.mrf.mxu0
      %v1174 = vadd.f32 0.0, %v1173
      %v1175 = vpop.f32.mrf.mxu0
      %v1176 = vadd.f32 0.0, %v1175
      %1177 = vmatmul.bf16.gmra.mxu0 %v1081
      %v1178 = vpop.f32.mrf.mxu0
      %v1179 = vadd.f32 0.0, %v1178
      %v1180 = vpop.f32.mrf.mxu0
      %v1181 = vadd.f32 0.0, %v1180
      %1182 = vmatmul.bf16.gmra.mxu0 %v1090
      %v1183 = vpop.f32.mrf.mxu0
      %v1184 = vadd.f32 0.0, %v1183
      %v1185 = vpop.f32.mrf.mxu0
      %v1186 = vadd.f32 0.0, %v1185
      %1187 = vmatmul.bf16.gmra.mxu0 %v1099
      %v1188 = vpop.f32.mrf.mxu0
      %v1189 = vadd.f32 0.0, %v1188
      %v1190 = vpop.f32.mrf.mxu0
      %v1191 = vadd.f32 0.0, %v1190
      %1192 = vdwg.mxu0
      %v1193 = vadd.f32 %v1004, %v1164
      %v1194 = vadd.f32 %v1005, %v1166
      %v1195 = vadd.f32 %v1006, %v1169
      %v1196 = vadd.f32 %v1007, %v1171
      %v1197 = vadd.f32 %v1008, %v1174
      %v1198 = vadd.f32 %v1009, %v1176
      %v1199 = vadd.f32 %v1010, %v1179
      %v1200 = vadd.f32 %v1011, %v1181
      %v1201 = vadd.f32 %v1012, %v1184
      %v1202 = vadd.f32 %v1013, %v1186
      %v1203 = vadd.f32 %v1014, %v1189
      %v1204 = vadd.f32 %v1015, %v1191
      %v1206 = vperm.slane %v329, 0
      %v1208 = vadd.f32 %v1193, %v1206
      %v1209 = vadd.f32 %v1194, %v1206
      %v1210 = vadd.f32 %v1195, %v1206
      %v1211 = vadd.f32 %v1196, %v1206
      %v1212 = vadd.f32 %v1197, %v1206
      %v1213 = vadd.f32 %v1198, %v1206
      %v1214 = vadd.f32 %v1199, %v1206
      %v1215 = vadd.f32 %v1200, %v1206
      %v1216 = vadd.f32 %v1201, %v1206
      %v1217 = vadd.f32 %v1202, %v1206
      %v1218 = vadd.f32 %v1203, %v1206
      %v1219 = vadd.f32 %v1204, %v1206
      %v1220 = vmax.f32 %v1208, 0.0
      %v1221 = vmax.f32 %v1209, 0.0
      %v1222 = vmax.f32 %v1210, 0.0
      %v1223 = vmax.f32 %v1211, 0.0
      %v1224 = vmax.f32 %v1212, 0.0
      %v1225 = vmax.f32 %v1213, 0.0
      %v1226 = vmax.f32 %v1214, 0.0
      %v1227 = vmax.f32 %v1215, 0.0
      %v1228 = vmax.f32 %v1216, 0.0
      %v1229 = vmax.f32 %v1217, 0.0
      %v1230 = vmax.f32 %v1218, 0.0
      %v1231 = vmax.f32 %v1219, 0.0
      %v1232 = vld [vmem:[%s7 + $0xb] sm:$0xff]
      %v1233 = vld [vmem:[%s7 + $0x13] sm:$0xff]
      %v1234 = vld [vmem:[%s7 + $0x1b] sm:$0xff]
      %v1235 = vld [vmem:[%s7 + $0x23] sm:$0xff]
      %v1236 = vld [vmem:[%s7 + $0x2b] sm:$0xff]
      %v1237 = vld [vmem:[%s7 + $0x33] sm:$0xff]
      %v1238 = vld [vmem:[%s7 + $0x3b] sm:$0xff]
      %v1239 = vld [vmem:[%s7 + $0x43] sm:$0xff]
      %v1240 = vld [vmem:[%s7 + $0x4b] sm:$0xff]
      %v1241 = vld [vmem:[%s7 + $0x53] sm:$0xff]
      %v1242 = vld [vmem:[%s7 + $0x5b] sm:$0xff]
      %v1243 = vld [vmem:[%s7 + $0x63] sm:$0xff]
      %vm1244 = vcmp.gt.f32.partialorder %v1232, 0.5
      %vm1245 = vcmp.gt.f32.partialorder %v1233, 0.5
      %vm1246 = vcmp.gt.f32.partialorder %v1234, 0.5
      %vm1247 = vcmp.gt.f32.partialorder %v1235, 0.5
      %vm1248 = vcmp.gt.f32.partialorder %v1236, 0.5
      %vm1249 = vcmp.gt.f32.partialorder %v1237, 0.5
      %vm1250 = vcmp.gt.f32.partialorder %v1238, 0.5
      %vm1251 = vcmp.gt.f32.partialorder %v1239, 0.5
      %vm1252 = vcmp.gt.f32.partialorder %v1240, 0.5
      %vm1253 = vcmp.gt.f32.partialorder %v1241, 0.5
      %vm1254 = vcmp.gt.f32.partialorder %v1242, 0.5
      %vm1255 = vcmp.gt.f32.partialorder %v1243, 0.5
      %v1256 = vsel %vm1244, 1, 0
      %v1257 = vsel %vm1245, 1, 0
      %v1258 = vsel %vm1246, 1, 0
      %v1259 = vsel %vm1247, 1, 0
      %v1260 = vsel %vm1248, 1, 0
      %v1261 = vsel %vm1249, 1, 0
      %v1262 = vsel %vm1250, 1, 0
      %v1263 = vsel %vm1251, 1, 0
      %v1264 = vsel %vm1252, 1, 0
      %v1265 = vsel %vm1253, 1, 0
      %v1266 = vsel %vm1254, 1, 0
      %v1267 = vsel %vm1255, 1, 0
      %1268 = vset.pattern.permute.xlu0 0
      %1269 = vperm.xlu0 %1268, %v1256
      %v1270 = vpop.permute.xlu0 %1269
      %1271 = vset.pattern.permute.xlu0 0
      %1272 = vperm.xlu0 %1271, %v1257
      %v1273 = vpop.permute.xlu0 %1272
      %1274 = vset.pattern.permute.xlu0 0
      %1275 = vperm.xlu0 %1274, %v1258
      %v1276 = vpop.permute.xlu0 %1275
      %1277 = vset.pattern.permute.xlu0 0
      %1278 = vperm.xlu0 %1277, %v1259
      %v1279 = vpop.permute.xlu0 %1278
      %1280 = vset.pattern.permute.xlu0 0
      %1281 = vperm.xlu0 %1280, %v1260
      %v1282 = vpop.permute.xlu0 %1281
      %1283 = vset.pattern.permute.xlu0 0
      %1284 = vperm.xlu0 %1283, %v1261
      %v1285 = vpop.permute.xlu0 %1284
      %1286 = vset.pattern.permute.xlu0 0
      %1287 = vperm.xlu0 %1286, %v1262
      %v1288 = vpop.permute.xlu0 %1287
      %1289 = vset.pattern.permute.xlu0 0
      %1290 = vperm.xlu0 %1289, %v1263
      %v1291 = vpop.permute.xlu0 %1290
      %1292 = vset.pattern.permute.xlu0 0
      %1293 = vperm.xlu0 %1292, %v1264
      %v1294 = vpop.permute.xlu0 %1293
      %1295 = vset.pattern.permute.xlu0 0
      %1296 = vperm.xlu0 %1295, %v1265
      %v1297 = vpop.permute.xlu0 %1296
      %1298 = vset.pattern.permute.xlu0 0
      %1299 = vperm.xlu0 %1298, %v1266
      %v1300 = vpop.permute.xlu0 %1299
      %1301 = vset.pattern.permute.xlu0 0
      %1302 = vperm.xlu0 %1301, %v1267
      %v1303 = vpop.permute.xlu0 %1302
      %vm1304 = vcmp.eq.s32.totalorder %v1270, 1
      %vm1305 = vcmp.eq.s32.totalorder %v1273, 1
      %vm1306 = vcmp.eq.s32.totalorder %v1276, 1
      %vm1307 = vcmp.eq.s32.totalorder %v1279, 1
      %vm1308 = vcmp.eq.s32.totalorder %v1282, 1
      %vm1309 = vcmp.eq.s32.totalorder %v1285, 1
      %vm1310 = vcmp.eq.s32.totalorder %v1288, 1
      %vm1311 = vcmp.eq.s32.totalorder %v1291, 1
      %vm1312 = vcmp.eq.s32.totalorder %v1294, 1
      %vm1313 = vcmp.eq.s32.totalorder %v1297, 1
      %vm1314 = vcmp.eq.s32.totalorder %v1300, 1
      %vm1315 = vcmp.eq.s32.totalorder %v1303, 1
      %v1316 = vsel %vm1304, %v1220, 0.0
      %v1317 = vsel %vm1305, %v1221, 0.0
      %v1318 = vsel %vm1306, %v1222, 0.0
      %v1319 = vsel %vm1307, %v1223, 0.0
      %v1320 = vsel %vm1308, %v1224, 0.0
      %v1321 = vsel %vm1309, %v1225, 0.0
      %v1322 = vsel %vm1310, %v1226, 0.0
      %v1323 = vsel %vm1311, %v1227, 0.0
      %v1324 = vsel %vm1312, %v1228, 0.0
      %v1325 = vsel %vm1313, %v1229, 0.0
      %v1326 = vsel %vm1314, %v1230, 0.0
      %v1327 = vsel %vm1315, %v1231, 0.0
      %v1328 = vpack.c.bf16 %v1316, %v1316
      %v1329 = vpack.c.bf16 %v1317, %v1317
      %v1330 = vpack.c.bf16 %v1318, %v1318
      %v1331 = vpack.c.bf16 %v1319, %v1319
      %v1332 = vpack.c.bf16 %v1320, %v1320
      %v1333 = vpack.c.bf16 %v1321, %v1321
      %v1334 = vpack.c.bf16 %v1322, %v1322
      %v1335 = vpack.c.bf16 %v1323, %v1323
      %v1336 = vpack.c.bf16 %v1324, %v1324
      %v1337 = vpack.c.bf16 %v1325, %v1325
      %v1338 = vpack.c.bf16 %v1326, %v1326
      %v1339 = vpack.c.bf16 %v1327, %v1327
      %vm1340 = vsmask.f32 5392
      %vm1341 = vmor %vm315, %vm1340
      %v1343 = vshrl.u32 %v1328, 16
      %v1345 = vrot.slane %v1343, 6
      %v1346 = vshll.u32 %v1328, 16
      %v1348 = vrot.slane %v1346, 7
      %v1349 = vor.u32 %v1345, %v1348
      %v1350 = vrot.slane %v1349, 4
      %v1352 = vshrl.u32 %v1329, 16
      %v1354 = vrot.slane %v1352, 6
      %v1355 = vshll.u32 %v1329, 16
      %v1357 = vrot.slane %v1355, 7
      %v1358 = vor.u32 %v1354, %v1357
      %v1359 = vsel %vm1341, %v1350, %v1358
      %v1360 = vrot.slane %v1358, 4
      %v1362 = vshrl.u32 %v1330, 16
      %v1364 = vrot.slane %v1362, 6
      %v1365 = vshll.u32 %v1330, 16
      %v1367 = vrot.slane %v1365, 7
      %v1368 = vor.u32 %v1364, %v1367
      %v1369 = vsel %vm1341, %v1360, %v1368
      %v1370 = vrot.slane %v1368, 4
      %v1372 = vshrl.u32 %v1331, 16
      %v1374 = vrot.slane %v1372, 6
      %v1375 = vshll.u32 %v1331, 16
      %v1377 = vrot.slane %v1375, 7
      %v1378 = vor.u32 %v1374, %v1377
      %v1379 = vsel %vm1341, %v1370, %v1378
      %v1380 = vrot.slane %v1378, 4
      %v1382 = vshrl.u32 %v1332, 16
      %v1384 = vrot.slane %v1382, 6
      %v1385 = vshll.u32 %v1332, 16
      %v1387 = vrot.slane %v1385, 7
      %v1388 = vor.u32 %v1384, %v1387
      %v1389 = vsel %vm1341, %v1380, %v1388
      %v1390 = vrot.slane %v1388, 4
      %v1392 = vshrl.u32 %v1333, 16
      %v1394 = vrot.slane %v1392, 6
      %v1395 = vshll.u32 %v1333, 16
      %v1397 = vrot.slane %v1395, 7
      %v1398 = vor.u32 %v1394, %v1397
      %v1399 = vsel %vm1341, %v1390, %v1398
      %v1400 = vrot.slane %v1398, 4
      %v1402 = vshrl.u32 %v1334, 16
      %v1404 = vrot.slane %v1402, 6
      %v1405 = vshll.u32 %v1334, 16
      %v1407 = vrot.slane %v1405, 7
      %v1408 = vor.u32 %v1404, %v1407
      %v1409 = vsel %vm1341, %v1400, %v1408
      %v1410 = vrot.slane %v1408, 4
      %v1412 = vshrl.u32 %v1335, 16
      %v1414 = vrot.slane %v1412, 6
      %v1415 = vshll.u32 %v1335, 16
      %v1417 = vrot.slane %v1415, 7
      %v1418 = vor.u32 %v1414, %v1417
      %v1419 = vsel %vm1341, %v1410, %v1418
      %v1420 = vrot.slane %v1418, 4
      %v1422 = vshrl.u32 %v1336, 16
      %v1424 = vrot.slane %v1422, 6
      %v1425 = vshll.u32 %v1336, 16
      %v1427 = vrot.slane %v1425, 7
      %v1428 = vor.u32 %v1424, %v1427
      %v1429 = vsel %vm1341, %v1420, %v1428
      %v1430 = vrot.slane %v1428, 4
      %v1432 = vshrl.u32 %v1337, 16
      %v1434 = vrot.slane %v1432, 6
      %v1435 = vshll.u32 %v1337, 16
      %v1437 = vrot.slane %v1435, 7
      %v1438 = vor.u32 %v1434, %v1437
      %v1439 = vsel %vm1341, %v1430, %v1438
      %v1440 = vrot.slane %v1438, 4
      %v1442 = vshrl.u32 %v1338, 16
      %v1444 = vrot.slane %v1442, 6
      %v1445 = vshll.u32 %v1338, 16
      %v1447 = vrot.slane %v1445, 7
      %v1448 = vor.u32 %v1444, %v1447
      %v1449 = vsel %vm1341, %v1440, %v1448
      %v1450 = vrot.slane %v1448, 4
      %v1452 = vshrl.u32 %v1339, 16
      %v1454 = vrot.slane %v1452, 6
      %v1455 = vshll.u32 %v1339, 16
      %v1457 = vrot.slane %v1455, 7
      %v1458 = vor.u32 %v1454, %v1457
      %v1459 = vsel %vm1341, %v1450, %v1458
      %v1460 = vrot.slane %v1458, 4
      %v1474 = vld [vmem:[#allocation3 + $0x4] sm:$0xe]
      %v1475 = vsel %vm322, %v1349, %v1474
      %1476 = vst [vmem:[#allocation3 + $0x4] sm:$0xe] %v1475
      %1477 = vst [vmem:[#allocation3 + $0x8] sm:$0xf] %v1359
      %1478 = vst [vmem:[#allocation3 + $0xc] sm:$0xf] %v1369
      %1479 = vst [vmem:[#allocation3 + $0x10] sm:$0xf] %v1379
      %1480 = vst [vmem:[#allocation3 + $0x14] sm:$0xf] %v1389
      %1481 = vst [vmem:[#allocation3 + $0x18] sm:$0xf] %v1399
      %1482 = vst [vmem:[#allocation3 + $0x1c] sm:$0xf] %v1409
      %1483 = vst [vmem:[#allocation3 + $0x20] sm:$0xf] %v1419
      %1484 = vst [vmem:[#allocation3 + $0x24] sm:$0xf] %v1429
      %1485 = vst [vmem:[#allocation3 + $0x28] sm:$0xf] %v1439
      %1486 = vst [vmem:[#allocation3 + $0x2c] sm:$0xf] %v1449
      %1487 = vst [vmem:[#allocation3 + $0x30] sm:$0xf] %v1459
      %v1488 = vld [vmem:[#allocation3 + $0x34] sm:$0x3]
      %v1489 = vsel %vm316, %v1460, %v1488
      %1490 = vst [vmem:[#allocation3 + $0x34] sm:$0x3] %v1489
      %v1491 = vld [vmem:[#allocation3] sm:$0xf]
      %v1492 = vld [vmem:[#allocation3 + $0x4] sm:$0xf]
      %v1493 = vld [vmem:[#allocation3 + $0x8] sm:$0xf]
      %v1494 = vld [vmem:[#allocation3 + $0xc] sm:$0xf]
      %v1495 = vld [vmem:[#allocation3 + $0x10] sm:$0xf]
      %v1496 = vld [vmem:[#allocation3 + $0x14] sm:$0xf]
      %v1497 = vld [vmem:[#allocation3 + $0x18] sm:$0xf]
      %v1498 = vld [vmem:[#allocation3 + $0x1c] sm:$0xf]
      %v1499 = vld [vmem:[#allocation3 + $0x20] sm:$0xf]
      %v1500 = vld [vmem:[#allocation3 + $0x24] sm:$0xf]
      %v1501 = vld [vmem:[#allocation3 + $0x28] sm:$0xf]
      %v1502 = vld [vmem:[#allocation3 + $0x2c] sm:$0xf]
      %v1503 = vld [vmem:[%s2] sm:$0xf]
      %v1504 = vld [vmem:[%s2 + $0x4] sm:$0xf]
      %v1505 = vld [vmem:[%s2 + $0x8] sm:$0xf]
      %v1506 = vld [vmem:[%s2 + $0xc] sm:$0xf]
      %v1507 = vld [vmem:[%s2 + $0x10] sm:$0xf]
      %v1508 = vld [vmem:[%s2 + $0x14] sm:$0xf]
      %v1509 = vld [vmem:[%s2 + $0x18] sm:$0xf]
      %v1510 = vld [vmem:[%s2 + $0x1c] sm:$0xf]
      %v1511 = vld [vmem:[%s2 + $0x20] sm:$0xf]
      %v1512 = vld [vmem:[%s2 + $0x24] sm:$0xf]
      %v1513 = vld [vmem:[%s2 + $0x28] sm:$0xf]
      %v1514 = vld [vmem:[%s2 + $0x2c] sm:$0xf]
      %v1515 = vld [vmem:[%s2 + $0x30] sm:$0xf]
      %v1516 = vld [vmem:[%s2 + $0x34] sm:$0xf]
      %v1517 = vld [vmem:[%s2 + $0x38] sm:$0xf]
      %v1518 = vld [vmem:[%s2 + $0x3c] sm:$0xf]
      %v1519 = vld [vmem:[#allocation3 + $0x30] sm:$0x1]
      %s1520 = scalar_lea.vmem %s2, 64
      %v1521 = vld [vmem:[%s1520] sm:$0xf]
      %v1522 = vld [vmem:[%s1520 + $0x4] sm:$0xf]
      %v1523 = vld [vmem:[%s1520 + $0x8] sm:$0xf]
      %v1524 = vld [vmem:[%s1520 + $0xc] sm:$0xf]
      %v1525 = vld [vmem:[%s1520 + $0x10] sm:$0xf]
      %v1526 = vld [vmem:[%s1520 + $0x14] sm:$0xf]
      %v1527 = vld [vmem:[%s1520 + $0x18] sm:$0xf]
      %v1528 = vld [vmem:[%s1520 + $0x1c] sm:$0xf]
      %v1529 = vld [vmem:[%s1520 + $0x20] sm:$0xf]
      %v1530 = vld [vmem:[%s1520 + $0x24] sm:$0xf]
      %v1531 = vld [vmem:[%s1520 + $0x28] sm:$0xf]
      %v1532 = vld [vmem:[%s1520 + $0x2c] sm:$0xf]
      %v1533 = vld [vmem:[%s1520 + $0x30] sm:$0xf]
      %v1534 = vld [vmem:[%s1520 + $0x34] sm:$0xf]
      %v1535 = vld [vmem:[%s1520 + $0x38] sm:$0xf]
      %v1536 = vld [vmem:[%s1520 + $0x3c] sm:$0xf]
      %v1550 = vunpack.c.l.b16 %v1491
      %v1551 = vunpack.c.l.b16 %v1492
      %v1552 = vunpack.c.l.b16 %v1493
      %v1553 = vunpack.c.l.b16 %v1494
      %v1554 = vunpack.c.l.b16 %v1495
      %v1555 = vunpack.c.l.b16 %v1496
      %v1556 = vunpack.c.l.b16 %v1497
      %v1557 = vunpack.c.l.b16 %v1498
      %v1558 = vunpack.c.l.b16 %v1499
      %v1559 = vunpack.c.l.b16 %v1500
      %v1560 = vunpack.c.l.b16 %v1501
      %v1561 = vunpack.c.l.b16 %v1502
      %v1562 = vunpack.c.l.b16 %v1519
      %v1563 = vpack.c.b16 %v1551, %v1550
      %v1564 = vpack.c.b16 %v1553, %v1552
      %v1565 = vpack.c.b16 %v1555, %v1554
      %v1566 = vpack.c.b16 %v1557, %v1556
      %v1567 = vpack.c.b16 %v1559, %v1558
      %v1568 = vpack.c.b16 %v1561, %v1560
      %v1569 = vpack.c.b16 %v1562, %v1562
      %v1571 = vshrl.u32 %v1563, 16
      %v1573 = vshll.u32 %v1563, 16
      %v1575 = vrot.slane %v1573, 1
      %v1576 = vor.u32 %v1571, %v1575
      %v1578 = vshll.u32 %v1564, 16
      %v1580 = vrot.slane %v1578, 1
      %v1581 = vsel %vm595, %v1576, %v1580
      %v1582 = vshrl.u32 %v1564, 16
      %v1584 = vor.u32 %v1582, %v1580
      %v1586 = vshll.u32 %v1565, 16
      %v1588 = vrot.slane %v1586, 1
      %v1589 = vsel %vm595, %v1584, %v1588
      %v1590 = vshrl.u32 %v1565, 16
      %v1592 = vor.u32 %v1590, %v1588
      %v1594 = vshll.u32 %v1566, 16
      %v1596 = vrot.slane %v1594, 1
      %v1597 = vsel %vm595, %v1592, %v1596
      %v1598 = vshrl.u32 %v1566, 16
      %v1600 = vor.u32 %v1598, %v1596
      %v1602 = vshll.u32 %v1567, 16
      %v1604 = vrot.slane %v1602, 1
      %v1605 = vsel %vm595, %v1600, %v1604
      %v1606 = vshrl.u32 %v1567, 16
      %v1608 = vor.u32 %v1606, %v1604
      %v1610 = vshll.u32 %v1568, 16
      %v1612 = vrot.slane %v1610, 1
      %v1613 = vsel %vm595, %v1608, %v1612
      %v1614 = vshrl.u32 %v1568, 16
      %v1616 = vor.u32 %v1614, %v1612
      %v1618 = vshll.u32 %v1569, 16
      %v1620 = vrot.slane %v1618, 1
      %v1621 = vsel %vm595, %v1616, %v1620
      %v1644 = vunpack.c.l.b16 %v1521
      %v1645 = vunpack.c.l.b16 %v1522
      %v1646 = vunpack.c.l.b16 %v1523
      %v1647 = vunpack.c.l.b16 %v1524
      %v1648 = vunpack.c.l.b16 %v1525
      %v1649 = vunpack.c.l.b16 %v1526
      %v1650 = vunpack.c.l.b16 %v1527
      %v1651 = vunpack.c.l.b16 %v1528
      %v1652 = vunpack.c.l.b16 %v1529
      %v1653 = vunpack.c.l.b16 %v1530
      %v1654 = vunpack.c.l.b16 %v1531
      %v1655 = vunpack.c.l.b16 %v1532
      %v1656 = vunpack.c.l.b16 %v1533
      %v1657 = vunpack.c.l.b16 %v1534
      %v1658 = vunpack.c.l.b16 %v1535
      %v1659 = vunpack.c.l.b16 %v1536
      %v1660 = vpack.c.b16 %v1645, %v1644
      %v1661 = vpack.c.b16 %v1647, %v1646
      %v1662 = vpack.c.b16 %v1649, %v1648
      %v1663 = vpack.c.b16 %v1651, %v1650
      %v1664 = vpack.c.b16 %v1653, %v1652
      %v1665 = vpack.c.b16 %v1655, %v1654
      %v1666 = vpack.c.b16 %v1657, %v1656
      %v1667 = vpack.c.b16 %v1659, %v1658
      %1676 = vmatpush.bf16.msra.mxu0 %v1667
      %1677 = vmatpush.bf16.msra.mxu0 %v1666
      %1678 = vmatpush.bf16.msra.mxu0 %v1665
      %1679 = vmatpush.bf16.msra.mxu0 %v1664
      %1680 = vmatpush.bf16.msra.mxu0 %v1663
      %1681 = vmatpush.bf16.msra.mxu0 %v1662
      %1682 = vmatpush.bf16.msra.mxu0 %v1661
      %1683 = vmatpush.bf16.msra.mxu0 %v1660
      %1684 = vmatmul.bf16.gmra.mxu0 %v1581
      %v1685 = vpop.f32.mrf.mxu0
      %v1686 = vadd.f32 0.0, %v1685
      %v1687 = vpop.f32.mrf.mxu0
      %v1688 = vadd.f32 0.0, %v1687
      %1689 = vmatmul.bf16.gmra.mxu0 %v1589
      %v1690 = vpop.f32.mrf.mxu0
      %v1691 = vadd.f32 0.0, %v1690
      %v1692 = vpop.f32.mrf.mxu0
      %v1693 = vadd.f32 0.0, %v1692
      %1694 = vmatmul.bf16.gmra.mxu0 %v1597
      %v1695 = vpop.f32.mrf.mxu0
      %v1696 = vadd.f32 0.0, %v1695
      %v1697 = vpop.f32.mrf.mxu0
      %v1698 = vadd.f32 0.0, %v1697
      %1699 = vmatmul.bf16.gmra.mxu0 %v1605
      %v1700 = vpop.f32.mrf.mxu0
      %v1701 = vadd.f32 0.0, %v1700
      %v1702 = vpop.f32.mrf.mxu0
      %v1703 = vadd.f32 0.0, %v1702
      %1704 = vmatmul.bf16.gmra.mxu0 %v1613
      %v1705 = vpop.f32.mrf.mxu0
      %v1706 = vadd.f32 0.0, %v1705
      %v1707 = vpop.f32.mrf.mxu0
      %v1708 = vadd.f32 0.0, %v1707
      %1709 = vmatmul.bf16.gmra.mxu0 %v1621
      %v1710 = vpop.f32.mrf.mxu0
      %v1711 = vadd.f32 0.0, %v1710
      %v1712 = vpop.f32.mrf.mxu0
      %v1713 = vadd.f32 0.0, %v1712
      %1714 = vdwg.mxu0
      %v1737 = vunpack.c.l.b16 %v1503
      %v1738 = vunpack.c.l.b16 %v1504
      %v1739 = vunpack.c.l.b16 %v1505
      %v1740 = vunpack.c.l.b16 %v1506
      %v1741 = vunpack.c.l.b16 %v1507
      %v1742 = vunpack.c.l.b16 %v1508
      %v1743 = vunpack.c.l.b16 %v1509
      %v1744 = vunpack.c.l.b16 %v1510
      %v1745 = vunpack.c.l.b16 %v1511
      %v1746 = vunpack.c.l.b16 %v1512
      %v1747 = vunpack.c.l.b16 %v1513
      %v1748 = vunpack.c.l.b16 %v1514
      %v1749 = vunpack.c.l.b16 %v1515
      %v1750 = vunpack.c.l.b16 %v1516
      %v1751 = vunpack.c.l.b16 %v1517
      %v1752 = vunpack.c.l.b16 %v1518
      %v1753 = vpack.c.b16 %v1738, %v1737
      %v1754 = vpack.c.b16 %v1740, %v1739
      %v1755 = vpack.c.b16 %v1742, %v1741
      %v1756 = vpack.c.b16 %v1744, %v1743
      %v1757 = vpack.c.b16 %v1746, %v1745
      %v1758 = vpack.c.b16 %v1748, %v1747
      %v1759 = vpack.c.b16 %v1750, %v1749
      %v1760 = vpack.c.b16 %v1752, %v1751
      %1769 = vmatpush.bf16.msra.mxu0 %v1760
      %1770 = vmatpush.bf16.msra.mxu0 %v1759
      %1771 = vmatpush.bf16.msra.mxu0 %v1758
      %1772 = vmatpush.bf16.msra.mxu0 %v1757
      %1773 = vmatpush.bf16.msra.mxu0 %v1756
      %1774 = vmatpush.bf16.msra.mxu0 %v1755
      %1775 = vmatpush.bf16.msra.mxu0 %v1754
      %1776 = vmatpush.bf16.msra.mxu0 %v1753
      %1777 = vmatmul.bf16.gmra.mxu0 %v1563
      %v1778 = vpop.f32.mrf.mxu0
      %v1779 = vadd.f32 %v1686, %v1778
      %v1780 = vpop.f32.mrf.mxu0
      %v1781 = vadd.f32 %v1688, %v1780
      %1782 = vmatmul.bf16.gmra.mxu0 %v1564
      %v1783 = vpop.f32.mrf.mxu0
      %v1784 = vadd.f32 %v1691, %v1783
      %v1785 = vpop.f32.mrf.mxu0
      %v1786 = vadd.f32 %v1693, %v1785
      %1787 = vmatmul.bf16.gmra.mxu0 %v1565
      %v1788 = vpop.f32.mrf.mxu0
      %v1789 = vadd.f32 %v1696, %v1788
      %v1790 = vpop.f32.mrf.mxu0
      %v1791 = vadd.f32 %v1698, %v1790
      %1792 = vmatmul.bf16.gmra.mxu0 %v1566
      %v1793 = vpop.f32.mrf.mxu0
      %v1794 = vadd.f32 %v1701, %v1793
      %v1795 = vpop.f32.mrf.mxu0
      %v1796 = vadd.f32 %v1703, %v1795
      %1797 = vmatmul.bf16.gmra.mxu0 %v1567
      %v1798 = vpop.f32.mrf.mxu0
      %v1799 = vadd.f32 %v1706, %v1798
      %v1800 = vpop.f32.mrf.mxu0
      %v1801 = vadd.f32 %v1708, %v1800
      %1802 = vmatmul.bf16.gmra.mxu0 %v1568
      %v1803 = vpop.f32.mrf.mxu0
      %v1804 = vadd.f32 %v1711, %v1803
      %v1805 = vpop.f32.mrf.mxu0
      %v1806 = vadd.f32 %v1713, %v1805
      %1807 = vdwg.mxu0
      %v1808 = vld [vmem:[#allocation3] sm:$0xe]
      %s1809 = scalar_lea.vmem %s2, 128
      %v1810 = vld [vmem:[%s1809] sm:$0xf]
      %v1811 = vld [vmem:[%s1809 + $0x4] sm:$0xf]
      %v1812 = vld [vmem:[%s1809 + $0x8] sm:$0xf]
      %v1813 = vld [vmem:[%s1809 + $0xc] sm:$0xf]
      %v1814 = vld [vmem:[%s1809 + $0x10] sm:$0xf]
      %v1815 = vld [vmem:[%s1809 + $0x14] sm:$0xf]
      %v1816 = vld [vmem:[%s1809 + $0x18] sm:$0xf]
      %v1817 = vld [vmem:[%s1809 + $0x1c] sm:$0xf]
      %v1818 = vld [vmem:[%s1809 + $0x20] sm:$0xf]
      %v1819 = vld [vmem:[%s1809 + $0x24] sm:$0xf]
      %v1820 = vld [vmem:[%s1809 + $0x28] sm:$0xf]
      %v1821 = vld [vmem:[%s1809 + $0x2c] sm:$0xf]
      %v1822 = vld [vmem:[%s1809 + $0x30] sm:$0xf]
      %v1823 = vld [vmem:[%s1809 + $0x34] sm:$0xf]
      %v1824 = vld [vmem:[%s1809 + $0x38] sm:$0xf]
      %v1825 = vld [vmem:[%s1809 + $0x3c] sm:$0xf]
      %v1827 = vunpack.c.l.b16 %v1808
      %v1828 = vpack.c.b16 %v1551, %v1827
      %v1829 = vrot.slane %v1828, 1
      %v1830 = vrot.slane %v1564, 1
      %v1831 = vsel %vm897, %v1829, %v1830
      %v1832 = vrot.slane %v1565, 1
      %v1833 = vsel %vm897, %v1830, %v1832
      %v1834 = vrot.slane %v1566, 1
      %v1835 = vsel %vm897, %v1832, %v1834
      %v1836 = vrot.slane %v1567, 1
      %v1837 = vsel %vm897, %v1834, %v1836
      %v1838 = vrot.slane %v1568, 1
      %v1839 = vsel %vm897, %v1836, %v1838
      %v1840 = vrot.slane %v1569, 1
      %v1841 = vsel %vm897, %v1838, %v1840
      %v1864 = vunpack.c.l.b16 %v1810
      %v1865 = vunpack.c.l.b16 %v1811
      %v1866 = vunpack.c.l.b16 %v1812
      %v1867 = vunpack.c.l.b16 %v1813
      %v1868 = vunpack.c.l.b16 %v1814
      %v1869 = vunpack.c.l.b16 %v1815
      %v1870 = vunpack.c.l.b16 %v1816
      %v1871 = vunpack.c.l.b16 %v1817
      %v1872 = vunpack.c.l.b16 %v1818
      %v1873 = vunpack.c.l.b16 %v1819
      %v1874 = vunpack.c.l.b16 %v1820
      %v1875 = vunpack.c.l.b16 %v1821
      %v1876 = vunpack.c.l.b16 %v1822
      %v1877 = vunpack.c.l.b16 %v1823
      %v1878 = vunpack.c.l.b16 %v1824
      %v1879 = vunpack.c.l.b16 %v1825
      %v1880 = vpack.c.b16 %v1865, %v1864
      %v1881 = vpack.c.b16 %v1867, %v1866
      %v1882 = vpack.c.b16 %v1869, %v1868
      %v1883 = vpack.c.b16 %v1871, %v1870
      %v1884 = vpack.c.b16 %v1873, %v1872
      %v1885 = vpack.c.b16 %v1875, %v1874
      %v1886 = vpack.c.b16 %v1877, %v1876
      %v1887 = vpack.c.b16 %v1879, %v1878
      %1896 = vmatpush.bf16.msra.mxu0 %v1887
      %1897 = vmatpush.bf16.msra.mxu0 %v1886
      %1898 = vmatpush.bf16.msra.mxu0 %v1885
      %1899 = vmatpush.bf16.msra.mxu0 %v1884
      %1900 = vmatpush.bf16.msra.mxu0 %v1883
      %1901 = vmatpush.bf16.msra.mxu0 %v1882
      %1902 = vmatpush.bf16.msra.mxu0 %v1881
      %1903 = vmatpush.bf16.msra.mxu0 %v1880
      %1904 = vmatmul.bf16.gmra.mxu0 %v1831
      %v1905 = vpop.f32.mrf.mxu0
      %v1906 = vadd.f32 0.0, %v1905
      %v1907 = vpop.f32.mrf.mxu0
      %v1908 = vadd.f32 0.0, %v1907
      %1909 = vmatmul.bf16.gmra.mxu0 %v1833
      %v1910 = vpop.f32.mrf.mxu0
      %v1911 = vadd.f32 0.0, %v1910
      %v1912 = vpop.f32.mrf.mxu0
      %v1913 = vadd.f32 0.0, %v1912
      %1914 = vmatmul.bf16.gmra.mxu0 %v1835
      %v1915 = vpop.f32.mrf.mxu0
      %v1916 = vadd.f32 0.0, %v1915
      %v1917 = vpop.f32.mrf.mxu0
      %v1918 = vadd.f32 0.0, %v1917
      %1919 = vmatmul.bf16.gmra.mxu0 %v1837
      %v1920 = vpop.f32.mrf.mxu0
      %v1921 = vadd.f32 0.0, %v1920
      %v1922 = vpop.f32.mrf.mxu0
      %v1923 = vadd.f32 0.0, %v1922
      %1924 = vmatmul.bf16.gmra.mxu0 %v1839
      %v1925 = vpop.f32.mrf.mxu0
      %v1926 = vadd.f32 0.0, %v1925
      %v1927 = vpop.f32.mrf.mxu0
      %v1928 = vadd.f32 0.0, %v1927
      %1929 = vmatmul.bf16.gmra.mxu0 %v1841
      %v1930 = vpop.f32.mrf.mxu0
      %v1931 = vadd.f32 0.0, %v1930
      %v1932 = vpop.f32.mrf.mxu0
      %v1933 = vadd.f32 0.0, %v1932
      %1934 = vdwg.mxu0
      %v1935 = vadd.f32 %v1779, %v1906
      %v1936 = vadd.f32 %v1781, %v1908
      %v1937 = vadd.f32 %v1784, %v1911
      %v1938 = vadd.f32 %v1786, %v1913
      %v1939 = vadd.f32 %v1789, %v1916
      %v1940 = vadd.f32 %v1791, %v1918
      %v1941 = vadd.f32 %v1794, %v1921
      %v1942 = vadd.f32 %v1796, %v1923
      %v1943 = vadd.f32 %v1799, %v1926
      %v1944 = vadd.f32 %v1801, %v1928
      %v1945 = vadd.f32 %v1804, %v1931
      %v1946 = vadd.f32 %v1806, %v1933
      %v1947 = vld [vmem:[#allocation3 + $0x4] sm:$0xe]
      %v1948 = vld [vmem:[#allocation3 + $0x8] sm:$0xf]
      %v1949 = vld [vmem:[#allocation3 + $0xc] sm:$0xf]
      %v1950 = vld [vmem:[#allocation3 + $0x10] sm:$0xf]
      %v1951 = vld [vmem:[#allocation3 + $0x14] sm:$0xf]
      %v1952 = vld [vmem:[#allocation3 + $0x18] sm:$0xf]
      %v1953 = vld [vmem:[#allocation3 + $0x1c] sm:$0xf]
      %v1954 = vld [vmem:[#allocation3 + $0x20] sm:$0xf]
      %v1955 = vld [vmem:[#allocation3 + $0x24] sm:$0xf]
      %v1956 = vld [vmem:[#allocation3 + $0x28] sm:$0xf]
      %v1957 = vld [vmem:[#allocation3 + $0x2c] sm:$0xf]
      %v1958 = vld [vmem:[#allocation3 + $0x30] sm:$0xf]
      %v1959 = vld [vmem:[#allocation3 + $0x34] sm:$0x1]
      %s1960 = scalar_lea.vmem %s2, 192
      %v1961 = vld [vmem:[%s1960] sm:$0xf]
      %v1962 = vld [vmem:[%s1960 + $0x4] sm:$0xf]
      %v1963 = vld [vmem:[%s1960 + $0x8] sm:$0xf]
      %v1964 = vld [vmem:[%s1960 + $0xc] sm:$0xf]
      %v1965 = vld [vmem:[%s1960 + $0x10] sm:$0xf]
      %v1966 = vld [vmem:[%s1960 + $0x14] sm:$0xf]
      %v1967 = vld [vmem:[%s1960 + $0x18] sm:$0xf]
      %v1968 = vld [vmem:[%s1960 + $0x1c] sm:$0xf]
      %v1969 = vld [vmem:[%s1960 + $0x20] sm:$0xf]
      %v1970 = vld [vmem:[%s1960 + $0x24] sm:$0xf]
      %v1971 = vld [vmem:[%s1960 + $0x28] sm:$0xf]
      %v1972 = vld [vmem:[%s1960 + $0x2c] sm:$0xf]
      %v1973 = vld [vmem:[%s1960 + $0x30] sm:$0xf]
      %v1974 = vld [vmem:[%s1960 + $0x34] sm:$0xf]
      %v1975 = vld [vmem:[%s1960 + $0x38] sm:$0xf]
      %v1976 = vld [vmem:[%s1960 + $0x3c] sm:$0xf]
      %v1990 = vunpack.c.l.b16 %v1947
      %v1991 = vunpack.c.l.b16 %v1948
      %v1992 = vunpack.c.l.b16 %v1949
      %v1993 = vunpack.c.l.b16 %v1950
      %v1994 = vunpack.c.l.b16 %v1951
      %v1995 = vunpack.c.l.b16 %v1952
      %v1996 = vunpack.c.l.b16 %v1953
      %v1997 = vunpack.c.l.b16 %v1954
      %v1998 = vunpack.c.l.b16 %v1955
      %v1999 = vunpack.c.l.b16 %v1956
      %v2000 = vunpack.c.l.b16 %v1957
      %v2001 = vunpack.c.l.b16 %v1958
      %v2002 = vunpack.c.l.b16 %v1959
      %v2003 = vpack.c.b16 %v1991, %v1990
      %v2004 = vpack.c.b16 %v1993, %v1992
      %v2005 = vpack.c.b16 %v1995, %v1994
      %v2006 = vpack.c.b16 %v1997, %v1996
      %v2007 = vpack.c.b16 %v1999, %v1998
      %v2008 = vpack.c.b16 %v2001, %v2000
      %v2009 = vpack.c.b16 %v2002, %v2002
      %v2010 = vrot.slane %v2003, 1
      %v2011 = vrot.slane %v2004, 1
      %v2012 = vsel %vm897, %v2010, %v2011
      %v2013 = vrot.slane %v2005, 1
      %v2014 = vsel %vm897, %v2011, %v2013
      %v2015 = vrot.slane %v2006, 1
      %v2016 = vsel %vm897, %v2013, %v2015
      %v2017 = vrot.slane %v2007, 1
      %v2018 = vsel %vm897, %v2015, %v2017
      %v2019 = vrot.slane %v2008, 1
      %v2020 = vsel %vm897, %v2017, %v2019
      %v2021 = vrot.slane %v2009, 1
      %v2022 = vsel %vm897, %v2019, %v2021
      %v2045 = vunpack.c.l.b16 %v1961
      %v2046 = vunpack.c.l.b16 %v1962
      %v2047 = vunpack.c.l.b16 %v1963
      %v2048 = vunpack.c.l.b16 %v1964
      %v2049 = vunpack.c.l.b16 %v1965
      %v2050 = vunpack.c.l.b16 %v1966
      %v2051 = vunpack.c.l.b16 %v1967
      %v2052 = vunpack.c.l.b16 %v1968
      %v2053 = vunpack.c.l.b16 %v1969
      %v2054 = vunpack.c.l.b16 %v1970
      %v2055 = vunpack.c.l.b16 %v1971
      %v2056 = vunpack.c.l.b16 %v1972
      %v2057 = vunpack.c.l.b16 %v1973
      %v2058 = vunpack.c.l.b16 %v1974
      %v2059 = vunpack.c.l.b16 %v1975
      %v2060 = vunpack.c.l.b16 %v1976
      %v2061 = vpack.c.b16 %v2046, %v2045
      %v2062 = vpack.c.b16 %v2048, %v2047
      %v2063 = vpack.c.b16 %v2050, %v2049
      %v2064 = vpack.c.b16 %v2052, %v2051
      %v2065 = vpack.c.b16 %v2054, %v2053
      %v2066 = vpack.c.b16 %v2056, %v2055
      %v2067 = vpack.c.b16 %v2058, %v2057
      %v2068 = vpack.c.b16 %v2060, %v2059
      %2077 = vmatpush.bf16.msra.mxu0 %v2068
      %2078 = vmatpush.bf16.msra.mxu0 %v2067
      %2079 = vmatpush.bf16.msra.mxu0 %v2066
      %2080 = vmatpush.bf16.msra.mxu0 %v2065
      %2081 = vmatpush.bf16.msra.mxu0 %v2064
      %2082 = vmatpush.bf16.msra.mxu0 %v2063
      %2083 = vmatpush.bf16.msra.mxu0 %v2062
      %2084 = vmatpush.bf16.msra.mxu0 %v2061
      %2085 = vmatmul.bf16.gmra.mxu0 %v2012
      %v2086 = vpop.f32.mrf.mxu0
      %v2087 = vadd.f32 0.0, %v2086
      %v2088 = vpop.f32.mrf.mxu0
      %v2089 = vadd.f32 0.0, %v2088
      %2090 = vmatmul.bf16.gmra.mxu0 %v2014
      %v2091 = vpop.f32.mrf.mxu0
      %v2092 = vadd.f32 0.0, %v2091
      %v2093 = vpop.f32.mrf.mxu0
      %v2094 = vadd.f32 0.0, %v2093
      %2095 = vmatmul.bf16.gmra.mxu0 %v2016
      %v2096 = vpop.f32.mrf.mxu0
      %v2097 = vadd.f32 0.0, %v2096
      %v2098 = vpop.f32.mrf.mxu0
      %v2099 = vadd.f32 0.0, %v2098
      %2100 = vmatmul.bf16.gmra.mxu0 %v2018
      %v2101 = vpop.f32.mrf.mxu0
      %v2102 = vadd.f32 0.0, %v2101
      %v2103 = vpop.f32.mrf.mxu0
      %v2104 = vadd.f32 0.0, %v2103
      %2105 = vmatmul.bf16.gmra.mxu0 %v2020
      %v2106 = vpop.f32.mrf.mxu0
      %v2107 = vadd.f32 0.0, %v2106
      %v2108 = vpop.f32.mrf.mxu0
      %v2109 = vadd.f32 0.0, %v2108
      %2110 = vmatmul.bf16.gmra.mxu0 %v2022
      %v2111 = vpop.f32.mrf.mxu0
      %v2112 = vadd.f32 0.0, %v2111
      %v2113 = vpop.f32.mrf.mxu0
      %v2114 = vadd.f32 0.0, %v2113
      %2115 = vdwg.mxu0
      %v2116 = vadd.f32 %v1935, %v2087
      %v2117 = vadd.f32 %v1936, %v2089
      %v2118 = vadd.f32 %v1937, %v2092
      %v2119 = vadd.f32 %v1938, %v2094
      %v2120 = vadd.f32 %v1939, %v2097
      %v2121 = vadd.f32 %v1940, %v2099
      %v2122 = vadd.f32 %v1941, %v2102
      %v2123 = vadd.f32 %v1942, %v2104
      %v2124 = vadd.f32 %v1943, %v2107
      %v2125 = vadd.f32 %v1944, %v2109
      %v2126 = vadd.f32 %v1945, %v2112
      %v2127 = vadd.f32 %v1946, %v2114
      %v2128 = vld [vmem:[#allocation3 + $0x34] sm:$0x3]
      %s2129 = scalar_lea.vmem %s2, 256
      %v2130 = vld [vmem:[%s2129] sm:$0xf]
      %v2131 = vld [vmem:[%s2129 + $0x4] sm:$0xf]
      %v2132 = vld [vmem:[%s2129 + $0x8] sm:$0xf]
      %v2133 = vld [vmem:[%s2129 + $0xc] sm:$0xf]
      %v2134 = vld [vmem:[%s2129 + $0x10] sm:$0xf]
      %v2135 = vld [vmem:[%s2129 + $0x14] sm:$0xf]
      %v2136 = vld [vmem:[%s2129 + $0x18] sm:$0xf]
      %v2137 = vld [vmem:[%s2129 + $0x1c] sm:$0xf]
      %v2138 = vld [vmem:[%s2129 + $0x20] sm:$0xf]
      %v2139 = vld [vmem:[%s2129 + $0x24] sm:$0xf]
      %v2140 = vld [vmem:[%s2129 + $0x28] sm:$0xf]
      %v2141 = vld [vmem:[%s2129 + $0x2c] sm:$0xf]
      %v2142 = vld [vmem:[%s2129 + $0x30] sm:$0xf]
      %v2143 = vld [vmem:[%s2129 + $0x34] sm:$0xf]
      %v2144 = vld [vmem:[%s2129 + $0x38] sm:$0xf]
      %v2145 = vld [vmem:[%s2129 + $0x3c] sm:$0xf]
      %v2147 = vunpack.c.l.b16 %v2128
      %v2148 = vpack.c.b16 %v2147, %v2147
      %v2150 = vshrl.u32 %v2003, 16
      %v2152 = vrot.slane %v2150, 1
      %v2153 = vshll.u32 %v2003, 16
      %v2155 = vrot.slane %v2153, 2
      %v2156 = vor.u32 %v2152, %v2155
      %v2158 = vshrl.u32 %v2004, 16
      %v2160 = vrot.slane %v2158, 1
      %v2161 = vshll.u32 %v2004, 16
      %v2163 = vrot.slane %v2161, 2
      %v2164 = vor.u32 %v2160, %v2163
      %v2165 = vsel %vm1037, %v2156, %v2164
      %v2167 = vshrl.u32 %v2005, 16
      %v2169 = vrot.slane %v2167, 1
      %v2170 = vshll.u32 %v2005, 16
      %v2172 = vrot.slane %v2170, 2
      %v2173 = vor.u32 %v2169, %v2172
      %v2174 = vsel %vm1037, %v2164, %v2173
      %v2176 = vshrl.u32 %v2006, 16
      %v2178 = vrot.slane %v2176, 1
      %v2179 = vshll.u32 %v2006, 16
      %v2181 = vrot.slane %v2179, 2
      %v2182 = vor.u32 %v2178, %v2181
      %v2183 = vsel %vm1037, %v2173, %v2182
      %v2185 = vshrl.u32 %v2007, 16
      %v2187 = vrot.slane %v2185, 1
      %v2188 = vshll.u32 %v2007, 16
      %v2190 = vrot.slane %v2188, 2
      %v2191 = vor.u32 %v2187, %v2190
      %v2192 = vsel %vm1037, %v2182, %v2191
      %v2194 = vshrl.u32 %v2008, 16
      %v2196 = vrot.slane %v2194, 1
      %v2197 = vshll.u32 %v2008, 16
      %v2199 = vrot.slane %v2197, 2
      %v2200 = vor.u32 %v2196, %v2199
      %v2201 = vsel %vm1037, %v2191, %v2200
      %v2203 = vshrl.u32 %v2148, 16
      %v2205 = vrot.slane %v2203, 1
      %v2206 = vshll.u32 %v2148, 16
      %v2208 = vrot.slane %v2206, 2
      %v2209 = vor.u32 %v2205, %v2208
      %v2210 = vsel %vm1037, %v2200, %v2209
      %v2233 = vunpack.c.l.b16 %v2130
      %v2234 = vunpack.c.l.b16 %v2131
      %v2235 = vunpack.c.l.b16 %v2132
      %v2236 = vunpack.c.l.b16 %v2133
      %v2237 = vunpack.c.l.b16 %v2134
      %v2238 = vunpack.c.l.b16 %v2135
      %v2239 = vunpack.c.l.b16 %v2136
      %v2240 = vunpack.c.l.b16 %v2137
      %v2241 = vunpack.c.l.b16 %v2138
      %v2242 = vunpack.c.l.b16 %v2139
      %v2243 = vunpack.c.l.b16 %v2140
      %v2244 = vunpack.c.l.b16 %v2141
      %v2245 = vunpack.c.l.b16 %v2142
      %v2246 = vunpack.c.l.b16 %v2143
      %v2247 = vunpack.c.l.b16 %v2144
      %v2248 = vunpack.c.l.b16 %v2145
      %v2249 = vpack.c.b16 %v2234, %v2233
      %v2250 = vpack.c.b16 %v2236, %v2235
      %v2251 = vpack.c.b16 %v2238, %v2237
      %v2252 = vpack.c.b16 %v2240, %v2239
      %v2253 = vpack.c.b16 %v2242, %v2241
      %v2254 = vpack.c.b16 %v2244, %v2243
      %v2255 = vpack.c.b16 %v2246, %v2245
      %v2256 = vpack.c.b16 %v2248, %v2247
      %2265 = vmatpush.bf16.msra.mxu0 %v2256
      %2266 = vmatpush.bf16.msra.mxu0 %v2255
      %2267 = vmatpush.bf16.msra.mxu0 %v2254
      %2268 = vmatpush.bf16.msra.mxu0 %v2253
      %2269 = vmatpush.bf16.msra.mxu0 %v2252
      %2270 = vmatpush.bf16.msra.mxu0 %v2251
      %2271 = vmatpush.bf16.msra.mxu0 %v2250
      %2272 = vmatpush.bf16.msra.mxu0 %v2249
      %2273 = vmatmul.bf16.gmra.mxu0 %v2165
      %v2274 = vpop.f32.mrf.mxu0
      %v2275 = vadd.f32 0.0, %v2274
      %v2276 = vpop.f32.mrf.mxu0
      %v2277 = vadd.f32 0.0, %v2276
      %2278 = vmatmul.bf16.gmra.mxu0 %v2174
      %v2279 = vpop.f32.mrf.mxu0
      %v2280 = vadd.f32 0.0, %v2279
      %v2281 = vpop.f32.mrf.mxu0
      %v2282 = vadd.f32 0.0, %v2281
      %2283 = vmatmul.bf16.gmra.mxu0 %v2183
      %v2284 = vpop.f32.mrf.mxu0
      %v2285 = vadd.f32 0.0, %v2284
      %v2286 = vpop.f32.mrf.mxu0
      %v2287 = vadd.f32 0.0, %v2286
      %2288 = vmatmul.bf16.gmra.mxu0 %v2192
      %v2289 = vpop.f32.mrf.mxu0
      %v2290 = vadd.f32 0.0, %v2289
      %v2291 = vpop.f32.mrf.mxu0
      %v2292 = vadd.f32 0.0, %v2291
      %2293 = vmatmul.bf16.gmra.mxu0 %v2201
      %v2294 = vpop.f32.mrf.mxu0
      %v2295 = vadd.f32 0.0, %v2294
      %v2296 = vpop.f32.mrf.mxu0
      %v2297 = vadd.f32 0.0, %v2296
      %2298 = vmatmul.bf16.gmra.mxu0 %v2210
      %v2299 = vpop.f32.mrf.mxu0
      %v2300 = vadd.f32 0.0, %v2299
      %v2301 = vpop.f32.mrf.mxu0
      %v2302 = vadd.f32 0.0, %v2301
      %2303 = vdwg.mxu0
      %v2304 = vadd.f32 %v2116, %v2275
      %v2305 = vadd.f32 %v2117, %v2277
      %v2306 = vadd.f32 %v2118, %v2280
      %v2307 = vadd.f32 %v2119, %v2282
      %v2308 = vadd.f32 %v2120, %v2285
      %v2309 = vadd.f32 %v2121, %v2287
      %v2310 = vadd.f32 %v2122, %v2290
      %v2311 = vadd.f32 %v2123, %v2292
      %v2312 = vadd.f32 %v2124, %v2295
      %v2313 = vadd.f32 %v2125, %v2297
      %v2314 = vadd.f32 %v2126, %v2300
      %v2315 = vadd.f32 %v2127, %v2302
      %v2316 = vld [vmem:[#allocation3 + $0x4] sm:$0xc]
      %s2317 = scalar_lea.vmem %s2, 320
      %v2318 = vld [vmem:[%s2317] sm:$0xf]
      %v2319 = vld [vmem:[%s2317 + $0x4] sm:$0xf]
      %v2320 = vld [vmem:[%s2317 + $0x8] sm:$0xf]
      %v2321 = vld [vmem:[%s2317 + $0xc] sm:$0xf]
      %v2322 = vld [vmem:[%s2317 + $0x10] sm:$0xf]
      %v2323 = vld [vmem:[%s2317 + $0x14] sm:$0xf]
      %v2324 = vld [vmem:[%s2317 + $0x18] sm:$0xf]
      %v2325 = vld [vmem:[%s2317 + $0x1c] sm:$0xf]
      %v2326 = vld [vmem:[%s2317 + $0x20] sm:$0xf]
      %v2327 = vld [vmem:[%s2317 + $0x24] sm:$0xf]
      %v2328 = vld [vmem:[%s2317 + $0x28] sm:$0xf]
      %v2329 = vld [vmem:[%s2317 + $0x2c] sm:$0xf]
      %v2330 = vld [vmem:[%s2317 + $0x30] sm:$0xf]
      %v2331 = vld [vmem:[%s2317 + $0x34] sm:$0xf]
      %v2332 = vld [vmem:[%s2317 + $0x38] sm:$0xf]
      %v2333 = vld [vmem:[%s2317 + $0x3c] sm:$0xf]
      %v2335 = vunpack.c.l.b16 %v2316
      %v2336 = vpack.c.b16 %v1991, %v2335
      %vm2337 = vcmask 1045504
      %v2338 = vrot.slane %v2336, 2
      %v2339 = vrot.slane %v2004, 2
      %v2340 = vsel %vm2337, %v2338, %v2339
      %v2341 = vrot.slane %v2005, 2
      %v2342 = vsel %vm2337, %v2339, %v2341
      %v2343 = vrot.slane %v2006, 2
      %v2344 = vsel %vm2337, %v2341, %v2343
      %v2345 = vrot.slane %v2007, 2
      %v2346 = vsel %vm2337, %v2343, %v2345
      %v2347 = vrot.slane %v2008, 2
      %v2348 = vsel %vm2337, %v2345, %v2347
      %v2349 = vrot.slane %v2148, 2
      %v2350 = vsel %vm2337, %v2347, %v2349
      %v2373 = vunpack.c.l.b16 %v2318
      %v2374 = vunpack.c.l.b16 %v2319
      %v2375 = vunpack.c.l.b16 %v2320
      %v2376 = vunpack.c.l.b16 %v2321
      %v2377 = vunpack.c.l.b16 %v2322
      %v2378 = vunpack.c.l.b16 %v2323
      %v2379 = vunpack.c.l.b16 %v2324
      %v2380 = vunpack.c.l.b16 %v2325
      %v2381 = vunpack.c.l.b16 %v2326
      %v2382 = vunpack.c.l.b16 %v2327
      %v2383 = vunpack.c.l.b16 %v2328
      %v2384 = vunpack.c.l.b16 %v2329
      %v2385 = vunpack.c.l.b16 %v2330
      %v2386 = vunpack.c.l.b16 %v2331
      %v2387 = vunpack.c.l.b16 %v2332
      %v2388 = vunpack.c.l.b16 %v2333
      %v2389 = vpack.c.b16 %v2374, %v2373
      %v2390 = vpack.c.b16 %v2376, %v2375
      %v2391 = vpack.c.b16 %v2378, %v2377
      %v2392 = vpack.c.b16 %v2380, %v2379
      %v2393 = vpack.c.b16 %v2382, %v2381
      %v2394 = vpack.c.b16 %v2384, %v2383
      %v2395 = vpack.c.b16 %v2386, %v2385
      %v2396 = vpack.c.b16 %v2388, %v2387
      %2405 = vmatpush.bf16.msra.mxu0 %v2396
      %2406 = vmatpush.bf16.msra.mxu0 %v2395
      %2407 = vmatpush.bf16.msra.mxu0 %v2394
      %2408 = vmatpush.bf16.msra.mxu0 %v2393
      %2409 = vmatpush.bf16.msra.mxu0 %v2392
      %2410 = vmatpush.bf16.msra.mxu0 %v2391
      %2411 = vmatpush.bf16.msra.mxu0 %v2390
      %2412 = vmatpush.bf16.msra.mxu0 %v2389
      %2413 = vmatmul.bf16.gmra.mxu0 %v2340
      %v2414 = vpop.f32.mrf.mxu0
      %v2415 = vadd.f32 0.0, %v2414
      %v2416 = vpop.f32.mrf.mxu0
      %v2417 = vadd.f32 0.0, %v2416
      %2418 = vmatmul.bf16.gmra.mxu0 %v2342
      %v2419 = vpop.f32.mrf.mxu0
      %v2420 = vadd.f32 0.0, %v2419
      %v2421 = vpop.f32.mrf.mxu0
      %v2422 = vadd.f32 0.0, %v2421
      %2423 = vmatmul.bf16.gmra.mxu0 %v2344
      %v2424 = vpop.f32.mrf.mxu0
      %v2425 = vadd.f32 0.0, %v2424
      %v2426 = vpop.f32.mrf.mxu0
      %v2427 = vadd.f32 0.0, %v2426
      %2428 = vmatmul.bf16.gmra.mxu0 %v2346
      %v2429 = vpop.f32.mrf.mxu0
      %v2430 = vadd.f32 0.0, %v2429
      %v2431 = vpop.f32.mrf.mxu0
      %v2432 = vadd.f32 0.0, %v2431
      %2433 = vmatmul.bf16.gmra.mxu0 %v2348
      %v2434 = vpop.f32.mrf.mxu0
      %v2435 = vadd.f32 0.0, %v2434
      %v2436 = vpop.f32.mrf.mxu0
      %v2437 = vadd.f32 0.0, %v2436
      %2438 = vmatmul.bf16.gmra.mxu0 %v2350
      %v2439 = vpop.f32.mrf.mxu0
      %v2440 = vadd.f32 0.0, %v2439
      %v2441 = vpop.f32.mrf.mxu0
      %v2442 = vadd.f32 0.0, %v2441
      %2443 = vdwg.mxu0
      %v2444 = vadd.f32 %v2304, %v2415
      %v2445 = vadd.f32 %v2305, %v2417
      %v2446 = vadd.f32 %v2306, %v2420
      %v2447 = vadd.f32 %v2307, %v2422
      %v2448 = vadd.f32 %v2308, %v2425
      %v2449 = vadd.f32 %v2309, %v2427
      %v2450 = vadd.f32 %v2310, %v2430
      %v2451 = vadd.f32 %v2311, %v2432
      %v2452 = vadd.f32 %v2312, %v2435
      %v2453 = vadd.f32 %v2313, %v2437
      %v2454 = vadd.f32 %v2314, %v2440
      %v2455 = vadd.f32 %v2315, %v2442
      %v2456 = vld [vmem:[#allocation3 + $0x8] sm:$0xc]
      %v2457 = vld [vmem:[#allocation3 + $0xc] sm:$0xf]
      %v2458 = vld [vmem:[#allocation3 + $0x10] sm:$0xf]
      %v2459 = vld [vmem:[#allocation3 + $0x14] sm:$0xf]
      %v2460 = vld [vmem:[#allocation3 + $0x18] sm:$0xf]
      %v2461 = vld [vmem:[#allocation3 + $0x1c] sm:$0xf]
      %v2462 = vld [vmem:[#allocation3 + $0x20] sm:$0xf]
      %v2463 = vld [vmem:[#allocation3 + $0x24] sm:$0xf]
      %v2464 = vld [vmem:[#allocation3 + $0x28] sm:$0xf]
      %v2465 = vld [vmem:[#allocation3 + $0x2c] sm:$0xf]
      %v2466 = vld [vmem:[#allocation3 + $0x30] sm:$0xf]
      %v2467 = vld [vmem:[#allocation3 + $0x34] sm:$0xf]
      %v2468 = vld [vmem:[#allocation3 + $0x38] sm:$0x3]
      %s2469 = scalar_lea.vmem %s2, 384
      %v2470 = vld [vmem:[%s2469] sm:$0xf]
      %v2471 = vld [vmem:[%s2469 + $0x4] sm:$0xf]
      %v2472 = vld [vmem:[%s2469 + $0x8] sm:$0xf]
      %v2473 = vld [vmem:[%s2469 + $0xc] sm:$0xf]
      %v2474 = vld [vmem:[%s2469 + $0x10] sm:$0xf]
      %v2475 = vld [vmem:[%s2469 + $0x14] sm:$0xf]
      %v2476 = vld [vmem:[%s2469 + $0x18] sm:$0xf]
      %v2477 = vld [vmem:[%s2469 + $0x1c] sm:$0xf]
      %v2478 = vld [vmem:[%s2469 + $0x20] sm:$0xf]
      %v2479 = vld [vmem:[%s2469 + $0x24] sm:$0xf]
      %v2480 = vld [vmem:[%s2469 + $0x28] sm:$0xf]
      %v2481 = vld [vmem:[%s2469 + $0x2c] sm:$0xf]
      %v2482 = vld [vmem:[%s2469 + $0x30] sm:$0xf]
      %v2483 = vld [vmem:[%s2469 + $0x34] sm:$0xf]
      %v2484 = vld [vmem:[%s2469 + $0x38] sm:$0xf]
      %v2485 = vld [vmem:[%s2469 + $0x3c] sm:$0xf]
      %v2499 = vunpack.c.l.b16 %v2456
      %v2500 = vunpack.c.l.b16 %v2457
      %v2501 = vunpack.c.l.b16 %v2458
      %v2502 = vunpack.c.l.b16 %v2459
      %v2503 = vunpack.c.l.b16 %v2460
      %v2504 = vunpack.c.l.b16 %v2461
      %v2505 = vunpack.c.l.b16 %v2462
      %v2506 = vunpack.c.l.b16 %v2463
      %v2507 = vunpack.c.l.b16 %v2464
      %v2508 = vunpack.c.l.b16 %v2465
      %v2509 = vunpack.c.l.b16 %v2466
      %v2510 = vunpack.c.l.b16 %v2467
      %v2511 = vunpack.c.l.b16 %v2468
      %v2512 = vpack.c.b16 %v2500, %v2499
      %v2513 = vpack.c.b16 %v2502, %v2501
      %v2514 = vpack.c.b16 %v2504, %v2503
      %v2515 = vpack.c.b16 %v2506, %v2505
      %v2516 = vpack.c.b16 %v2508, %v2507
      %v2517 = vpack.c.b16 %v2510, %v2509
      %v2518 = vpack.c.b16 %v2511, %v2511
      %v2519 = vrot.slane %v2512, 2
      %v2520 = vrot.slane %v2513, 2
      %v2521 = vsel %vm2337, %v2519, %v2520
      %v2522 = vrot.slane %v2514, 2
      %v2523 = vsel %vm2337, %v2520, %v2522
      %v2524 = vrot.slane %v2515, 2
      %v2525 = vsel %vm2337, %v2522, %v2524
      %v2526 = vrot.slane %v2516, 2
      %v2527 = vsel %vm2337, %v2524, %v2526
      %v2528 = vrot.slane %v2517, 2
      %v2529 = vsel %vm2337, %v2526, %v2528
      %v2530 = vrot.slane %v2518, 2
      %v2531 = vsel %vm2337, %v2528, %v2530
      %v2554 = vunpack.c.l.b16 %v2470
      %v2555 = vunpack.c.l.b16 %v2471
      %v2556 = vunpack.c.l.b16 %v2472
      %v2557 = vunpack.c.l.b16 %v2473
      %v2558 = vunpack.c.l.b16 %v2474
      %v2559 = vunpack.c.l.b16 %v2475
      %v2560 = vunpack.c.l.b16 %v2476
      %v2561 = vunpack.c.l.b16 %v2477
      %v2562 = vunpack.c.l.b16 %v2478
      %v2563 = vunpack.c.l.b16 %v2479
      %v2564 = vunpack.c.l.b16 %v2480
      %v2565 = vunpack.c.l.b16 %v2481
      %v2566 = vunpack.c.l.b16 %v2482
      %v2567 = vunpack.c.l.b16 %v2483
      %v2568 = vunpack.c.l.b16 %v2484
      %v2569 = vunpack.c.l.b16 %v2485
      %v2570 = vpack.c.b16 %v2555, %v2554
      %v2571 = vpack.c.b16 %v2557, %v2556
      %v2572 = vpack.c.b16 %v2559, %v2558
      %v2573 = vpack.c.b16 %v2561, %v2560
      %v2574 = vpack.c.b16 %v2563, %v2562
      %v2575 = vpack.c.b16 %v2565, %v2564
      %v2576 = vpack.c.b16 %v2567, %v2566
      %v2577 = vpack.c.b16 %v2569, %v2568
      %2586 = vmatpush.bf16.msra.mxu0 %v2577
      %2587 = vmatpush.bf16.msra.mxu0 %v2576
      %2588 = vmatpush.bf16.msra.mxu0 %v2575
      %2589 = vmatpush.bf16.msra.mxu0 %v2574
      %2590 = vmatpush.bf16.msra.mxu0 %v2573
      %2591 = vmatpush.bf16.msra.mxu0 %v2572
      %2592 = vmatpush.bf16.msra.mxu0 %v2571
      %2593 = vmatpush.bf16.msra.mxu0 %v2570
      %2594 = vmatmul.bf16.gmra.mxu0 %v2521
      %v2595 = vpop.f32.mrf.mxu0
      %v2596 = vadd.f32 0.0, %v2595
      %v2597 = vpop.f32.mrf.mxu0
      %v2598 = vadd.f32 0.0, %v2597
      %2599 = vmatmul.bf16.gmra.mxu0 %v2523
      %v2600 = vpop.f32.mrf.mxu0
      %v2601 = vadd.f32 0.0, %v2600
      %v2602 = vpop.f32.mrf.mxu0
      %v2603 = vadd.f32 0.0, %v2602
      %2604 = vmatmul.bf16.gmra.mxu0 %v2525
      %v2605 = vpop.f32.mrf.mxu0
      %v2606 = vadd.f32 0.0, %v2605
      %v2607 = vpop.f32.mrf.mxu0
      %v2608 = vadd.f32 0.0, %v2607
      %2609 = vmatmul.bf16.gmra.mxu0 %v2527
      %v2610 = vpop.f32.mrf.mxu0
      %v2611 = vadd.f32 0.0, %v2610
      %v2612 = vpop.f32.mrf.mxu0
      %v2613 = vadd.f32 0.0, %v2612
      %2614 = vmatmul.bf16.gmra.mxu0 %v2529
      %v2615 = vpop.f32.mrf.mxu0
      %v2616 = vadd.f32 0.0, %v2615
      %v2617 = vpop.f32.mrf.mxu0
      %v2618 = vadd.f32 0.0, %v2617
      %2619 = vmatmul.bf16.gmra.mxu0 %v2531
      %v2620 = vpop.f32.mrf.mxu0
      %v2621 = vadd.f32 0.0, %v2620
      %v2622 = vpop.f32.mrf.mxu0
      %v2623 = vadd.f32 0.0, %v2622
      %2624 = vdwg.mxu0
      %v2625 = vadd.f32 %v2444, %v2596
      %v2626 = vadd.f32 %v2445, %v2598
      %v2627 = vadd.f32 %v2446, %v2601
      %v2628 = vadd.f32 %v2447, %v2603
      %v2629 = vadd.f32 %v2448, %v2606
      %v2630 = vadd.f32 %v2449, %v2608
      %v2631 = vadd.f32 %v2450, %v2611
      %v2632 = vadd.f32 %v2451, %v2613
      %v2633 = vadd.f32 %v2452, %v2616
      %v2634 = vadd.f32 %v2453, %v2618
      %v2635 = vadd.f32 %v2454, %v2621
      %v2636 = vadd.f32 %v2455, %v2623
      %v2637 = vld [vmem:[#allocation3 + $0x38] sm:$0x7]
      %s2638 = scalar_lea.vmem %s2, 448
      %v2639 = vld [vmem:[%s2638] sm:$0xf]
      %v2640 = vld [vmem:[%s2638 + $0x4] sm:$0xf]
      %v2641 = vld [vmem:[%s2638 + $0x8] sm:$0xf]
      %v2642 = vld [vmem:[%s2638 + $0xc] sm:$0xf]
      %v2643 = vld [vmem:[%s2638 + $0x10] sm:$0xf]
      %v2644 = vld [vmem:[%s2638 + $0x14] sm:$0xf]
      %v2645 = vld [vmem:[%s2638 + $0x18] sm:$0xf]
      %v2646 = vld [vmem:[%s2638 + $0x1c] sm:$0xf]
      %v2647 = vld [vmem:[%s2638 + $0x20] sm:$0xf]
      %v2648 = vld [vmem:[%s2638 + $0x24] sm:$0xf]
      %v2649 = vld [vmem:[%s2638 + $0x28] sm:$0xf]
      %v2650 = vld [vmem:[%s2638 + $0x2c] sm:$0xf]
      %v2651 = vld [vmem:[%s2638 + $0x30] sm:$0xf]
      %v2652 = vld [vmem:[%s2638 + $0x34] sm:$0xf]
      %v2653 = vld [vmem:[%s2638 + $0x38] sm:$0xf]
      %v2654 = vld [vmem:[%s2638 + $0x3c] sm:$0xf]
      %v2656 = vunpack.c.l.b16 %v2637
      %v2657 = vpack.c.b16 %v2656, %v2656
      %vm2658 = vsmask.f32 5376
      %v2660 = vshrl.u32 %v2512, 16
      %v2662 = vrot.slane %v2660, 2
      %v2663 = vshll.u32 %v2512, 16
      %v2665 = vrot.slane %v2663, 3
      %v2666 = vor.u32 %v2662, %v2665
      %v2668 = vshrl.u32 %v2513, 16
      %v2670 = vrot.slane %v2668, 2
      %v2671 = vshll.u32 %v2513, 16
      %v2673 = vrot.slane %v2671, 3
      %v2674 = vor.u32 %v2670, %v2673
      %v2675 = vsel %vm2658, %v2666, %v2674
      %v2677 = vshrl.u32 %v2514, 16
      %v2679 = vrot.slane %v2677, 2
      %v2680 = vshll.u32 %v2514, 16
      %v2682 = vrot.slane %v2680, 3
      %v2683 = vor.u32 %v2679, %v2682
      %v2684 = vsel %vm2658, %v2674, %v2683
      %v2686 = vshrl.u32 %v2515, 16
      %v2688 = vrot.slane %v2686, 2
      %v2689 = vshll.u32 %v2515, 16
      %v2691 = vrot.slane %v2689, 3
      %v2692 = vor.u32 %v2688, %v2691
      %v2693 = vsel %vm2658, %v2683, %v2692
      %v2695 = vshrl.u32 %v2516, 16
      %v2697 = vrot.slane %v2695, 2
      %v2698 = vshll.u32 %v2516, 16
      %v2700 = vrot.slane %v2698, 3
      %v2701 = vor.u32 %v2697, %v2700
      %v2702 = vsel %vm2658, %v2692, %v2701
      %v2704 = vshrl.u32 %v2517, 16
      %v2706 = vrot.slane %v2704, 2
      %v2707 = vshll.u32 %v2517, 16
      %v2709 = vrot.slane %v2707, 3
      %v2710 = vor.u32 %v2706, %v2709
      %v2711 = vsel %vm2658, %v2701, %v2710
      %v2713 = vshrl.u32 %v2657, 16
      %v2715 = vrot.slane %v2713, 2
      %v2716 = vshll.u32 %v2657, 16
      %v2718 = vrot.slane %v2716, 3
      %v2719 = vor.u32 %v2715, %v2718
      %v2720 = vsel %vm2658, %v2710, %v2719
      %v2743 = vunpack.c.l.b16 %v2639
      %v2744 = vunpack.c.l.b16 %v2640
      %v2745 = vunpack.c.l.b16 %v2641
      %v2746 = vunpack.c.l.b16 %v2642
      %v2747 = vunpack.c.l.b16 %v2643
      %v2748 = vunpack.c.l.b16 %v2644
      %v2749 = vunpack.c.l.b16 %v2645
      %v2750 = vunpack.c.l.b16 %v2646
      %v2751 = vunpack.c.l.b16 %v2647
      %v2752 = vunpack.c.l.b16 %v2648
      %v2753 = vunpack.c.l.b16 %v2649
      %v2754 = vunpack.c.l.b16 %v2650
      %v2755 = vunpack.c.l.b16 %v2651
      %v2756 = vunpack.c.l.b16 %v2652
      %v2757 = vunpack.c.l.b16 %v2653
      %v2758 = vunpack.c.l.b16 %v2654
      %v2759 = vpack.c.b16 %v2744, %v2743
      %v2760 = vpack.c.b16 %v2746, %v2745
      %v2761 = vpack.c.b16 %v2748, %v2747
      %v2762 = vpack.c.b16 %v2750, %v2749
      %v2763 = vpack.c.b16 %v2752, %v2751
      %v2764 = vpack.c.b16 %v2754, %v2753
      %v2765 = vpack.c.b16 %v2756, %v2755
      %v2766 = vpack.c.b16 %v2758, %v2757
      %2775 = vmatpush.bf16.msra.mxu0 %v2766
      %2776 = vmatpush.bf16.msra.mxu0 %v2765
      %2777 = vmatpush.bf16.msra.mxu0 %v2764
      %2778 = vmatpush.bf16.msra.mxu0 %v2763
      %2779 = vmatpush.bf16.msra.mxu0 %v2762
      %2780 = vmatpush.bf16.msra.mxu0 %v2761
      %2781 = vmatpush.bf16.msra.mxu0 %v2760
      %2782 = vmatpush.bf16.msra.mxu0 %v2759
      %2783 = vmatmul.bf16.gmra.mxu0 %v2675
      %v2784 = vpop.f32.mrf.mxu0
      %v2785 = vadd.f32 0.0, %v2784
      %v2786 = vpop.f32.mrf.mxu0
      %v2787 = vadd.f32 0.0, %v2786
      %2788 = vmatmul.bf16.gmra.mxu0 %v2684
      %v2789 = vpop.f32.mrf.mxu0
      %v2790 = vadd.f32 0.0, %v2789
      %v2791 = vpop.f32.mrf.mxu0
      %v2792 = vadd.f32 0.0, %v2791
      %2793 = vmatmul.bf16.gmra.mxu0 %v2693
      %v2794 = vpop.f32.mrf.mxu0
      %v2795 = vadd.f32 0.0, %v2794
      %v2796 = vpop.f32.mrf.mxu0
      %v2797 = vadd.f32 0.0, %v2796
      %2798 = vmatmul.bf16.gmra.mxu0 %v2702
      %v2799 = vpop.f32.mrf.mxu0
      %v2800 = vadd.f32 0.0, %v2799
      %v2801 = vpop.f32.mrf.mxu0
      %v2802 = vadd.f32 0.0, %v2801
      %2803 = vmatmul.bf16.gmra.mxu0 %v2711
      %v2804 = vpop.f32.mrf.mxu0
      %v2805 = vadd.f32 0.0, %v2804
      %v2806 = vpop.f32.mrf.mxu0
      %v2807 = vadd.f32 0.0, %v2806
      %2808 = vmatmul.bf16.gmra.mxu0 %v2720
      %v2809 = vpop.f32.mrf.mxu0
      %v2810 = vadd.f32 0.0, %v2809
      %v2811 = vpop.f32.mrf.mxu0
      %v2812 = vadd.f32 0.0, %v2811
      %2813 = vdwg.mxu0
      %v2814 = vadd.f32 %v2625, %v2785
      %v2815 = vadd.f32 %v2626, %v2787
      %v2816 = vadd.f32 %v2627, %v2790
      %v2817 = vadd.f32 %v2628, %v2792
      %v2818 = vadd.f32 %v2629, %v2795
      %v2819 = vadd.f32 %v2630, %v2797
      %v2820 = vadd.f32 %v2631, %v2800
      %v2821 = vadd.f32 %v2632, %v2802
      %v2822 = vadd.f32 %v2633, %v2805
      %v2823 = vadd.f32 %v2634, %v2807
      %v2824 = vadd.f32 %v2635, %v2810
      %v2825 = vadd.f32 %v2636, %v2812
      %v2826 = vld [vmem:[#allocation3 + $0x8] sm:$0x8]
      %s2827 = scalar_lea.vmem %s2, 512
      %v2828 = vld [vmem:[%s2827] sm:$0xf]
      %v2829 = vld [vmem:[%s2827 + $0x4] sm:$0xf]
      %v2830 = vld [vmem:[%s2827 + $0x8] sm:$0xf]
      %v2831 = vld [vmem:[%s2827 + $0xc] sm:$0xf]
      %v2832 = vld [vmem:[%s2827 + $0x10] sm:$0xf]
      %v2833 = vld [vmem:[%s2827 + $0x14] sm:$0xf]
      %v2834 = vld [vmem:[%s2827 + $0x18] sm:$0xf]
      %v2835 = vld [vmem:[%s2827 + $0x1c] sm:$0xf]
      %v2836 = vld [vmem:[%s2827 + $0x20] sm:$0xf]
      %v2837 = vld [vmem:[%s2827 + $0x24] sm:$0xf]
      %v2838 = vld [vmem:[%s2827 + $0x28] sm:$0xf]
      %v2839 = vld [vmem:[%s2827 + $0x2c] sm:$0xf]
      %v2840 = vld [vmem:[%s2827 + $0x30] sm:$0xf]
      %v2841 = vld [vmem:[%s2827 + $0x34] sm:$0xf]
      %v2842 = vld [vmem:[%s2827 + $0x38] sm:$0xf]
      %v2843 = vld [vmem:[%s2827 + $0x3c] sm:$0xf]
      %v2845 = vunpack.c.l.b16 %v2826
      %v2846 = vpack.c.b16 %v2500, %v2845
      %vm2847 = vcmask 1044480
      %v2848 = vrot.slane %v2846, 3
      %v2849 = vrot.slane %v2513, 3
      %v2850 = vsel %vm2847, %v2848, %v2849
      %v2851 = vrot.slane %v2514, 3
      %v2852 = vsel %vm2847, %v2849, %v2851
      %v2853 = vrot.slane %v2515, 3
      %v2854 = vsel %vm2847, %v2851, %v2853
      %v2855 = vrot.slane %v2516, 3
      %v2856 = vsel %vm2847, %v2853, %v2855
      %v2857 = vrot.slane %v2517, 3
      %v2858 = vsel %vm2847, %v2855, %v2857
      %v2859 = vrot.slane %v2657, 3
      %v2860 = vsel %vm2847, %v2857, %v2859
      %v2883 = vunpack.c.l.b16 %v2828
      %v2884 = vunpack.c.l.b16 %v2829
      %v2885 = vunpack.c.l.b16 %v2830
      %v2886 = vunpack.c.l.b16 %v2831
      %v2887 = vunpack.c.l.b16 %v2832
      %v2888 = vunpack.c.l.b16 %v2833
      %v2889 = vunpack.c.l.b16 %v2834
      %v2890 = vunpack.c.l.b16 %v2835
      %v2891 = vunpack.c.l.b16 %v2836
      %v2892 = vunpack.c.l.b16 %v2837
      %v2893 = vunpack.c.l.b16 %v2838
      %v2894 = vunpack.c.l.b16 %v2839
      %v2895 = vunpack.c.l.b16 %v2840
      %v2896 = vunpack.c.l.b16 %v2841
      %v2897 = vunpack.c.l.b16 %v2842
      %v2898 = vunpack.c.l.b16 %v2843
      %v2899 = vpack.c.b16 %v2884, %v2883
      %v2900 = vpack.c.b16 %v2886, %v2885
      %v2901 = vpack.c.b16 %v2888, %v2887
      %v2902 = vpack.c.b16 %v2890, %v2889
      %v2903 = vpack.c.b16 %v2892, %v2891
      %v2904 = vpack.c.b16 %v2894, %v2893
      %v2905 = vpack.c.b16 %v2896, %v2895
      %v2906 = vpack.c.b16 %v2898, %v2897
      %2915 = vmatpush.bf16.msra.mxu0 %v2906
      %2916 = vmatpush.bf16.msra.mxu0 %v2905
      %2917 = vmatpush.bf16.msra.mxu0 %v2904
      %2918 = vmatpush.bf16.msra.mxu0 %v2903
      %2919 = vmatpush.bf16.msra.mxu0 %v2902
      %2920 = vmatpush.bf16.msra.mxu0 %v2901
      %2921 = vmatpush.bf16.msra.mxu0 %v2900
      %2922 = vmatpush.bf16.msra.mxu0 %v2899
      %2923 = vmatmul.bf16.gmra.mxu0 %v2850
      %v2924 = vpop.f32.mrf.mxu0
      %v2925 = vadd.f32 0.0, %v2924
      %v2926 = vpop.f32.mrf.mxu0
      %v2927 = vadd.f32 0.0, %v2926
      %2928 = vmatmul.bf16.gmra.mxu0 %v2852
      %v2929 = vpop.f32.mrf.mxu0
      %v2930 = vadd.f32 0.0, %v2929
      %v2931 = vpop.f32.mrf.mxu0
      %v2932 = vadd.f32 0.0, %v2931
      %2933 = vmatmul.bf16.gmra.mxu0 %v2854
      %v2934 = vpop.f32.mrf.mxu0
      %v2935 = vadd.f32 0.0, %v2934
      %v2936 = vpop.f32.mrf.mxu0
      %v2937 = vadd.f32 0.0, %v2936
      %2938 = vmatmul.bf16.gmra.mxu0 %v2856
      %v2939 = vpop.f32.mrf.mxu0
      %v2940 = vadd.f32 0.0, %v2939
      %v2941 = vpop.f32.mrf.mxu0
      %v2942 = vadd.f32 0.0, %v2941
      %2943 = vmatmul.bf16.gmra.mxu0 %v2858
      %v2944 = vpop.f32.mrf.mxu0
      %v2945 = vadd.f32 0.0, %v2944
      %v2946 = vpop.f32.mrf.mxu0
      %v2947 = vadd.f32 0.0, %v2946
      %2948 = vmatmul.bf16.gmra.mxu0 %v2860
      %v2949 = vpop.f32.mrf.mxu0
      %v2950 = vadd.f32 0.0, %v2949
      %v2951 = vpop.f32.mrf.mxu0
      %v2952 = vadd.f32 0.0, %v2951
      %2953 = vdwg.mxu0
      %v2954 = vadd.f32 %v2814, %v2925
      %v2955 = vadd.f32 %v2815, %v2927
      %v2956 = vadd.f32 %v2816, %v2930
      %v2957 = vadd.f32 %v2817, %v2932
      %v2958 = vadd.f32 %v2818, %v2935
      %v2959 = vadd.f32 %v2819, %v2937
      %v2960 = vadd.f32 %v2820, %v2940
      %v2961 = vadd.f32 %v2821, %v2942
      %v2962 = vadd.f32 %v2822, %v2945
      %v2963 = vadd.f32 %v2823, %v2947
      %v2964 = vadd.f32 %v2824, %v2950
      %v2965 = vadd.f32 %v2825, %v2952
      %v2966 = vld [vmem:[#allocation2 + $0x4] sm:$0xe]
      %v2967 = vld [vmem:[#allocation2 + $0x8] sm:$0xf]
      %v2968 = vld [vmem:[#allocation2 + $0xc] sm:$0xf]
      %v2969 = vld [vmem:[#allocation2 + $0x10] sm:$0xf]
      %v2970 = vld [vmem:[#allocation2 + $0x14] sm:$0xf]
      %v2971 = vld [vmem:[#allocation2 + $0x18] sm:$0xf]
      %v2972 = vld [vmem:[#allocation2 + $0x1c] sm:$0xf]
      %v2973 = vld [vmem:[#allocation2 + $0x20] sm:$0xf]
      %v2974 = vld [vmem:[#allocation2 + $0x24] sm:$0xf]
      %v2975 = vld [vmem:[#allocation2 + $0x28] sm:$0xf]
      %v2976 = vld [vmem:[#allocation2 + $0x2c] sm:$0xf]
      %v2977 = vld [vmem:[#allocation2 + $0x30] sm:$0xf]
      %v2978 = vld [vmem:[#allocation2 + $0x34] sm:$0x3]
      %v2979 = vld [vmem:[%s3] sm:$0xf]
      %v2980 = vld [vmem:[%s3 + $0x4] sm:$0xf]
      %v2981 = vld [vmem:[%s3 + $0x8] sm:$0xf]
      %v2982 = vld [vmem:[%s3 + $0xc] sm:$0xf]
      %v2983 = vld [vmem:[%s3 + $0x10] sm:$0xf]
      %v2984 = vld [vmem:[%s3 + $0x14] sm:$0xf]
      %v2985 = vld [vmem:[%s3 + $0x18] sm:$0xf]
      %v2986 = vld [vmem:[%s3 + $0x1c] sm:$0xf]
      %v2987 = vld [vmem:[%s3 + $0x20] sm:$0xf]
      %v2988 = vld [vmem:[%s3 + $0x24] sm:$0xf]
      %v2989 = vld [vmem:[%s3 + $0x28] sm:$0xf]
      %v2990 = vld [vmem:[%s3 + $0x2c] sm:$0xf]
      %v2991 = vld [vmem:[%s3 + $0x30] sm:$0xf]
      %v2992 = vld [vmem:[%s3 + $0x34] sm:$0xf]
      %v2993 = vld [vmem:[%s3 + $0x38] sm:$0xf]
      %v2994 = vld [vmem:[%s3 + $0x3c] sm:$0xf]
      %v3008 = vunpack.c.l.b16 %v2966
      %v3009 = vunpack.c.l.b16 %v2967
      %v3010 = vunpack.c.l.b16 %v2968
      %v3011 = vunpack.c.l.b16 %v2969
      %v3012 = vunpack.c.l.b16 %v2970
      %v3013 = vunpack.c.l.b16 %v2971
      %v3014 = vunpack.c.l.b16 %v2972
      %v3015 = vunpack.c.l.b16 %v2973
      %v3016 = vunpack.c.l.b16 %v2974
      %v3017 = vunpack.c.l.b16 %v2975
      %v3018 = vunpack.c.l.b16 %v2976
      %v3019 = vunpack.c.l.b16 %v2977
      %v3020 = vunpack.c.l.b16 %v2978
      %v3021 = vpack.c.b16 %v3009, %v3008
      %v3022 = vpack.c.b16 %v3011, %v3010
      %v3023 = vpack.c.b16 %v3013, %v3012
      %v3024 = vpack.c.b16 %v3015, %v3014
      %v3025 = vpack.c.b16 %v3017, %v3016
      %v3026 = vpack.c.b16 %v3019, %v3018
      %v3027 = vpack.c.b16 %v3020, %v3020
      %v3029 = vshrl.u32 %v3021, 16
      %v3031 = vrot.slane %v3029, 1
      %v3032 = vshll.u32 %v3021, 16
      %v3034 = vrot.slane %v3032, 2
      %v3035 = vor.u32 %v3031, %v3034
      %v3037 = vshrl.u32 %v3022, 16
      %v3039 = vrot.slane %v3037, 1
      %v3040 = vshll.u32 %v3022, 16
      %v3042 = vrot.slane %v3040, 2
      %v3043 = vor.u32 %v3039, %v3042
      %v3044 = vsel %vm1037, %v3035, %v3043
      %v3046 = vshrl.u32 %v3023, 16
      %v3048 = vrot.slane %v3046, 1
      %v3049 = vshll.u32 %v3023, 16
      %v3051 = vrot.slane %v3049, 2
      %v3052 = vor.u32 %v3048, %v3051
      %v3053 = vsel %vm1037, %v3043, %v3052
      %v3055 = vshrl.u32 %v3024, 16
      %v3057 = vrot.slane %v3055, 1
      %v3058 = vshll.u32 %v3024, 16
      %v3060 = vrot.slane %v3058, 2
      %v3061 = vor.u32 %v3057, %v3060
      %v3062 = vsel %vm1037, %v3052, %v3061
      %v3064 = vshrl.u32 %v3025, 16
      %v3066 = vrot.slane %v3064, 1
      %v3067 = vshll.u32 %v3025, 16
      %v3069 = vrot.slane %v3067, 2
      %v3070 = vor.u32 %v3066, %v3069
      %v3071 = vsel %vm1037, %v3061, %v3070
      %v3073 = vshrl.u32 %v3026, 16
      %v3075 = vrot.slane %v3073, 1
      %v3076 = vshll.u32 %v3026, 16
      %v3078 = vrot.slane %v3076, 2
      %v3079 = vor.u32 %v3075, %v3078
      %v3080 = vsel %vm1037, %v3070, %v3079
      %v3082 = vshrl.u32 %v3027, 16
      %v3084 = vrot.slane %v3082, 1
      %v3085 = vshll.u32 %v3027, 16
      %v3087 = vrot.slane %v3085, 2
      %v3088 = vor.u32 %v3084, %v3087
      %v3089 = vsel %vm1037, %v3079, %v3088
      %v3112 = vunpack.c.l.b16 %v2979
      %v3113 = vunpack.c.l.b16 %v2980
      %v3114 = vunpack.c.l.b16 %v2981
      %v3115 = vunpack.c.l.b16 %v2982
      %v3116 = vunpack.c.l.b16 %v2983
      %v3117 = vunpack.c.l.b16 %v2984
      %v3118 = vunpack.c.l.b16 %v2985
      %v3119 = vunpack.c.l.b16 %v2986
      %v3120 = vunpack.c.l.b16 %v2987
      %v3121 = vunpack.c.l.b16 %v2988
      %v3122 = vunpack.c.l.b16 %v2989
      %v3123 = vunpack.c.l.b16 %v2990
      %v3124 = vunpack.c.l.b16 %v2991
      %v3125 = vunpack.c.l.b16 %v2992
      %v3126 = vunpack.c.l.b16 %v2993
      %v3127 = vunpack.c.l.b16 %v2994
      %v3128 = vpack.c.b16 %v3113, %v3112
      %v3129 = vpack.c.b16 %v3115, %v3114
      %v3130 = vpack.c.b16 %v3117, %v3116
      %v3131 = vpack.c.b16 %v3119, %v3118
      %v3132 = vpack.c.b16 %v3121, %v3120
      %v3133 = vpack.c.b16 %v3123, %v3122
      %v3134 = vpack.c.b16 %v3125, %v3124
      %v3135 = vpack.c.b16 %v3127, %v3126
      %3144 = vmatpush.bf16.msra.mxu0 %v3135
      %3145 = vmatpush.bf16.msra.mxu0 %v3134
      %3146 = vmatpush.bf16.msra.mxu0 %v3133
      %3147 = vmatpush.bf16.msra.mxu0 %v3132
      %3148 = vmatpush.bf16.msra.mxu0 %v3131
      %3149 = vmatpush.bf16.msra.mxu0 %v3130
      %3150 = vmatpush.bf16.msra.mxu0 %v3129
      %3151 = vmatpush.bf16.msra.mxu0 %v3128
      %3152 = vmatmul.bf16.gmra.mxu0 %v3044
      %v3153 = vpop.f32.mrf.mxu0
      %v3154 = vadd.f32 0.0, %v3153
      %v3155 = vpop.f32.mrf.mxu0
      %v3156 = vadd.f32 0.0, %v3155
      %3157 = vmatmul.bf16.gmra.mxu0 %v3053
      %v3158 = vpop.f32.mrf.mxu0
      %v3159 = vadd.f32 0.0, %v3158
      %v3160 = vpop.f32.mrf.mxu0
      %v3161 = vadd.f32 0.0, %v3160
      %3162 = vmatmul.bf16.gmra.mxu0 %v3062
      %v3163 = vpop.f32.mrf.mxu0
      %v3164 = vadd.f32 0.0, %v3163
      %v3165 = vpop.f32.mrf.mxu0
      %v3166 = vadd.f32 0.0, %v3165
      %3167 = vmatmul.bf16.gmra.mxu0 %v3071
      %v3168 = vpop.f32.mrf.mxu0
      %v3169 = vadd.f32 0.0, %v3168
      %v3170 = vpop.f32.mrf.mxu0
      %v3171 = vadd.f32 0.0, %v3170
      %3172 = vmatmul.bf16.gmra.mxu0 %v3080
      %v3173 = vpop.f32.mrf.mxu0
      %v3174 = vadd.f32 0.0, %v3173
      %v3175 = vpop.f32.mrf.mxu0
      %v3176 = vadd.f32 0.0, %v3175
      %3177 = vmatmul.bf16.gmra.mxu0 %v3089
      %v3178 = vpop.f32.mrf.mxu0
      %v3179 = vadd.f32 0.0, %v3178
      %v3180 = vpop.f32.mrf.mxu0
      %v3181 = vadd.f32 0.0, %v3180
      %3182 = vdwg.mxu0
      %v3183 = vadd.f32 %v2954, %v3154
      %v3184 = vadd.f32 %v2955, %v3156
      %v3185 = vadd.f32 %v2956, %v3159
      %v3186 = vadd.f32 %v2957, %v3161
      %v3187 = vadd.f32 %v2958, %v3164
      %v3188 = vadd.f32 %v2959, %v3166
      %v3189 = vadd.f32 %v2960, %v3169
      %v3190 = vadd.f32 %v2961, %v3171
      %v3191 = vadd.f32 %v2962, %v3174
      %v3192 = vadd.f32 %v2963, %v3176
      %v3193 = vadd.f32 %v2964, %v3179
      %v3194 = vadd.f32 %v2965, %v3181
      %v3195 = vpack.c.bf16 %v3183, %v3183
      %v3196 = vpack.c.bf16 %v3184, %v3184
      %v3197 = vpack.c.bf16 %v3185, %v3185
      %v3198 = vpack.c.bf16 %v3186, %v3186
      %v3199 = vpack.c.bf16 %v3187, %v3187
      %v3200 = vpack.c.bf16 %v3188, %v3188
      %v3201 = vpack.c.bf16 %v3189, %v3189
      %v3202 = vpack.c.bf16 %v3190, %v3190
      %v3203 = vpack.c.bf16 %v3191, %v3191
      %v3204 = vpack.c.bf16 %v3192, %v3192
      %v3205 = vpack.c.bf16 %v3193, %v3193
      %v3206 = vpack.c.bf16 %v3194, %v3194
      %v3208 = vshrl.u32 %v3195, 16
      %v3210 = vrot.slane %v3208, 6
      %v3211 = vshll.u32 %v3195, 16
      %v3213 = vrot.slane %v3211, 7
      %v3214 = vor.u32 %v3210, %v3213
      %v3215 = vrot.slane %v3214, 4
      %v3217 = vshrl.u32 %v3196, 16
      %v3219 = vrot.slane %v3217, 6
      %v3220 = vshll.u32 %v3196, 16
      %v3222 = vrot.slane %v3220, 7
      %v3223 = vor.u32 %v3219, %v3222
      %v3224 = vsel %vm1341, %v3215, %v3223
      %v3225 = vrot.slane %v3223, 4
      %v3227 = vshrl.u32 %v3197, 16
      %v3229 = vrot.slane %v3227, 6
      %v3230 = vshll.u32 %v3197, 16
      %v3232 = vrot.slane %v3230, 7
      %v3233 = vor.u32 %v3229, %v3232
      %v3234 = vsel %vm1341, %v3225, %v3233
      %v3235 = vrot.slane %v3233, 4
      %v3237 = vshrl.u32 %v3198, 16
      %v3239 = vrot.slane %v3237, 6
      %v3240 = vshll.u32 %v3198, 16
      %v3242 = vrot.slane %v3240, 7
      %v3243 = vor.u32 %v3239, %v3242
      %v3244 = vsel %vm1341, %v3235, %v3243
      %v3245 = vrot.slane %v3243, 4
      %v3247 = vshrl.u32 %v3199, 16
      %v3249 = vrot.slane %v3247, 6
      %v3250 = vshll.u32 %v3199, 16
      %v3252 = vrot.slane %v3250, 7
      %v3253 = vor.u32 %v3249, %v3252
      %v3254 = vsel %vm1341, %v3245, %v3253
      %v3255 = vrot.slane %v3253, 4
      %v3257 = vshrl.u32 %v3200, 16
      %v3259 = vrot.slane %v3257, 6
      %v3260 = vshll.u32 %v3200, 16
      %v3262 = vrot.slane %v3260, 7
      %v3263 = vor.u32 %v3259, %v3262
      %v3264 = vsel %vm1341, %v3255, %v3263
      %v3265 = vrot.slane %v3263, 4
      %v3267 = vshrl.u32 %v3201, 16
      %v3269 = vrot.slane %v3267, 6
      %v3270 = vshll.u32 %v3201, 16
      %v3272 = vrot.slane %v3270, 7
      %v3273 = vor.u32 %v3269, %v3272
      %v3274 = vsel %vm1341, %v3265, %v3273
      %v3275 = vrot.slane %v3273, 4
      %v3277 = vshrl.u32 %v3202, 16
      %v3279 = vrot.slane %v3277, 6
      %v3280 = vshll.u32 %v3202, 16
      %v3282 = vrot.slane %v3280, 7
      %v3283 = vor.u32 %v3279, %v3282
      %v3284 = vsel %vm1341, %v3275, %v3283
      %v3285 = vrot.slane %v3283, 4
      %v3287 = vshrl.u32 %v3203, 16
      %v3289 = vrot.slane %v3287, 6
      %v3290 = vshll.u32 %v3203, 16
      %v3292 = vrot.slane %v3290, 7
      %v3293 = vor.u32 %v3289, %v3292
      %v3294 = vsel %vm1341, %v3285, %v3293
      %v3295 = vrot.slane %v3293, 4
      %v3297 = vshrl.u32 %v3204, 16
      %v3299 = vrot.slane %v3297, 6
      %v3300 = vshll.u32 %v3204, 16
      %v3302 = vrot.slane %v3300, 7
      %v3303 = vor.u32 %v3299, %v3302
      %v3304 = vsel %vm1341, %v3295, %v3303
      %v3305 = vrot.slane %v3303, 4
      %v3307 = vshrl.u32 %v3205, 16
      %v3309 = vrot.slane %v3307, 6
      %v3310 = vshll.u32 %v3205, 16
      %v3312 = vrot.slane %v3310, 7
      %v3313 = vor.u32 %v3309, %v3312
      %v3314 = vsel %vm1341, %v3305, %v3313
      %v3315 = vrot.slane %v3313, 4
      %v3317 = vshrl.u32 %v3206, 16
      %v3319 = vrot.slane %v3317, 6
      %v3320 = vshll.u32 %v3206, 16
      %v3322 = vrot.slane %v3320, 7
      %v3323 = vor.u32 %v3319, %v3322
      %v3324 = vsel %vm1341, %v3315, %v3323
      %v3325 = vrot.slane %v3323, 4
      %v3339 = vld [vmem:[%s307 + $0x4] sm:$0xe]
      %v3340 = vsel %vm322, %v3214, %v3339
      %3341 = vst [vmem:[%s307 + $0x4] sm:$0xe] %v3340
      %3342 = vst [vmem:[%s307 + $0x8] sm:$0xf] %v3224
      %3343 = vst [vmem:[%s307 + $0xc] sm:$0xf] %v3234
      %3344 = vst [vmem:[%s307 + $0x10] sm:$0xf] %v3244
      %3345 = vst [vmem:[%s307 + $0x14] sm:$0xf] %v3254
      %3346 = vst [vmem:[%s307 + $0x18] sm:$0xf] %v3264
      %3347 = vst [vmem:[%s307 + $0x1c] sm:$0xf] %v3274
      %3348 = vst [vmem:[%s307 + $0x20] sm:$0xf] %v3284
      %3349 = vst [vmem:[%s307 + $0x24] sm:$0xf] %v3294
      %3350 = vst [vmem:[%s307 + $0x28] sm:$0xf] %v3304
      %3351 = vst [vmem:[%s307 + $0x2c] sm:$0xf] %v3314
      %3352 = vst [vmem:[%s307 + $0x30] sm:$0xf] %v3324
      %v3353 = vld [vmem:[%s307 + $0x34] sm:$0x3]
      %v3354 = vsel %vm316, %v3325, %v3353
      %3355 = vst [vmem:[%s307 + $0x34] sm:$0x3] %v3354
      %s3356 = smul.u32 14, %s19
      %p3357 = scmp.lt.s32.totalorder %s3356, 27
      %s3358 = scalar_select %p3357, %s3356, 27
      %s3359 = smul.addr %s3358, 4
      %s3360 = scalar_lea.vmem %s8, %s3359
      // Predicated region
      $region53: #{network_block_forward.2} parent=51 // pred_check
        %p3361 = pneg %p210
      $region54: #{network_block_forward.2} parent=51 // pred_check_branch
        %3363 = sbr.rel (%p3361) target = $region56
      $region55: #{network_block_forward.2} parent=51 // pred_region
        %s3364 = smul.u32 14, %s19
      $region56: #{network_block_forward.2} parent=51 // pred_fallthru
        _
    $region52: #{network_block_forward.2} parent=5 // pred_fallthru
      _
    %p3365 = scmp.le.s32.totalorder 2, %s14
    // Predicated region
    $region57: #{network_block_forward.2} parent=5 // pred_check
      %p3366 = pneg %p3365
    $region58: #{network_block_forward.2} parent=5 // pred_check_branch
      %3368 = sbr.rel (%p3366) target = $region60
    $region59: #{network_block_forward.2} parent=5 // pred_region
      %s3369 = ssub.s32 %s14, 2
      // Predicated region
      $region61: #{network_block_forward.2} parent=59 // pred_check
        %p3370 = pneg %p216
      $region62: #{network_block_forward.2} parent=59 // pred_check_branch
        %3372 = sbr.rel (%p3370) target = $region64
      $region63: #{network_block_forward.2} parent=59 // pred_region
        %s3373 = smul.u32 14, %s20
        %p3374 = scmp.lt.s32.totalorder %s3373, 27
        %s3375 = scalar_select %p3374, %s3373, 27
        %s3376 = smul.addr %s3375, 4
        %s3377 = scalar_lea.vmem %s8, %s3376
      $region64: #{network_block_forward.2} parent=59 // pred_fallthru
        _
    $region60: #{network_block_forward.2} parent=5 // pred_fallthru
      _
  $region6: #{network_block_forward.2} parent=0 // loop_footer
    %s18 = sadd.s32 1, %s14
  $region7: #{network_block_forward.2} parent=0 // loop_footer_branch
    %13 = sbr.rel target = $region3
  $region8: #{network_block_forward.2} parent=0 // loop_exit
    _

// kernel: network_block_forward.3
$region0: #{network_block_forward.3}
  #allocation0 [shape = 'u32[]', space=smem, size = 0x4, offset = 0x4, fixed_abs, tag = 'smem constant byte address 0x4 - core index']
  #allocation1 [shape = 'u32[72,128]{1,0:T(1,128)}', space=vmem, size = 0x9000, scoped, tag = 'internal scratch']
  #allocation2 [shape = 'bf16[120,128]{1,0:T(8,128)(2,1)}', space=vmem, size = 0x7800, scoped, tag = 'scratch operand']
  #allocation3 [shape = 'bf16[120,128]{1,0:T(8,128)(2,1)}', space=vmem, size = 0x7800, scoped, tag = 'scratch operand']
  %s0 = inlined_call_operand.vmem [shape: bf16[224,128], index: 0, kind: input, shape index: {}]
  %s1 = inlined_call_operand.vmem [shape: bf16[9,128,128], index: 1, kind: input, shape index: {}]
  %s2 = inlined_call_operand.vmem [shape: bf16[9,128,128], index: 2, kind: input, shape index: {}]
  %s3 = inlined_call_operand.vmem [shape: f32[1,128], index: 3, kind: input, shape index: {}]
  %s4 = inlined_call_operand.vmem [shape: f32[1,128], index: 4, kind: input, shape index: {}, may-alias: {4,5}]
  %s5 = inlined_call_operand.vmem [shape: f32[1,128], index: 5, kind: input, shape index: {}, may-alias: {4,5}]
  %s6 = inlined_call_operand.vmem [shape: f32[112,1], index: 6, kind: input, shape index: {}]
  %s7 = inlined_call_operand.vmem [shape: bf16[224,128], index: 7, kind: output, shape index: {}]
  %s8 = sld [smem:[#allocation0]]
  $region61: #{network_block_forward.3} parent=0
    _
  %s10 = ssub.s32 1, %s8
  %s11 = scalar_select 0, %s10, %s8
  loop: start=0, step=1, limit=4
  $region2: #{network_block_forward.3} parent=0 // loop_pre_header
    _
  $region3: #{network_block_forward.3} parent=0 // loop_header
    %s13 = sphi 0, %s17
    %p14 = scmp.ge.s32.totalorder %s13, 4
    %s23 = sphi 0, %s25
    %s26 = sphi 0, %s23
    %s27 = sphi 0, %s26
    %s43 = sphi 0, %s27
    %s47 = sphi 0, %s47
    %s49 = sphi 0, %s47
    %s50 = sphi 0, %s49
    %s64 = sphi 0, %s50
    %s68 = sphi 0, %s68
    %s70 = sphi 0, %s68
    %s71 = sphi 0, %s70
    %s85 = sphi 0, %s71
    %s89 = sphi 0, %s89
    %s91 = sphi 0, %s89
    %s92 = sphi 0, %s91
    %s106 = sphi 0, %s92
    %s110 = sphi 0, %s110
    %s112 = sphi 0, %s110
    %s113 = sphi 0, %s112
    %s127 = sphi 0, %s113
    %s131 = sphi 0, %s131
    %s133 = sphi 0, %s131
    %s134 = sphi 0, %s133
    %s148 = sphi 0, %s134
    %s152 = sphi 0, %s152
    %s154 = sphi 0, %s152
    %s155 = sphi 0, %s154
    %s169 = sphi 0, %s155
    %s175 = sphi 0, %s177
    %s178 = sphi 0, %s175
    %s179 = sphi 0, %s178
    %s195 = sphi 0, %s179
  $region4: #{network_block_forward.3} parent=0 // loop_header_branch
    %16 = sbr.rel (%p14) target = $region8
  $region5: #{network_block_forward.3} parent=0 // loop_body
    %s18 = ssub.s32 %s13, 1
    %s19 = ssub.s32 %s13, 2
    %s20 = sadd.s32 %s13, 1
    %s21 = ssub.s32 %s13, %s20
    %p22 = scmp.eq.s32.totalorder %s21, 0
    %s24 = sadd.s32 %s23, 1
    %s25 = scalar_select %p22, %s23, %s24
    %p28 = pneg %p22
    %p29 = scmp.eq.s32.totalorder %s13, 1
    %p30 = por %p28, %p29
    %p31 = scmp.ne.s32.totalorder %s23, %s26
    %p32 = scmp.eq.s32.totalorder %s13, 0
    %p33 = por %p31, %p32
    %p34 = scmp.ne.s32.totalorder %s23, %s26
    %p35 = scmp.eq.s32.totalorder %s18, 1
    %p36 = por %p34, %p35
    %p37 = scmp.ne.s32.totalorder %s26, %s27
    %p38 = scmp.eq.s32.totalorder %s18, 0
    %p39 = por %p37, %p38
    %p40 = scmp.ne.s32.totalorder %s26, %s27
    %p41 = scmp.eq.s32.totalorder %s19, 1
    %p42 = por %p40, %p41
    %p44 = scmp.ne.s32.totalorder %s27, %s43
    %p45 = scmp.eq.s32.totalorder %s19, 0
    %p46 = por %p44, %p45
    %s48 = sadd.s32 %s47, 1
    %p51 = scmp.eq.s32.totalorder %s13, 1
    %p52 = scmp.ne.s32.totalorder %s47, %s49
    %p53 = scmp.eq.s32.totalorder %s13, 0
    %p54 = por %p52, %p53
    %p55 = scmp.ne.s32.totalorder %s47, %s49
    %p56 = scmp.eq.s32.totalorder %s18, 1
    %p57 = por %p55, %p56
    %p58 = scmp.ne.s32.totalorder %s49, %s50
    %p59 = scmp.eq.s32.totalorder %s18, 0
    %p60 = por %p58, %p59
    %p61 = scmp.ne.s32.totalorder %s49, %s50
    %p62 = scmp.eq.s32.totalorder %s19, 1
    %p63 = por %p61, %p62
    %p65 = scmp.ne.s32.totalorder %s50, %s64
    %p66 = scmp.eq.s32.totalorder %s19, 0
    %p67 = por %p65, %p66
    %s69 = sadd.s32 %s68, 1
    %p72 = scmp.eq.s32.totalorder %s13, 1
    %p73 = scmp.ne.s32.totalorder %s68, %s70
    %p74 = scmp.eq.s32.totalorder %s13, 0
    %p75 = por %p73, %p74
    %p76 = scmp.ne.s32.totalorder %s68, %s70
    %p77 = scmp.eq.s32.totalorder %s18, 1
    %p78 = por %p76, %p77
    %p79 = scmp.ne.s32.totalorder %s70, %s71
    %p80 = scmp.eq.s32.totalorder %s18, 0
    %p81 = por %p79, %p80
    %p82 = scmp.ne.s32.totalorder %s70, %s71
    %p83 = scmp.eq.s32.totalorder %s19, 1
    %p84 = por %p82, %p83
    %p86 = scmp.ne.s32.totalorder %s71, %s85
    %p87 = scmp.eq.s32.totalorder %s19, 0
    %p88 = por %p86, %p87
    %s90 = sadd.s32 %s89, 1
    %p93 = scmp.eq.s32.totalorder %s13, 1
    %p94 = scmp.ne.s32.totalorder %s89, %s91
    %p95 = scmp.eq.s32.totalorder %s13, 0
    %p96 = por %p94, %p95
    %p97 = scmp.ne.s32.totalorder %s89, %s91
    %p98 = scmp.eq.s32.totalorder %s18, 1
    %p99 = por %p97, %p98
    %p100 = scmp.ne.s32.totalorder %s91, %s92
    %p101 = scmp.eq.s32.totalorder %s18, 0
    %p102 = por %p100, %p101
    %p103 = scmp.ne.s32.totalorder %s91, %s92
    %p104 = scmp.eq.s32.totalorder %s19, 1
    %p105 = por %p103, %p104
    %p107 = scmp.ne.s32.totalorder %s92, %s106
    %p108 = scmp.eq.s32.totalorder %s19, 0
    %p109 = por %p107, %p108
    %s111 = sadd.s32 %s110, 1
    %p114 = scmp.eq.s32.totalorder %s13, 1
    %p115 = scmp.ne.s32.totalorder %s110, %s112
    %p116 = scmp.eq.s32.totalorder %s13, 0
    %p117 = por %p115, %p116
    %p118 = scmp.ne.s32.totalorder %s110, %s112
    %p119 = scmp.eq.s32.totalorder %s18, 1
    %p120 = por %p118, %p119
    %p121 = scmp.ne.s32.totalorder %s112, %s113
    %p122 = scmp.eq.s32.totalorder %s18, 0
    %p123 = por %p121, %p122
    %p124 = scmp.ne.s32.totalorder %s112, %s113
    %p125 = scmp.eq.s32.totalorder %s19, 1
    %p126 = por %p124, %p125
    %p128 = scmp.ne.s32.totalorder %s113, %s127
    %p129 = scmp.eq.s32.totalorder %s19, 0
    %p130 = por %p128, %p129
    %s132 = sadd.s32 %s131, 1
    %p135 = scmp.eq.s32.totalorder %s13, 1
    %p136 = scmp.ne.s32.totalorder %s131, %s133
    %p137 = scmp.eq.s32.totalorder %s13, 0
    %p138 = por %p136, %p137
    %p139 = scmp.ne.s32.totalorder %s131, %s133
    %p140 = scmp.eq.s32.totalorder %s18, 1
    %p141 = por %p139, %p140
    %p142 = scmp.ne.s32.totalorder %s133, %s134
    %p143 = scmp.eq.s32.totalorder %s18, 0
    %p144 = por %p142, %p143
    %p145 = scmp.ne.s32.totalorder %s133, %s134
    %p146 = scmp.eq.s32.totalorder %s19, 1
    %p147 = por %p145, %p146
    %p149 = scmp.ne.s32.totalorder %s134, %s148
    %p150 = scmp.eq.s32.totalorder %s19, 0
    %p151 = por %p149, %p150
    %s153 = sadd.s32 %s152, 1
    %p156 = scmp.eq.s32.totalorder %s13, 1
    %p157 = scmp.ne.s32.totalorder %s152, %s154
    %p158 = scmp.eq.s32.totalorder %s13, 0
    %p159 = por %p157, %p158
    %p160 = scmp.ne.s32.totalorder %s152, %s154
    %p161 = scmp.eq.s32.totalorder %s18, 1
    %p162 = por %p160, %p161
    %p163 = scmp.ne.s32.totalorder %s154, %s155
    %p164 = scmp.eq.s32.totalorder %s18, 0
    %p165 = por %p163, %p164
    %p166 = scmp.ne.s32.totalorder %s154, %s155
    %p167 = scmp.eq.s32.totalorder %s19, 1
    %p168 = por %p166, %p167
    %p170 = scmp.ne.s32.totalorder %s155, %s169
    %p171 = scmp.eq.s32.totalorder %s19, 0
    %p172 = por %p170, %p171
    %s173 = ssub.s32 %s13, %s20
    %p174 = scmp.eq.s32.totalorder %s173, 0
    %s176 = sadd.s32 %s175, 1
    %s177 = scalar_select %p174, %s175, %s176
    %p180 = pneg %p174
    %p181 = scmp.eq.s32.totalorder %s13, 1
    %p182 = por %p180, %p181
    %p183 = scmp.ne.s32.totalorder %s175, %s178
    %p184 = scmp.eq.s32.totalorder %s13, 0
    %p185 = por %p183, %p184
    %p186 = scmp.ne.s32.totalorder %s175, %s178
    %p187 = scmp.eq.s32.totalorder %s18, 1
    %p188 = por %p186, %p187
    %p189 = scmp.ne.s32.totalorder %s178, %s179
    %p190 = scmp.eq.s32.totalorder %s18, 0
    %p191 = por %p189, %p190
    %p192 = scmp.ne.s32.totalorder %s178, %s179
    %p193 = scmp.eq.s32.totalorder %s19, 1
    %p194 = por %p192, %p193
    %p196 = scmp.ne.s32.totalorder %s179, %s195
    %p197 = scmp.eq.s32.totalorder %s19, 0
    %p198 = por %p196, %p197
    %p199 = scmp.le.s32.totalorder 1, %s13
    %p200 = scmp.lt.s32.totalorder %s13, 3
    %p201 = pnand %p199, %p200
    %p202 = pneg %p201
    // Predicated region
    $region9: #{network_block_forward.3} parent=5 // pred_check
      _
    $region10: #{network_block_forward.3} parent=5 // pred_check_branch
      %204 = sbr.rel (%p201) target = $region12
    $region11: #{network_block_forward.3} parent=5 // pred_region
      %s205 = ssub.s32 %s13, 1
      // Predicated region
      $region13: #{network_block_forward.3} parent=11 // pred_check
        %p206 = pneg %p60
      $region14: #{network_block_forward.3} parent=11 // pred_check_branch
        %208 = sbr.rel (%p206) target = $region16
      $region15: #{network_block_forward.3} parent=11 // pred_region
        _
      $region16: #{network_block_forward.3} parent=11 // pred_fallthru
        _
      // Predicated region
      $region17: #{network_block_forward.3} parent=11 // pred_check
        %p209 = pneg %p81
      $region18: #{network_block_forward.3} parent=11 // pred_check_branch
        %211 = sbr.rel (%p209) target = $region20
      $region19: #{network_block_forward.3} parent=11 // pred_region
        _
      $region20: #{network_block_forward.3} parent=11 // pred_fallthru
        _
      // Predicated region
      $region21: #{network_block_forward.3} parent=11 // pred_check
        %p212 = pneg %p102
      $region22: #{network_block_forward.3} parent=11 // pred_check_branch
        %214 = sbr.rel (%p212) target = $region24
      $region23: #{network_block_forward.3} parent=11 // pred_region
        _
      $region24: #{network_block_forward.3} parent=11 // pred_fallthru
        _
      // Predicated region
      $region25: #{network_block_forward.3} parent=11 // pred_check
        %p215 = pneg %p123
      $region26: #{network_block_forward.3} parent=11 // pred_check_branch
        %217 = sbr.rel (%p215) target = $region28
      $region27: #{network_block_forward.3} parent=11 // pred_region
        _
      $region28: #{network_block_forward.3} parent=11 // pred_fallthru
        _
      // Predicated region
      $region29: #{network_block_forward.3} parent=11 // pred_check
        %p218 = pneg %p144
      $region30: #{network_block_forward.3} parent=11 // pred_check_branch
        %220 = sbr.rel (%p218) target = $region32
      $region31: #{network_block_forward.3} parent=11 // pred_region
        _
      $region32: #{network_block_forward.3} parent=11 // pred_fallthru
        _
      // Predicated region
      $region33: #{network_block_forward.3} parent=11 // pred_check
        %p221 = pneg %p165
      $region34: #{network_block_forward.3} parent=11 // pred_check_branch
        %223 = sbr.rel (%p221) target = $region36
      $region35: #{network_block_forward.3} parent=11 // pred_region
        _
      $region36: #{network_block_forward.3} parent=11 // pred_fallthru
        _
    $region12: #{network_block_forward.3} parent=5 // pred_fallthru
      _
    %p224 = scmp.lt.s32.totalorder %s13, 2
    // Predicated region
    $region37: #{network_block_forward.3} parent=5 // pred_check
      %p225 = pneg %p224
    $region38: #{network_block_forward.3} parent=5 // pred_check_branch
      %227 = sbr.rel (%p225) target = $region40
    $region39: #{network_block_forward.3} parent=5 // pred_region
      // Predicated region
      $region41: #{network_block_forward.3} parent=39 // pred_check
        %p228 = pneg %p33
      $region42: #{network_block_forward.3} parent=39 // pred_check_branch
        %230 = sbr.rel (%p228) target = $region44
      $region43: #{network_block_forward.3} parent=39 // pred_region
        %s231 = smul.u32 14, %s13
        %p232 = scmp.lt.s32.totalorder %s231, 27
        %s233 = scalar_select %p232, %s231, 27
        %s234 = smul.addr %s233, 4
        %s235 = scalar_lea.vmem %s0, %s234
        %s236 = smul.u32 14, %s13
      $region44: #{network_block_forward.3} parent=39 // pred_fallthru
        _
    $region40: #{network_block_forward.3} parent=5 // pred_fallthru
      _
    %p237 = scmp.le.s32.totalorder 1, %s13
    %p238 = scmp.lt.s32.totalorder %s13, 3
    %p239 = pnand %p237, %p238
    %p240 = pneg %p239
    // Predicated region
    $region45: #{network_block_forward.3} parent=5 // pred_check
      _
    $region46: #{network_block_forward.3} parent=5 // pred_check_branch
      %242 = sbr.rel (%p239) target = $region48
    $region47: #{network_block_forward.3} parent=5 // pred_region
      %s243 = ssub.s32 %s13, 1
      %s244 = smul.u32 14, %s18
      %p245 = scmp.lt.s32.totalorder %s244, 27
      %s246 = scalar_select %p245, %s244, 27
      %s247 = smul.addr %s246, 4
      %s248 = scalar_lea.vmem %s0, %s247
      %p249 = pneg %p39
      %p250 = pneg %p36
      %p251 = pneg %p60
      %p252 = pneg %p57
      %p253 = pneg %p81
      %p254 = pneg %p78
      %p255 = pneg %p102
      %p256 = pneg %p99
      %p257 = pneg %p123
      %p258 = pneg %p120
      %p259 = pneg %p144
      %p260 = pneg %p141
      %p261 = pneg %p165
      %p262 = pneg %p162
      %p263 = pneg %p191
      %p264 = pneg %p188
      %s265 = smul.u32 14, %s18
      %p266 = scmp.lt.s32.totalorder %s265, 27
      %s267 = scalar_select %p266, %s265, 27
      %s268 = smul.addr %s267, 4
      %s269 = scalar_lea.vmem %s7, %s268
      %s270 = smul.u32 14, %s18
      %p271 = scmp.lt.s32.totalorder %s270, 27
      %s272 = scalar_select %p271, %s270, 27
      %s273 = smul.addr %s272, 4
      %s274 = scalar_lea.vmem %s0, %s273
      %s275 = smul.u32 14, %s18
      %s276 = smul.u32 14, %s18
      %p277 = scmp.lt.s32.totalorder %s276, 27
      %s278 = scalar_select %p277, %s276, 27
      %s279 = smul.addr %s278, 4
      %s280 = scalar_lea.vmem %s7, %s279
      %s281 = smul.u32 14, %s18
      %283 = vst [vmem:[#allocation2 + $0x30] sm:$0xf] 0
      %284 = vst [vmem:[#allocation2 + $0x34] sm:$0xf] 0
      %285 = vst [vmem:[#allocation2 + $0x38] sm:$0xf] 0
      %286 = vst [vmem:[#allocation3] sm:$0xf] 0
      %vm287 = vcmask 1041408
      %vm288 = vsmask.f32 1280
      %vm289 = vmand %vm287, %vm288
      %v290 = vld [vmem:[#allocation3 + $0x4] sm:$0x3]
      %v291 = vsel %vm289, 0, %v290
      %292 = vst [vmem:[#allocation3 + $0x4] sm:$0x3] %v291
      %vm293 = vcmask 1043457
      %vm294 = vsmask.f32 7942
      %vm295 = vmand %vm293, %vm294
      %v296 = vld [vmem:[#allocation3 + $0x34] sm:$0xe]
      %v297 = vsel %vm295, 0, %v296
      %298 = vst [vmem:[#allocation3 + $0x34] sm:$0xe] %v297
      %299 = vst [vmem:[#allocation3 + $0x38] sm:$0xf] 0
      %v300 = vld [vmem:[%s3] sm:$0x1]
      %v301 = vld [vmem:[%s4] sm:$0x1]
      %v302 = vld [vmem:[%s5] sm:$0x1]
      %v303 = vld [vmem:[%s274] sm:$0xf]
      %v304 = vld [vmem:[%s274 + $0x4] sm:$0xf]
      %v305 = vld [vmem:[%s274 + $0x8] sm:$0xf]
      %v306 = vld [vmem:[%s274 + $0xc] sm:$0xf]
      %v307 = vld [vmem:[%s274 + $0x10] sm:$0xf]
      %v308 = vld [vmem:[%s274 + $0x14] sm:$0xf]
      %v309 = vld [vmem:[%s274 + $0x18] sm:$0xf]
      %v310 = vld [vmem:[%s274 + $0x1c] sm:$0xf]
      %v311 = vld [vmem:[%s274 + $0x20] sm:$0xf]
      %v312 = vld [vmem:[%s274 + $0x24] sm:$0xf]
      %v313 = vld [vmem:[%s274 + $0x28] sm:$0xf]
      %v314 = vld [vmem:[%s274 + $0x2c] sm:$0xf]
      %v315 = vunpack.c.l.bf16 %v303
      %v316 = vunpack.c.l.bf16 %v304
      %v317 = vunpack.c.l.bf16 %v305
      %v318 = vunpack.c.l.bf16 %v306
      %v319 = vunpack.c.l.bf16 %v307
      %v320 = vunpack.c.l.bf16 %v308
      %v321 = vunpack.c.l.bf16 %v309
      %v322 = vunpack.c.l.bf16 %v310
      %v323 = vunpack.c.l.bf16 %v311
      %v324 = vunpack.c.l.bf16 %v312
      %v325 = vunpack.c.l.bf16 %v313
      %v326 = vunpack.c.l.bf16 %v314
      %v327 = vld [vmem:[%s6] sm:$0xff]
      %v328 = vld [vmem:[%s6 + $0x8] sm:$0xff]
      %v329 = vld [vmem:[%s6 + $0x10] sm:$0xff]
      %v330 = vld [vmem:[%s6 + $0x18] sm:$0xff]
      %v331 = vld [vmem:[%s6 + $0x20] sm:$0xff]
      %v332 = vld [vmem:[%s6 + $0x28] sm:$0xff]
      %v333 = vld [vmem:[%s6 + $0x30] sm:$0xff]
      %v334 = vld [vmem:[%s6 + $0x38] sm:$0xff]
      %v335 = vld [vmem:[%s6 + $0x40] sm:$0xff]
      %v336 = vld [vmem:[%s6 + $0x48] sm:$0xff]
      %v337 = vld [vmem:[%s6 + $0x50] sm:$0xff]
      %v338 = vld [vmem:[%s6 + $0x58] sm:$0xff]
      %v340 = vperm.slane %v300, 0
      %v342 = vmul.f32 %v315, %v340
      %v343 = vmul.f32 %v316, %v340
      %v344 = vmul.f32 %v317, %v340
      %v345 = vmul.f32 %v318, %v340
      %v346 = vmul.f32 %v319, %v340
      %v347 = vmul.f32 %v320, %v340
      %v348 = vmul.f32 %v321, %v340
      %v349 = vmul.f32 %v322, %v340
      %v350 = vmul.f32 %v323, %v340
      %v351 = vmul.f32 %v324, %v340
      %v352 = vmul.f32 %v325, %v340
      %v353 = vmul.f32 %v326, %v340
      %v355 = vperm.slane %v301, 0
      %v357 = vadd.f32 %v342, %v355
      %v358 = vadd.f32 %v343, %v355
      %v359 = vadd.f32 %v344, %v355
      %v360 = vadd.f32 %v345, %v355
      %v361 = vadd.f32 %v346, %v355
      %v362 = vadd.f32 %v347, %v355
      %v363 = vadd.f32 %v348, %v355
      %v364 = vadd.f32 %v349, %v355
      %v365 = vadd.f32 %v350, %v355
      %v366 = vadd.f32 %v351, %v355
      %v367 = vadd.f32 %v352, %v355
      %v368 = vadd.f32 %v353, %v355
      %v369 = vmax.f32 %v357, 0.0
      %v370 = vmax.f32 %v358, 0.0
      %v371 = vmax.f32 %v359, 0.0
      %v372 = vmax.f32 %v360, 0.0
      %v373 = vmax.f32 %v361, 0.0
      %v374 = vmax.f32 %v362, 0.0
      %v375 = vmax.f32 %v363, 0.0
      %v376 = vmax.f32 %v364, 0.0
      %v377 = vmax.f32 %v365, 0.0
      %v378 = vmax.f32 %v366, 0.0
      %v379 = vmax.f32 %v367, 0.0
      %v380 = vmax.f32 %v368, 0.0
      %vm381 = vcmp.gt.f32.partialorder %v327, 0.5
      %vm382 = vcmp.gt.f32.partialorder %v328, 0.5
      %vm383 = vcmp.gt.f32.partialorder %v329, 0.5
      %vm384 = vcmp.gt.f32.partialorder %v330, 0.5
      %vm385 = vcmp.gt.f32.partialorder %v331, 0.5
      %vm386 = vcmp.gt.f32.partialorder %v332, 0.5
      %vm387 = vcmp.gt.f32.partialorder %v333, 0.5
      %vm388 = vcmp.gt.f32.partialorder %v334, 0.5
      %vm389 = vcmp.gt.f32.partialorder %v335, 0.5
      %vm390 = vcmp.gt.f32.partialorder %v336, 0.5
      %vm391 = vcmp.gt.f32.partialorder %v337, 0.5
      %vm392 = vcmp.gt.f32.partialorder %v338, 0.5
      %v393 = vsel %vm381, 1, 0
      %v394 = vsel %vm382, 1, 0
      %v395 = vsel %vm383, 1, 0
      %v396 = vsel %vm384, 1, 0
      %v397 = vsel %vm385, 1, 0
      %v398 = vsel %vm386, 1, 0
      %v399 = vsel %vm387, 1, 0
      %v400 = vsel %vm388, 1, 0
      %v401 = vsel %vm389, 1, 0
      %v402 = vsel %vm390, 1, 0
      %v403 = vsel %vm391, 1, 0
      %v404 = vsel %vm392, 1, 0
      %405 = vset.pattern.permute.xlu0 0
      %406 = vperm.xlu0 %405, %v393
      %v407 = vpop.permute.xlu0 %406
      %408 = vset.pattern.permute.xlu0 0
      %409 = vperm.xlu0 %408, %v394
      %v410 = vpop.permute.xlu0 %409
      %411 = vset.pattern.permute.xlu0 0
      %412 = vperm.xlu0 %411, %v395
      %v413 = vpop.permute.xlu0 %412
      %414 = vset.pattern.permute.xlu0 0
      %415 = vperm.xlu0 %414, %v396
      %v416 = vpop.permute.xlu0 %415
      %417 = vset.pattern.permute.xlu0 0
      %418 = vperm.xlu0 %417, %v397
      %v419 = vpop.permute.xlu0 %418
      %420 = vset.pattern.permute.xlu0 0
      %421 = vperm.xlu0 %420, %v398
      %v422 = vpop.permute.xlu0 %421
      %423 = vset.pattern.permute.xlu0 0
      %424 = vperm.xlu0 %423, %v399
      %v425 = vpop.permute.xlu0 %424
      %426 = vset.pattern.permute.xlu0 0
      %427 = vperm.xlu0 %426, %v400
      %v428 = vpop.permute.xlu0 %427
      %429 = vset.pattern.permute.xlu0 0
      %430 = vperm.xlu0 %429, %v401
      %v431 = vpop.permute.xlu0 %430
      %432 = vset.pattern.permute.xlu0 0
      %433 = vperm.xlu0 %432, %v402
      %v434 = vpop.permute.xlu0 %433
      %435 = vset.pattern.permute.xlu0 0
      %436 = vperm.xlu0 %435, %v403
      %v437 = vpop.permute.xlu0 %436
      %438 = vset.pattern.permute.xlu0 0
      %439 = vperm.xlu0 %438, %v404
      %v440 = vpop.permute.xlu0 %439
      %vm441 = vcmp.eq.s32.totalorder %v407, 1
      %vm442 = vcmp.eq.s32.totalorder %v410, 1
      %vm443 = vcmp.eq.s32.totalorder %v413, 1
      %vm444 = vcmp.eq.s32.totalorder %v416, 1
      %vm445 = vcmp.eq.s32.totalorder %v419, 1
      %vm446 = vcmp.eq.s32.totalorder %v422, 1
      %vm447 = vcmp.eq.s32.totalorder %v425, 1
      %vm448 = vcmp.eq.s32.totalorder %v428, 1
      %vm449 = vcmp.eq.s32.totalorder %v431, 1
      %vm450 = vcmp.eq.s32.totalorder %v434, 1
      %vm451 = vcmp.eq.s32.totalorder %v437, 1
      %vm452 = vcmp.eq.s32.totalorder %v440, 1
      %v453 = vsel %vm441, %v369, 0.0
      %v454 = vsel %vm442, %v370, 0.0
      %v455 = vsel %vm443, %v371, 0.0
      %v456 = vsel %vm444, %v372, 0.0
      %v457 = vsel %vm445, %v373, 0.0
      %v458 = vsel %vm446, %v374, 0.0
      %v459 = vsel %vm447, %v375, 0.0
      %v460 = vsel %vm448, %v376, 0.0
      %v461 = vsel %vm449, %v377, 0.0
      %v462 = vsel %vm450, %v378, 0.0
      %v463 = vsel %vm451, %v379, 0.0
      %v464 = vsel %vm452, %v380, 0.0
      %v465 = vpack.c.bf16 %v453, %v453
      %v466 = vpack.c.bf16 %v454, %v454
      %v467 = vpack.c.bf16 %v455, %v455
      %v468 = vpack.c.bf16 %v456, %v456
      %v469 = vpack.c.bf16 %v457, %v457
      %v470 = vpack.c.bf16 %v458, %v458
      %v471 = vpack.c.bf16 %v459, %v459
      %v472 = vpack.c.bf16 %v460, %v460
      %v473 = vpack.c.bf16 %v461, %v461
      %v474 = vpack.c.bf16 %v462, %v462
      %v475 = vpack.c.bf16 %v463, %v463
      %v476 = vpack.c.bf16 %v464, %v464
      %477 = vst [vmem:[#allocation2] sm:$0xf] %v465
      %478 = vst [vmem:[#allocation2 + $0x4] sm:$0xf] %v466
      %479 = vst [vmem:[#allocation2 + $0x8] sm:$0xf] %v467
      %480 = vst [vmem:[#allocation2 + $0xc] sm:$0xf] %v468
      %481 = vst [vmem:[#allocation2 + $0x10] sm:$0xf] %v469
      %482 = vst [vmem:[#allocation2 + $0x14] sm:$0xf] %v470
      %483 = vst [vmem:[#allocation2 + $0x18] sm:$0xf] %v471
      %484 = vst [vmem:[#allocation2 + $0x1c] sm:$0xf] %v472
      %485 = vst [vmem:[#allocation2 + $0x20] sm:$0xf] %v473
      %486 = vst [vmem:[#allocation2 + $0x24] sm:$0xf] %v474
      %487 = vst [vmem:[#allocation2 + $0x28] sm:$0xf] %v475
      %488 = vst [vmem:[#allocation2 + $0x2c] sm:$0xf] %v476
      %v489 = vld [vmem:[#allocation2] sm:$0xf]
      %v490 = vld [vmem:[#allocation2 + $0x4] sm:$0xf]
      %v491 = vld [vmem:[#allocation2 + $0x8] sm:$0xf]
      %v492 = vld [vmem:[#allocation2 + $0xc] sm:$0xf]
      %v493 = vld [vmem:[#allocation2 + $0x10] sm:$0xf]
      %v494 = vld [vmem:[#allocation2 + $0x14] sm:$0xf]
      %v495 = vld [vmem:[#allocation2 + $0x18] sm:$0xf]
      %v496 = vld [vmem:[#allocation2 + $0x1c] sm:$0xf]
      %v497 = vld [vmem:[#allocation2 + $0x20] sm:$0xf]
      %v498 = vld [vmem:[#allocation2 + $0x24] sm:$0xf]
      %v499 = vld [vmem:[#allocation2 + $0x28] sm:$0xf]
      %v500 = vld [vmem:[#allocation2 + $0x2c] sm:$0xf]
      %v501 = vld [vmem:[%s1] sm:$0xf]
      %v502 = vld [vmem:[%s1 + $0x4] sm:$0xf]
      %v503 = vld [vmem:[%s1 + $0x8] sm:$0xf]
      %v504 = vld [vmem:[%s1 + $0xc] sm:$0xf]
      %v505 = vld [vmem:[%s1 + $0x10] sm:$0xf]
      %v506 = vld [vmem:[%s1 + $0x14] sm:$0xf]
      %v507 = vld [vmem:[%s1 + $0x18] sm:$0xf]
      %v508 = vld [vmem:[%s1 + $0x1c] sm:$0xf]
      %v509 = vld [vmem:[%s1 + $0x20] sm:$0xf]
      %v510 = vld [vmem:[%s1 + $0x24] sm:$0xf]
      %v511 = vld [vmem:[%s1 + $0x28] sm:$0xf]
      %v512 = vld [vmem:[%s1 + $0x2c] sm:$0xf]
      %v513 = vld [vmem:[%s1 + $0x30] sm:$0xf]
      %v514 = vld [vmem:[%s1 + $0x34] sm:$0xf]
      %v515 = vld [vmem:[%s1 + $0x38] sm:$0xf]
      %v516 = vld [vmem:[%s1 + $0x3c] sm:$0xf]
      %v517 = vld [vmem:[#allocation2 + $0x30] sm:$0x1]
      %s518 = scalar_lea.vmem %s1, 64
      %v519 = vld [vmem:[%s518] sm:$0xf]
      %v520 = vld [vmem:[%s518 + $0x4] sm:$0xf]
      %v521 = vld [vmem:[%s518 + $0x8] sm:$0xf]
      %v522 = vld [vmem:[%s518 + $0xc] sm:$0xf]
      %v523 = vld [vmem:[%s518 + $0x10] sm:$0xf]
      %v524 = vld [vmem:[%s518 + $0x14] sm:$0xf]
      %v525 = vld [vmem:[%s518 + $0x18] sm:$0xf]
      %v526 = vld [vmem:[%s518 + $0x1c] sm:$0xf]
      %v527 = vld [vmem:[%s518 + $0x20] sm:$0xf]
      %v528 = vld [vmem:[%s518 + $0x24] sm:$0xf]
      %v529 = vld [vmem:[%s518 + $0x28] sm:$0xf]
      %v530 = vld [vmem:[%s518 + $0x2c] sm:$0xf]
      %v531 = vld [vmem:[%s518 + $0x30] sm:$0xf]
      %v532 = vld [vmem:[%s518 + $0x34] sm:$0xf]
      %v533 = vld [vmem:[%s518 + $0x38] sm:$0xf]
      %v534 = vld [vmem:[%s518 + $0x3c] sm:$0xf]
      %v548 = vunpack.c.l.b16 %v489
      %v549 = vunpack.c.l.b16 %v490
      %v550 = vunpack.c.l.b16 %v491
      %v551 = vunpack.c.l.b16 %v492
      %v552 = vunpack.c.l.b16 %v493
      %v553 = vunpack.c.l.b16 %v494
      %v554 = vunpack.c.l.b16 %v495
      %v555 = vunpack.c.l.b16 %v496
      %v556 = vunpack.c.l.b16 %v497
      %v557 = vunpack.c.l.b16 %v498
      %v558 = vunpack.c.l.b16 %v499
      %v559 = vunpack.c.l.b16 %v500
      %v560 = vunpack.c.l.b16 %v517
      %v561 = vpack.c.b16 %v549, %v548
      %v562 = vpack.c.b16 %v551, %v550
      %v563 = vpack.c.b16 %v553, %v552
      %v564 = vpack.c.b16 %v555, %v554
      %v565 = vpack.c.b16 %v557, %v556
      %v566 = vpack.c.b16 %v559, %v558
      %v567 = vpack.c.b16 %v560, %v560
      %vm568 = vsmask.f32 7424
      %v570 = vshrl.u32 %v561, 16
      %v572 = vshll.u32 %v561, 16
      %v574 = vrot.slane %v572, 1
      %v575 = vor.u32 %v570, %v574
      %v577 = vshll.u32 %v562, 16
      %v579 = vrot.slane %v577, 1
      %v580 = vsel %vm568, %v575, %v579
      %v581 = vshrl.u32 %v562, 16
      %v583 = vor.u32 %v581, %v579
      %v585 = vshll.u32 %v563, 16
      %v587 = vrot.slane %v585, 1
      %v588 = vsel %vm568, %v583, %v587
      %v589 = vshrl.u32 %v563, 16
      %v591 = vor.u32 %v589, %v587
      %v593 = vshll.u32 %v564, 16
      %v595 = vrot.slane %v593, 1
      %v596 = vsel %vm568, %v591, %v595
      %v597 = vshrl.u32 %v564, 16
      %v599 = vor.u32 %v597, %v595
      %v601 = vshll.u32 %v565, 16
      %v603 = vrot.slane %v601, 1
      %v604 = vsel %vm568, %v599, %v603
      %v605 = vshrl.u32 %v565, 16
      %v607 = vor.u32 %v605, %v603
      %v609 = vshll.u32 %v566, 16
      %v611 = vrot.slane %v609, 1
      %v612 = vsel %vm568, %v607, %v611
      %v613 = vshrl.u32 %v566, 16
      %v615 = vor.u32 %v613, %v611
      %v617 = vshll.u32 %v567, 16
      %v619 = vrot.slane %v617, 1
      %v620 = vsel %vm568, %v615, %v619
      %v643 = vunpack.c.l.b16 %v519
      %v644 = vunpack.c.l.b16 %v520
      %v645 = vunpack.c.l.b16 %v521
      %v646 = vunpack.c.l.b16 %v522
      %v647 = vunpack.c.l.b16 %v523
      %v648 = vunpack.c.l.b16 %v524
      %v649 = vunpack.c.l.b16 %v525
      %v650 = vunpack.c.l.b16 %v526
      %v651 = vunpack.c.l.b16 %v527
      %v652 = vunpack.c.l.b16 %v528
      %v653 = vunpack.c.l.b16 %v529
      %v654 = vunpack.c.l.b16 %v530
      %v655 = vunpack.c.l.b16 %v531
      %v656 = vunpack.c.l.b16 %v532
      %v657 = vunpack.c.l.b16 %v533
      %v658 = vunpack.c.l.b16 %v534
      %v659 = vpack.c.b16 %v644, %v643
      %v660 = vpack.c.b16 %v646, %v645
      %v661 = vpack.c.b16 %v648, %v647
      %v662 = vpack.c.b16 %v650, %v649
      %v663 = vpack.c.b16 %v652, %v651
      %v664 = vpack.c.b16 %v654, %v653
      %v665 = vpack.c.b16 %v656, %v655
      %v666 = vpack.c.b16 %v658, %v657
      %675 = vmatpush.bf16.msra.mxu0 %v666
      %676 = vmatpush.bf16.msra.mxu0 %v665
      %677 = vmatpush.bf16.msra.mxu0 %v664
      %678 = vmatpush.bf16.msra.mxu0 %v663
      %679 = vmatpush.bf16.msra.mxu0 %v662
      %680 = vmatpush.bf16.msra.mxu0 %v661
      %681 = vmatpush.bf16.msra.mxu0 %v660
      %682 = vmatpush.bf16.msra.mxu0 %v659
      %683 = vmatmul.bf16.gmra.mxu0 %v580
      %v684 = vpop.f32.mrf.mxu0
      %v685 = vadd.f32 0.0, %v684
      %v686 = vpop.f32.mrf.mxu0
      %v687 = vadd.f32 0.0, %v686
      %688 = vmatmul.bf16.gmra.mxu0 %v588
      %v689 = vpop.f32.mrf.mxu0
      %v690 = vadd.f32 0.0, %v689
      %v691 = vpop.f32.mrf.mxu0
      %v692 = vadd.f32 0.0, %v691
      %693 = vmatmul.bf16.gmra.mxu0 %v596
      %v694 = vpop.f32.mrf.mxu0
      %v695 = vadd.f32 0.0, %v694
      %v696 = vpop.f32.mrf.mxu0
      %v697 = vadd.f32 0.0, %v696
      %698 = vmatmul.bf16.gmra.mxu0 %v604
      %v699 = vpop.f32.mrf.mxu0
      %v700 = vadd.f32 0.0, %v699
      %v701 = vpop.f32.mrf.mxu0
      %v702 = vadd.f32 0.0, %v701
      %703 = vmatmul.bf16.gmra.mxu0 %v612
      %v704 = vpop.f32.mrf.mxu0
      %v705 = vadd.f32 0.0, %v704
      %v706 = vpop.f32.mrf.mxu0
      %v707 = vadd.f32 0.0, %v706
      %708 = vmatmul.bf16.gmra.mxu0 %v620
      %v709 = vpop.f32.mrf.mxu0
      %v710 = vadd.f32 0.0, %v709
      %v711 = vpop.f32.mrf.mxu0
      %v712 = vadd.f32 0.0, %v711
      %713 = vdwg.mxu0
      %v736 = vunpack.c.l.b16 %v501
      %v737 = vunpack.c.l.b16 %v502
      %v738 = vunpack.c.l.b16 %v503
      %v739 = vunpack.c.l.b16 %v504
      %v740 = vunpack.c.l.b16 %v505
      %v741 = vunpack.c.l.b16 %v506
      %v742 = vunpack.c.l.b16 %v507
      %v743 = vunpack.c.l.b16 %v508
      %v744 = vunpack.c.l.b16 %v509
      %v745 = vunpack.c.l.b16 %v510
      %v746 = vunpack.c.l.b16 %v511
      %v747 = vunpack.c.l.b16 %v512
      %v748 = vunpack.c.l.b16 %v513
      %v749 = vunpack.c.l.b16 %v514
      %v750 = vunpack.c.l.b16 %v515
      %v751 = vunpack.c.l.b16 %v516
      %v752 = vpack.c.b16 %v737, %v736
      %v753 = vpack.c.b16 %v739, %v738
      %v754 = vpack.c.b16 %v741, %v740
      %v755 = vpack.c.b16 %v743, %v742
      %v756 = vpack.c.b16 %v745, %v744
      %v757 = vpack.c.b16 %v747, %v746
      %v758 = vpack.c.b16 %v749, %v748
      %v759 = vpack.c.b16 %v751, %v750
      %768 = vmatpush.bf16.msra.mxu0 %v759
      %769 = vmatpush.bf16.msra.mxu0 %v758
      %770 = vmatpush.bf16.msra.mxu0 %v757
      %771 = vmatpush.bf16.msra.mxu0 %v756
      %772 = vmatpush.bf16.msra.mxu0 %v755
      %773 = vmatpush.bf16.msra.mxu0 %v754
      %774 = vmatpush.bf16.msra.mxu0 %v753
      %775 = vmatpush.bf16.msra.mxu0 %v752
      %776 = vmatmul.bf16.gmra.mxu0 %v561
      %v777 = vpop.f32.mrf.mxu0
      %v778 = vadd.f32 %v685, %v777
      %v779 = vpop.f32.mrf.mxu0
      %v780 = vadd.f32 %v687, %v779
      %781 = vmatmul.bf16.gmra.mxu0 %v562
      %v782 = vpop.f32.mrf.mxu0
      %v783 = vadd.f32 %v690, %v782
      %v784 = vpop.f32.mrf.mxu0
      %v785 = vadd.f32 %v692, %v784
      %786 = vmatmul.bf16.gmra.mxu0 %v563
      %v787 = vpop.f32.mrf.mxu0
      %v788 = vadd.f32 %v695, %v787
      %v789 = vpop.f32.mrf.mxu0
      %v790 = vadd.f32 %v697, %v789
      %791 = vmatmul.bf16.gmra.mxu0 %v564
      %v792 = vpop.f32.mrf.mxu0
      %v793 = vadd.f32 %v700, %v792
      %v794 = vpop.f32.mrf.mxu0
      %v795 = vadd.f32 %v702, %v794
      %796 = vmatmul.bf16.gmra.mxu0 %v565
      %v797 = vpop.f32.mrf.mxu0
      %v798 = vadd.f32 %v705, %v797
      %v799 = vpop.f32.mrf.mxu0
      %v800 = vadd.f32 %v707, %v799
      %801 = vmatmul.bf16.gmra.mxu0 %v566
      %v802 = vpop.f32.mrf.mxu0
      %v803 = vadd.f32 %v710, %v802
      %v804 = vpop.f32.mrf.mxu0
      %v805 = vadd.f32 %v712, %v804
      %806 = vdwg.mxu0
      %v807 = vld [vmem:[#allocation2] sm:$0xe]
      %s808 = scalar_lea.vmem %s1, 128
      %v809 = vld [vmem:[%s808] sm:$0xf]
      %v810 = vld [vmem:[%s808 + $0x4] sm:$0xf]
      %v811 = vld [vmem:[%s808 + $0x8] sm:$0xf]
      %v812 = vld [vmem:[%s808 + $0xc] sm:$0xf]
      %v813 = vld [vmem:[%s808 + $0x10] sm:$0xf]
      %v814 = vld [vmem:[%s808 + $0x14] sm:$0xf]
      %v815 = vld [vmem:[%s808 + $0x18] sm:$0xf]
      %v816 = vld [vmem:[%s808 + $0x1c] sm:$0xf]
      %v817 = vld [vmem:[%s808 + $0x20] sm:$0xf]
      %v818 = vld [vmem:[%s808 + $0x24] sm:$0xf]
      %v819 = vld [vmem:[%s808 + $0x28] sm:$0xf]
      %v820 = vld [vmem:[%s808 + $0x2c] sm:$0xf]
      %v821 = vld [vmem:[%s808 + $0x30] sm:$0xf]
      %v822 = vld [vmem:[%s808 + $0x34] sm:$0xf]
      %v823 = vld [vmem:[%s808 + $0x38] sm:$0xf]
      %v824 = vld [vmem:[%s808 + $0x3c] sm:$0xf]
      %v826 = vunpack.c.l.b16 %v807
      %v827 = vpack.c.b16 %v549, %v826
      %vm828 = vcmask 1046528
      %v829 = vrot.slane %v827, 1
      %v830 = vrot.slane %v562, 1
      %v831 = vsel %vm828, %v829, %v830
      %v832 = vrot.slane %v563, 1
      %v833 = vsel %vm828, %v830, %v832
      %v834 = vrot.slane %v564, 1
      %v835 = vsel %vm828, %v832, %v834
      %v836 = vrot.slane %v565, 1
      %v837 = vsel %vm828, %v834, %v836
      %v838 = vrot.slane %v566, 1
      %v839 = vsel %vm828, %v836, %v838
      %v840 = vrot.slane %v567, 1
      %v841 = vsel %vm828, %v838, %v840
      %v864 = vunpack.c.l.b16 %v809
      %v865 = vunpack.c.l.b16 %v810
      %v866 = vunpack.c.l.b16 %v811
      %v867 = vunpack.c.l.b16 %v812
      %v868 = vunpack.c.l.b16 %v813
      %v869 = vunpack.c.l.b16 %v814
      %v870 = vunpack.c.l.b16 %v815
      %v871 = vunpack.c.l.b16 %v816
      %v872 = vunpack.c.l.b16 %v817
      %v873 = vunpack.c.l.b16 %v818
      %v874 = vunpack.c.l.b16 %v819
      %v875 = vunpack.c.l.b16 %v820
      %v876 = vunpack.c.l.b16 %v821
      %v877 = vunpack.c.l.b16 %v822
      %v878 = vunpack.c.l.b16 %v823
      %v879 = vunpack.c.l.b16 %v824
      %v880 = vpack.c.b16 %v865, %v864
      %v881 = vpack.c.b16 %v867, %v866
      %v882 = vpack.c.b16 %v869, %v868
      %v883 = vpack.c.b16 %v871, %v870
      %v884 = vpack.c.b16 %v873, %v872
      %v885 = vpack.c.b16 %v875, %v874
      %v886 = vpack.c.b16 %v877, %v876
      %v887 = vpack.c.b16 %v879, %v878
      %896 = vmatpush.bf16.msra.mxu0 %v887
      %897 = vmatpush.bf16.msra.mxu0 %v886
      %898 = vmatpush.bf16.msra.mxu0 %v885
      %899 = vmatpush.bf16.msra.mxu0 %v884
      %900 = vmatpush.bf16.msra.mxu0 %v883
      %901 = vmatpush.bf16.msra.mxu0 %v882
      %902 = vmatpush.bf16.msra.mxu0 %v881
      %903 = vmatpush.bf16.msra.mxu0 %v880
      %904 = vmatmul.bf16.gmra.mxu0 %v831
      %v905 = vpop.f32.mrf.mxu0
      %v906 = vadd.f32 0.0, %v905
      %v907 = vpop.f32.mrf.mxu0
      %v908 = vadd.f32 0.0, %v907
      %909 = vmatmul.bf16.gmra.mxu0 %v833
      %v910 = vpop.f32.mrf.mxu0
      %v911 = vadd.f32 0.0, %v910
      %v912 = vpop.f32.mrf.mxu0
      %v913 = vadd.f32 0.0, %v912
      %914 = vmatmul.bf16.gmra.mxu0 %v835
      %v915 = vpop.f32.mrf.mxu0
      %v916 = vadd.f32 0.0, %v915
      %v917 = vpop.f32.mrf.mxu0
      %v918 = vadd.f32 0.0, %v917
      %919 = vmatmul.bf16.gmra.mxu0 %v837
      %v920 = vpop.f32.mrf.mxu0
      %v921 = vadd.f32 0.0, %v920
      %v922 = vpop.f32.mrf.mxu0
      %v923 = vadd.f32 0.0, %v922
      %924 = vmatmul.bf16.gmra.mxu0 %v839
      %v925 = vpop.f32.mrf.mxu0
      %v926 = vadd.f32 0.0, %v925
      %v927 = vpop.f32.mrf.mxu0
      %v928 = vadd.f32 0.0, %v927
      %929 = vmatmul.bf16.gmra.mxu0 %v841
      %v930 = vpop.f32.mrf.mxu0
      %v931 = vadd.f32 0.0, %v930
      %v932 = vpop.f32.mrf.mxu0
      %v933 = vadd.f32 0.0, %v932
      %934 = vdwg.mxu0
      %v935 = vadd.f32 %v778, %v906
      %v936 = vadd.f32 %v780, %v908
      %v937 = vadd.f32 %v783, %v911
      %v938 = vadd.f32 %v785, %v913
      %v939 = vadd.f32 %v788, %v916
      %v940 = vadd.f32 %v790, %v918
      %v941 = vadd.f32 %v793, %v921
      %v942 = vadd.f32 %v795, %v923
      %v943 = vadd.f32 %v798, %v926
      %v944 = vadd.f32 %v800, %v928
      %v945 = vadd.f32 %v803, %v931
      %v946 = vadd.f32 %v805, %v933
      %v947 = vld [vmem:[#allocation2 + $0x4] sm:$0xe]
      %v948 = vld [vmem:[#allocation2 + $0x8] sm:$0xf]
      %v949 = vld [vmem:[#allocation2 + $0xc] sm:$0xf]
      %v950 = vld [vmem:[#allocation2 + $0x10] sm:$0xf]
      %v951 = vld [vmem:[#allocation2 + $0x14] sm:$0xf]
      %v952 = vld [vmem:[#allocation2 + $0x18] sm:$0xf]
      %v953 = vld [vmem:[#allocation2 + $0x1c] sm:$0xf]
      %v954 = vld [vmem:[#allocation2 + $0x20] sm:$0xf]
      %v955 = vld [vmem:[#allocation2 + $0x24] sm:$0xf]
      %v956 = vld [vmem:[#allocation2 + $0x28] sm:$0xf]
      %v957 = vld [vmem:[#allocation2 + $0x2c] sm:$0xf]
      %v958 = vld [vmem:[#allocation2 + $0x30] sm:$0xf]
      %v959 = vld [vmem:[#allocation2 + $0x34] sm:$0x1]
      %s960 = scalar_lea.vmem %s1, 192
      %v961 = vld [vmem:[%s960] sm:$0xf]
      %v962 = vld [vmem:[%s960 + $0x4] sm:$0xf]
      %v963 = vld [vmem:[%s960 + $0x8] sm:$0xf]
      %v964 = vld [vmem:[%s960 + $0xc] sm:$0xf]
      %v965 = vld [vmem:[%s960 + $0x10] sm:$0xf]
      %v966 = vld [vmem:[%s960 + $0x14] sm:$0xf]
      %v967 = vld [vmem:[%s960 + $0x18] sm:$0xf]
      %v968 = vld [vmem:[%s960 + $0x1c] sm:$0xf]
      %v969 = vld [vmem:[%s960 + $0x20] sm:$0xf]
      %v970 = vld [vmem:[%s960 + $0x24] sm:$0xf]
      %v971 = vld [vmem:[%s960 + $0x28] sm:$0xf]
      %v972 = vld [vmem:[%s960 + $0x2c] sm:$0xf]
      %v973 = vld [vmem:[%s960 + $0x30] sm:$0xf]
      %v974 = vld [vmem:[%s960 + $0x34] sm:$0xf]
      %v975 = vld [vmem:[%s960 + $0x38] sm:$0xf]
      %v976 = vld [vmem:[%s960 + $0x3c] sm:$0xf]
      %v990 = vunpack.c.l.b16 %v947
      %v991 = vunpack.c.l.b16 %v948
      %v992 = vunpack.c.l.b16 %v949
      %v993 = vunpack.c.l.b16 %v950
      %v994 = vunpack.c.l.b16 %v951
      %v995 = vunpack.c.l.b16 %v952
      %v996 = vunpack.c.l.b16 %v953
      %v997 = vunpack.c.l.b16 %v954
      %v998 = vunpack.c.l.b16 %v955
      %v999 = vunpack.c.l.b16 %v956
      %v1000 = vunpack.c.l.b16 %v957
      %v1001 = vunpack.c.l.b16 %v958
      %v1002 = vunpack.c.l.b16 %v959
      %v1003 = vpack.c.b16 %v991, %v990
      %v1004 = vpack.c.b16 %v993, %v992
      %v1005 = vpack.c.b16 %v995, %v994
      %v1006 = vpack.c.b16 %v997, %v996
      %v1007 = vpack.c.b16 %v999, %v998
      %v1008 = vpack.c.b16 %v1001, %v1000
      %v1009 = vpack.c.b16 %v1002, %v1002
      %v1010 = vrot.slane %v1003, 1
      %v1011 = vrot.slane %v1004, 1
      %v1012 = vsel %vm828, %v1010, %v1011
      %v1013 = vrot.slane %v1005, 1
      %v1014 = vsel %vm828, %v1011, %v1013
      %v1015 = vrot.slane %v1006, 1
      %v1016 = vsel %vm828, %v1013, %v1015
      %v1017 = vrot.slane %v1007, 1
      %v1018 = vsel %vm828, %v1015, %v1017
      %v1019 = vrot.slane %v1008, 1
      %v1020 = vsel %vm828, %v1017, %v1019
      %v1021 = vrot.slane %v1009, 1
      %v1022 = vsel %vm828, %v1019, %v1021
      %v1045 = vunpack.c.l.b16 %v961
      %v1046 = vunpack.c.l.b16 %v962
      %v1047 = vunpack.c.l.b16 %v963
      %v1048 = vunpack.c.l.b16 %v964
      %v1049 = vunpack.c.l.b16 %v965
      %v1050 = vunpack.c.l.b16 %v966
      %v1051 = vunpack.c.l.b16 %v967
      %v1052 = vunpack.c.l.b16 %v968
      %v1053 = vunpack.c.l.b16 %v969
      %v1054 = vunpack.c.l.b16 %v970
      %v1055 = vunpack.c.l.b16 %v971
      %v1056 = vunpack.c.l.b16 %v972
      %v1057 = vunpack.c.l.b16 %v973
      %v1058 = vunpack.c.l.b16 %v974
      %v1059 = vunpack.c.l.b16 %v975
      %v1060 = vunpack.c.l.b16 %v976
      %v1061 = vpack.c.b16 %v1046, %v1045
      %v1062 = vpack.c.b16 %v1048, %v1047
      %v1063 = vpack.c.b16 %v1050, %v1049
      %v1064 = vpack.c.b16 %v1052, %v1051
      %v1065 = vpack.c.b16 %v1054, %v1053
      %v1066 = vpack.c.b16 %v1056, %v1055
      %v1067 = vpack.c.b16 %v1058, %v1057
      %v1068 = vpack.c.b16 %v1060, %v1059
      %1077 = vmatpush.bf16.msra.mxu0 %v1068
      %1078 = vmatpush.bf16.msra.mxu0 %v1067
      %1079 = vmatpush.bf16.msra.mxu0 %v1066
      %1080 = vmatpush.bf16.msra.mxu0 %v1065
      %1081 = vmatpush.bf16.msra.mxu0 %v1064
      %1082 = vmatpush.bf16.msra.mxu0 %v1063
      %1083 = vmatpush.bf16.msra.mxu0 %v1062
      %1084 = vmatpush.bf16.msra.mxu0 %v1061
      %1085 = vmatmul.bf16.gmra.mxu0 %v1012
      %v1086 = vpop.f32.mrf.mxu0
      %v1087 = vadd.f32 0.0, %v1086
      %v1088 = vpop.f32.mrf.mxu0
      %v1089 = vadd.f32 0.0, %v1088
      %1090 = vmatmul.bf16.gmra.mxu0 %v1014
      %v1091 = vpop.f32.mrf.mxu0
      %v1092 = vadd.f32 0.0, %v1091
      %v1093 = vpop.f32.mrf.mxu0
      %v1094 = vadd.f32 0.0, %v1093
      %1095 = vmatmul.bf16.gmra.mxu0 %v1016
      %v1096 = vpop.f32.mrf.mxu0
      %v1097 = vadd.f32 0.0, %v1096
      %v1098 = vpop.f32.mrf.mxu0
      %v1099 = vadd.f32 0.0, %v1098
      %1100 = vmatmul.bf16.gmra.mxu0 %v1018
      %v1101 = vpop.f32.mrf.mxu0
      %v1102 = vadd.f32 0.0, %v1101
      %v1103 = vpop.f32.mrf.mxu0
      %v1104 = vadd.f32 0.0, %v1103
      %1105 = vmatmul.bf16.gmra.mxu0 %v1020
      %v1106 = vpop.f32.mrf.mxu0
      %v1107 = vadd.f32 0.0, %v1106
      %v1108 = vpop.f32.mrf.mxu0
      %v1109 = vadd.f32 0.0, %v1108
      %1110 = vmatmul.bf16.gmra.mxu0 %v1022
      %v1111 = vpop.f32.mrf.mxu0
      %v1112 = vadd.f32 0.0, %v1111
      %v1113 = vpop.f32.mrf.mxu0
      %v1114 = vadd.f32 0.0, %v1113
      %1115 = vdwg.mxu0
      %v1116 = vadd.f32 %v935, %v1087
      %v1117 = vadd.f32 %v936, %v1089
      %v1118 = vadd.f32 %v937, %v1092
      %v1119 = vadd.f32 %v938, %v1094
      %v1120 = vadd.f32 %v939, %v1097
      %v1121 = vadd.f32 %v940, %v1099
      %v1122 = vadd.f32 %v941, %v1102
      %v1123 = vadd.f32 %v942, %v1104
      %v1124 = vadd.f32 %v943, %v1107
      %v1125 = vadd.f32 %v944, %v1109
      %v1126 = vadd.f32 %v945, %v1112
      %v1127 = vadd.f32 %v946, %v1114
      %v1128 = vld [vmem:[#allocation2 + $0x34] sm:$0x3]
      %s1129 = scalar_lea.vmem %s1, 256
      %v1130 = vld [vmem:[%s1129] sm:$0xf]
      %v1131 = vld [vmem:[%s1129 + $0x4] sm:$0xf]
      %v1132 = vld [vmem:[%s1129 + $0x8] sm:$0xf]
      %v1133 = vld [vmem:[%s1129 + $0xc] sm:$0xf]
      %v1134 = vld [vmem:[%s1129 + $0x10] sm:$0xf]
      %v1135 = vld [vmem:[%s1129 + $0x14] sm:$0xf]
      %v1136 = vld [vmem:[%s1129 + $0x18] sm:$0xf]
      %v1137 = vld [vmem:[%s1129 + $0x1c] sm:$0xf]
      %v1138 = vld [vmem:[%s1129 + $0x20] sm:$0xf]
      %v1139 = vld [vmem:[%s1129 + $0x24] sm:$0xf]
      %v1140 = vld [vmem:[%s1129 + $0x28] sm:$0xf]
      %v1141 = vld [vmem:[%s1129 + $0x2c] sm:$0xf]
      %v1142 = vld [vmem:[%s1129 + $0x30] sm:$0xf]
      %v1143 = vld [vmem:[%s1129 + $0x34] sm:$0xf]
      %v1144 = vld [vmem:[%s1129 + $0x38] sm:$0xf]
      %v1145 = vld [vmem:[%s1129 + $0x3c] sm:$0xf]
      %v1147 = vunpack.c.l.b16 %v1128
      %v1148 = vpack.c.b16 %v1147, %v1147
      %vm1149 = vsmask.f32 6400
      %v1151 = vshrl.u32 %v1003, 16
      %v1153 = vrot.slane %v1151, 1
      %v1154 = vshll.u32 %v1003, 16
      %v1156 = vrot.slane %v1154, 2
      %v1157 = vor.u32 %v1153, %v1156
      %v1159 = vshrl.u32 %v1004, 16
      %v1161 = vrot.slane %v1159, 1
      %v1162 = vshll.u32 %v1004, 16
      %v1164 = vrot.slane %v1162, 2
      %v1165 = vor.u32 %v1161, %v1164
      %v1166 = vsel %vm1149, %v1157, %v1165
      %v1168 = vshrl.u32 %v1005, 16
      %v1170 = vrot.slane %v1168, 1
      %v1171 = vshll.u32 %v1005, 16
      %v1173 = vrot.slane %v1171, 2
      %v1174 = vor.u32 %v1170, %v1173
      %v1175 = vsel %vm1149, %v1165, %v1174
      %v1177 = vshrl.u32 %v1006, 16
      %v1179 = vrot.slane %v1177, 1
      %v1180 = vshll.u32 %v1006, 16
      %v1182 = vrot.slane %v1180, 2
      %v1183 = vor.u32 %v1179, %v1182
      %v1184 = vsel %vm1149, %v1174, %v1183
      %v1186 = vshrl.u32 %v1007, 16
      %v1188 = vrot.slane %v1186, 1
      %v1189 = vshll.u32 %v1007, 16
      %v1191 = vrot.slane %v1189, 2
      %v1192 = vor.u32 %v1188, %v1191
      %v1193 = vsel %vm1149, %v1183, %v1192
      %v1195 = vshrl.u32 %v1008, 16
      %v1197 = vrot.slane %v1195, 1
      %v1198 = vshll.u32 %v1008, 16
      %v1200 = vrot.slane %v1198, 2
      %v1201 = vor.u32 %v1197, %v1200
      %v1202 = vsel %vm1149, %v1192, %v1201
      %v1204 = vshrl.u32 %v1148, 16
      %v1206 = vrot.slane %v1204, 1
      %v1207 = vshll.u32 %v1148, 16
      %v1209 = vrot.slane %v1207, 2
      %v1210 = vor.u32 %v1206, %v1209
      %v1211 = vsel %vm1149, %v1201, %v1210
      %v1234 = vunpack.c.l.b16 %v1130
      %v1235 = vunpack.c.l.b16 %v1131
      %v1236 = vunpack.c.l.b16 %v1132
      %v1237 = vunpack.c.l.b16 %v1133
      %v1238 = vunpack.c.l.b16 %v1134
      %v1239 = vunpack.c.l.b16 %v1135
      %v1240 = vunpack.c.l.b16 %v1136
      %v1241 = vunpack.c.l.b16 %v1137
      %v1242 = vunpack.c.l.b16 %v1138
      %v1243 = vunpack.c.l.b16 %v1139
      %v1244 = vunpack.c.l.b16 %v1140
      %v1245 = vunpack.c.l.b16 %v1141
      %v1246 = vunpack.c.l.b16 %v1142
      %v1247 = vunpack.c.l.b16 %v1143
      %v1248 = vunpack.c.l.b16 %v1144
      %v1249 = vunpack.c.l.b16 %v1145
      %v1250 = vpack.c.b16 %v1235, %v1234
      %v1251 = vpack.c.b16 %v1237, %v1236
      %v1252 = vpack.c.b16 %v1239, %v1238
      %v1253 = vpack.c.b16 %v1241, %v1240
      %v1254 = vpack.c.b16 %v1243, %v1242
      %v1255 = vpack.c.b16 %v1245, %v1244
      %v1256 = vpack.c.b16 %v1247, %v1246
      %v1257 = vpack.c.b16 %v1249, %v1248
      %1266 = vmatpush.bf16.msra.mxu0 %v1257
      %1267 = vmatpush.bf16.msra.mxu0 %v1256
      %1268 = vmatpush.bf16.msra.mxu0 %v1255
      %1269 = vmatpush.bf16.msra.mxu0 %v1254
      %1270 = vmatpush.bf16.msra.mxu0 %v1253
      %1271 = vmatpush.bf16.msra.mxu0 %v1252
      %1272 = vmatpush.bf16.msra.mxu0 %v1251
      %1273 = vmatpush.bf16.msra.mxu0 %v1250
      %1274 = vmatmul.bf16.gmra.mxu0 %v1166
      %v1275 = vpop.f32.mrf.mxu0
      %v1276 = vadd.f32 0.0, %v1275
      %v1277 = vpop.f32.mrf.mxu0
      %v1278 = vadd.f32 0.0, %v1277
      %1279 = vmatmul.bf16.gmra.mxu0 %v1175
      %v1280 = vpop.f32.mrf.mxu0
      %v1281 = vadd.f32 0.0, %v1280
      %v1282 = vpop.f32.mrf.mxu0
      %v1283 = vadd.f32 0.0, %v1282
      %1284 = vmatmul.bf16.gmra.mxu0 %v1184
      %v1285 = vpop.f32.mrf.mxu0
      %v1286 = vadd.f32 0.0, %v1285
      %v1287 = vpop.f32.mrf.mxu0
      %v1288 = vadd.f32 0.0, %v1287
      %1289 = vmatmul.bf16.gmra.mxu0 %v1193
      %v1290 = vpop.f32.mrf.mxu0
      %v1291 = vadd.f32 0.0, %v1290
      %v1292 = vpop.f32.mrf.mxu0
      %v1293 = vadd.f32 0.0, %v1292
      %1294 = vmatmul.bf16.gmra.mxu0 %v1202
      %v1295 = vpop.f32.mrf.mxu0
      %v1296 = vadd.f32 0.0, %v1295
      %v1297 = vpop.f32.mrf.mxu0
      %v1298 = vadd.f32 0.0, %v1297
      %1299 = vmatmul.bf16.gmra.mxu0 %v1211
      %v1300 = vpop.f32.mrf.mxu0
      %v1301 = vadd.f32 0.0, %v1300
      %v1302 = vpop.f32.mrf.mxu0
      %v1303 = vadd.f32 0.0, %v1302
      %1304 = vdwg.mxu0
      %v1305 = vadd.f32 %v1116, %v1276
      %v1306 = vadd.f32 %v1117, %v1278
      %v1307 = vadd.f32 %v1118, %v1281
      %v1308 = vadd.f32 %v1119, %v1283
      %v1309 = vadd.f32 %v1120, %v1286
      %v1310 = vadd.f32 %v1121, %v1288
      %v1311 = vadd.f32 %v1122, %v1291
      %v1312 = vadd.f32 %v1123, %v1293
      %v1313 = vadd.f32 %v1124, %v1296
      %v1314 = vadd.f32 %v1125, %v1298
      %v1315 = vadd.f32 %v1126, %v1301
      %v1316 = vadd.f32 %v1127, %v1303
      %v1317 = vld [vmem:[#allocation2 + $0x4] sm:$0xc]
      %s1318 = scalar_lea.vmem %s1, 320
      %v1319 = vld [vmem:[%s1318] sm:$0xf]
      %v1320 = vld [vmem:[%s1318 + $0x4] sm:$0xf]
      %v1321 = vld [vmem:[%s1318 + $0x8] sm:$0xf]
      %v1322 = vld [vmem:[%s1318 + $0xc] sm:$0xf]
      %v1323 = vld [vmem:[%s1318 + $0x10] sm:$0xf]
      %v1324 = vld [vmem:[%s1318 + $0x14] sm:$0xf]
      %v1325 = vld [vmem:[%s1318 + $0x18] sm:$0xf]
      %v1326 = vld [vmem:[%s1318 + $0x1c] sm:$0xf]
      %v1327 = vld [vmem:[%s1318 + $0x20] sm:$0xf]
      %v1328 = vld [vmem:[%s1318 + $0x24] sm:$0xf]
      %v1329 = vld [vmem:[%s1318 + $0x28] sm:$0xf]
      %v1330 = vld [vmem:[%s1318 + $0x2c] sm:$0xf]
      %v1331 = vld [vmem:[%s1318 + $0x30] sm:$0xf]
      %v1332 = vld [vmem:[%s1318 + $0x34] sm:$0xf]
      %v1333 = vld [vmem:[%s1318 + $0x38] sm:$0xf]
      %v1334 = vld [vmem:[%s1318 + $0x3c] sm:$0xf]
      %v1336 = vunpack.c.l.b16 %v1317
      %v1337 = vpack.c.b16 %v991, %v1336
      %vm1338 = vcmask 1045504
      %v1339 = vrot.slane %v1337, 2
      %v1340 = vrot.slane %v1004, 2
      %v1341 = vsel %vm1338, %v1339, %v1340
      %v1342 = vrot.slane %v1005, 2
      %v1343 = vsel %vm1338, %v1340, %v1342
      %v1344 = vrot.slane %v1006, 2
      %v1345 = vsel %vm1338, %v1342, %v1344
      %v1346 = vrot.slane %v1007, 2
      %v1347 = vsel %vm1338, %v1344, %v1346
      %v1348 = vrot.slane %v1008, 2
      %v1349 = vsel %vm1338, %v1346, %v1348
      %v1350 = vrot.slane %v1148, 2
      %v1351 = vsel %vm1338, %v1348, %v1350
      %v1374 = vunpack.c.l.b16 %v1319
      %v1375 = vunpack.c.l.b16 %v1320
      %v1376 = vunpack.c.l.b16 %v1321
      %v1377 = vunpack.c.l.b16 %v1322
      %v1378 = vunpack.c.l.b16 %v1323
      %v1379 = vunpack.c.l.b16 %v1324
      %v1380 = vunpack.c.l.b16 %v1325
      %v1381 = vunpack.c.l.b16 %v1326
      %v1382 = vunpack.c.l.b16 %v1327
      %v1383 = vunpack.c.l.b16 %v1328
      %v1384 = vunpack.c.l.b16 %v1329
      %v1385 = vunpack.c.l.b16 %v1330
      %v1386 = vunpack.c.l.b16 %v1331
      %v1387 = vunpack.c.l.b16 %v1332
      %v1388 = vunpack.c.l.b16 %v1333
      %v1389 = vunpack.c.l.b16 %v1334
      %v1390 = vpack.c.b16 %v1375, %v1374
      %v1391 = vpack.c.b16 %v1377, %v1376
      %v1392 = vpack.c.b16 %v1379, %v1378
      %v1393 = vpack.c.b16 %v1381, %v1380
      %v1394 = vpack.c.b16 %v1383, %v1382
      %v1395 = vpack.c.b16 %v1385, %v1384
      %v1396 = vpack.c.b16 %v1387, %v1386
      %v1397 = vpack.c.b16 %v1389, %v1388
      %1406 = vmatpush.bf16.msra.mxu0 %v1397
      %1407 = vmatpush.bf16.msra.mxu0 %v1396
      %1408 = vmatpush.bf16.msra.mxu0 %v1395
      %1409 = vmatpush.bf16.msra.mxu0 %v1394
      %1410 = vmatpush.bf16.msra.mxu0 %v1393
      %1411 = vmatpush.bf16.msra.mxu0 %v1392
      %1412 = vmatpush.bf16.msra.mxu0 %v1391
      %1413 = vmatpush.bf16.msra.mxu0 %v1390
      %1414 = vmatmul.bf16.gmra.mxu0 %v1341
      %v1415 = vpop.f32.mrf.mxu0
      %v1416 = vadd.f32 0.0, %v1415
      %v1417 = vpop.f32.mrf.mxu0
      %v1418 = vadd.f32 0.0, %v1417
      %1419 = vmatmul.bf16.gmra.mxu0 %v1343
      %v1420 = vpop.f32.mrf.mxu0
      %v1421 = vadd.f32 0.0, %v1420
      %v1422 = vpop.f32.mrf.mxu0
      %v1423 = vadd.f32 0.0, %v1422
      %1424 = vmatmul.bf16.gmra.mxu0 %v1345
      %v1425 = vpop.f32.mrf.mxu0
      %v1426 = vadd.f32 0.0, %v1425
      %v1427 = vpop.f32.mrf.mxu0
      %v1428 = vadd.f32 0.0, %v1427
      %1429 = vmatmul.bf16.gmra.mxu0 %v1347
      %v1430 = vpop.f32.mrf.mxu0
      %v1431 = vadd.f32 0.0, %v1430
      %v1432 = vpop.f32.mrf.mxu0
      %v1433 = vadd.f32 0.0, %v1432
      %1434 = vmatmul.bf16.gmra.mxu0 %v1349
      %v1435 = vpop.f32.mrf.mxu0
      %v1436 = vadd.f32 0.0, %v1435
      %v1437 = vpop.f32.mrf.mxu0
      %v1438 = vadd.f32 0.0, %v1437
      %1439 = vmatmul.bf16.gmra.mxu0 %v1351
      %v1440 = vpop.f32.mrf.mxu0
      %v1441 = vadd.f32 0.0, %v1440
      %v1442 = vpop.f32.mrf.mxu0
      %v1443 = vadd.f32 0.0, %v1442
      %1444 = vdwg.mxu0
      %v1445 = vadd.f32 %v1305, %v1416
      %v1446 = vadd.f32 %v1306, %v1418
      %v1447 = vadd.f32 %v1307, %v1421
      %v1448 = vadd.f32 %v1308, %v1423
      %v1449 = vadd.f32 %v1309, %v1426
      %v1450 = vadd.f32 %v1310, %v1428
      %v1451 = vadd.f32 %v1311, %v1431
      %v1452 = vadd.f32 %v1312, %v1433
      %v1453 = vadd.f32 %v1313, %v1436
      %v1454 = vadd.f32 %v1314, %v1438
      %v1455 = vadd.f32 %v1315, %v1441
      %v1456 = vadd.f32 %v1316, %v1443
      %v1457 = vld [vmem:[#allocation2 + $0x8] sm:$0xc]
      %v1458 = vld [vmem:[#allocation2 + $0xc] sm:$0xf]
      %v1459 = vld [vmem:[#allocation2 + $0x10] sm:$0xf]
      %v1460 = vld [vmem:[#allocation2 + $0x14] sm:$0xf]
      %v1461 = vld [vmem:[#allocation2 + $0x18] sm:$0xf]
      %v1462 = vld [vmem:[#allocation2 + $0x1c] sm:$0xf]
      %v1463 = vld [vmem:[#allocation2 + $0x20] sm:$0xf]
      %v1464 = vld [vmem:[#allocation2 + $0x24] sm:$0xf]
      %v1465 = vld [vmem:[#allocation2 + $0x28] sm:$0xf]
      %v1466 = vld [vmem:[#allocation2 + $0x2c] sm:$0xf]
      %v1467 = vld [vmem:[#allocation2 + $0x30] sm:$0xf]
      %v1468 = vld [vmem:[#allocation2 + $0x34] sm:$0xf]
      %v1469 = vld [vmem:[#allocation2 + $0x38] sm:$0x3]
      %s1470 = scalar_lea.vmem %s1, 384
      %v1471 = vld [vmem:[%s1470] sm:$0xf]
      %v1472 = vld [vmem:[%s1470 + $0x4] sm:$0xf]
      %v1473 = vld [vmem:[%s1470 + $0x8] sm:$0xf]
      %v1474 = vld [vmem:[%s1470 + $0xc] sm:$0xf]
      %v1475 = vld [vmem:[%s1470 + $0x10] sm:$0xf]
      %v1476 = vld [vmem:[%s1470 + $0x14] sm:$0xf]
      %v1477 = vld [vmem:[%s1470 + $0x18] sm:$0xf]
      %v1478 = vld [vmem:[%s1470 + $0x1c] sm:$0xf]
      %v1479 = vld [vmem:[%s1470 + $0x20] sm:$0xf]
      %v1480 = vld [vmem:[%s1470 + $0x24] sm:$0xf]
      %v1481 = vld [vmem:[%s1470 + $0x28] sm:$0xf]
      %v1482 = vld [vmem:[%s1470 + $0x2c] sm:$0xf]
      %v1483 = vld [vmem:[%s1470 + $0x30] sm:$0xf]
      %v1484 = vld [vmem:[%s1470 + $0x34] sm:$0xf]
      %v1485 = vld [vmem:[%s1470 + $0x38] sm:$0xf]
      %v1486 = vld [vmem:[%s1470 + $0x3c] sm:$0xf]
      %v1500 = vunpack.c.l.b16 %v1457
      %v1501 = vunpack.c.l.b16 %v1458
      %v1502 = vunpack.c.l.b16 %v1459
      %v1503 = vunpack.c.l.b16 %v1460
      %v1504 = vunpack.c.l.b16 %v1461
      %v1505 = vunpack.c.l.b16 %v1462
      %v1506 = vunpack.c.l.b16 %v1463
      %v1507 = vunpack.c.l.b16 %v1464
      %v1508 = vunpack.c.l.b16 %v1465
      %v1509 = vunpack.c.l.b16 %v1466
      %v1510 = vunpack.c.l.b16 %v1467
      %v1511 = vunpack.c.l.b16 %v1468
      %v1512 = vunpack.c.l.b16 %v1469
      %v1513 = vpack.c.b16 %v1501, %v1500
      %v1514 = vpack.c.b16 %v1503, %v1502
      %v1515 = vpack.c.b16 %v1505, %v1504
      %v1516 = vpack.c.b16 %v1507, %v1506
      %v1517 = vpack.c.b16 %v1509, %v1508
      %v1518 = vpack.c.b16 %v1511, %v1510
      %v1519 = vpack.c.b16 %v1512, %v1512
      %v1520 = vrot.slane %v1513, 2
      %v1521 = vrot.slane %v1514, 2
      %v1522 = vsel %vm1338, %v1520, %v1521
      %v1523 = vrot.slane %v1515, 2
      %v1524 = vsel %vm1338, %v1521, %v1523
      %v1525 = vrot.slane %v1516, 2
      %v1526 = vsel %vm1338, %v1523, %v1525
      %v1527 = vrot.slane %v1517, 2
      %v1528 = vsel %vm1338, %v1525, %v1527
      %v1529 = vrot.slane %v1518, 2
      %v1530 = vsel %vm1338, %v1527, %v1529
      %v1531 = vrot.slane %v1519, 2
      %v1532 = vsel %vm1338, %v1529, %v1531
      %v1555 = vunpack.c.l.b16 %v1471
      %v1556 = vunpack.c.l.b16 %v1472
      %v1557 = vunpack.c.l.b16 %v1473
      %v1558 = vunpack.c.l.b16 %v1474
      %v1559 = vunpack.c.l.b16 %v1475
      %v1560 = vunpack.c.l.b16 %v1476
      %v1561 = vunpack.c.l.b16 %v1477
      %v1562 = vunpack.c.l.b16 %v1478
      %v1563 = vunpack.c.l.b16 %v1479
      %v1564 = vunpack.c.l.b16 %v1480
      %v1565 = vunpack.c.l.b16 %v1481
      %v1566 = vunpack.c.l.b16 %v1482
      %v1567 = vunpack.c.l.b16 %v1483
      %v1568 = vunpack.c.l.b16 %v1484
      %v1569 = vunpack.c.l.b16 %v1485
      %v1570 = vunpack.c.l.b16 %v1486
      %v1571 = vpack.c.b16 %v1556, %v1555
      %v1572 = vpack.c.b16 %v1558, %v1557
      %v1573 = vpack.c.b16 %v1560, %v1559
      %v1574 = vpack.c.b16 %v1562, %v1561
      %v1575 = vpack.c.b16 %v1564, %v1563
      %v1576 = vpack.c.b16 %v1566, %v1565
      %v1577 = vpack.c.b16 %v1568, %v1567
      %v1578 = vpack.c.b16 %v1570, %v1569
      %1587 = vmatpush.bf16.msra.mxu0 %v1578
      %1588 = vmatpush.bf16.msra.mxu0 %v1577
      %1589 = vmatpush.bf16.msra.mxu0 %v1576
      %1590 = vmatpush.bf16.msra.mxu0 %v1575
      %1591 = vmatpush.bf16.msra.mxu0 %v1574
      %1592 = vmatpush.bf16.msra.mxu0 %v1573
      %1593 = vmatpush.bf16.msra.mxu0 %v1572
      %1594 = vmatpush.bf16.msra.mxu0 %v1571
      %1595 = vmatmul.bf16.gmra.mxu0 %v1522
      %v1596 = vpop.f32.mrf.mxu0
      %v1597 = vadd.f32 0.0, %v1596
      %v1598 = vpop.f32.mrf.mxu0
      %v1599 = vadd.f32 0.0, %v1598
      %1600 = vmatmul.bf16.gmra.mxu0 %v1524
      %v1601 = vpop.f32.mrf.mxu0
      %v1602 = vadd.f32 0.0, %v1601
      %v1603 = vpop.f32.mrf.mxu0
      %v1604 = vadd.f32 0.0, %v1603
      %1605 = vmatmul.bf16.gmra.mxu0 %v1526
      %v1606 = vpop.f32.mrf.mxu0
      %v1607 = vadd.f32 0.0, %v1606
      %v1608 = vpop.f32.mrf.mxu0
      %v1609 = vadd.f32 0.0, %v1608
      %1610 = vmatmul.bf16.gmra.mxu0 %v1528
      %v1611 = vpop.f32.mrf.mxu0
      %v1612 = vadd.f32 0.0, %v1611
      %v1613 = vpop.f32.mrf.mxu0
      %v1614 = vadd.f32 0.0, %v1613
      %1615 = vmatmul.bf16.gmra.mxu0 %v1530
      %v1616 = vpop.f32.mrf.mxu0
      %v1617 = vadd.f32 0.0, %v1616
      %v1618 = vpop.f32.mrf.mxu0
      %v1619 = vadd.f32 0.0, %v1618
      %1620 = vmatmul.bf16.gmra.mxu0 %v1532
      %v1621 = vpop.f32.mrf.mxu0
      %v1622 = vadd.f32 0.0, %v1621
      %v1623 = vpop.f32.mrf.mxu0
      %v1624 = vadd.f32 0.0, %v1623
      %1625 = vdwg.mxu0
      %v1626 = vadd.f32 %v1445, %v1597
      %v1627 = vadd.f32 %v1446, %v1599
      %v1628 = vadd.f32 %v1447, %v1602
      %v1629 = vadd.f32 %v1448, %v1604
      %v1630 = vadd.f32 %v1449, %v1607
      %v1631 = vadd.f32 %v1450, %v1609
      %v1632 = vadd.f32 %v1451, %v1612
      %v1633 = vadd.f32 %v1452, %v1614
      %v1634 = vadd.f32 %v1453, %v1617
      %v1635 = vadd.f32 %v1454, %v1619
      %v1636 = vadd.f32 %v1455, %v1622
      %v1637 = vadd.f32 %v1456, %v1624
      %v1638 = vld [vmem:[#allocation2 + $0x38] sm:$0x7]
      %s1639 = scalar_lea.vmem %s1, 448
      %v1640 = vld [vmem:[%s1639] sm:$0xf]
      %v1641 = vld [vmem:[%s1639 + $0x4] sm:$0xf]
      %v1642 = vld [vmem:[%s1639 + $0x8] sm:$0xf]
      %v1643 = vld [vmem:[%s1639 + $0xc] sm:$0xf]
      %v1644 = vld [vmem:[%s1639 + $0x10] sm:$0xf]
      %v1645 = vld [vmem:[%s1639 + $0x14] sm:$0xf]
      %v1646 = vld [vmem:[%s1639 + $0x18] sm:$0xf]
      %v1647 = vld [vmem:[%s1639 + $0x1c] sm:$0xf]
      %v1648 = vld [vmem:[%s1639 + $0x20] sm:$0xf]
      %v1649 = vld [vmem:[%s1639 + $0x24] sm:$0xf]
      %v1650 = vld [vmem:[%s1639 + $0x28] sm:$0xf]
      %v1651 = vld [vmem:[%s1639 + $0x2c] sm:$0xf]
      %v1652 = vld [vmem:[%s1639 + $0x30] sm:$0xf]
      %v1653 = vld [vmem:[%s1639 + $0x34] sm:$0xf]
      %v1654 = vld [vmem:[%s1639 + $0x38] sm:$0xf]
      %v1655 = vld [vmem:[%s1639 + $0x3c] sm:$0xf]
      %v1657 = vunpack.c.l.b16 %v1638
      %v1658 = vpack.c.b16 %v1657, %v1657
      %vm1659 = vsmask.f32 5376
      %v1661 = vshrl.u32 %v1513, 16
      %v1663 = vrot.slane %v1661, 2
      %v1664 = vshll.u32 %v1513, 16
      %v1666 = vrot.slane %v1664, 3
      %v1667 = vor.u32 %v1663, %v1666
      %v1669 = vshrl.u32 %v1514, 16
      %v1671 = vrot.slane %v1669, 2
      %v1672 = vshll.u32 %v1514, 16
      %v1674 = vrot.slane %v1672, 3
      %v1675 = vor.u32 %v1671, %v1674
      %v1676 = vsel %vm1659, %v1667, %v1675
      %v1678 = vshrl.u32 %v1515, 16
      %v1680 = vrot.slane %v1678, 2
      %v1681 = vshll.u32 %v1515, 16
      %v1683 = vrot.slane %v1681, 3
      %v1684 = vor.u32 %v1680, %v1683
      %v1685 = vsel %vm1659, %v1675, %v1684
      %v1687 = vshrl.u32 %v1516, 16
      %v1689 = vrot.slane %v1687, 2
      %v1690 = vshll.u32 %v1516, 16
      %v1692 = vrot.slane %v1690, 3
      %v1693 = vor.u32 %v1689, %v1692
      %v1694 = vsel %vm1659, %v1684, %v1693
      %v1696 = vshrl.u32 %v1517, 16
      %v1698 = vrot.slane %v1696, 2
      %v1699 = vshll.u32 %v1517, 16
      %v1701 = vrot.slane %v1699, 3
      %v1702 = vor.u32 %v1698, %v1701
      %v1703 = vsel %vm1659, %v1693, %v1702
      %v1705 = vshrl.u32 %v1518, 16
      %v1707 = vrot.slane %v1705, 2
      %v1708 = vshll.u32 %v1518, 16
      %v1710 = vrot.slane %v1708, 3
      %v1711 = vor.u32 %v1707, %v1710
      %v1712 = vsel %vm1659, %v1702, %v1711
      %v1714 = vshrl.u32 %v1658, 16
      %v1716 = vrot.slane %v1714, 2
      %v1717 = vshll.u32 %v1658, 16
      %v1719 = vrot.slane %v1717, 3
      %v1720 = vor.u32 %v1716, %v1719
      %v1721 = vsel %vm1659, %v1711, %v1720
      %v1744 = vunpack.c.l.b16 %v1640
      %v1745 = vunpack.c.l.b16 %v1641
      %v1746 = vunpack.c.l.b16 %v1642
      %v1747 = vunpack.c.l.b16 %v1643
      %v1748 = vunpack.c.l.b16 %v1644
      %v1749 = vunpack.c.l.b16 %v1645
      %v1750 = vunpack.c.l.b16 %v1646
      %v1751 = vunpack.c.l.b16 %v1647
      %v1752 = vunpack.c.l.b16 %v1648
      %v1753 = vunpack.c.l.b16 %v1649
      %v1754 = vunpack.c.l.b16 %v1650
      %v1755 = vunpack.c.l.b16 %v1651
      %v1756 = vunpack.c.l.b16 %v1652
      %v1757 = vunpack.c.l.b16 %v1653
      %v1758 = vunpack.c.l.b16 %v1654
      %v1759 = vunpack.c.l.b16 %v1655
      %v1760 = vpack.c.b16 %v1745, %v1744
      %v1761 = vpack.c.b16 %v1747, %v1746
      %v1762 = vpack.c.b16 %v1749, %v1748
      %v1763 = vpack.c.b16 %v1751, %v1750
      %v1764 = vpack.c.b16 %v1753, %v1752
      %v1765 = vpack.c.b16 %v1755, %v1754
      %v1766 = vpack.c.b16 %v1757, %v1756
      %v1767 = vpack.c.b16 %v1759, %v1758
      %1776 = vmatpush.bf16.msra.mxu0 %v1767
      %1777 = vmatpush.bf16.msra.mxu0 %v1766
      %1778 = vmatpush.bf16.msra.mxu0 %v1765
      %1779 = vmatpush.bf16.msra.mxu0 %v1764
      %1780 = vmatpush.bf16.msra.mxu0 %v1763
      %1781 = vmatpush.bf16.msra.mxu0 %v1762
      %1782 = vmatpush.bf16.msra.mxu0 %v1761
      %1783 = vmatpush.bf16.msra.mxu0 %v1760
      %1784 = vmatmul.bf16.gmra.mxu0 %v1676
      %v1785 = vpop.f32.mrf.mxu0
      %v1786 = vadd.f32 0.0, %v1785
      %v1787 = vpop.f32.mrf.mxu0
      %v1788 = vadd.f32 0.0, %v1787
      %1789 = vmatmul.bf16.gmra.mxu0 %v1685
      %v1790 = vpop.f32.mrf.mxu0
      %v1791 = vadd.f32 0.0, %v1790
      %v1792 = vpop.f32.mrf.mxu0
      %v1793 = vadd.f32 0.0, %v1792
      %1794 = vmatmul.bf16.gmra.mxu0 %v1694
      %v1795 = vpop.f32.mrf.mxu0
      %v1796 = vadd.f32 0.0, %v1795
      %v1797 = vpop.f32.mrf.mxu0
      %v1798 = vadd.f32 0.0, %v1797
      %1799 = vmatmul.bf16.gmra.mxu0 %v1703
      %v1800 = vpop.f32.mrf.mxu0
      %v1801 = vadd.f32 0.0, %v1800
      %v1802 = vpop.f32.mrf.mxu0
      %v1803 = vadd.f32 0.0, %v1802
      %1804 = vmatmul.bf16.gmra.mxu0 %v1712
      %v1805 = vpop.f32.mrf.mxu0
      %v1806 = vadd.f32 0.0, %v1805
      %v1807 = vpop.f32.mrf.mxu0
      %v1808 = vadd.f32 0.0, %v1807
      %1809 = vmatmul.bf16.gmra.mxu0 %v1721
      %v1810 = vpop.f32.mrf.mxu0
      %v1811 = vadd.f32 0.0, %v1810
      %v1812 = vpop.f32.mrf.mxu0
      %v1813 = vadd.f32 0.0, %v1812
      %1814 = vdwg.mxu0
      %v1815 = vadd.f32 %v1626, %v1786
      %v1816 = vadd.f32 %v1627, %v1788
      %v1817 = vadd.f32 %v1628, %v1791
      %v1818 = vadd.f32 %v1629, %v1793
      %v1819 = vadd.f32 %v1630, %v1796
      %v1820 = vadd.f32 %v1631, %v1798
      %v1821 = vadd.f32 %v1632, %v1801
      %v1822 = vadd.f32 %v1633, %v1803
      %v1823 = vadd.f32 %v1634, %v1806
      %v1824 = vadd.f32 %v1635, %v1808
      %v1825 = vadd.f32 %v1636, %v1811
      %v1826 = vadd.f32 %v1637, %v1813
      %v1827 = vld [vmem:[#allocation2 + $0x8] sm:$0x8]
      %s1828 = scalar_lea.vmem %s1, 512
      %v1829 = vld [vmem:[%s1828] sm:$0xf]
      %v1830 = vld [vmem:[%s1828 + $0x4] sm:$0xf]
      %v1831 = vld [vmem:[%s1828 + $0x8] sm:$0xf]
      %v1832 = vld [vmem:[%s1828 + $0xc] sm:$0xf]
      %v1833 = vld [vmem:[%s1828 + $0x10] sm:$0xf]
      %v1834 = vld [vmem:[%s1828 + $0x14] sm:$0xf]
      %v1835 = vld [vmem:[%s1828 + $0x18] sm:$0xf]
      %v1836 = vld [vmem:[%s1828 + $0x1c] sm:$0xf]
      %v1837 = vld [vmem:[%s1828 + $0x20] sm:$0xf]
      %v1838 = vld [vmem:[%s1828 + $0x24] sm:$0xf]
      %v1839 = vld [vmem:[%s1828 + $0x28] sm:$0xf]
      %v1840 = vld [vmem:[%s1828 + $0x2c] sm:$0xf]
      %v1841 = vld [vmem:[%s1828 + $0x30] sm:$0xf]
      %v1842 = vld [vmem:[%s1828 + $0x34] sm:$0xf]
      %v1843 = vld [vmem:[%s1828 + $0x38] sm:$0xf]
      %v1844 = vld [vmem:[%s1828 + $0x3c] sm:$0xf]
      %v1846 = vunpack.c.l.b16 %v1827
      %v1847 = vpack.c.b16 %v1501, %v1846
      %vm1848 = vcmask 1044480
      %v1849 = vrot.slane %v1847, 3
      %v1850 = vrot.slane %v1514, 3
      %v1851 = vsel %vm1848, %v1849, %v1850
      %v1852 = vrot.slane %v1515, 3
      %v1853 = vsel %vm1848, %v1850, %v1852
      %v1854 = vrot.slane %v1516, 3
      %v1855 = vsel %vm1848, %v1852, %v1854
      %v1856 = vrot.slane %v1517, 3
      %v1857 = vsel %vm1848, %v1854, %v1856
      %v1858 = vrot.slane %v1518, 3
      %v1859 = vsel %vm1848, %v1856, %v1858
      %v1860 = vrot.slane %v1658, 3
      %v1861 = vsel %vm1848, %v1858, %v1860
      %v1884 = vunpack.c.l.b16 %v1829
      %v1885 = vunpack.c.l.b16 %v1830
      %v1886 = vunpack.c.l.b16 %v1831
      %v1887 = vunpack.c.l.b16 %v1832
      %v1888 = vunpack.c.l.b16 %v1833
      %v1889 = vunpack.c.l.b16 %v1834
      %v1890 = vunpack.c.l.b16 %v1835
      %v1891 = vunpack.c.l.b16 %v1836
      %v1892 = vunpack.c.l.b16 %v1837
      %v1893 = vunpack.c.l.b16 %v1838
      %v1894 = vunpack.c.l.b16 %v1839
      %v1895 = vunpack.c.l.b16 %v1840
      %v1896 = vunpack.c.l.b16 %v1841
      %v1897 = vunpack.c.l.b16 %v1842
      %v1898 = vunpack.c.l.b16 %v1843
      %v1899 = vunpack.c.l.b16 %v1844
      %v1900 = vpack.c.b16 %v1885, %v1884
      %v1901 = vpack.c.b16 %v1887, %v1886
      %v1902 = vpack.c.b16 %v1889, %v1888
      %v1903 = vpack.c.b16 %v1891, %v1890
      %v1904 = vpack.c.b16 %v1893, %v1892
      %v1905 = vpack.c.b16 %v1895, %v1894
      %v1906 = vpack.c.b16 %v1897, %v1896
      %v1907 = vpack.c.b16 %v1899, %v1898
      %1916 = vmatpush.bf16.msra.mxu0 %v1907
      %1917 = vmatpush.bf16.msra.mxu0 %v1906
      %1918 = vmatpush.bf16.msra.mxu0 %v1905
      %1919 = vmatpush.bf16.msra.mxu0 %v1904
      %1920 = vmatpush.bf16.msra.mxu0 %v1903
      %1921 = vmatpush.bf16.msra.mxu0 %v1902
      %1922 = vmatpush.bf16.msra.mxu0 %v1901
      %1923 = vmatpush.bf16.msra.mxu0 %v1900
      %1924 = vmatmul.bf16.gmra.mxu0 %v1851
      %v1925 = vpop.f32.mrf.mxu0
      %v1926 = vadd.f32 0.0, %v1925
      %v1927 = vpop.f32.mrf.mxu0
      %v1928 = vadd.f32 0.0, %v1927
      %1929 = vmatmul.bf16.gmra.mxu0 %v1853
      %v1930 = vpop.f32.mrf.mxu0
      %v1931 = vadd.f32 0.0, %v1930
      %v1932 = vpop.f32.mrf.mxu0
      %v1933 = vadd.f32 0.0, %v1932
      %1934 = vmatmul.bf16.gmra.mxu0 %v1855
      %v1935 = vpop.f32.mrf.mxu0
      %v1936 = vadd.f32 0.0, %v1935
      %v1937 = vpop.f32.mrf.mxu0
      %v1938 = vadd.f32 0.0, %v1937
      %1939 = vmatmul.bf16.gmra.mxu0 %v1857
      %v1940 = vpop.f32.mrf.mxu0
      %v1941 = vadd.f32 0.0, %v1940
      %v1942 = vpop.f32.mrf.mxu0
      %v1943 = vadd.f32 0.0, %v1942
      %1944 = vmatmul.bf16.gmra.mxu0 %v1859
      %v1945 = vpop.f32.mrf.mxu0
      %v1946 = vadd.f32 0.0, %v1945
      %v1947 = vpop.f32.mrf.mxu0
      %v1948 = vadd.f32 0.0, %v1947
      %1949 = vmatmul.bf16.gmra.mxu0 %v1861
      %v1950 = vpop.f32.mrf.mxu0
      %v1951 = vadd.f32 0.0, %v1950
      %v1952 = vpop.f32.mrf.mxu0
      %v1953 = vadd.f32 0.0, %v1952
      %1954 = vdwg.mxu0
      %v1955 = vadd.f32 %v1815, %v1926
      %v1956 = vadd.f32 %v1816, %v1928
      %v1957 = vadd.f32 %v1817, %v1931
      %v1958 = vadd.f32 %v1818, %v1933
      %v1959 = vadd.f32 %v1819, %v1936
      %v1960 = vadd.f32 %v1820, %v1938
      %v1961 = vadd.f32 %v1821, %v1941
      %v1962 = vadd.f32 %v1822, %v1943
      %v1963 = vadd.f32 %v1823, %v1946
      %v1964 = vadd.f32 %v1824, %v1948
      %v1965 = vadd.f32 %v1825, %v1951
      %v1966 = vadd.f32 %v1826, %v1953
      %v1968 = vperm.slane %v302, 0
      %v1970 = vadd.f32 %v1955, %v1968
      %v1971 = vadd.f32 %v1956, %v1968
      %v1972 = vadd.f32 %v1957, %v1968
      %v1973 = vadd.f32 %v1958, %v1968
      %v1974 = vadd.f32 %v1959, %v1968
      %v1975 = vadd.f32 %v1960, %v1968
      %v1976 = vadd.f32 %v1961, %v1968
      %v1977 = vadd.f32 %v1962, %v1968
      %v1978 = vadd.f32 %v1963, %v1968
      %v1979 = vadd.f32 %v1964, %v1968
      %v1980 = vadd.f32 %v1965, %v1968
      %v1981 = vadd.f32 %v1966, %v1968
      %v1982 = vmax.f32 %v1970, 0.0
      %v1983 = vmax.f32 %v1971, 0.0
      %v1984 = vmax.f32 %v1972, 0.0
      %v1985 = vmax.f32 %v1973, 0.0
      %v1986 = vmax.f32 %v1974, 0.0
      %v1987 = vmax.f32 %v1975, 0.0
      %v1988 = vmax.f32 %v1976, 0.0
      %v1989 = vmax.f32 %v1977, 0.0
      %v1990 = vmax.f32 %v1978, 0.0
      %v1991 = vmax.f32 %v1979, 0.0
      %v1992 = vmax.f32 %v1980, 0.0
      %v1993 = vmax.f32 %v1981, 0.0
      %v1994 = vld [vmem:[%s6 + $0xb] sm:$0xff]
      %v1995 = vld [vmem:[%s6 + $0x13] sm:$0xff]
      %v1996 = vld [vmem:[%s6 + $0x1b] sm:$0xff]
      %v1997 = vld [vmem:[%s6 + $0x23] sm:$0xff]
      %v1998 = vld [vmem:[%s6 + $0x2b] sm:$0xff]
      %v1999 = vld [vmem:[%s6 + $0x33] sm:$0xff]
      %v2000 = vld [vmem:[%s6 + $0x3b] sm:$0xff]
      %v2001 = vld [vmem:[%s6 + $0x43] sm:$0xff]
      %v2002 = vld [vmem:[%s6 + $0x4b] sm:$0xff]
      %v2003 = vld [vmem:[%s6 + $0x53] sm:$0xff]
      %v2004 = vld [vmem:[%s6 + $0x5b] sm:$0xff]
      %v2005 = vld [vmem:[%s6 + $0x63] sm:$0xff]
      %vm2006 = vcmp.gt.f32.partialorder %v1994, 0.5
      %vm2007 = vcmp.gt.f32.partialorder %v1995, 0.5
      %vm2008 = vcmp.gt.f32.partialorder %v1996, 0.5
      %vm2009 = vcmp.gt.f32.partialorder %v1997, 0.5
      %vm2010 = vcmp.gt.f32.partialorder %v1998, 0.5
      %vm2011 = vcmp.gt.f32.partialorder %v1999, 0.5
      %vm2012 = vcmp.gt.f32.partialorder %v2000, 0.5
      %vm2013 = vcmp.gt.f32.partialorder %v2001, 0.5
      %vm2014 = vcmp.gt.f32.partialorder %v2002, 0.5
      %vm2015 = vcmp.gt.f32.partialorder %v2003, 0.5
      %vm2016 = vcmp.gt.f32.partialorder %v2004, 0.5
      %vm2017 = vcmp.gt.f32.partialorder %v2005, 0.5
      %v2018 = vsel %vm2006, 1, 0
      %v2019 = vsel %vm2007, 1, 0
      %v2020 = vsel %vm2008, 1, 0
      %v2021 = vsel %vm2009, 1, 0
      %v2022 = vsel %vm2010, 1, 0
      %v2023 = vsel %vm2011, 1, 0
      %v2024 = vsel %vm2012, 1, 0
      %v2025 = vsel %vm2013, 1, 0
      %v2026 = vsel %vm2014, 1, 0
      %v2027 = vsel %vm2015, 1, 0
      %v2028 = vsel %vm2016, 1, 0
      %v2029 = vsel %vm2017, 1, 0
      %2030 = vset.pattern.permute.xlu0 0
      %2031 = vperm.xlu0 %2030, %v2018
      %v2032 = vpop.permute.xlu0 %2031
      %2033 = vset.pattern.permute.xlu0 0
      %2034 = vperm.xlu0 %2033, %v2019
      %v2035 = vpop.permute.xlu0 %2034
      %2036 = vset.pattern.permute.xlu0 0
      %2037 = vperm.xlu0 %2036, %v2020
      %v2038 = vpop.permute.xlu0 %2037
      %2039 = vset.pattern.permute.xlu0 0
      %2040 = vperm.xlu0 %2039, %v2021
      %v2041 = vpop.permute.xlu0 %2040
      %2042 = vset.pattern.permute.xlu0 0
      %2043 = vperm.xlu0 %2042, %v2022
      %v2044 = vpop.permute.xlu0 %2043
      %2045 = vset.pattern.permute.xlu0 0
      %2046 = vperm.xlu0 %2045, %v2023
      %v2047 = vpop.permute.xlu0 %2046
      %2048 = vset.pattern.permute.xlu0 0
      %2049 = vperm.xlu0 %2048, %v2024
      %v2050 = vpop.permute.xlu0 %2049
      %2051 = vset.pattern.permute.xlu0 0
      %2052 = vperm.xlu0 %2051, %v2025
      %v2053 = vpop.permute.xlu0 %2052
      %2054 = vset.pattern.permute.xlu0 0
      %2055 = vperm.xlu0 %2054, %v2026
      %v2056 = vpop.permute.xlu0 %2055
      %2057 = vset.pattern.permute.xlu0 0
      %2058 = vperm.xlu0 %2057, %v2027
      %v2059 = vpop.permute.xlu0 %2058
      %2060 = vset.pattern.permute.xlu0 0
      %2061 = vperm.xlu0 %2060, %v2028
      %v2062 = vpop.permute.xlu0 %2061
      %2063 = vset.pattern.permute.xlu0 0
      %2064 = vperm.xlu0 %2063, %v2029
      %v2065 = vpop.permute.xlu0 %2064
      %vm2066 = vcmp.eq.s32.totalorder %v2032, 1
      %vm2067 = vcmp.eq.s32.totalorder %v2035, 1
      %vm2068 = vcmp.eq.s32.totalorder %v2038, 1
      %vm2069 = vcmp.eq.s32.totalorder %v2041, 1
      %vm2070 = vcmp.eq.s32.totalorder %v2044, 1
      %vm2071 = vcmp.eq.s32.totalorder %v2047, 1
      %vm2072 = vcmp.eq.s32.totalorder %v2050, 1
      %vm2073 = vcmp.eq.s32.totalorder %v2053, 1
      %vm2074 = vcmp.eq.s32.totalorder %v2056, 1
      %vm2075 = vcmp.eq.s32.totalorder %v2059, 1
      %vm2076 = vcmp.eq.s32.totalorder %v2062, 1
      %vm2077 = vcmp.eq.s32.totalorder %v2065, 1
      %v2078 = vsel %vm2066, %v1982, 0.0
      %v2079 = vsel %vm2067, %v1983, 0.0
      %v2080 = vsel %vm2068, %v1984, 0.0
      %v2081 = vsel %vm2069, %v1985, 0.0
      %v2082 = vsel %vm2070, %v1986, 0.0
      %v2083 = vsel %vm2071, %v1987, 0.0
      %v2084 = vsel %vm2072, %v1988, 0.0
      %v2085 = vsel %vm2073, %v1989, 0.0
      %v2086 = vsel %vm2074, %v1990, 0.0
      %v2087 = vsel %vm2075, %v1991, 0.0
      %v2088 = vsel %vm2076, %v1992, 0.0
      %v2089 = vsel %vm2077, %v1993, 0.0
      %v2090 = vpack.c.bf16 %v2078, %v2078
      %v2091 = vpack.c.bf16 %v2079, %v2079
      %v2092 = vpack.c.bf16 %v2080, %v2080
      %v2093 = vpack.c.bf16 %v2081, %v2081
      %v2094 = vpack.c.bf16 %v2082, %v2082
      %v2095 = vpack.c.bf16 %v2083, %v2083
      %v2096 = vpack.c.bf16 %v2084, %v2084
      %v2097 = vpack.c.bf16 %v2085, %v2085
      %v2098 = vpack.c.bf16 %v2086, %v2086
      %v2099 = vpack.c.bf16 %v2087, %v2087
      %v2100 = vpack.c.bf16 %v2088, %v2088
      %v2101 = vpack.c.bf16 %v2089, %v2089
      %vm2102 = vsmask.f32 5392
      %vm2103 = vmor %vm288, %vm2102
      %v2105 = vshrl.u32 %v2090, 16
      %v2107 = vrot.slane %v2105, 6
      %v2108 = vshll.u32 %v2090, 16
      %v2110 = vrot.slane %v2108, 7
      %v2111 = vor.u32 %v2107, %v2110
      %v2112 = vrot.slane %v2111, 4
      %v2114 = vshrl.u32 %v2091, 16
      %v2116 = vrot.slane %v2114, 6
      %v2117 = vshll.u32 %v2091, 16
      %v2119 = vrot.slane %v2117, 7
      %v2120 = vor.u32 %v2116, %v2119
      %v2121 = vsel %vm2103, %v2112, %v2120
      %v2122 = vrot.slane %v2120, 4
      %v2124 = vshrl.u32 %v2092, 16
      %v2126 = vrot.slane %v2124, 6
      %v2127 = vshll.u32 %v2092, 16
      %v2129 = vrot.slane %v2127, 7
      %v2130 = vor.u32 %v2126, %v2129
      %v2131 = vsel %vm2103, %v2122, %v2130
      %v2132 = vrot.slane %v2130, 4
      %v2134 = vshrl.u32 %v2093, 16
      %v2136 = vrot.slane %v2134, 6
      %v2137 = vshll.u32 %v2093, 16
      %v2139 = vrot.slane %v2137, 7
      %v2140 = vor.u32 %v2136, %v2139
      %v2141 = vsel %vm2103, %v2132, %v2140
      %v2142 = vrot.slane %v2140, 4
      %v2144 = vshrl.u32 %v2094, 16
      %v2146 = vrot.slane %v2144, 6
      %v2147 = vshll.u32 %v2094, 16
      %v2149 = vrot.slane %v2147, 7
      %v2150 = vor.u32 %v2146, %v2149
      %v2151 = vsel %vm2103, %v2142, %v2150
      %v2152 = vrot.slane %v2150, 4
      %v2154 = vshrl.u32 %v2095, 16
      %v2156 = vrot.slane %v2154, 6
      %v2157 = vshll.u32 %v2095, 16
      %v2159 = vrot.slane %v2157, 7
      %v2160 = vor.u32 %v2156, %v2159
      %v2161 = vsel %vm2103, %v2152, %v2160
      %v2162 = vrot.slane %v2160, 4
      %v2164 = vshrl.u32 %v2096, 16
      %v2166 = vrot.slane %v2164, 6
      %v2167 = vshll.u32 %v2096, 16
      %v2169 = vrot.slane %v2167, 7
      %v2170 = vor.u32 %v2166, %v2169
      %v2171 = vsel %vm2103, %v2162, %v2170
      %v2172 = vrot.slane %v2170, 4
      %v2174 = vshrl.u32 %v2097, 16
      %v2176 = vrot.slane %v2174, 6
      %v2177 = vshll.u32 %v2097, 16
      %v2179 = vrot.slane %v2177, 7
      %v2180 = vor.u32 %v2176, %v2179
      %v2181 = vsel %vm2103, %v2172, %v2180
      %v2182 = vrot.slane %v2180, 4
      %v2184 = vshrl.u32 %v2098, 16
      %v2186 = vrot.slane %v2184, 6
      %v2187 = vshll.u32 %v2098, 16
      %v2189 = vrot.slane %v2187, 7
      %v2190 = vor.u32 %v2186, %v2189
      %v2191 = vsel %vm2103, %v2182, %v2190
      %v2192 = vrot.slane %v2190, 4
      %v2194 = vshrl.u32 %v2099, 16
      %v2196 = vrot.slane %v2194, 6
      %v2197 = vshll.u32 %v2099, 16
      %v2199 = vrot.slane %v2197, 7
      %v2200 = vor.u32 %v2196, %v2199
      %v2201 = vsel %vm2103, %v2192, %v2200
      %v2202 = vrot.slane %v2200, 4
      %v2204 = vshrl.u32 %v2100, 16
      %v2206 = vrot.slane %v2204, 6
      %v2207 = vshll.u32 %v2100, 16
      %v2209 = vrot.slane %v2207, 7
      %v2210 = vor.u32 %v2206, %v2209
      %v2211 = vsel %vm2103, %v2202, %v2210
      %v2212 = vrot.slane %v2210, 4
      %v2214 = vshrl.u32 %v2101, 16
      %v2216 = vrot.slane %v2214, 6
      %v2217 = vshll.u32 %v2101, 16
      %v2219 = vrot.slane %v2217, 7
      %v2220 = vor.u32 %v2216, %v2219
      %v2221 = vsel %vm2103, %v2212, %v2220
      %v2222 = vrot.slane %v2220, 4
      %v2236 = vld [vmem:[#allocation3 + $0x4] sm:$0xe]
      %v2237 = vsel %vm295, %v2111, %v2236
      %2238 = vst [vmem:[#allocation3 + $0x4] sm:$0xe] %v2237
      %2239 = vst [vmem:[#allocation3 + $0x8] sm:$0xf] %v2121
      %2240 = vst [vmem:[#allocation3 + $0xc] sm:$0xf] %v2131
      %2241 = vst [vmem:[#allocation3 + $0x10] sm:$0xf] %v2141
      %2242 = vst [vmem:[#allocation3 + $0x14] sm:$0xf] %v2151
      %2243 = vst [vmem:[#allocation3 + $0x18] sm:$0xf] %v2161
      %2244 = vst [vmem:[#allocation3 + $0x1c] sm:$0xf] %v2171
      %2245 = vst [vmem:[#allocation3 + $0x20] sm:$0xf] %v2181
      %2246 = vst [vmem:[#allocation3 + $0x24] sm:$0xf] %v2191
      %2247 = vst [vmem:[#allocation3 + $0x28] sm:$0xf] %v2201
      %2248 = vst [vmem:[#allocation3 + $0x2c] sm:$0xf] %v2211
      %2249 = vst [vmem:[#allocation3 + $0x30] sm:$0xf] %v2221
      %v2250 = vld [vmem:[#allocation3 + $0x34] sm:$0x3]
      %v2251 = vsel %vm289, %v2222, %v2250
      %2252 = vst [vmem:[#allocation3 + $0x34] sm:$0x3] %v2251
      %v2253 = vld [vmem:[#allocation3] sm:$0xf]
      %v2254 = vld [vmem:[#allocation3 + $0x4] sm:$0xf]
      %v2255 = vld [vmem:[#allocation3 + $0x8] sm:$0xf]
      %v2256 = vld [vmem:[#allocation3 + $0xc] sm:$0xf]
      %v2257 = vld [vmem:[#allocation3 + $0x10] sm:$0xf]
      %v2258 = vld [vmem:[#allocation3 + $0x14] sm:$0xf]
      %v2259 = vld [vmem:[#allocation3 + $0x18] sm:$0xf]
      %v2260 = vld [vmem:[#allocation3 + $0x1c] sm:$0xf]
      %v2261 = vld [vmem:[#allocation3 + $0x20] sm:$0xf]
      %v2262 = vld [vmem:[#allocation3 + $0x24] sm:$0xf]
      %v2263 = vld [vmem:[#allocation3 + $0x28] sm:$0xf]
      %v2264 = vld [vmem:[#allocation3 + $0x2c] sm:$0xf]
      %v2265 = vld [vmem:[%s2] sm:$0xf]
      %v2266 = vld [vmem:[%s2 + $0x4] sm:$0xf]
      %v2267 = vld [vmem:[%s2 + $0x8] sm:$0xf]
      %v2268 = vld [vmem:[%s2 + $0xc] sm:$0xf]
      %v2269 = vld [vmem:[%s2 + $0x10] sm:$0xf]
      %v2270 = vld [vmem:[%s2 + $0x14] sm:$0xf]
      %v2271 = vld [vmem:[%s2 + $0x18] sm:$0xf]
      %v2272 = vld [vmem:[%s2 + $0x1c] sm:$0xf]
      %v2273 = vld [vmem:[%s2 + $0x20] sm:$0xf]
      %v2274 = vld [vmem:[%s2 + $0x24] sm:$0xf]
      %v2275 = vld [vmem:[%s2 + $0x28] sm:$0xf]
      %v2276 = vld [vmem:[%s2 + $0x2c] sm:$0xf]
      %v2277 = vld [vmem:[%s2 + $0x30] sm:$0xf]
      %v2278 = vld [vmem:[%s2 + $0x34] sm:$0xf]
      %v2279 = vld [vmem:[%s2 + $0x38] sm:$0xf]
      %v2280 = vld [vmem:[%s2 + $0x3c] sm:$0xf]
      %v2281 = vld [vmem:[#allocation3 + $0x30] sm:$0x1]
      %s2282 = scalar_lea.vmem %s2, 64
      %v2283 = vld [vmem:[%s2282] sm:$0xf]
      %v2284 = vld [vmem:[%s2282 + $0x4] sm:$0xf]
      %v2285 = vld [vmem:[%s2282 + $0x8] sm:$0xf]
      %v2286 = vld [vmem:[%s2282 + $0xc] sm:$0xf]
      %v2287 = vld [vmem:[%s2282 + $0x10] sm:$0xf]
      %v2288 = vld [vmem:[%s2282 + $0x14] sm:$0xf]
      %v2289 = vld [vmem:[%s2282 + $0x18] sm:$0xf]
      %v2290 = vld [vmem:[%s2282 + $0x1c] sm:$0xf]
      %v2291 = vld [vmem:[%s2282 + $0x20] sm:$0xf]
      %v2292 = vld [vmem:[%s2282 + $0x24] sm:$0xf]
      %v2293 = vld [vmem:[%s2282 + $0x28] sm:$0xf]
      %v2294 = vld [vmem:[%s2282 + $0x2c] sm:$0xf]
      %v2295 = vld [vmem:[%s2282 + $0x30] sm:$0xf]
      %v2296 = vld [vmem:[%s2282 + $0x34] sm:$0xf]
      %v2297 = vld [vmem:[%s2282 + $0x38] sm:$0xf]
      %v2298 = vld [vmem:[%s2282 + $0x3c] sm:$0xf]
      %v2312 = vunpack.c.l.b16 %v2253
      %v2313 = vunpack.c.l.b16 %v2254
      %v2314 = vunpack.c.l.b16 %v2255
      %v2315 = vunpack.c.l.b16 %v2256
      %v2316 = vunpack.c.l.b16 %v2257
      %v2317 = vunpack.c.l.b16 %v2258
      %v2318 = vunpack.c.l.b16 %v2259
      %v2319 = vunpack.c.l.b16 %v2260
      %v2320 = vunpack.c.l.b16 %v2261
      %v2321 = vunpack.c.l.b16 %v2262
      %v2322 = vunpack.c.l.b16 %v2263
      %v2323 = vunpack.c.l.b16 %v2264
      %v2324 = vunpack.c.l.b16 %v2281
      %v2325 = vpack.c.b16 %v2313, %v2312
      %v2326 = vpack.c.b16 %v2315, %v2314
      %v2327 = vpack.c.b16 %v2317, %v2316
      %v2328 = vpack.c.b16 %v2319, %v2318
      %v2329 = vpack.c.b16 %v2321, %v2320
      %v2330 = vpack.c.b16 %v2323, %v2322
      %v2331 = vpack.c.b16 %v2324, %v2324
      %v2333 = vshrl.u32 %v2325, 16
      %v2335 = vshll.u32 %v2325, 16
      %v2337 = vrot.slane %v2335, 1
      %v2338 = vor.u32 %v2333, %v2337
      %v2340 = vshll.u32 %v2326, 16
      %v2342 = vrot.slane %v2340, 1
      %v2343 = vsel %vm568, %v2338, %v2342
      %v2344 = vshrl.u32 %v2326, 16
      %v2346 = vor.u32 %v2344, %v2342
      %v2348 = vshll.u32 %v2327, 16
      %v2350 = vrot.slane %v2348, 1
      %v2351 = vsel %vm568, %v2346, %v2350
      %v2352 = vshrl.u32 %v2327, 16
      %v2354 = vor.u32 %v2352, %v2350
      %v2356 = vshll.u32 %v2328, 16
      %v2358 = vrot.slane %v2356, 1
      %v2359 = vsel %vm568, %v2354, %v2358
      %v2360 = vshrl.u32 %v2328, 16
      %v2362 = vor.u32 %v2360, %v2358
      %v2364 = vshll.u32 %v2329, 16
      %v2366 = vrot.slane %v2364, 1
      %v2367 = vsel %vm568, %v2362, %v2366
      %v2368 = vshrl.u32 %v2329, 16
      %v2370 = vor.u32 %v2368, %v2366
      %v2372 = vshll.u32 %v2330, 16
      %v2374 = vrot.slane %v2372, 1
      %v2375 = vsel %vm568, %v2370, %v2374
      %v2376 = vshrl.u32 %v2330, 16
      %v2378 = vor.u32 %v2376, %v2374
      %v2380 = vshll.u32 %v2331, 16
      %v2382 = vrot.slane %v2380, 1
      %v2383 = vsel %vm568, %v2378, %v2382
      %v2406 = vunpack.c.l.b16 %v2283
      %v2407 = vunpack.c.l.b16 %v2284
      %v2408 = vunpack.c.l.b16 %v2285
      %v2409 = vunpack.c.l.b16 %v2286
      %v2410 = vunpack.c.l.b16 %v2287
      %v2411 = vunpack.c.l.b16 %v2288
      %v2412 = vunpack.c.l.b16 %v2289
      %v2413 = vunpack.c.l.b16 %v2290
      %v2414 = vunpack.c.l.b16 %v2291
      %v2415 = vunpack.c.l.b16 %v2292
      %v2416 = vunpack.c.l.b16 %v2293
      %v2417 = vunpack.c.l.b16 %v2294
      %v2418 = vunpack.c.l.b16 %v2295
      %v2419 = vunpack.c.l.b16 %v2296
      %v2420 = vunpack.c.l.b16 %v2297
      %v2421 = vunpack.c.l.b16 %v2298
      %v2422 = vpack.c.b16 %v2407, %v2406
      %v2423 = vpack.c.b16 %v2409, %v2408
      %v2424 = vpack.c.b16 %v2411, %v2410
      %v2425 = vpack.c.b16 %v2413, %v2412
      %v2426 = vpack.c.b16 %v2415, %v2414
      %v2427 = vpack.c.b16 %v2417, %v2416
      %v2428 = vpack.c.b16 %v2419, %v2418
      %v2429 = vpack.c.b16 %v2421, %v2420
      %2438 = vmatpush.bf16.msra.mxu0 %v2429
      %2439 = vmatpush.bf16.msra.mxu0 %v2428
      %2440 = vmatpush.bf16.msra.mxu0 %v2427
      %2441 = vmatpush.bf16.msra.mxu0 %v2426
      %2442 = vmatpush.bf16.msra.mxu0 %v2425
      %2443 = vmatpush.bf16.msra.mxu0 %v2424
      %2444 = vmatpush.bf16.msra.mxu0 %v2423
      %2445 = vmatpush.bf16.msra.mxu0 %v2422
      %2446 = vmatmul.bf16.gmra.mxu0 %v2343
      %v2447 = vpop.f32.mrf.mxu0
      %v2448 = vadd.f32 0.0, %v2447
      %v2449 = vpop.f32.mrf.mxu0
      %v2450 = vadd.f32 0.0, %v2449
      %2451 = vmatmul.bf16.gmra.mxu0 %v2351
      %v2452 = vpop.f32.mrf.mxu0
      %v2453 = vadd.f32 0.0, %v2452
      %v2454 = vpop.f32.mrf.mxu0
      %v2455 = vadd.f32 0.0, %v2454
      %2456 = vmatmul.bf16.gmra.mxu0 %v2359
      %v2457 = vpop.f32.mrf.mxu0
      %v2458 = vadd.f32 0.0, %v2457
      %v2459 = vpop.f32.mrf.mxu0
      %v2460 = vadd.f32 0.0, %v2459
      %2461 = vmatmul.bf16.gmra.mxu0 %v2367
      %v2462 = vpop.f32.mrf.mxu0
      %v2463 = vadd.f32 0.0, %v2462
      %v2464 = vpop.f32.mrf.mxu0
      %v2465 = vadd.f32 0.0, %v2464
      %2466 = vmatmul.bf16.gmra.mxu0 %v2375
      %v2467 = vpop.f32.mrf.mxu0
      %v2468 = vadd.f32 0.0, %v2467
      %v2469 = vpop.f32.mrf.mxu0
      %v2470 = vadd.f32 0.0, %v2469
      %2471 = vmatmul.bf16.gmra.mxu0 %v2383
      %v2472 = vpop.f32.mrf.mxu0
      %v2473 = vadd.f32 0.0, %v2472
      %v2474 = vpop.f32.mrf.mxu0
      %v2475 = vadd.f32 0.0, %v2474
      %2476 = vdwg.mxu0
      %v2499 = vunpack.c.l.b16 %v2265
      %v2500 = vunpack.c.l.b16 %v2266
      %v2501 = vunpack.c.l.b16 %v2267
      %v2502 = vunpack.c.l.b16 %v2268
      %v2503 = vunpack.c.l.b16 %v2269
      %v2504 = vunpack.c.l.b16 %v2270
      %v2505 = vunpack.c.l.b16 %v2271
      %v2506 = vunpack.c.l.b16 %v2272
      %v2507 = vunpack.c.l.b16 %v2273
      %v2508 = vunpack.c.l.b16 %v2274
      %v2509 = vunpack.c.l.b16 %v2275
      %v2510 = vunpack.c.l.b16 %v2276
      %v2511 = vunpack.c.l.b16 %v2277
      %v2512 = vunpack.c.l.b16 %v2278
      %v2513 = vunpack.c.l.b16 %v2279
      %v2514 = vunpack.c.l.b16 %v2280
      %v2515 = vpack.c.b16 %v2500, %v2499
      %v2516 = vpack.c.b16 %v2502, %v2501
      %v2517 = vpack.c.b16 %v2504, %v2503
      %v2518 = vpack.c.b16 %v2506, %v2505
      %v2519 = vpack.c.b16 %v2508, %v2507
      %v2520 = vpack.c.b16 %v2510, %v2509
      %v2521 = vpack.c.b16 %v2512, %v2511
      %v2522 = vpack.c.b16 %v2514, %v2513
      %2531 = vmatpush.bf16.msra.mxu0 %v2522
      %2532 = vmatpush.bf16.msra.mxu0 %v2521
      %2533 = vmatpush.bf16.msra.mxu0 %v2520
      %2534 = vmatpush.bf16.msra.mxu0 %v2519
      %2535 = vmatpush.bf16.msra.mxu0 %v2518
      %2536 = vmatpush.bf16.msra.mxu0 %v2517
      %2537 = vmatpush.bf16.msra.mxu0 %v2516
      %2538 = vmatpush.bf16.msra.mxu0 %v2515
      %2539 = vmatmul.bf16.gmra.mxu0 %v2325
      %v2540 = vpop.f32.mrf.mxu0
      %v2541 = vadd.f32 %v2448, %v2540
      %v2542 = vpop.f32.mrf.mxu0
      %v2543 = vadd.f32 %v2450, %v2542
      %2544 = vmatmul.bf16.gmra.mxu0 %v2326
      %v2545 = vpop.f32.mrf.mxu0
      %v2546 = vadd.f32 %v2453, %v2545
      %v2547 = vpop.f32.mrf.mxu0
      %v2548 = vadd.f32 %v2455, %v2547
      %2549 = vmatmul.bf16.gmra.mxu0 %v2327
      %v2550 = vpop.f32.mrf.mxu0
      %v2551 = vadd.f32 %v2458, %v2550
      %v2552 = vpop.f32.mrf.mxu0
      %v2553 = vadd.f32 %v2460, %v2552
      %2554 = vmatmul.bf16.gmra.mxu0 %v2328
      %v2555 = vpop.f32.mrf.mxu0
      %v2556 = vadd.f32 %v2463, %v2555
      %v2557 = vpop.f32.mrf.mxu0
      %v2558 = vadd.f32 %v2465, %v2557
      %2559 = vmatmul.bf16.gmra.mxu0 %v2329
      %v2560 = vpop.f32.mrf.mxu0
      %v2561 = vadd.f32 %v2468, %v2560
      %v2562 = vpop.f32.mrf.mxu0
      %v2563 = vadd.f32 %v2470, %v2562
      %2564 = vmatmul.bf16.gmra.mxu0 %v2330
      %v2565 = vpop.f32.mrf.mxu0
      %v2566 = vadd.f32 %v2473, %v2565
      %v2567 = vpop.f32.mrf.mxu0
      %v2568 = vadd.f32 %v2475, %v2567
      %2569 = vdwg.mxu0
      %v2570 = vld [vmem:[#allocation3] sm:$0xe]
      %s2571 = scalar_lea.vmem %s2, 128
      %v2572 = vld [vmem:[%s2571] sm:$0xf]
      %v2573 = vld [vmem:[%s2571 + $0x4] sm:$0xf]
      %v2574 = vld [vmem:[%s2571 + $0x8] sm:$0xf]
      %v2575 = vld [vmem:[%s2571 + $0xc] sm:$0xf]
      %v2576 = vld [vmem:[%s2571 + $0x10] sm:$0xf]
      %v2577 = vld [vmem:[%s2571 + $0x14] sm:$0xf]
      %v2578 = vld [vmem:[%s2571 + $0x18] sm:$0xf]
      %v2579 = vld [vmem:[%s2571 + $0x1c] sm:$0xf]
      %v2580 = vld [vmem:[%s2571 + $0x20] sm:$0xf]
      %v2581 = vld [vmem:[%s2571 + $0x24] sm:$0xf]
      %v2582 = vld [vmem:[%s2571 + $0x28] sm:$0xf]
      %v2583 = vld [vmem:[%s2571 + $0x2c] sm:$0xf]
      %v2584 = vld [vmem:[%s2571 + $0x30] sm:$0xf]
      %v2585 = vld [vmem:[%s2571 + $0x34] sm:$0xf]
      %v2586 = vld [vmem:[%s2571 + $0x38] sm:$0xf]
      %v2587 = vld [vmem:[%s2571 + $0x3c] sm:$0xf]
      %v2589 = vunpack.c.l.b16 %v2570
      %v2590 = vpack.c.b16 %v2313, %v2589
      %v2591 = vrot.slane %v2590, 1
      %v2592 = vrot.slane %v2326, 1
      %v2593 = vsel %vm828, %v2591, %v2592
      %v2594 = vrot.slane %v2327, 1
      %v2595 = vsel %vm828, %v2592, %v2594
      %v2596 = vrot.slane %v2328, 1
      %v2597 = vsel %vm828, %v2594, %v2596
      %v2598 = vrot.slane %v2329, 1
      %v2599 = vsel %vm828, %v2596, %v2598
      %v2600 = vrot.slane %v2330, 1
      %v2601 = vsel %vm828, %v2598, %v2600
      %v2602 = vrot.slane %v2331, 1
      %v2603 = vsel %vm828, %v2600, %v2602
      %v2626 = vunpack.c.l.b16 %v2572
      %v2627 = vunpack.c.l.b16 %v2573
      %v2628 = vunpack.c.l.b16 %v2574
      %v2629 = vunpack.c.l.b16 %v2575
      %v2630 = vunpack.c.l.b16 %v2576
      %v2631 = vunpack.c.l.b16 %v2577
      %v2632 = vunpack.c.l.b16 %v2578
      %v2633 = vunpack.c.l.b16 %v2579
      %v2634 = vunpack.c.l.b16 %v2580
      %v2635 = vunpack.c.l.b16 %v2581
      %v2636 = vunpack.c.l.b16 %v2582
      %v2637 = vunpack.c.l.b16 %v2583
      %v2638 = vunpack.c.l.b16 %v2584
      %v2639 = vunpack.c.l.b16 %v2585
      %v2640 = vunpack.c.l.b16 %v2586
      %v2641 = vunpack.c.l.b16 %v2587
      %v2642 = vpack.c.b16 %v2627, %v2626
      %v2643 = vpack.c.b16 %v2629, %v2628
      %v2644 = vpack.c.b16 %v2631, %v2630
      %v2645 = vpack.c.b16 %v2633, %v2632
      %v2646 = vpack.c.b16 %v2635, %v2634
      %v2647 = vpack.c.b16 %v2637, %v2636
      %v2648 = vpack.c.b16 %v2639, %v2638
      %v2649 = vpack.c.b16 %v2641, %v2640
      %2658 = vmatpush.bf16.msra.mxu0 %v2649
      %2659 = vmatpush.bf16.msra.mxu0 %v2648
      %2660 = vmatpush.bf16.msra.mxu0 %v2647
      %2661 = vmatpush.bf16.msra.mxu0 %v2646
      %2662 = vmatpush.bf16.msra.mxu0 %v2645
      %2663 = vmatpush.bf16.msra.mxu0 %v2644
      %2664 = vmatpush.bf16.msra.mxu0 %v2643
      %2665 = vmatpush.bf16.msra.mxu0 %v2642
      %2666 = vmatmul.bf16.gmra.mxu0 %v2593
      %v2667 = vpop.f32.mrf.mxu0
      %v2668 = vadd.f32 0.0, %v2667
      %v2669 = vpop.f32.mrf.mxu0
      %v2670 = vadd.f32 0.0, %v2669
      %2671 = vmatmul.bf16.gmra.mxu0 %v2595
      %v2672 = vpop.f32.mrf.mxu0
      %v2673 = vadd.f32 0.0, %v2672
      %v2674 = vpop.f32.mrf.mxu0
      %v2675 = vadd.f32 0.0, %v2674
      %2676 = vmatmul.bf16.gmra.mxu0 %v2597
      %v2677 = vpop.f32.mrf.mxu0
      %v2678 = vadd.f32 0.0, %v2677
      %v2679 = vpop.f32.mrf.mxu0
      %v2680 = vadd.f32 0.0, %v2679
      %2681 = vmatmul.bf16.gmra.mxu0 %v2599
      %v2682 = vpop.f32.mrf.mxu0
      %v2683 = vadd.f32 0.0, %v2682
      %v2684 = vpop.f32.mrf.mxu0
      %v2685 = vadd.f32 0.0, %v2684
      %2686 = vmatmul.bf16.gmra.mxu0 %v2601
      %v2687 = vpop.f32.mrf.mxu0
      %v2688 = vadd.f32 0.0, %v2687
      %v2689 = vpop.f32.mrf.mxu0
      %v2690 = vadd.f32 0.0, %v2689
      %2691 = vmatmul.bf16.gmra.mxu0 %v2603
      %v2692 = vpop.f32.mrf.mxu0
      %v2693 = vadd.f32 0.0, %v2692
      %v2694 = vpop.f32.mrf.mxu0
      %v2695 = vadd.f32 0.0, %v2694
      %2696 = vdwg.mxu0
      %v2697 = vadd.f32 %v2541, %v2668
      %v2698 = vadd.f32 %v2543, %v2670
      %v2699 = vadd.f32 %v2546, %v2673
      %v2700 = vadd.f32 %v2548, %v2675
      %v2701 = vadd.f32 %v2551, %v2678
      %v2702 = vadd.f32 %v2553, %v2680
      %v2703 = vadd.f32 %v2556, %v2683
      %v2704 = vadd.f32 %v2558, %v2685
      %v2705 = vadd.f32 %v2561, %v2688
      %v2706 = vadd.f32 %v2563, %v2690
      %v2707 = vadd.f32 %v2566, %v2693
      %v2708 = vadd.f32 %v2568, %v2695
      %v2709 = vld [vmem:[#allocation3 + $0x4] sm:$0xe]
      %v2710 = vld [vmem:[#allocation3 + $0x8] sm:$0xf]
      %v2711 = vld [vmem:[#allocation3 + $0xc] sm:$0xf]
      %v2712 = vld [vmem:[#allocation3 + $0x10] sm:$0xf]
      %v2713 = vld [vmem:[#allocation3 + $0x14] sm:$0xf]
      %v2714 = vld [vmem:[#allocation3 + $0x18] sm:$0xf]
      %v2715 = vld [vmem:[#allocation3 + $0x1c] sm:$0xf]
      %v2716 = vld [vmem:[#allocation3 + $0x20] sm:$0xf]
      %v2717 = vld [vmem:[#allocation3 + $0x24] sm:$0xf]
      %v2718 = vld [vmem:[#allocation3 + $0x28] sm:$0xf]
      %v2719 = vld [vmem:[#allocation3 + $0x2c] sm:$0xf]
      %v2720 = vld [vmem:[#allocation3 + $0x30] sm:$0xf]
      %v2721 = vld [vmem:[#allocation3 + $0x34] sm:$0x1]
      %s2722 = scalar_lea.vmem %s2, 192
      %v2723 = vld [vmem:[%s2722] sm:$0xf]
      %v2724 = vld [vmem:[%s2722 + $0x4] sm:$0xf]
      %v2725 = vld [vmem:[%s2722 + $0x8] sm:$0xf]
      %v2726 = vld [vmem:[%s2722 + $0xc] sm:$0xf]
      %v2727 = vld [vmem:[%s2722 + $0x10] sm:$0xf]
      %v2728 = vld [vmem:[%s2722 + $0x14] sm:$0xf]
      %v2729 = vld [vmem:[%s2722 + $0x18] sm:$0xf]
      %v2730 = vld [vmem:[%s2722 + $0x1c] sm:$0xf]
      %v2731 = vld [vmem:[%s2722 + $0x20] sm:$0xf]
      %v2732 = vld [vmem:[%s2722 + $0x24] sm:$0xf]
      %v2733 = vld [vmem:[%s2722 + $0x28] sm:$0xf]
      %v2734 = vld [vmem:[%s2722 + $0x2c] sm:$0xf]
      %v2735 = vld [vmem:[%s2722 + $0x30] sm:$0xf]
      %v2736 = vld [vmem:[%s2722 + $0x34] sm:$0xf]
      %v2737 = vld [vmem:[%s2722 + $0x38] sm:$0xf]
      %v2738 = vld [vmem:[%s2722 + $0x3c] sm:$0xf]
      %v2752 = vunpack.c.l.b16 %v2709
      %v2753 = vunpack.c.l.b16 %v2710
      %v2754 = vunpack.c.l.b16 %v2711
      %v2755 = vunpack.c.l.b16 %v2712
      %v2756 = vunpack.c.l.b16 %v2713
      %v2757 = vunpack.c.l.b16 %v2714
      %v2758 = vunpack.c.l.b16 %v2715
      %v2759 = vunpack.c.l.b16 %v2716
      %v2760 = vunpack.c.l.b16 %v2717
      %v2761 = vunpack.c.l.b16 %v2718
      %v2762 = vunpack.c.l.b16 %v2719
      %v2763 = vunpack.c.l.b16 %v2720
      %v2764 = vunpack.c.l.b16 %v2721
      %v2765 = vpack.c.b16 %v2753, %v2752
      %v2766 = vpack.c.b16 %v2755, %v2754
      %v2767 = vpack.c.b16 %v2757, %v2756
      %v2768 = vpack.c.b16 %v2759, %v2758
      %v2769 = vpack.c.b16 %v2761, %v2760
      %v2770 = vpack.c.b16 %v2763, %v2762
      %v2771 = vpack.c.b16 %v2764, %v2764
      %v2772 = vrot.slane %v2765, 1
      %v2773 = vrot.slane %v2766, 1
      %v2774 = vsel %vm828, %v2772, %v2773
      %v2775 = vrot.slane %v2767, 1
      %v2776 = vsel %vm828, %v2773, %v2775
      %v2777 = vrot.slane %v2768, 1
      %v2778 = vsel %vm828, %v2775, %v2777
      %v2779 = vrot.slane %v2769, 1
      %v2780 = vsel %vm828, %v2777, %v2779
      %v2781 = vrot.slane %v2770, 1
      %v2782 = vsel %vm828, %v2779, %v2781
      %v2783 = vrot.slane %v2771, 1
      %v2784 = vsel %vm828, %v2781, %v2783
      %v2807 = vunpack.c.l.b16 %v2723
      %v2808 = vunpack.c.l.b16 %v2724
      %v2809 = vunpack.c.l.b16 %v2725
      %v2810 = vunpack.c.l.b16 %v2726
      %v2811 = vunpack.c.l.b16 %v2727
      %v2812 = vunpack.c.l.b16 %v2728
      %v2813 = vunpack.c.l.b16 %v2729
      %v2814 = vunpack.c.l.b16 %v2730
      %v2815 = vunpack.c.l.b16 %v2731
      %v2816 = vunpack.c.l.b16 %v2732
      %v2817 = vunpack.c.l.b16 %v2733
      %v2818 = vunpack.c.l.b16 %v2734
      %v2819 = vunpack.c.l.b16 %v2735
      %v2820 = vunpack.c.l.b16 %v2736
      %v2821 = vunpack.c.l.b16 %v2737
      %v2822 = vunpack.c.l.b16 %v2738
      %v2823 = vpack.c.b16 %v2808, %v2807
      %v2824 = vpack.c.b16 %v2810, %v2809
      %v2825 = vpack.c.b16 %v2812, %v2811
      %v2826 = vpack.c.b16 %v2814, %v2813
      %v2827 = vpack.c.b16 %v2816, %v2815
      %v2828 = vpack.c.b16 %v2818, %v2817
      %v2829 = vpack.c.b16 %v2820, %v2819
      %v2830 = vpack.c.b16 %v2822, %v2821
      %2839 = vmatpush.bf16.msra.mxu0 %v2830
      %2840 = vmatpush.bf16.msra.mxu0 %v2829
      %2841 = vmatpush.bf16.msra.mxu0 %v2828
      %2842 = vmatpush.bf16.msra.mxu0 %v2827
      %2843 = vmatpush.bf16.msra.mxu0 %v2826
      %2844 = vmatpush.bf16.msra.mxu0 %v2825
      %2845 = vmatpush.bf16.msra.mxu0 %v2824
      %2846 = vmatpush.bf16.msra.mxu0 %v2823
      %2847 = vmatmul.bf16.gmra.mxu0 %v2774
      %v2848 = vpop.f32.mrf.mxu0
      %v2849 = vadd.f32 0.0, %v2848
      %v2850 = vpop.f32.mrf.mxu0
      %v2851 = vadd.f32 0.0, %v2850
      %2852 = vmatmul.bf16.gmra.mxu0 %v2776
      %v2853 = vpop.f32.mrf.mxu0
      %v2854 = vadd.f32 0.0, %v2853
      %v2855 = vpop.f32.mrf.mxu0
      %v2856 = vadd.f32 0.0, %v2855
      %2857 = vmatmul.bf16.gmra.mxu0 %v2778
      %v2858 = vpop.f32.mrf.mxu0
      %v2859 = vadd.f32 0.0, %v2858
      %v2860 = vpop.f32.mrf.mxu0
      %v2861 = vadd.f32 0.0, %v2860
      %2862 = vmatmul.bf16.gmra.mxu0 %v2780
      %v2863 = vpop.f32.mrf.mxu0
      %v2864 = vadd.f32 0.0, %v2863
      %v2865 = vpop.f32.mrf.mxu0
      %v2866 = vadd.f32 0.0, %v2865
      %2867 = vmatmul.bf16.gmra.mxu0 %v2782
      %v2868 = vpop.f32.mrf.mxu0
      %v2869 = vadd.f32 0.0, %v2868
      %v2870 = vpop.f32.mrf.mxu0
      %v2871 = vadd.f32 0.0, %v2870
      %2872 = vmatmul.bf16.gmra.mxu0 %v2784
      %v2873 = vpop.f32.mrf.mxu0
      %v2874 = vadd.f32 0.0, %v2873
      %v2875 = vpop.f32.mrf.mxu0
      %v2876 = vadd.f32 0.0, %v2875
      %2877 = vdwg.mxu0
      %v2878 = vadd.f32 %v2697, %v2849
      %v2879 = vadd.f32 %v2698, %v2851
      %v2880 = vadd.f32 %v2699, %v2854
      %v2881 = vadd.f32 %v2700, %v2856
      %v2882 = vadd.f32 %v2701, %v2859
      %v2883 = vadd.f32 %v2702, %v2861
      %v2884 = vadd.f32 %v2703, %v2864
      %v2885 = vadd.f32 %v2704, %v2866
      %v2886 = vadd.f32 %v2705, %v2869
      %v2887 = vadd.f32 %v2706, %v2871
      %v2888 = vadd.f32 %v2707, %v2874
      %v2889 = vadd.f32 %v2708, %v2876
      %v2890 = vld [vmem:[#allocation3 + $0x34] sm:$0x3]
      %s2891 = scalar_lea.vmem %s2, 256
      %v2892 = vld [vmem:[%s2891] sm:$0xf]
      %v2893 = vld [vmem:[%s2891 + $0x4] sm:$0xf]
      %v2894 = vld [vmem:[%s2891 + $0x8] sm:$0xf]
      %v2895 = vld [vmem:[%s2891 + $0xc] sm:$0xf]
      %v2896 = vld [vmem:[%s2891 + $0x10] sm:$0xf]
      %v2897 = vld [vmem:[%s2891 + $0x14] sm:$0xf]
      %v2898 = vld [vmem:[%s2891 + $0x18] sm:$0xf]
      %v2899 = vld [vmem:[%s2891 + $0x1c] sm:$0xf]
      %v2900 = vld [vmem:[%s2891 + $0x20] sm:$0xf]
      %v2901 = vld [vmem:[%s2891 + $0x24] sm:$0xf]
      %v2902 = vld [vmem:[%s2891 + $0x28] sm:$0xf]
      %v2903 = vld [vmem:[%s2891 + $0x2c] sm:$0xf]
      %v2904 = vld [vmem:[%s2891 + $0x30] sm:$0xf]
      %v2905 = vld [vmem:[%s2891 + $0x34] sm:$0xf]
      %v2906 = vld [vmem:[%s2891 + $0x38] sm:$0xf]
      %v2907 = vld [vmem:[%s2891 + $0x3c] sm:$0xf]
      %v2909 = vunpack.c.l.b16 %v2890
      %v2910 = vpack.c.b16 %v2909, %v2909
      %v2912 = vshrl.u32 %v2765, 16
      %v2914 = vrot.slane %v2912, 1
      %v2915 = vshll.u32 %v2765, 16
      %v2917 = vrot.slane %v2915, 2
      %v2918 = vor.u32 %v2914, %v2917
      %v2920 = vshrl.u32 %v2766, 16
      %v2922 = vrot.slane %v2920, 1
      %v2923 = vshll.u32 %v2766, 16
      %v2925 = vrot.slane %v2923, 2
      %v2926 = vor.u32 %v2922, %v2925
      %v2927 = vsel %vm1149, %v2918, %v2926
      %v2929 = vshrl.u32 %v2767, 16
      %v2931 = vrot.slane %v2929, 1
      %v2932 = vshll.u32 %v2767, 16
      %v2934 = vrot.slane %v2932, 2
      %v2935 = vor.u32 %v2931, %v2934
      %v2936 = vsel %vm1149, %v2926, %v2935
      %v2938 = vshrl.u32 %v2768, 16
      %v2940 = vrot.slane %v2938, 1
      %v2941 = vshll.u32 %v2768, 16
      %v2943 = vrot.slane %v2941, 2
      %v2944 = vor.u32 %v2940, %v2943
      %v2945 = vsel %vm1149, %v2935, %v2944
      %v2947 = vshrl.u32 %v2769, 16
      %v2949 = vrot.slane %v2947, 1
      %v2950 = vshll.u32 %v2769, 16
      %v2952 = vrot.slane %v2950, 2
      %v2953 = vor.u32 %v2949, %v2952
      %v2954 = vsel %vm1149, %v2944, %v2953
      %v2956 = vshrl.u32 %v2770, 16
      %v2958 = vrot.slane %v2956, 1
      %v2959 = vshll.u32 %v2770, 16
      %v2961 = vrot.slane %v2959, 2
      %v2962 = vor.u32 %v2958, %v2961
      %v2963 = vsel %vm1149, %v2953, %v2962
      %v2965 = vshrl.u32 %v2910, 16
      %v2967 = vrot.slane %v2965, 1
      %v2968 = vshll.u32 %v2910, 16
      %v2970 = vrot.slane %v2968, 2
      %v2971 = vor.u32 %v2967, %v2970
      %v2972 = vsel %vm1149, %v2962, %v2971
      %v2995 = vunpack.c.l.b16 %v2892
      %v2996 = vunpack.c.l.b16 %v2893
      %v2997 = vunpack.c.l.b16 %v2894
      %v2998 = vunpack.c.l.b16 %v2895
      %v2999 = vunpack.c.l.b16 %v2896
      %v3000 = vunpack.c.l.b16 %v2897
      %v3001 = vunpack.c.l.b16 %v2898
      %v3002 = vunpack.c.l.b16 %v2899
      %v3003 = vunpack.c.l.b16 %v2900
      %v3004 = vunpack.c.l.b16 %v2901
      %v3005 = vunpack.c.l.b16 %v2902
      %v3006 = vunpack.c.l.b16 %v2903
      %v3007 = vunpack.c.l.b16 %v2904
      %v3008 = vunpack.c.l.b16 %v2905
      %v3009 = vunpack.c.l.b16 %v2906
      %v3010 = vunpack.c.l.b16 %v2907
      %v3011 = vpack.c.b16 %v2996, %v2995
      %v3012 = vpack.c.b16 %v2998, %v2997
      %v3013 = vpack.c.b16 %v3000, %v2999
      %v3014 = vpack.c.b16 %v3002, %v3001
      %v3015 = vpack.c.b16 %v3004, %v3003
      %v3016 = vpack.c.b16 %v3006, %v3005
      %v3017 = vpack.c.b16 %v3008, %v3007
      %v3018 = vpack.c.b16 %v3010, %v3009
      %3027 = vmatpush.bf16.msra.mxu0 %v3018
      %3028 = vmatpush.bf16.msra.mxu0 %v3017
      %3029 = vmatpush.bf16.msra.mxu0 %v3016
      %3030 = vmatpush.bf16.msra.mxu0 %v3015
      %3031 = vmatpush.bf16.msra.mxu0 %v3014
      %3032 = vmatpush.bf16.msra.mxu0 %v3013
      %3033 = vmatpush.bf16.msra.mxu0 %v3012
      %3034 = vmatpush.bf16.msra.mxu0 %v3011
      %3035 = vmatmul.bf16.gmra.mxu0 %v2927
      %v3036 = vpop.f32.mrf.mxu0
      %v3037 = vadd.f32 0.0, %v3036
      %v3038 = vpop.f32.mrf.mxu0
      %v3039 = vadd.f32 0.0, %v3038
      %3040 = vmatmul.bf16.gmra.mxu0 %v2936
      %v3041 = vpop.f32.mrf.mxu0
      %v3042 = vadd.f32 0.0, %v3041
      %v3043 = vpop.f32.mrf.mxu0
      %v3044 = vadd.f32 0.0, %v3043
      %3045 = vmatmul.bf16.gmra.mxu0 %v2945
      %v3046 = vpop.f32.mrf.mxu0
      %v3047 = vadd.f32 0.0, %v3046
      %v3048 = vpop.f32.mrf.mxu0
      %v3049 = vadd.f32 0.0, %v3048
      %3050 = vmatmul.bf16.gmra.mxu0 %v2954
      %v3051 = vpop.f32.mrf.mxu0
      %v3052 = vadd.f32 0.0, %v3051
      %v3053 = vpop.f32.mrf.mxu0
      %v3054 = vadd.f32 0.0, %v3053
      %3055 = vmatmul.bf16.gmra.mxu0 %v2963
      %v3056 = vpop.f32.mrf.mxu0
      %v3057 = vadd.f32 0.0, %v3056
      %v3058 = vpop.f32.mrf.mxu0
      %v3059 = vadd.f32 0.0, %v3058
      %3060 = vmatmul.bf16.gmra.mxu0 %v2972
      %v3061 = vpop.f32.mrf.mxu0
      %v3062 = vadd.f32 0.0, %v3061
      %v3063 = vpop.f32.mrf.mxu0
      %v3064 = vadd.f32 0.0, %v3063
      %3065 = vdwg.mxu0
      %v3066 = vadd.f32 %v2878, %v3037
      %v3067 = vadd.f32 %v2879, %v3039
      %v3068 = vadd.f32 %v2880, %v3042
      %v3069 = vadd.f32 %v2881, %v3044
      %v3070 = vadd.f32 %v2882, %v3047
      %v3071 = vadd.f32 %v2883, %v3049
      %v3072 = vadd.f32 %v2884, %v3052
      %v3073 = vadd.f32 %v2885, %v3054
      %v3074 = vadd.f32 %v2886, %v3057
      %v3075 = vadd.f32 %v2887, %v3059
      %v3076 = vadd.f32 %v2888, %v3062
      %v3077 = vadd.f32 %v2889, %v3064
      %v3078 = vld [vmem:[#allocation3 + $0x4] sm:$0xc]
      %s3079 = scalar_lea.vmem %s2, 320
      %v3080 = vld [vmem:[%s3079] sm:$0xf]
      %v3081 = vld [vmem:[%s3079 + $0x4] sm:$0xf]
      %v3082 = vld [vmem:[%s3079 + $0x8] sm:$0xf]
      %v3083 = vld [vmem:[%s3079 + $0xc] sm:$0xf]
      %v3084 = vld [vmem:[%s3079 + $0x10] sm:$0xf]
      %v3085 = vld [vmem:[%s3079 + $0x14] sm:$0xf]
      %v3086 = vld [vmem:[%s3079 + $0x18] sm:$0xf]
      %v3087 = vld [vmem:[%s3079 + $0x1c] sm:$0xf]
      %v3088 = vld [vmem:[%s3079 + $0x20] sm:$0xf]
      %v3089 = vld [vmem:[%s3079 + $0x24] sm:$0xf]
      %v3090 = vld [vmem:[%s3079 + $0x28] sm:$0xf]
      %v3091 = vld [vmem:[%s3079 + $0x2c] sm:$0xf]
      %v3092 = vld [vmem:[%s3079 + $0x30] sm:$0xf]
      %v3093 = vld [vmem:[%s3079 + $0x34] sm:$0xf]
      %v3094 = vld [vmem:[%s3079 + $0x38] sm:$0xf]
      %v3095 = vld [vmem:[%s3079 + $0x3c] sm:$0xf]
      %v3097 = vunpack.c.l.b16 %v3078
      %v3098 = vpack.c.b16 %v2753, %v3097
      %v3099 = vrot.slane %v3098, 2
      %v3100 = vrot.slane %v2766, 2
      %v3101 = vsel %vm1338, %v3099, %v3100
      %v3102 = vrot.slane %v2767, 2
      %v3103 = vsel %vm1338, %v3100, %v3102
      %v3104 = vrot.slane %v2768, 2
      %v3105 = vsel %vm1338, %v3102, %v3104
      %v3106 = vrot.slane %v2769, 2
      %v3107 = vsel %vm1338, %v3104, %v3106
      %v3108 = vrot.slane %v2770, 2
      %v3109 = vsel %vm1338, %v3106, %v3108
      %v3110 = vrot.slane %v2910, 2
      %v3111 = vsel %vm1338, %v3108, %v3110
      %v3134 = vunpack.c.l.b16 %v3080
      %v3135 = vunpack.c.l.b16 %v3081
      %v3136 = vunpack.c.l.b16 %v3082
      %v3137 = vunpack.c.l.b16 %v3083
      %v3138 = vunpack.c.l.b16 %v3084
      %v3139 = vunpack.c.l.b16 %v3085
      %v3140 = vunpack.c.l.b16 %v3086
      %v3141 = vunpack.c.l.b16 %v3087
      %v3142 = vunpack.c.l.b16 %v3088
      %v3143 = vunpack.c.l.b16 %v3089
      %v3144 = vunpack.c.l.b16 %v3090
      %v3145 = vunpack.c.l.b16 %v3091
      %v3146 = vunpack.c.l.b16 %v3092
      %v3147 = vunpack.c.l.b16 %v3093
      %v3148 = vunpack.c.l.b16 %v3094
      %v3149 = vunpack.c.l.b16 %v3095
      %v3150 = vpack.c.b16 %v3135, %v3134
      %v3151 = vpack.c.b16 %v3137, %v3136
      %v3152 = vpack.c.b16 %v3139, %v3138
      %v3153 = vpack.c.b16 %v3141, %v3140
      %v3154 = vpack.c.b16 %v3143, %v3142
      %v3155 = vpack.c.b16 %v3145, %v3144
      %v3156 = vpack.c.b16 %v3147, %v3146
      %v3157 = vpack.c.b16 %v3149, %v3148
      %3166 = vmatpush.bf16.msra.mxu0 %v3157
      %3167 = vmatpush.bf16.msra.mxu0 %v3156
      %3168 = vmatpush.bf16.msra.mxu0 %v3155
      %3169 = vmatpush.bf16.msra.mxu0 %v3154
      %3170 = vmatpush.bf16.msra.mxu0 %v3153
      %3171 = vmatpush.bf16.msra.mxu0 %v3152
      %3172 = vmatpush.bf16.msra.mxu0 %v3151
      %3173 = vmatpush.bf16.msra.mxu0 %v3150
      %3174 = vmatmul.bf16.gmra.mxu0 %v3101
      %v3175 = vpop.f32.mrf.mxu0
      %v3176 = vadd.f32 0.0, %v3175
      %v3177 = vpop.f32.mrf.mxu0
      %v3178 = vadd.f32 0.0, %v3177
      %3179 = vmatmul.bf16.gmra.mxu0 %v3103
      %v3180 = vpop.f32.mrf.mxu0
      %v3181 = vadd.f32 0.0, %v3180
      %v3182 = vpop.f32.mrf.mxu0
      %v3183 = vadd.f32 0.0, %v3182
      %3184 = vmatmul.bf16.gmra.mxu0 %v3105
      %v3185 = vpop.f32.mrf.mxu0
      %v3186 = vadd.f32 0.0, %v3185
      %v3187 = vpop.f32.mrf.mxu0
      %v3188 = vadd.f32 0.0, %v3187
      %3189 = vmatmul.bf16.gmra.mxu0 %v3107
      %v3190 = vpop.f32.mrf.mxu0
      %v3191 = vadd.f32 0.0, %v3190
      %v3192 = vpop.f32.mrf.mxu0
      %v3193 = vadd.f32 0.0, %v3192
      %3194 = vmatmul.bf16.gmra.mxu0 %v3109
      %v3195 = vpop.f32.mrf.mxu0
      %v3196 = vadd.f32 0.0, %v3195
      %v3197 = vpop.f32.mrf.mxu0
      %v3198 = vadd.f32 0.0, %v3197
      %3199 = vmatmul.bf16.gmra.mxu0 %v3111
      %v3200 = vpop.f32.mrf.mxu0
      %v3201 = vadd.f32 0.0, %v3200
      %v3202 = vpop.f32.mrf.mxu0
      %v3203 = vadd.f32 0.0, %v3202
      %3204 = vdwg.mxu0
      %v3205 = vadd.f32 %v3066, %v3176
      %v3206 = vadd.f32 %v3067, %v3178
      %v3207 = vadd.f32 %v3068, %v3181
      %v3208 = vadd.f32 %v3069, %v3183
      %v3209 = vadd.f32 %v3070, %v3186
      %v3210 = vadd.f32 %v3071, %v3188
      %v3211 = vadd.f32 %v3072, %v3191
      %v3212 = vadd.f32 %v3073, %v3193
      %v3213 = vadd.f32 %v3074, %v3196
      %v3214 = vadd.f32 %v3075, %v3198
      %v3215 = vadd.f32 %v3076, %v3201
      %v3216 = vadd.f32 %v3077, %v3203
      %v3217 = vld [vmem:[#allocation3 + $0x8] sm:$0xc]
      %v3218 = vld [vmem:[#allocation3 + $0xc] sm:$0xf]
      %v3219 = vld [vmem:[#allocation3 + $0x10] sm:$0xf]
      %v3220 = vld [vmem:[#allocation3 + $0x14] sm:$0xf]
      %v3221 = vld [vmem:[#allocation3 + $0x18] sm:$0xf]
      %v3222 = vld [vmem:[#allocation3 + $0x1c] sm:$0xf]
      %v3223 = vld [vmem:[#allocation3 + $0x20] sm:$0xf]
      %v3224 = vld [vmem:[#allocation3 + $0x24] sm:$0xf]
      %v3225 = vld [vmem:[#allocation3 + $0x28] sm:$0xf]
      %v3226 = vld [vmem:[#allocation3 + $0x2c] sm:$0xf]
      %v3227 = vld [vmem:[#allocation3 + $0x30] sm:$0xf]
      %v3228 = vld [vmem:[#allocation3 + $0x34] sm:$0xf]
      %v3229 = vld [vmem:[#allocation3 + $0x38] sm:$0x3]
      %s3230 = scalar_lea.vmem %s2, 384
      %v3231 = vld [vmem:[%s3230] sm:$0xf]
      %v3232 = vld [vmem:[%s3230 + $0x4] sm:$0xf]
      %v3233 = vld [vmem:[%s3230 + $0x8] sm:$0xf]
      %v3234 = vld [vmem:[%s3230 + $0xc] sm:$0xf]
      %v3235 = vld [vmem:[%s3230 + $0x10] sm:$0xf]
      %v3236 = vld [vmem:[%s3230 + $0x14] sm:$0xf]
      %v3237 = vld [vmem:[%s3230 + $0x18] sm:$0xf]
      %v3238 = vld [vmem:[%s3230 + $0x1c] sm:$0xf]
      %v3239 = vld [vmem:[%s3230 + $0x20] sm:$0xf]
      %v3240 = vld [vmem:[%s3230 + $0x24] sm:$0xf]
      %v3241 = vld [vmem:[%s3230 + $0x28] sm:$0xf]
      %v3242 = vld [vmem:[%s3230 + $0x2c] sm:$0xf]
      %v3243 = vld [vmem:[%s3230 + $0x30] sm:$0xf]
      %v3244 = vld [vmem:[%s3230 + $0x34] sm:$0xf]
      %v3245 = vld [vmem:[%s3230 + $0x38] sm:$0xf]
      %v3246 = vld [vmem:[%s3230 + $0x3c] sm:$0xf]
      %v3260 = vunpack.c.l.b16 %v3217
      %v3261 = vunpack.c.l.b16 %v3218
      %v3262 = vunpack.c.l.b16 %v3219
      %v3263 = vunpack.c.l.b16 %v3220
      %v3264 = vunpack.c.l.b16 %v3221
      %v3265 = vunpack.c.l.b16 %v3222
      %v3266 = vunpack.c.l.b16 %v3223
      %v3267 = vunpack.c.l.b16 %v3224
      %v3268 = vunpack.c.l.b16 %v3225
      %v3269 = vunpack.c.l.b16 %v3226
      %v3270 = vunpack.c.l.b16 %v3227
      %v3271 = vunpack.c.l.b16 %v3228
      %v3272 = vunpack.c.l.b16 %v3229
      %v3273 = vpack.c.b16 %v3261, %v3260
      %v3274 = vpack.c.b16 %v3263, %v3262
      %v3275 = vpack.c.b16 %v3265, %v3264
      %v3276 = vpack.c.b16 %v3267, %v3266
      %v3277 = vpack.c.b16 %v3269, %v3268
      %v3278 = vpack.c.b16 %v3271, %v3270
      %v3279 = vpack.c.b16 %v3272, %v3272
      %v3280 = vrot.slane %v3273, 2
      %v3281 = vrot.slane %v3274, 2
      %v3282 = vsel %vm1338, %v3280, %v3281
      %v3283 = vrot.slane %v3275, 2
      %v3284 = vsel %vm1338, %v3281, %v3283
      %v3285 = vrot.slane %v3276, 2
      %v3286 = vsel %vm1338, %v3283, %v3285
      %v3287 = vrot.slane %v3277, 2
      %v3288 = vsel %vm1338, %v3285, %v3287
      %v3289 = vrot.slane %v3278, 2
      %v3290 = vsel %vm1338, %v3287, %v3289
      %v3291 = vrot.slane %v3279, 2
      %v3292 = vsel %vm1338, %v3289, %v3291
      %v3315 = vunpack.c.l.b16 %v3231
      %v3316 = vunpack.c.l.b16 %v3232
      %v3317 = vunpack.c.l.b16 %v3233
      %v3318 = vunpack.c.l.b16 %v3234
      %v3319 = vunpack.c.l.b16 %v3235
      %v3320 = vunpack.c.l.b16 %v3236
      %v3321 = vunpack.c.l.b16 %v3237
      %v3322 = vunpack.c.l.b16 %v3238
      %v3323 = vunpack.c.l.b16 %v3239
      %v3324 = vunpack.c.l.b16 %v3240
      %v3325 = vunpack.c.l.b16 %v3241
      %v3326 = vunpack.c.l.b16 %v3242
      %v3327 = vunpack.c.l.b16 %v3243
      %v3328 = vunpack.c.l.b16 %v3244
      %v3329 = vunpack.c.l.b16 %v3245
      %v3330 = vunpack.c.l.b16 %v3246
      %v3331 = vpack.c.b16 %v3316, %v3315
      %v3332 = vpack.c.b16 %v3318, %v3317
      %v3333 = vpack.c.b16 %v3320, %v3319
      %v3334 = vpack.c.b16 %v3322, %v3321
      %v3335 = vpack.c.b16 %v3324, %v3323
      %v3336 = vpack.c.b16 %v3326, %v3325
      %v3337 = vpack.c.b16 %v3328, %v3327
      %v3338 = vpack.c.b16 %v3330, %v3329
      %3347 = vmatpush.bf16.msra.mxu0 %v3338
      %3348 = vmatpush.bf16.msra.mxu0 %v3337
      %3349 = vmatpush.bf16.msra.mxu0 %v3336
      %3350 = vmatpush.bf16.msra.mxu0 %v3335
      %3351 = vmatpush.bf16.msra.mxu0 %v3334
      %3352 = vmatpush.bf16.msra.mxu0 %v3333
      %3353 = vmatpush.bf16.msra.mxu0 %v3332
      %3354 = vmatpush.bf16.msra.mxu0 %v3331
      %3355 = vmatmul.bf16.gmra.mxu0 %v3282
      %v3356 = vpop.f32.mrf.mxu0
      %v3357 = vadd.f32 0.0, %v3356
      %v3358 = vpop.f32.mrf.mxu0
      %v3359 = vadd.f32 0.0, %v3358
      %3360 = vmatmul.bf16.gmra.mxu0 %v3284
      %v3361 = vpop.f32.mrf.mxu0
      %v3362 = vadd.f32 0.0, %v3361
      %v3363 = vpop.f32.mrf.mxu0
      %v3364 = vadd.f32 0.0, %v3363
      %3365 = vmatmul.bf16.gmra.mxu0 %v3286
      %v3366 = vpop.f32.mrf.mxu0
      %v3367 = vadd.f32 0.0, %v3366
      %v3368 = vpop.f32.mrf.mxu0
      %v3369 = vadd.f32 0.0, %v3368
      %3370 = vmatmul.bf16.gmra.mxu0 %v3288
      %v3371 = vpop.f32.mrf.mxu0
      %v3372 = vadd.f32 0.0, %v3371
      %v3373 = vpop.f32.mrf.mxu0
      %v3374 = vadd.f32 0.0, %v3373
      %3375 = vmatmul.bf16.gmra.mxu0 %v3290
      %v3376 = vpop.f32.mrf.mxu0
      %v3377 = vadd.f32 0.0, %v3376
      %v3378 = vpop.f32.mrf.mxu0
      %v3379 = vadd.f32 0.0, %v3378
      %3380 = vmatmul.bf16.gmra.mxu0 %v3292
      %v3381 = vpop.f32.mrf.mxu0
      %v3382 = vadd.f32 0.0, %v3381
      %v3383 = vpop.f32.mrf.mxu0
      %v3384 = vadd.f32 0.0, %v3383
      %3385 = vdwg.mxu0
      %v3386 = vadd.f32 %v3205, %v3357
      %v3387 = vadd.f32 %v3206, %v3359
      %v3388 = vadd.f32 %v3207, %v3362
      %v3389 = vadd.f32 %v3208, %v3364
      %v3390 = vadd.f32 %v3209, %v3367
      %v3391 = vadd.f32 %v3210, %v3369
      %v3392 = vadd.f32 %v3211, %v3372
      %v3393 = vadd.f32 %v3212, %v3374
      %v3394 = vadd.f32 %v3213, %v3377
      %v3395 = vadd.f32 %v3214, %v3379
      %v3396 = vadd.f32 %v3215, %v3382
      %v3397 = vadd.f32 %v3216, %v3384
      %v3398 = vld [vmem:[#allocation3 + $0x38] sm:$0x7]
      %s3399 = scalar_lea.vmem %s2, 448
      %v3400 = vld [vmem:[%s3399] sm:$0xf]
      %v3401 = vld [vmem:[%s3399 + $0x4] sm:$0xf]
      %v3402 = vld [vmem:[%s3399 + $0x8] sm:$0xf]
      %v3403 = vld [vmem:[%s3399 + $0xc] sm:$0xf]
      %v3404 = vld [vmem:[%s3399 + $0x10] sm:$0xf]
      %v3405 = vld [vmem:[%s3399 + $0x14] sm:$0xf]
      %v3406 = vld [vmem:[%s3399 + $0x18] sm:$0xf]
      %v3407 = vld [vmem:[%s3399 + $0x1c] sm:$0xf]
      %v3408 = vld [vmem:[%s3399 + $0x20] sm:$0xf]
      %v3409 = vld [vmem:[%s3399 + $0x24] sm:$0xf]
      %v3410 = vld [vmem:[%s3399 + $0x28] sm:$0xf]
      %v3411 = vld [vmem:[%s3399 + $0x2c] sm:$0xf]
      %v3412 = vld [vmem:[%s3399 + $0x30] sm:$0xf]
      %v3413 = vld [vmem:[%s3399 + $0x34] sm:$0xf]
      %v3414 = vld [vmem:[%s3399 + $0x38] sm:$0xf]
      %v3415 = vld [vmem:[%s3399 + $0x3c] sm:$0xf]
      %v3417 = vunpack.c.l.b16 %v3398
      %v3418 = vpack.c.b16 %v3417, %v3417
      %v3420 = vshrl.u32 %v3273, 16
      %v3422 = vrot.slane %v3420, 2
      %v3423 = vshll.u32 %v3273, 16
      %v3425 = vrot.slane %v3423, 3
      %v3426 = vor.u32 %v3422, %v3425
      %v3428 = vshrl.u32 %v3274, 16
      %v3430 = vrot.slane %v3428, 2
      %v3431 = vshll.u32 %v3274, 16
      %v3433 = vrot.slane %v3431, 3
      %v3434 = vor.u32 %v3430, %v3433
      %v3435 = vsel %vm1659, %v3426, %v3434
      %v3437 = vshrl.u32 %v3275, 16
      %v3439 = vrot.slane %v3437, 2
      %v3440 = vshll.u32 %v3275, 16
      %v3442 = vrot.slane %v3440, 3
      %v3443 = vor.u32 %v3439, %v3442
      %v3444 = vsel %vm1659, %v3434, %v3443
      %v3446 = vshrl.u32 %v3276, 16
      %v3448 = vrot.slane %v3446, 2
      %v3449 = vshll.u32 %v3276, 16
      %v3451 = vrot.slane %v3449, 3
      %v3452 = vor.u32 %v3448, %v3451
      %v3453 = vsel %vm1659, %v3443, %v3452
      %v3455 = vshrl.u32 %v3277, 16
      %v3457 = vrot.slane %v3455, 2
      %v3458 = vshll.u32 %v3277, 16
      %v3460 = vrot.slane %v3458, 3
      %v3461 = vor.u32 %v3457, %v3460
      %v3462 = vsel %vm1659, %v3452, %v3461
      %v3464 = vshrl.u32 %v3278, 16
      %v3466 = vrot.slane %v3464, 2
      %v3467 = vshll.u32 %v3278, 16
      %v3469 = vrot.slane %v3467, 3
      %v3470 = vor.u32 %v3466, %v3469
      %v3471 = vsel %vm1659, %v3461, %v3470
      %v3473 = vshrl.u32 %v3418, 16
      %v3475 = vrot.slane %v3473, 2
      %v3476 = vshll.u32 %v3418, 16
      %v3478 = vrot.slane %v3476, 3
      %v3479 = vor.u32 %v3475, %v3478
      %v3480 = vsel %vm1659, %v3470, %v3479
      %v3503 = vunpack.c.l.b16 %v3400
      %v3504 = vunpack.c.l.b16 %v3401
      %v3505 = vunpack.c.l.b16 %v3402
      %v3506 = vunpack.c.l.b16 %v3403
      %v3507 = vunpack.c.l.b16 %v3404
      %v3508 = vunpack.c.l.b16 %v3405
      %v3509 = vunpack.c.l.b16 %v3406
      %v3510 = vunpack.c.l.b16 %v3407
      %v3511 = vunpack.c.l.b16 %v3408
      %v3512 = vunpack.c.l.b16 %v3409
      %v3513 = vunpack.c.l.b16 %v3410
      %v3514 = vunpack.c.l.b16 %v3411
      %v3515 = vunpack.c.l.b16 %v3412
      %v3516 = vunpack.c.l.b16 %v3413
      %v3517 = vunpack.c.l.b16 %v3414
      %v3518 = vunpack.c.l.b16 %v3415
      %v3519 = vpack.c.b16 %v3504, %v3503
      %v3520 = vpack.c.b16 %v3506, %v3505
      %v3521 = vpack.c.b16 %v3508, %v3507
      %v3522 = vpack.c.b16 %v3510, %v3509
      %v3523 = vpack.c.b16 %v3512, %v3511
      %v3524 = vpack.c.b16 %v3514, %v3513
      %v3525 = vpack.c.b16 %v3516, %v3515
      %v3526 = vpack.c.b16 %v3518, %v3517
      %3535 = vmatpush.bf16.msra.mxu0 %v3526
      %3536 = vmatpush.bf16.msra.mxu0 %v3525
      %3537 = vmatpush.bf16.msra.mxu0 %v3524
      %3538 = vmatpush.bf16.msra.mxu0 %v3523
      %3539 = vmatpush.bf16.msra.mxu0 %v3522
      %3540 = vmatpush.bf16.msra.mxu0 %v3521
      %3541 = vmatpush.bf16.msra.mxu0 %v3520
      %3542 = vmatpush.bf16.msra.mxu0 %v3519
      %3543 = vmatmul.bf16.gmra.mxu0 %v3435
      %v3544 = vpop.f32.mrf.mxu0
      %v3545 = vadd.f32 0.0, %v3544
      %v3546 = vpop.f32.mrf.mxu0
      %v3547 = vadd.f32 0.0, %v3546
      %3548 = vmatmul.bf16.gmra.mxu0 %v3444
      %v3549 = vpop.f32.mrf.mxu0
      %v3550 = vadd.f32 0.0, %v3549
      %v3551 = vpop.f32.mrf.mxu0
      %v3552 = vadd.f32 0.0, %v3551
      %3553 = vmatmul.bf16.gmra.mxu0 %v3453
      %v3554 = vpop.f32.mrf.mxu0
      %v3555 = vadd.f32 0.0, %v3554
      %v3556 = vpop.f32.mrf.mxu0
      %v3557 = vadd.f32 0.0, %v3556
      %3558 = vmatmul.bf16.gmra.mxu0 %v3462
      %v3559 = vpop.f32.mrf.mxu0
      %v3560 = vadd.f32 0.0, %v3559
      %v3561 = vpop.f32.mrf.mxu0
      %v3562 = vadd.f32 0.0, %v3561
      %3563 = vmatmul.bf16.gmra.mxu0 %v3471
      %v3564 = vpop.f32.mrf.mxu0
      %v3565 = vadd.f32 0.0, %v3564
      %v3566 = vpop.f32.mrf.mxu0
      %v3567 = vadd.f32 0.0, %v3566
      %3568 = vmatmul.bf16.gmra.mxu0 %v3480
      %v3569 = vpop.f32.mrf.mxu0
      %v3570 = vadd.f32 0.0, %v3569
      %v3571 = vpop.f32.mrf.mxu0
      %v3572 = vadd.f32 0.0, %v3571
      %3573 = vdwg.mxu0
      %v3574 = vadd.f32 %v3386, %v3545
      %v3575 = vadd.f32 %v3387, %v3547
      %v3576 = vadd.f32 %v3388, %v3550
      %v3577 = vadd.f32 %v3389, %v3552
      %v3578 = vadd.f32 %v3390, %v3555
      %v3579 = vadd.f32 %v3391, %v3557
      %v3580 = vadd.f32 %v3392, %v3560
      %v3581 = vadd.f32 %v3393, %v3562
      %v3582 = vadd.f32 %v3394, %v3565
      %v3583 = vadd.f32 %v3395, %v3567
      %v3584 = vadd.f32 %v3396, %v3570
      %v3585 = vadd.f32 %v3397, %v3572
      %v3586 = vld [vmem:[#allocation3 + $0x8] sm:$0x8]
      %s3587 = scalar_lea.vmem %s2, 512
      %v3588 = vld [vmem:[%s3587] sm:$0xf]
      %v3589 = vld [vmem:[%s3587 + $0x4] sm:$0xf]
      %v3590 = vld [vmem:[%s3587 + $0x8] sm:$0xf]
      %v3591 = vld [vmem:[%s3587 + $0xc] sm:$0xf]
      %v3592 = vld [vmem:[%s3587 + $0x10] sm:$0xf]
      %v3593 = vld [vmem:[%s3587 + $0x14] sm:$0xf]
      %v3594 = vld [vmem:[%s3587 + $0x18] sm:$0xf]
      %v3595 = vld [vmem:[%s3587 + $0x1c] sm:$0xf]
      %v3596 = vld [vmem:[%s3587 + $0x20] sm:$0xf]
      %v3597 = vld [vmem:[%s3587 + $0x24] sm:$0xf]
      %v3598 = vld [vmem:[%s3587 + $0x28] sm:$0xf]
      %v3599 = vld [vmem:[%s3587 + $0x2c] sm:$0xf]
      %v3600 = vld [vmem:[%s3587 + $0x30] sm:$0xf]
      %v3601 = vld [vmem:[%s3587 + $0x34] sm:$0xf]
      %v3602 = vld [vmem:[%s3587 + $0x38] sm:$0xf]
      %v3603 = vld [vmem:[%s3587 + $0x3c] sm:$0xf]
      %v3605 = vunpack.c.l.b16 %v3586
      %v3606 = vpack.c.b16 %v3261, %v3605
      %v3607 = vrot.slane %v3606, 3
      %v3608 = vrot.slane %v3274, 3
      %v3609 = vsel %vm1848, %v3607, %v3608
      %v3610 = vrot.slane %v3275, 3
      %v3611 = vsel %vm1848, %v3608, %v3610
      %v3612 = vrot.slane %v3276, 3
      %v3613 = vsel %vm1848, %v3610, %v3612
      %v3614 = vrot.slane %v3277, 3
      %v3615 = vsel %vm1848, %v3612, %v3614
      %v3616 = vrot.slane %v3278, 3
      %v3617 = vsel %vm1848, %v3614, %v3616
      %v3618 = vrot.slane %v3418, 3
      %v3619 = vsel %vm1848, %v3616, %v3618
      %v3642 = vunpack.c.l.b16 %v3588
      %v3643 = vunpack.c.l.b16 %v3589
      %v3644 = vunpack.c.l.b16 %v3590
      %v3645 = vunpack.c.l.b16 %v3591
      %v3646 = vunpack.c.l.b16 %v3592
      %v3647 = vunpack.c.l.b16 %v3593
      %v3648 = vunpack.c.l.b16 %v3594
      %v3649 = vunpack.c.l.b16 %v3595
      %v3650 = vunpack.c.l.b16 %v3596
      %v3651 = vunpack.c.l.b16 %v3597
      %v3652 = vunpack.c.l.b16 %v3598
      %v3653 = vunpack.c.l.b16 %v3599
      %v3654 = vunpack.c.l.b16 %v3600
      %v3655 = vunpack.c.l.b16 %v3601
      %v3656 = vunpack.c.l.b16 %v3602
      %v3657 = vunpack.c.l.b16 %v3603
      %v3658 = vpack.c.b16 %v3643, %v3642
      %v3659 = vpack.c.b16 %v3645, %v3644
      %v3660 = vpack.c.b16 %v3647, %v3646
      %v3661 = vpack.c.b16 %v3649, %v3648
      %v3662 = vpack.c.b16 %v3651, %v3650
      %v3663 = vpack.c.b16 %v3653, %v3652
      %v3664 = vpack.c.b16 %v3655, %v3654
      %v3665 = vpack.c.b16 %v3657, %v3656
      %3674 = vmatpush.bf16.msra.mxu0 %v3665
      %3675 = vmatpush.bf16.msra.mxu0 %v3664
      %3676 = vmatpush.bf16.msra.mxu0 %v3663
      %3677 = vmatpush.bf16.msra.mxu0 %v3662
      %3678 = vmatpush.bf16.msra.mxu0 %v3661
      %3679 = vmatpush.bf16.msra.mxu0 %v3660
      %3680 = vmatpush.bf16.msra.mxu0 %v3659
      %3681 = vmatpush.bf16.msra.mxu0 %v3658
      %3682 = vmatmul.bf16.gmra.mxu0 %v3609
      %v3683 = vpop.f32.mrf.mxu0
      %v3684 = vadd.f32 0.0, %v3683
      %v3685 = vpop.f32.mrf.mxu0
      %v3686 = vadd.f32 0.0, %v3685
      %3687 = vmatmul.bf16.gmra.mxu0 %v3611
      %v3688 = vpop.f32.mrf.mxu0
      %v3689 = vadd.f32 0.0, %v3688
      %v3690 = vpop.f32.mrf.mxu0
      %v3691 = vadd.f32 0.0, %v3690
      %3692 = vmatmul.bf16.gmra.mxu0 %v3613
      %v3693 = vpop.f32.mrf.mxu0
      %v3694 = vadd.f32 0.0, %v3693
      %v3695 = vpop.f32.mrf.mxu0
      %v3696 = vadd.f32 0.0, %v3695
      %3697 = vmatmul.bf16.gmra.mxu0 %v3615
      %v3698 = vpop.f32.mrf.mxu0
      %v3699 = vadd.f32 0.0, %v3698
      %v3700 = vpop.f32.mrf.mxu0
      %v3701 = vadd.f32 0.0, %v3700
      %3702 = vmatmul.bf16.gmra.mxu0 %v3617
      %v3703 = vpop.f32.mrf.mxu0
      %v3704 = vadd.f32 0.0, %v3703
      %v3705 = vpop.f32.mrf.mxu0
      %v3706 = vadd.f32 0.0, %v3705
      %3707 = vmatmul.bf16.gmra.mxu0 %v3619
      %v3708 = vpop.f32.mrf.mxu0
      %v3709 = vadd.f32 0.0, %v3708
      %v3710 = vpop.f32.mrf.mxu0
      %v3711 = vadd.f32 0.0, %v3710
      %3712 = vdwg.mxu0
      %v3713 = vadd.f32 %v3574, %v3684
      %v3714 = vadd.f32 %v3575, %v3686
      %v3715 = vadd.f32 %v3576, %v3689
      %v3716 = vadd.f32 %v3577, %v3691
      %v3717 = vadd.f32 %v3578, %v3694
      %v3718 = vadd.f32 %v3579, %v3696
      %v3719 = vadd.f32 %v3580, %v3699
      %v3720 = vadd.f32 %v3581, %v3701
      %v3721 = vadd.f32 %v3582, %v3704
      %v3722 = vadd.f32 %v3583, %v3706
      %v3723 = vadd.f32 %v3584, %v3709
      %v3724 = vadd.f32 %v3585, %v3711
      %v3725 = vld [vmem:[%s274 + $0x4] sm:$0xe]
      %v3726 = vld [vmem:[%s274 + $0x8] sm:$0xf]
      %v3727 = vld [vmem:[%s274 + $0xc] sm:$0xf]
      %v3728 = vld [vmem:[%s274 + $0x10] sm:$0xf]
      %v3729 = vld [vmem:[%s274 + $0x14] sm:$0xf]
      %v3730 = vld [vmem:[%s274 + $0x18] sm:$0xf]
      %v3731 = vld [vmem:[%s274 + $0x1c] sm:$0xf]
      %v3732 = vld [vmem:[%s274 + $0x20] sm:$0xf]
      %v3733 = vld [vmem:[%s274 + $0x24] sm:$0xf]
      %v3734 = vld [vmem:[%s274 + $0x28] sm:$0xf]
      %v3735 = vld [vmem:[%s274 + $0x2c] sm:$0xf]
      %v3736 = vld [vmem:[%s274 + $0x30] sm:$0xf]
      %v3737 = vld [vmem:[%s274 + $0x34] sm:$0x3]
      %v3738 = vunpack.c.l.bf16 %v3725
      %v3739 = vunpack.c.l.bf16 %v3726
      %v3740 = vunpack.c.l.bf16 %v3727
      %v3741 = vunpack.c.l.bf16 %v3728
      %v3742 = vunpack.c.l.bf16 %v3729
      %v3743 = vunpack.c.l.bf16 %v3730
      %v3744 = vunpack.c.l.bf16 %v3731
      %v3745 = vunpack.c.l.bf16 %v3732
      %v3746 = vunpack.c.l.bf16 %v3733
      %v3747 = vunpack.c.l.bf16 %v3734
      %v3748 = vunpack.c.l.bf16 %v3735
      %v3749 = vunpack.c.l.bf16 %v3736
      %v3750 = vunpack.c.l.bf16 %v3737
      %vm3764 = vcmask 1044480
      %v3765 = vrot.slane %v3738, 3
      %v3766 = vrot.slane %v3739, 3
      %v3767 = vsel %vm3764, %v3765, %v3766
      %v3768 = vrot.slane %v3740, 3
      %v3769 = vsel %vm3764, %v3766, %v3768
      %v3770 = vrot.slane %v3741, 3
      %v3771 = vsel %vm3764, %v3768, %v3770
      %v3772 = vrot.slane %v3742, 3
      %v3773 = vsel %vm3764, %v3770, %v3772
      %v3774 = vrot.slane %v3743, 3
      %v3775 = vsel %vm3764, %v3772, %v3774
      %v3776 = vrot.slane %v3744, 3
      %v3777 = vsel %vm3764, %v3774, %v3776
      %v3778 = vrot.slane %v3745, 3
      %v3779 = vsel %vm3764, %v3776, %v3778
      %v3780 = vrot.slane %v3746, 3
      %v3781 = vsel %vm3764, %v3778, %v3780
      %v3782 = vrot.slane %v3747, 3
      %v3783 = vsel %vm3764, %v3780, %v3782
      %v3784 = vrot.slane %v3748, 3
      %v3785 = vsel %vm3764, %v3782, %v3784
      %v3786 = vrot.slane %v3749, 3
      %v3787 = vsel %vm3764, %v3784, %v3786
      %v3788 = vrot.slane %v3750, 3
      %v3789 = vsel %vm3764, %v3786, %v3788
      %v3802 = vadd.f32 %v3713, %v3767
      %v3803 = vadd.f32 %v3714, %v3769
      %v3804 = vadd.f32 %v3715, %v3771
      %v3805 = vadd.f32 %v3716, %v3773
      %v3806 = vadd.f32 %v3717, %v3775
      %v3807 = vadd.f32 %v3718, %v3777
      %v3808 = vadd.f32 %v3719, %v3779
      %v3809 = vadd.f32 %v3720, %v3781
      %v3810 = vadd.f32 %v3721, %v3783
      %v3811 = vadd.f32 %v3722, %v3785
      %v3812 = vadd.f32 %v3723, %v3787
      %v3813 = vadd.f32 %v3724, %v3789
      %v3814 = vpack.c.bf16 %v3802, %v3802
      %v3815 = vpack.c.bf16 %v3803, %v3803
      %v3816 = vpack.c.bf16 %v3804, %v3804
      %v3817 = vpack.c.bf16 %v3805, %v3805
      %v3818 = vpack.c.bf16 %v3806, %v3806
      %v3819 = vpack.c.bf16 %v3807, %v3807
      %v3820 = vpack.c.bf16 %v3808, %v3808
      %v3821 = vpack.c.bf16 %v3809, %v3809
      %v3822 = vpack.c.bf16 %v3810, %v3810
      %v3823 = vpack.c.bf16 %v3811, %v3811
      %v3824 = vpack.c.bf16 %v3812, %v3812
      %v3825 = vpack.c.bf16 %v3813, %v3813
      %v3827 = vshrl.u32 %v3814, 16
      %v3829 = vrot.slane %v3827, 6
      %v3830 = vshll.u32 %v3814, 16
      %v3832 = vrot.slane %v3830, 7
      %v3833 = vor.u32 %v3829, %v3832
      %v3834 = vrot.slane %v3833, 4
      %v3836 = vshrl.u32 %v3815, 16
      %v3838 = vrot.slane %v3836, 6
      %v3839 = vshll.u32 %v3815, 16
      %v3841 = vrot.slane %v3839, 7
      %v3842 = vor.u32 %v3838, %v3841
      %v3843 = vsel %vm2103, %v3834, %v3842
      %v3844 = vrot.slane %v3842, 4
      %v3846 = vshrl.u32 %v3816, 16
      %v3848 = vrot.slane %v3846, 6
      %v3849 = vshll.u32 %v3816, 16
      %v3851 = vrot.slane %v3849, 7
      %v3852 = vor.u32 %v3848, %v3851
      %v3853 = vsel %vm2103, %v3844, %v3852
      %v3854 = vrot.slane %v3852, 4
      %v3856 = vshrl.u32 %v3817, 16
      %v3858 = vrot.slane %v3856, 6
      %v3859 = vshll.u32 %v3817, 16
      %v3861 = vrot.slane %v3859, 7
      %v3862 = vor.u32 %v3858, %v3861
      %v3863 = vsel %vm2103, %v3854, %v3862
      %v3864 = vrot.slane %v3862, 4
      %v3866 = vshrl.u32 %v3818, 16
      %v3868 = vrot.slane %v3866, 6
      %v3869 = vshll.u32 %v3818, 16
      %v3871 = vrot.slane %v3869, 7
      %v3872 = vor.u32 %v3868, %v3871
      %v3873 = vsel %vm2103, %v3864, %v3872
      %v3874 = vrot.slane %v3872, 4
      %v3876 = vshrl.u32 %v3819, 16
      %v3878 = vrot.slane %v3876, 6
      %v3879 = vshll.u32 %v3819, 16
      %v3881 = vrot.slane %v3879, 7
      %v3882 = vor.u32 %v3878, %v3881
      %v3883 = vsel %vm2103, %v3874, %v3882
      %v3884 = vrot.slane %v3882, 4
      %v3886 = vshrl.u32 %v3820, 16
      %v3888 = vrot.slane %v3886, 6
      %v3889 = vshll.u32 %v3820, 16
      %v3891 = vrot.slane %v3889, 7
      %v3892 = vor.u32 %v3888, %v3891
      %v3893 = vsel %vm2103, %v3884, %v3892
      %v3894 = vrot.slane %v3892, 4
      %v3896 = vshrl.u32 %v3821, 16
      %v3898 = vrot.slane %v3896, 6
      %v3899 = vshll.u32 %v3821, 16
      %v3901 = vrot.slane %v3899, 7
      %v3902 = vor.u32 %v3898, %v3901
      %v3903 = vsel %vm2103, %v3894, %v3902
      %v3904 = vrot.slane %v3902, 4
      %v3906 = vshrl.u32 %v3822, 16
      %v3908 = vrot.slane %v3906, 6
      %v3909 = vshll.u32 %v3822, 16
      %v3911 = vrot.slane %v3909, 7
      %v3912 = vor.u32 %v3908, %v3911
      %v3913 = vsel %vm2103, %v3904, %v3912
      %v3914 = vrot.slane %v3912, 4
      %v3916 = vshrl.u32 %v3823, 16
      %v3918 = vrot.slane %v3916, 6
      %v3919 = vshll.u32 %v3823, 16
      %v3921 = vrot.slane %v3919, 7
      %v3922 = vor.u32 %v3918, %v3921
      %v3923 = vsel %vm2103, %v3914, %v3922
      %v3924 = vrot.slane %v3922, 4
      %v3926 = vshrl.u32 %v3824, 16
      %v3928 = vrot.slane %v3926, 6
      %v3929 = vshll.u32 %v3824, 16
      %v3931 = vrot.slane %v3929, 7
      %v3932 = vor.u32 %v3928, %v3931
      %v3933 = vsel %vm2103, %v3924, %v3932
      %v3934 = vrot.slane %v3932, 4
      %v3936 = vshrl.u32 %v3825, 16
      %v3938 = vrot.slane %v3936, 6
      %v3939 = vshll.u32 %v3825, 16
      %v3941 = vrot.slane %v3939, 7
      %v3942 = vor.u32 %v3938, %v3941
      %v3943 = vsel %vm2103, %v3934, %v3942
      %v3944 = vrot.slane %v3942, 4
      %v3958 = vld [vmem:[%s280 + $0x4] sm:$0xe]
      %v3959 = vsel %vm295, %v3833, %v3958
      %3960 = vst [vmem:[%s280 + $0x4] sm:$0xe] %v3959
      %3961 = vst [vmem:[%s280 + $0x8] sm:$0xf] %v3843
      %3962 = vst [vmem:[%s280 + $0xc] sm:$0xf] %v3853
      %3963 = vst [vmem:[%s280 + $0x10] sm:$0xf] %v3863
      %3964 = vst [vmem:[%s280 + $0x14] sm:$0xf] %v3873
      %3965 = vst [vmem:[%s280 + $0x18] sm:$0xf] %v3883
      %3966 = vst [vmem:[%s280 + $0x1c] sm:$0xf] %v3893
      %3967 = vst [vmem:[%s280 + $0x20] sm:$0xf] %v3903
      %3968 = vst [vmem:[%s280 + $0x24] sm:$0xf] %v3913
      %3969 = vst [vmem:[%s280 + $0x28] sm:$0xf] %v3923
      %3970 = vst [vmem:[%s280 + $0x2c] sm:$0xf] %v3933
      %3971 = vst [vmem:[%s280 + $0x30] sm:$0xf] %v3943
      %v3972 = vld [vmem:[%s280 + $0x34] sm:$0x3]
      %v3973 = vsel %vm289, %v3944, %v3972
      %3974 = vst [vmem:[%s280 + $0x34] sm:$0x3] %v3973
      %s3975 = smul.u32 14, %s18
      %p3976 = scmp.lt.s32.totalorder %s3975, 27
      %s3977 = scalar_select %p3976, %s3975, 27
      %s3978 = smul.addr %s3977, 4
      %s3979 = scalar_lea.vmem %s7, %s3978
      // Predicated region
      $region49: #{network_block_forward.3} parent=47 // pred_check
        %p3980 = pneg %p188
      $region50: #{network_block_forward.3} parent=47 // pred_check_branch
        %3982 = sbr.rel (%p3980) target = $region52
      $region51: #{network_block_forward.3} parent=47 // pred_region
        %s3983 = smul.u32 14, %s18
      $region52: #{network_block_forward.3} parent=47 // pred_fallthru
        _
    $region48: #{network_block_forward.3} parent=5 // pred_fallthru
      _
    %p3984 = scmp.le.s32.totalorder 2, %s13
    // Predicated region
    $region53: #{network_block_forward.3} parent=5 // pred_check
      %p3985 = pneg %p3984
    $region54: #{network_block_forward.3} parent=5 // pred_check_branch
      %3987 = sbr.rel (%p3985) target = $region56
    $region55: #{network_block_forward.3} parent=5 // pred_region
      %s3988 = ssub.s32 %s13, 2
      // Predicated region
      $region57: #{network_block_forward.3} parent=55 // pred_check
        %p3989 = pneg %p194
      $region58: #{network_block_forward.3} parent=55 // pred_check_branch
        %3991 = sbr.rel (%p3989) target = $region60
      $region59: #{network_block_forward.3} parent=55 // pred_region
        %s3992 = smul.u32 14, %s19
        %p3993 = scmp.lt.s32.totalorder %s3992, 27
        %s3994 = scalar_select %p3993, %s3992, 27
        %s3995 = smul.addr %s3994, 4
        %s3996 = scalar_lea.vmem %s7, %s3995
      $region60: #{network_block_forward.3} parent=55 // pred_fallthru
        _
    $region56: #{network_block_forward.3} parent=5 // pred_fallthru
      _
  $region6: #{network_block_forward.3} parent=0 // loop_footer
    %s17 = sadd.s32 1, %s13
  $region7: #{network_block_forward.3} parent=0 // loop_footer_branch
    %12 = sbr.rel target = $region3
  $region8: #{network_block_forward.3} parent=0 // loop_exit
    _

</llo_original>
